<compile_context>
chip_gen: v6e
topology: v6e:2x2x1
jax: 0.10.0
libtpu: 0.0.40
codegen_flags: <defaults>
</compile_context>

<pallas_src>
import math
import functools

import jax
import jax.numpy as jnp
from jax.experimental import pallas as pl
from jax.experimental.pallas import tpu as pltpu


def _fused_attn_kernel(q_ref, k_ref, v_ref, mask_ref, o_ref, qk_scratch, *, scale):
    """Fused (per batch element) scaled QK^T -> permute -> +mask -> softmax -> @V."""
    C, S, _ = q_ref.shape  # (C, S, S); C == S

    # ---- 1) qk[c, i, j] = sum_k Q[c, i, k] * K[c, j, k]   (C-batched, MXU)
    # Canonical batched form ('cik,cjk->cij'), f32 accumulation.
    qk = jax.lax.dot_general(
        q_ref[...], k_ref[...],
        dimension_numbers=(((2,), (2,)), ((0,), (0,))),
        preferred_element_type=jnp.float32,
    )
    qk_scratch[...] = qk * scale  # keep the scaled scores resident in VMEM

    # Identity matrix used to realize the (c, j) -> (j, c) permute as an
    # exact NT matmul on the MXU (multiplication by 1.0 / addition of 0.0).
    eye = (jax.lax.broadcasted_iota(jnp.int32, (S, S), 0)
           == jax.lax.broadcasted_iota(jnp.int32, (S, S), 1)).astype(jnp.float32)

    mask = mask_ref[...]  # (S, S), indexed [j, c] == mask[0, j, c]

    # ---- 2) per output row i: permute + mask + softmax + attn @ V
    # S is small and static -> unrolled at trace time.
    for i in range(S):
        s_i = qk_scratch[:, i, :]  # (C, S_j): scaled qk[:, i, :]

        # p_i[j, c] = s_i[c, j]  (permute via identity NT matmul) + mask[j, c]
        p_i = jax.lax.dot_general(
            eye, s_i,
            dimension_numbers=(((1,), (1,)), ((), ())),  # NT: contract last dims
            preferred_element_type=jnp.float32,
        ) + mask                                          # (S_j, C)

        # softmax over c (last axis), max-stabilized
        m = jnp.max(p_i, axis=-1, keepdims=True)
        e = jnp.exp(p_i - m)
        l = jnp.sum(e, axis=-1, keepdims=True)
        attn_i = e * pl.reciprocal(l, approx=True)        # (S_j, C)

        # out[i, j, w] = sum_c attn_i[j, c] * V[b, i, c, w]
        o_ref[i] = jnp.dot(attn_i, v_ref[i], preferred_element_type=jnp.float32)


@jax.jit
def model_forward(Q, K, V, mask):
    B, C, S, S2 = Q.shape
    assert S == S2 and C == S, "forward is only shape-consistent when C == S"
    scale = 1.0 / math.sqrt(S)

    kernel = functools.partial(_fused_attn_kernel, scale=scale)

    return pl.pallas_call(
        kernel,
        out_shape=jax.ShapeDtypeStruct((B, S, S, S), jnp.float32),
        grid=(B,),
        in_specs=[
            pl.BlockSpec((None, C, S, S), lambda b: (b, 0, 0, 0)),  # Q[b]
            pl.BlockSpec((None, C, S, S), lambda b: (b, 0, 0, 0)),  # K[b]
            pl.BlockSpec((None, C, S, S), lambda b: (b, 0, 0, 0)),  # V[b]
            pl.BlockSpec((None, S, S),    lambda b: (0, 0, 0)),     # mask (resident)
        ],
        out_specs=pl.BlockSpec((None, S, S, S), lambda b: (b, 0, 0, 0)),
        scratch_shapes=[pltpu.VMEM((C, S, S), jnp.float32)],
        compiler_params=pltpu.CompilerParams(
            dimension_semantics=("parallel",),
        ),
    )(Q, K, V, mask)


def _reference(Q, K, V, mask):
    # Pure-JAX reference of the PyTorch forward.
    S = Q.shape[-1]
    qk = jnp.einsum("bcik,bcjk->bcij", Q, K) / math.sqrt(S)
    p = jnp.transpose(qk, (0, 2, 3, 1)) + mask  # same broadcast as torch
    attn = jax.nn.softmax(p, axis=-1)
    return jnp.einsum("bijc,bicw->bijw", attn, V)


if __name__ == "__main__":
    B, C, S = 2, 16, 16  # C must equal S (see note at top)
    key = jax.random.PRNGKey(0)
    kq, kk, kv, km = jax.random.split(key, 4)
    Q = jax.random.normal(kq, (B, C, S, S), dtype=jnp.float32)
    K = jax.random.normal(kk, (B, C, S, S), dtype=jnp.float32)
    V = jax.random.normal(kv, (B, C, S, S), dtype=jnp.float32)
    mask = jnp.where(
        jax.random.uniform(km, (1, S, S)) > 0.7, -1e9, 0.0
    ).astype(jnp.float32)

    out = jax.block_until_ready(model_forward(Q, K, V, mask))
    ref = jax.block_until_ready(_reference(Q, K, V, mask))

    assert out.shape == (B, S, S, S)
    # Tolerance accounts for the approximate (EUP) reciprocal in the softmax.
    assert jnp.allclose(out, ref, rtol=5e-3, atol=5e-3)
    print("KERNEL_OK")
</pallas_src>

<mosaic_0001>
module attributes {stable_mosaic.version = 11 : i64} {
  func.func @_fused_attn_kernel(%arg0: i32, %arg1: memref<1x16x16x16xf32, #tpu.memory_space<vmem>>, %arg2: memref<1x16x16x16xf32, #tpu.memory_space<vmem>>, %arg3: memref<1x16x16x16xf32, #tpu.memory_space<vmem>>, %arg4: memref<1x16x16xf32, #tpu.memory_space<vmem>>, %arg5: memref<1x16x16x16xf32, #tpu.memory_space<vmem>>, %arg6: memref<16x16x16xf32, #tpu.memory_space<vmem>>) attributes {dimension_semantics = [#tpu.dimension_semantics<parallel>], iteration_bounds = array<i64: 2>, scalar_prefetch = 0 : i64, scratch_operands = 1 : i64, tpu.core_type = #tpu.core_type<tc>, window_params = [{transform_indices = @transform_0, window_bounds = array<i64: 1, 16, 16, 16>}, {transform_indices = @transform_1, window_bounds = array<i64: 1, 16, 16, 16>}, {transform_indices = @transform_2, window_bounds = array<i64: 1, 16, 16, 16>}, {pipeline_mode = #tpu.pipeline_mode<synchronous>, transform_indices = @transform_3, window_bounds = array<i64: 1, 16, 16>}, {transform_indices = @transform_4, window_bounds = array<i64: 1, 16, 16, 16>}]} {
    %c0 = arith.constant 0 : index
    %c0_0 = arith.constant 0 : index
    %c0_1 = arith.constant 0 : index
    %c0_2 = arith.constant 0 : index
    %0 = vector.load %arg1[%c0, %c0_0, %c0_1, %c0_2] : memref<1x16x16x16xf32, #tpu.memory_space<vmem>>, vector<1x16x16x16xf32>
    %1 = vector.shape_cast %0 : vector<1x16x16x16xf32> to vector<16x16x16xf32>
    %c0_3 = arith.constant 0 : index
    %c0_4 = arith.constant 0 : index
    %c0_5 = arith.constant 0 : index
    %c0_6 = arith.constant 0 : index
    %2 = vector.load %arg2[%c0_3, %c0_4, %c0_5, %c0_6] : memref<1x16x16x16xf32, #tpu.memory_space<vmem>>, vector<1x16x16x16xf32>
    %3 = vector.shape_cast %2 : vector<1x16x16x16xf32> to vector<16x16x16xf32>
    %cst = arith.constant dense<0.000000e+00> : vector<16x16x16xf32>
    %4 = tpu.matmul %1, %3, %cst {dimension_numbers = #tpu.dot_dimension_numbers<[2], [2], [1], [1], [0, 0, 0, 1, 1, 1], [0], [0]>} : vector<16x16x16xf32>, vector<16x16x16xf32>, vector<16x16x16xf32> -> vector<16x16x16xf32>
    %cst_7 = arith.constant 2.500000e-01 : f32
    %5 = vector.broadcast %cst_7 : f32 to vector<16x16x16xf32>
    %6 = arith.mulf %4, %5 : vector<16x16x16xf32>
    %c0_8 = arith.constant 0 : index
    %c0_9 = arith.constant 0 : index
    %c0_10 = arith.constant 0 : index
    %7 = vector.load %arg6[%c0_8, %c0_9, %c0_10] : memref<16x16x16xf32, #tpu.memory_space<vmem>>, vector<16x16x16xf32>
    tpu.vector_store %arg6[%c0_8, %c0_9, %c0_10], %6 {strides = array<i32>} : memref<16x16x16xf32, #tpu.memory_space<vmem>>, vector<16x16x16xf32>,
    %8 = tpu.iota {dimensions = array<i32: 0>} : vector<16x16xi32>
    %9 = tpu.iota {dimensions = array<i32: 1>} : vector<16x16xi32>
    %10 = arith.cmpi eq, %8, %9 : vector<16x16xi32>
    %11 = arith.extui %10 : vector<16x16xi1> to vector<16x16xi32>
    %12 = arith.sitofp %11 : vector<16x16xi32> to vector<16x16xf32>
    %c0_11 = arith.constant 0 : index
    %c0_12 = arith.constant 0 : index
    %c0_13 = arith.constant 0 : index
    %13 = vector.load %arg4[%c0_11, %c0_12, %c0_13] : memref<1x16x16xf32, #tpu.memory_space<vmem>>, vector<1x16x16xf32>
    %14 = vector.shape_cast %13 : vector<1x16x16xf32> to vector<16x16xf32>
    %c0_14 = arith.constant 0 : index
    %c0_15 = arith.constant 0 : index
    %c0_16 = arith.constant 0 : index
    %15 = vector.load %arg6[%c0_14, %c0_15, %c0_16] : memref<16x16x16xf32, #tpu.memory_space<vmem>>, vector<16x1x16xf32>
    %16 = vector.shape_cast %15 : vector<16x1x16xf32> to vector<16x16xf32>
    %cst_17 = arith.constant dense<0.000000e+00> : vector<16x16xf32>
    %17 = tpu.matmul %12, %16, %cst_17 {dimension_numbers = #tpu.dot_dimension_numbers<[1], [1], [0], [0], [0, 0, 1, 0], [], []>} : vector<16x16xf32>, vector<16x16xf32>, vector<16x16xf32> -> vector<16x16xf32>
    %18 = arith.addf %17, %14 : vector<16x16xf32>
    %cst_18 = arith.constant dense<0xFF800000> : vector<16xf32>
    %19 = vector.multi_reduction <maximumf>, %18, %cst_18 [1] : vector<16x16xf32> to vector<16xf32>
    %20 = vector.shape_cast %19 : vector<16xf32> to vector<16x1xf32>
    %21 = vector.broadcast %20 : vector<16x1xf32> to vector<16x16xf32>
    %22 = arith.subf %18, %21 : vector<16x16xf32>
    %23 = math.exp %22 : vector<16x16xf32>
    %cst_19 = arith.constant dense<0.000000e+00> : vector<16xf32>
    %24 = vector.multi_reduction <add>, %23, %cst_19 [1] : vector<16x16xf32> to vector<16xf32>
    %25 = vector.shape_cast %24 : vector<16xf32> to vector<16x1xf32>
    %26 = tpu.reciprocal %25 {approx = true} : vector<16x1xf32> -> vector<16x1xf32>
    %27 = vector.broadcast %26 : vector<16x1xf32> to vector<16x16xf32>
    %28 = arith.mulf %23, %27 : vector<16x16xf32>
    %c0_20 = arith.constant 0 : index
    %c0_21 = arith.constant 0 : index
    %c0_22 = arith.constant 0 : index
    %c0_23 = arith.constant 0 : index
    %29 = vector.load %arg3[%c0_20, %c0_21, %c0_22, %c0_23] : memref<1x16x16x16xf32, #tpu.memory_space<vmem>>, vector<1x1x16x16xf32>
    %30 = vector.shape_cast %29 : vector<1x1x16x16xf32> to vector<16x16xf32>
    %cst_24 = arith.constant dense<0.000000e+00> : vector<16x16xf32>
    %31 = tpu.matmul %28, %30, %cst_24 {dimension_numbers = #tpu.dot_dimension_numbers<[1], [0], [0], [1], [0, 0, 1, 1], [], []>} : vector<16x16xf32>, vector<16x16xf32>, vector<16x16xf32> -> vector<16x16xf32>
    %c0_25 = arith.constant 0 : index
    %c0_26 = arith.constant 0 : index
    %c0_27 = arith.constant 0 : index
    %c0_28 = arith.constant 0 : index
    %32 = vector.load %arg5[%c0_25, %c0_26, %c0_27, %c0_28] : memref<1x16x16x16xf32, #tpu.memory_space<vmem>>, vector<1x1x16x16xf32>
    %33 = vector.shape_cast %32 : vector<1x1x16x16xf32> to vector<16x16xf32>
    %34 = vector.shape_cast %31 : vector<16x16xf32> to vector<1x1x16x16xf32>
    tpu.vector_store %arg5[%c0_25, %c0_26, %c0_27, %c0_28], %34 {strides = array<i32>} : memref<1x16x16x16xf32, #tpu.memory_space<vmem>>, vector<1x1x16x16xf32>,
    %c0_29 = arith.constant 0 : index
    %c1 = arith.constant 1 : index
    %c0_30 = arith.constant 0 : index
    %35 = vector.load %arg6[%c0_29, %c1, %c0_30] : memref<16x16x16xf32, #tpu.memory_space<vmem>>, vector<16x1x16xf32>
    %36 = vector.shape_cast %35 : vector<16x1x16xf32> to vector<16x16xf32>
    %cst_31 = arith.constant dense<0.000000e+00> : vector<16x16xf32>
    %37 = tpu.matmul %12, %36, %cst_31 {dimension_numbers = #tpu.dot_dimension_numbers<[1], [1], [0], [0], [0, 0, 1, 0], [], []>} : vector<16x16xf32>, vector<16x16xf32>, vector<16x16xf32> -> vector<16x16xf32>
    %38 = arith.addf %37, %14 : vector<16x16xf32>
    %cst_32 = arith.constant dense<0xFF800000> : vector<16xf32>
    %39 = vector.multi_reduction <maximumf>, %38, %cst_32 [1] : vector<16x16xf32> to vector<16xf32>
    %40 = vector.shape_cast %39 : vector<16xf32> to vector<16x1xf32>
    %41 = vector.broadcast %40 : vector<16x1xf32> to vector<16x16xf32>
    %42 = arith.subf %38, %41 : vector<16x16xf32>
    %43 = math.exp %42 : vector<16x16xf32>
    %cst_33 = arith.constant dense<0.000000e+00> : vector<16xf32>
    %44 = vector.multi_reduction <add>, %43, %cst_33 [1] : vector<16x16xf32> to vector<16xf32>
    %45 = vector.shape_cast %44 : vector<16xf32> to vector<16x1xf32>
    %46 = tpu.reciprocal %45 {approx = true} : vector<16x1xf32> -> vector<16x1xf32>
    %47 = vector.broadcast %46 : vector<16x1xf32> to vector<16x16xf32>
    %48 = arith.mulf %43, %47 : vector<16x16xf32>
    %c0_34 = arith.constant 0 : index
    %c1_35 = arith.constant 1 : index
    %c0_36 = arith.constant 0 : index
    %c0_37 = arith.constant 0 : index
    %49 = vector.load %arg3[%c0_34, %c1_35, %c0_36, %c0_37] : memref<1x16x16x16xf32, #tpu.memory_space<vmem>>, vector<1x1x16x16xf32>
    %50 = vector.shape_cast %49 : vector<1x1x16x16xf32> to vector<16x16xf32>
    %cst_38 = arith.constant dense<0.000000e+00> : vector<16x16xf32>
    %51 = tpu.matmul %48, %50, %cst_38 {dimension_numbers = #tpu.dot_dimension_numbers<[1], [0], [0], [1], [0, 0, 1, 1], [], []>} : vector<16x16xf32>, vector<16x16xf32>, vector<16x16xf32> -> vector<16x16xf32>
    %c0_39 = arith.constant 0 : index
    %c1_40 = arith.constant 1 : index
    %c0_41 = arith.constant 0 : index
    %c0_42 = arith.constant 0 : index
    %52 = vector.load %arg5[%c0_39, %c1_40, %c0_41, %c0_42] : memref<1x16x16x16xf32, #tpu.memory_space<vmem>>, vector<1x1x16x16xf32>
    %53 = vector.shape_cast %52 : vector<1x1x16x16xf32> to vector<16x16xf32>
    %54 = vector.shape_cast %51 : vector<16x16xf32> to vector<1x1x16x16xf32>
    tpu.vector_store %arg5[%c0_39, %c1_40, %c0_41, %c0_42], %54 {strides = array<i32>} : memref<1x16x16x16xf32, #tpu.memory_space<vmem>>, vector<1x1x16x16xf32>,
    %c0_43 = arith.constant 0 : index
    %c2 = arith.constant 2 : index
    %c0_44 = arith.constant 0 : index
    %55 = vector.load %arg6[%c0_43, %c2, %c0_44] : memref<16x16x16xf32, #tpu.memory_space<vmem>>, vector<16x1x16xf32>
    %56 = vector.shape_cast %55 : vector<16x1x16xf32> to vector<16x16xf32>
    %cst_45 = arith.constant dense<0.000000e+00> : vector<16x16xf32>
    %57 = tpu.matmul %12, %56, %cst_45 {dimension_numbers = #tpu.dot_dimension_numbers<[1], [1], [0], [0], [0, 0, 1, 0], [], []>} : vector<16x16xf32>, vector<16x16xf32>, vector<16x16xf32> -> vector<16x16xf32>
    %58 = arith.addf %57, %14 : vector<16x16xf32>
    %cst_46 = arith.constant dense<0xFF800000> : vector<16xf32>
    %59 = vector.multi_reduction <maximumf>, %58, %cst_46 [1] : vector<16x16xf32> to vector<16xf32>
    %60 = vector.shape_cast %59 : vector<16xf32> to vector<16x1xf32>
    %61 = vector.broadcast %60 : vector<16x1xf32> to vector<16x16xf32>
    %62 = arith.subf %58, %61 : vector<16x16xf32>
    %63 = math.exp %62 : vector<16x16xf32>
    %cst_47 = arith.constant dense<0.000000e+00> : vector<16xf32>
    %64 = vector.multi_reduction <add>, %63, %cst_47 [1] : vector<16x16xf32> to vector<16xf32>
    %65 = vector.shape_cast %64 : vector<16xf32> to vector<16x1xf32>
    %66 = tpu.reciprocal %65 {approx = true} : vector<16x1xf32> -> vector<16x1xf32>
    %67 = vector.broadcast %66 : vector<16x1xf32> to vector<16x16xf32>
    %68 = arith.mulf %63, %67 : vector<16x16xf32>
    %c0_48 = arith.constant 0 : index
    %c2_49 = arith.constant 2 : index
    %c0_50 = arith.constant 0 : index
    %c0_51 = arith.constant 0 : index
    %69 = vector.load %arg3[%c0_48, %c2_49, %c0_50, %c0_51] : memref<1x16x16x16xf32, #tpu.memory_space<vmem>>, vector<1x1x16x16xf32>
    %70 = vector.shape_cast %69 : vector<1x1x16x16xf32> to vector<16x16xf32>
    %cst_52 = arith.constant dense<0.000000e+00> : vector<16x16xf32>
    %71 = tpu.matmul %68, %70, %cst_52 {dimension_numbers = #tpu.dot_dimension_numbers<[1], [0], [0], [1], [0, 0, 1, 1], [], []>} : vector<16x16xf32>, vector<16x16xf32>, vector<16x16xf32> -> vector<16x16xf32>
    %c0_53 = arith.constant 0 : index
    %c2_54 = arith.constant 2 : index
    %c0_55 = arith.constant 0 : index
    %c0_56 = arith.constant 0 : index
    %72 = vector.load %arg5[%c0_53, %c2_54, %c0_55, %c0_56] : memref<1x16x16x16xf32, #tpu.memory_space<vmem>>, vector<1x1x16x16xf32>
    %73 = vector.shape_cast %72 : vector<1x1x16x16xf32> to vector<16x16xf32>
    %74 = vector.shape_cast %71 : vector<16x16xf32> to vector<1x1x16x16xf32>
    tpu.vector_store %arg5[%c0_53, %c2_54, %c0_55, %c0_56], %74 {strides = array<i32>} : memref<1x16x16x16xf32, #tpu.memory_space<vmem>>, vector<1x1x16x16xf32>,
    %c0_57 = arith.constant 0 : index
    %c3 = arith.constant 3 : index
    %c0_58 = arith.constant 0 : index
    %75 = vector.load %arg6[%c0_57, %c3, %c0_58] : memref<16x16x16xf32, #tpu.memory_space<vmem>>, vector<16x1x16xf32>
    %76 = vector.shape_cast %75 : vector<16x1x16xf32> to vector<16x16xf32>
    %cst_59 = arith.constant dense<0.000000e+00> : vector<16x16xf32>
    %77 = tpu.matmul %12, %76, %cst_59 {dimension_numbers = #tpu.dot_dimension_numbers<[1], [1], [0], [0], [0, 0, 1, 0], [], []>} : vector<16x16xf32>, vector<16x16xf32>, vector<16x16xf32> -> vector<16x16xf32>
    %78 = arith.addf %77, %14 : vector<16x16xf32>
    %cst_60 = arith.constant dense<0xFF800000> : vector<16xf32>
    %79 = vector.multi_reduction <maximumf>, %78, %cst_60 [1] : vector<16x16xf32> to vector<16xf32>
    %80 = vector.shape_cast %79 : vector<16xf32> to vector<16x1xf32>
    %81 = vector.broadcast %80 : vector<16x1xf32> to vector<16x16xf32>
    %82 = arith.subf %78, %81 : vector<16x16xf32>
    %83 = math.exp %82 : vector<16x16xf32>
    %cst_61 = arith.constant dense<0.000000e+00> : vector<16xf32>
    %84 = vector.multi_reduction <add>, %83, %cst_61 [1] : vector<16x16xf32> to vector<16xf32>
    %85 = vector.shape_cast %84 : vector<16xf32> to vector<16x1xf32>
    %86 = tpu.reciprocal %85 {approx = true} : vector<16x1xf32> -> vector<16x1xf32>
    %87 = vector.broadcast %86 : vector<16x1xf32> to vector<16x16xf32>
    %88 = arith.mulf %83, %87 : vector<16x16xf32>
    %c0_62 = arith.constant 0 : index
    %c3_63 = arith.constant 3 : index
    %c0_64 = arith.constant 0 : index
    %c0_65 = arith.constant 0 : index
    %89 = vector.load %arg3[%c0_62, %c3_63, %c0_64, %c0_65] : memref<1x16x16x16xf32, #tpu.memory_space<vmem>>, vector<1x1x16x16xf32>
    %90 = vector.shape_cast %89 : vector<1x1x16x16xf32> to vector<16x16xf32>
    %cst_66 = arith.constant dense<0.000000e+00> : vector<16x16xf32>
    %91 = tpu.matmul %88, %90, %cst_66 {dimension_numbers = #tpu.dot_dimension_numbers<[1], [0], [0], [1], [0, 0, 1, 1], [], []>} : vector<16x16xf32>, vector<16x16xf32>, vector<16x16xf32> -> vector<16x16xf32>
    %c0_67 = arith.constant 0 : index
    %c3_68 = arith.constant 3 : index
    %c0_69 = arith.constant 0 : index
    %c0_70 = arith.constant 0 : index
    %92 = vector.load %arg5[%c0_67, %c3_68, %c0_69, %c0_70] : memref<1x16x16x16xf32, #tpu.memory_space<vmem>>, vector<1x1x16x16xf32>
    %93 = vector.shape_cast %92 : vector<1x1x16x16xf32> to vector<16x16xf32>
    %94 = vector.shape_cast %91 : vector<16x16xf32> to vector<1x1x16x16xf32>
    tpu.vector_store %arg5[%c0_67, %c3_68, %c0_69, %c0_70], %94 {strides = array<i32>} : memref<1x16x16x16xf32, #tpu.memory_space<vmem>>, vector<1x1x16x16xf32>,
    %c0_71 = arith.constant 0 : index
    %c4 = arith.constant 4 : index
    %c0_72 = arith.constant 0 : index
    %95 = vector.load %arg6[%c0_71, %c4, %c0_72] : memref<16x16x16xf32, #tpu.memory_space<vmem>>, vector<16x1x16xf32>
    %96 = vector.shape_cast %95 : vector<16x1x16xf32> to vector<16x16xf32>
    %cst_73 = arith.constant dense<0.000000e+00> : vector<16x16xf32>
    %97 = tpu.matmul %12, %96, %cst_73 {dimension_numbers = #tpu.dot_dimension_numbers<[1], [1], [0], [0], [0, 0, 1, 0], [], []>} : vector<16x16xf32>, vector<16x16xf32>, vector<16x16xf32> -> vector<16x16xf32>
    %98 = arith.addf %97, %14 : vector<16x16xf32>
    %cst_74 = arith.constant dense<0xFF800000> : vector<16xf32>
    %99 = vector.multi_reduction <maximumf>, %98, %cst_74 [1] : vector<16x16xf32> to vector<16xf32>
    %100 = vector.shape_cast %99 : vector<16xf32> to vector<16x1xf32>
    %101 = vector.broadcast %100 : vector<16x1xf32> to vector<16x16xf32>
    %102 = arith.subf %98, %101 : vector<16x16xf32>
    %103 = math.exp %102 : vector<16x16xf32>
    %cst_75 = arith.constant dense<0.000000e+00> : vector<16xf32>
    %104 = vector.multi_reduction <add>, %103, %cst_75 [1] : vector<16x16xf32> to vector<16xf32>
    %105 = vector.shape_cast %104 : vector<16xf32> to vector<16x1xf32>
    %106 = tpu.reciprocal %105 {approx = true} : vector<16x1xf32> -> vector<16x1xf32>
    %107 = vector.broadcast %106 : vector<16x1xf32> to vector<16x16xf32>
    %108 = arith.mulf %103, %107 : vector<16x16xf32>
    %c0_76 = arith.constant 0 : index
    %c4_77 = arith.constant 4 : index
    %c0_78 = arith.constant 0 : index
    %c0_79 = arith.constant 0 : index
    %109 = vector.load %arg3[%c0_76, %c4_77, %c0_78, %c0_79] : memref<1x16x16x16xf32, #tpu.memory_space<vmem>>, vector<1x1x16x16xf32>
    %110 = vector.shape_cast %109 : vector<1x1x16x16xf32> to vector<16x16xf32>
    %cst_80 = arith.constant dense<0.000000e+00> : vector<16x16xf32>
    %111 = tpu.matmul %108, %110, %cst_80 {dimension_numbers = #tpu.dot_dimension_numbers<[1], [0], [0], [1], [0, 0, 1, 1], [], []>} : vector<16x16xf32>, vector<16x16xf32>, vector<16x16xf32> -> vector<16x16xf32>
    %c0_81 = arith.constant 0 : index
    %c4_82 = arith.constant 4 : index
    %c0_83 = arith.constant 0 : index
    %c0_84 = arith.constant 0 : index
    %112 = vector.load %arg5[%c0_81, %c4_82, %c0_83, %c0_84] : memref<1x16x16x16xf32, #tpu.memory_space<vmem>>, vector<1x1x16x16xf32>
    %113 = vector.shape_cast %112 : vector<1x1x16x16xf32> to vector<16x16xf32>
    %114 = vector.shape_cast %111 : vector<16x16xf32> to vector<1x1x16x16xf32>
    tpu.vector_store %arg5[%c0_81, %c4_82, %c0_83, %c0_84], %114 {strides = array<i32>} : memref<1x16x16x16xf32, #tpu.memory_space<vmem>>, vector<1x1x16x16xf32>,
    %c0_85 = arith.constant 0 : index
    %c5 = arith.constant 5 : index
    %c0_86 = arith.constant 0 : index
    %115 = vector.load %arg6[%c0_85, %c5, %c0_86] : memref<16x16x16xf32, #tpu.memory_space<vmem>>, vector<16x1x16xf32>
    %116 = vector.shape_cast %115 : vector<16x1x16xf32> to vector<16x16xf32>
    %cst_87 = arith.constant dense<0.000000e+00> : vector<16x16xf32>
    %117 = tpu.matmul %12, %116, %cst_87 {dimension_numbers = #tpu.dot_dimension_numbers<[1], [1], [0], [0], [0, 0, 1, 0], [], []>} : vector<16x16xf32>, vector<16x16xf32>, vector<16x16xf32> -> vector<16x16xf32>
    %118 = arith.addf %117, %14 : vector<16x16xf32>
    %cst_88 = arith.constant dense<0xFF800000> : vector<16xf32>
    %119 = vector.multi_reduction <maximumf>, %118, %cst_88 [1] : vector<16x16xf32> to vector<16xf32>
    %120 = vector.shape_cast %119 : vector<16xf32> to vector<16x1xf32>
    %121 = vector.broadcast %120 : vector<16x1xf32> to vector<16x16xf32>
    %122 = arith.subf %118, %121 : vector<16x16xf32>
    %123 = math.exp %122 : vector<16x16xf32>
    %cst_89 = arith.constant dense<0.000000e+00> : vector<16xf32>
    %124 = vector.multi_reduction <add>, %123, %cst_89 [1] : vector<16x16xf32> to vector<16xf32>
    %125 = vector.shape_cast %124 : vector<16xf32> to vector<16x1xf32>
    %126 = tpu.reciprocal %125 {approx = true} : vector<16x1xf32> -> vector<16x1xf32>
    %127 = vector.broadcast %126 : vector<16x1xf32> to vector<16x16xf32>
    %128 = arith.mulf %123, %127 : vector<16x16xf32>
    %c0_90 = arith.constant 0 : index
    %c5_91 = arith.constant 5 : index
    %c0_92 = arith.constant 0 : index
    %c0_93 = arith.constant 0 : index
    %129 = vector.load %arg3[%c0_90, %c5_91, %c0_92, %c0_93] : memref<1x16x16x16xf32, #tpu.memory_space<vmem>>, vector<1x1x16x16xf32>
    %130 = vector.shape_cast %129 : vector<1x1x16x16xf32> to vector<16x16xf32>
    %cst_94 = arith.constant dense<0.000000e+00> : vector<16x16xf32>
    %131 = tpu.matmul %128, %130, %cst_94 {dimension_numbers = #tpu.dot_dimension_numbers<[1], [0], [0], [1], [0, 0, 1, 1], [], []>} : vector<16x16xf32>, vector<16x16xf32>, vector<16x16xf32> -> vector<16x16xf32>
    %c0_95 = arith.constant 0 : index
    %c5_96 = arith.constant 5 : index
    %c0_97 = arith.constant 0 : index
    %c0_98 = arith.constant 0 : index
    %132 = vector.load %arg5[%c0_95, %c5_96, %c0_97, %c0_98] : memref<1x16x16x16xf32, #tpu.memory_space<vmem>>, vector<1x1x16x16xf32>
    %133 = vector.shape_cast %132 : vector<1x1x16x16xf32> to vector<16x16xf32>
    %134 = vector.shape_cast %131 : vector<16x16xf32> to vector<1x1x16x16xf32>
    tpu.vector_store %arg5[%c0_95, %c5_96, %c0_97, %c0_98], %134 {strides = array<i32>} : memref<1x16x16x16xf32, #tpu.memory_space<vmem>>, vector<1x1x16x16xf32>,
    %c0_99 = arith.constant 0 : index
    %c6 = arith.constant 6 : index
    %c0_100 = arith.constant 0 : index
    %135 = vector.load %arg6[%c0_99, %c6, %c0_100] : memref<16x16x16xf32, #tpu.memory_space<vmem>>, vector<16x1x16xf32>
    %136 = vector.shape_cast %135 : vector<16x1x16xf32> to vector<16x16xf32>
    %cst_101 = arith.constant dense<0.000000e+00> : vector<16x16xf32>
    %137 = tpu.matmul %12, %136, %cst_101 {dimension_numbers = #tpu.dot_dimension_numbers<[1], [1], [0], [0], [0, 0, 1, 0], [], []>} : vector<16x16xf32>, vector<16x16xf32>, vector<16x16xf32> -> vector<16x16xf32>
    %138 = arith.addf %137, %14 : vector<16x16xf32>
    %cst_102 = arith.constant dense<0xFF800000> : vector<16xf32>
    %139 = vector.multi_reduction <maximumf>, %138, %cst_102 [1] : vector<16x16xf32> to vector<16xf32>
    %140 = vector.shape_cast %139 : vector<16xf32> to vector<16x1xf32>
    %141 = vector.broadcast %140 : vector<16x1xf32> to vector<16x16xf32>
    %142 = arith.subf %138, %141 : vector<16x16xf32>
    %143 = math.exp %142 : vector<16x16xf32>
    %cst_103 = arith.constant dense<0.000000e+00> : vector<16xf32>
    %144 = vector.multi_reduction <add>, %143, %cst_103 [1] : vector<16x16xf32> to vector<16xf32>
    %145 = vector.shape_cast %144 : vector<16xf32> to vector<16x1xf32>
    %146 = tpu.reciprocal %145 {approx = true} : vector<16x1xf32> -> vector<16x1xf32>
    %147 = vector.broadcast %146 : vector<16x1xf32> to vector<16x16xf32>
    %148 = arith.mulf %143, %147 : vector<16x16xf32>
    %c0_104 = arith.constant 0 : index
    %c6_105 = arith.constant 6 : index
    %c0_106 = arith.constant 0 : index
    %c0_107 = arith.constant 0 : index
    %149 = vector.load %arg3[%c0_104, %c6_105, %c0_106, %c0_107] : memref<1x16x16x16xf32, #tpu.memory_space<vmem>>, vector<1x1x16x16xf32>
    %150 = vector.shape_cast %149 : vector<1x1x16x16xf32> to vector<16x16xf32>
    %cst_108 = arith.constant dense<0.000000e+00> : vector<16x16xf32>
    %151 = tpu.matmul %148, %150, %cst_108 {dimension_numbers = #tpu.dot_dimension_numbers<[1], [0], [0], [1], [0, 0, 1, 1], [], []>} : vector<16x16xf32>, vector<16x16xf32>, vector<16x16xf32> -> vector<16x16xf32>
    %c0_109 = arith.constant 0 : index
    %c6_110 = arith.constant 6 : index
    %c0_111 = arith.constant 0 : index
    %c0_112 = arith.constant 0 : index
    %152 = vector.load %arg5[%c0_109, %c6_110, %c0_111, %c0_112] : memref<1x16x16x16xf32, #tpu.memory_space<vmem>>, vector<1x1x16x16xf32>
    %153 = vector.shape_cast %152 : vector<1x1x16x16xf32> to vector<16x16xf32>
    %154 = vector.shape_cast %151 : vector<16x16xf32> to vector<1x1x16x16xf32>
    tpu.vector_store %arg5[%c0_109, %c6_110, %c0_111, %c0_112], %154 {strides = array<i32>} : memref<1x16x16x16xf32, #tpu.memory_space<vmem>>, vector<1x1x16x16xf32>,
    %c0_113 = arith.constant 0 : index
    %c7 = arith.constant 7 : index
    %c0_114 = arith.constant 0 : index
    %155 = vector.load %arg6[%c0_113, %c7, %c0_114] : memref<16x16x16xf32, #tpu.memory_space<vmem>>, vector<16x1x16xf32>
    %156 = vector.shape_cast %155 : vector<16x1x16xf32> to vector<16x16xf32>
    %cst_115 = arith.constant dense<0.000000e+00> : vector<16x16xf32>
    %157 = tpu.matmul %12, %156, %cst_115 {dimension_numbers = #tpu.dot_dimension_numbers<[1], [1], [0], [0], [0, 0, 1, 0], [], []>} : vector<16x16xf32>, vector<16x16xf32>, vector<16x16xf32> -> vector<16x16xf32>
    %158 = arith.addf %157, %14 : vector<16x16xf32>
    %cst_116 = arith.constant dense<0xFF800000> : vector<16xf32>
    %159 = vector.multi_reduction <maximumf>, %158, %cst_116 [1] : vector<16x16xf32> to vector<16xf32>
    %160 = vector.shape_cast %159 : vector<16xf32> to vector<16x1xf32>
    %161 = vector.broadcast %160 : vector<16x1xf32> to vector<16x16xf32>
    %162 = arith.subf %158, %161 : vector<16x16xf32>
    %163 = math.exp %162 : vector<16x16xf32>
    %cst_117 = arith.constant dense<0.000000e+00> : vector<16xf32>
    %164 = vector.multi_reduction <add>, %163, %cst_117 [1] : vector<16x16xf32> to vector<16xf32>
    %165 = vector.shape_cast %164 : vector<16xf32> to vector<16x1xf32>
    %166 = tpu.reciprocal %165 {approx = true} : vector<16x1xf32> -> vector<16x1xf32>
    %167 = vector.broadcast %166 : vector<16x1xf32> to vector<16x16xf32>
    %168 = arith.mulf %163, %167 : vector<16x16xf32>
    %c0_118 = arith.constant 0 : index
    %c7_119 = arith.constant 7 : index
    %c0_120 = arith.constant 0 : index
    %c0_121 = arith.constant 0 : index
    %169 = vector.load %arg3[%c0_118, %c7_119, %c0_120, %c0_121] : memref<1x16x16x16xf32, #tpu.memory_space<vmem>>, vector<1x1x16x16xf32>
    %170 = vector.shape_cast %169 : vector<1x1x16x16xf32> to vector<16x16xf32>
    %cst_122 = arith.constant dense<0.000000e+00> : vector<16x16xf32>
    %171 = tpu.matmul %168, %170, %cst_122 {dimension_numbers = #tpu.dot_dimension_numbers<[1], [0], [0], [1], [0, 0, 1, 1], [], []>} : vector<16x16xf32>, vector<16x16xf32>, vector<16x16xf32> -> vector<16x16xf32>
    %c0_123 = arith.constant 0 : index
    %c7_124 = arith.constant 7 : index
    %c0_125 = arith.constant 0 : index
    %c0_126 = arith.constant 0 : index
    %172 = vector.load %arg5[%c0_123, %c7_124, %c0_125, %c0_126] : memref<1x16x16x16xf32, #tpu.memory_space<vmem>>, vector<1x1x16x16xf32>
    %173 = vector.shape_cast %172 : vector<1x1x16x16xf32> to vector<16x16xf32>
    %174 = vector.shape_cast %171 : vector<16x16xf32> to vector<1x1x16x16xf32>
    tpu.vector_store %arg5[%c0_123, %c7_124, %c0_125, %c0_126], %174 {strides = array<i32>} : memref<1x16x16x16xf32, #tpu.memory_space<vmem>>, vector<1x1x16x16xf32>,
    %c0_127 = arith.constant 0 : index
    %c8 = arith.constant 8 : index
    %c0_128 = arith.constant 0 : index
    %175 = vector.load %arg6[%c0_127, %c8, %c0_128] : memref<16x16x16xf32, #tpu.memory_space<vmem>>, vector<16x1x16xf32>
    %176 = vector.shape_cast %175 : vector<16x1x16xf32> to vector<16x16xf32>
    %cst_129 = arith.constant dense<0.000000e+00> : vector<16x16xf32>
    %177 = tpu.matmul %12, %176, %cst_129 {dimension_numbers = #tpu.dot_dimension_numbers<[1], [1], [0], [0], [0, 0, 1, 0], [], []>} : vector<16x16xf32>, vector<16x16xf32>, vector<16x16xf32> -> vector<16x16xf32>
    %178 = arith.addf %177, %14 : vector<16x16xf32>
    %cst_130 = arith.constant dense<0xFF800000> : vector<16xf32>
    %179 = vector.multi_reduction <maximumf>, %178, %cst_130 [1] : vector<16x16xf32> to vector<16xf32>
    %180 = vector.shape_cast %179 : vector<16xf32> to vector<16x1xf32>
    %181 = vector.broadcast %180 : vector<16x1xf32> to vector<16x16xf32>
    %182 = arith.subf %178, %181 : vector<16x16xf32>
    %183 = math.exp %182 : vector<16x16xf32>
    %cst_131 = arith.constant dense<0.000000e+00> : vector<16xf32>
    %184 = vector.multi_reduction <add>, %183, %cst_131 [1] : vector<16x16xf32> to vector<16xf32>
    %185 = vector.shape_cast %184 : vector<16xf32> to vector<16x1xf32>
    %186 = tpu.reciprocal %185 {approx = true} : vector<16x1xf32> -> vector<16x1xf32>
    %187 = vector.broadcast %186 : vector<16x1xf32> to vector<16x16xf32>
    %188 = arith.mulf %183, %187 : vector<16x16xf32>
    %c0_132 = arith.constant 0 : index
    %c8_133 = arith.constant 8 : index
    %c0_134 = arith.constant 0 : index
    %c0_135 = arith.constant 0 : index
    %189 = vector.load %arg3[%c0_132, %c8_133, %c0_134, %c0_135] : memref<1x16x16x16xf32, #tpu.memory_space<vmem>>, vector<1x1x16x16xf32>
    %190 = vector.shape_cast %189 : vector<1x1x16x16xf32> to vector<16x16xf32>
    %cst_136 = arith.constant dense<0.000000e+00> : vector<16x16xf32>
    %191 = tpu.matmul %188, %190, %cst_136 {dimension_numbers = #tpu.dot_dimension_numbers<[1], [0], [0], [1], [0, 0, 1, 1], [], []>} : vector<16x16xf32>, vector<16x16xf32>, vector<16x16xf32> -> vector<16x16xf32>
    %c0_137 = arith.constant 0 : index
    %c8_138 = arith.constant 8 : index
    %c0_139 = arith.constant 0 : index
    %c0_140 = arith.constant 0 : index
    %192 = vector.load %arg5[%c0_137, %c8_138, %c0_139, %c0_140] : memref<1x16x16x16xf32, #tpu.memory_space<vmem>>, vector<1x1x16x16xf32>
    %193 = vector.shape_cast %192 : vector<1x1x16x16xf32> to vector<16x16xf32>
    %194 = vector.shape_cast %191 : vector<16x16xf32> to vector<1x1x16x16xf32>
    tpu.vector_store %arg5[%c0_137, %c8_138, %c0_139, %c0_140], %194 {strides = array<i32>} : memref<1x16x16x16xf32, #tpu.memory_space<vmem>>, vector<1x1x16x16xf32>,
    %c0_141 = arith.constant 0 : index
    %c9 = arith.constant 9 : index
    %c0_142 = arith.constant 0 : index
    %195 = vector.load %arg6[%c0_141, %c9, %c0_142] : memref<16x16x16xf32, #tpu.memory_space<vmem>>, vector<16x1x16xf32>
    %196 = vector.shape_cast %195 : vector<16x1x16xf32> to vector<16x16xf32>
    %cst_143 = arith.constant dense<0.000000e+00> : vector<16x16xf32>
    %197 = tpu.matmul %12, %196, %cst_143 {dimension_numbers = #tpu.dot_dimension_numbers<[1], [1], [0], [0], [0, 0, 1, 0], [], []>} : vector<16x16xf32>, vector<16x16xf32>, vector<16x16xf32> -> vector<16x16xf32>
    %198 = arith.addf %197, %14 : vector<16x16xf32>
    %cst_144 = arith.constant dense<0xFF800000> : vector<16xf32>
    %199 = vector.multi_reduction <maximumf>, %198, %cst_144 [1] : vector<16x16xf32> to vector<16xf32>
    %200 = vector.shape_cast %199 : vector<16xf32> to vector<16x1xf32>
    %201 = vector.broadcast %200 : vector<16x1xf32> to vector<16x16xf32>
    %202 = arith.subf %198, %201 : vector<16x16xf32>
    %203 = math.exp %202 : vector<16x16xf32>
    %cst_145 = arith.constant dense<0.000000e+00> : vector<16xf32>
    %204 = vector.multi_reduction <add>, %203, %cst_145 [1] : vector<16x16xf32> to vector<16xf32>
    %205 = vector.shape_cast %204 : vector<16xf32> to vector<16x1xf32>
    %206 = tpu.reciprocal %205 {approx = true} : vector<16x1xf32> -> vector<16x1xf32>
    %207 = vector.broadcast %206 : vector<16x1xf32> to vector<16x16xf32>
    %208 = arith.mulf %203, %207 : vector<16x16xf32>
    %c0_146 = arith.constant 0 : index
    %c9_147 = arith.constant 9 : index
    %c0_148 = arith.constant 0 : index
    %c0_149 = arith.constant 0 : index
    %209 = vector.load %arg3[%c0_146, %c9_147, %c0_148, %c0_149] : memref<1x16x16x16xf32, #tpu.memory_space<vmem>>, vector<1x1x16x16xf32>
    %210 = vector.shape_cast %209 : vector<1x1x16x16xf32> to vector<16x16xf32>
    %cst_150 = arith.constant dense<0.000000e+00> : vector<16x16xf32>
    %211 = tpu.matmul %208, %210, %cst_150 {dimension_numbers = #tpu.dot_dimension_numbers<[1], [0], [0], [1], [0, 0, 1, 1], [], []>} : vector<16x16xf32>, vector<16x16xf32>, vector<16x16xf32> -> vector<16x16xf32>
    %c0_151 = arith.constant 0 : index
    %c9_152 = arith.constant 9 : index
    %c0_153 = arith.constant 0 : index
    %c0_154 = arith.constant 0 : index
    %212 = vector.load %arg5[%c0_151, %c9_152, %c0_153, %c0_154] : memref<1x16x16x16xf32, #tpu.memory_space<vmem>>, vector<1x1x16x16xf32>
    %213 = vector.shape_cast %212 : vector<1x1x16x16xf32> to vector<16x16xf32>
    %214 = vector.shape_cast %211 : vector<16x16xf32> to vector<1x1x16x16xf32>
    tpu.vector_store %arg5[%c0_151, %c9_152, %c0_153, %c0_154], %214 {strides = array<i32>} : memref<1x16x16x16xf32, #tpu.memory_space<vmem>>, vector<1x1x16x16xf32>,
    %c0_155 = arith.constant 0 : index
    %c10 = arith.constant 10 : index
    %c0_156 = arith.constant 0 : index
    %215 = vector.load %arg6[%c0_155, %c10, %c0_156] : memref<16x16x16xf32, #tpu.memory_space<vmem>>, vector<16x1x16xf32>
    %216 = vector.shape_cast %215 : vector<16x1x16xf32> to vector<16x16xf32>
    %cst_157 = arith.constant dense<0.000000e+00> : vector<16x16xf32>
    %217 = tpu.matmul %12, %216, %cst_157 {dimension_numbers = #tpu.dot_dimension_numbers<[1], [1], [0], [0], [0, 0, 1, 0], [], []>} : vector<16x16xf32>, vector<16x16xf32>, vector<16x16xf32> -> vector<16x16xf32>
    %218 = arith.addf %217, %14 : vector<16x16xf32>
    %cst_158 = arith.constant dense<0xFF800000> : vector<16xf32>
    %219 = vector.multi_reduction <maximumf>, %218, %cst_158 [1] : vector<16x16xf32> to vector<16xf32>
    %220 = vector.shape_cast %219 : vector<16xf32> to vector<16x1xf32>
    %221 = vector.broadcast %220 : vector<16x1xf32> to vector<16x16xf32>
    %222 = arith.subf %218, %221 : vector<16x16xf32>
    %223 = math.exp %222 : vector<16x16xf32>
    %cst_159 = arith.constant dense<0.000000e+00> : vector<16xf32>
    %224 = vector.multi_reduction <add>, %223, %cst_159 [1] : vector<16x16xf32> to vector<16xf32>
    %225 = vector.shape_cast %224 : vector<16xf32> to vector<16x1xf32>
    %226 = tpu.reciprocal %225 {approx = true} : vector<16x1xf32> -> vector<16x1xf32>
    %227 = vector.broadcast %226 : vector<16x1xf32> to vector<16x16xf32>
    %228 = arith.mulf %223, %227 : vector<16x16xf32>
    %c0_160 = arith.constant 0 : index
    %c10_161 = arith.constant 10 : index
    %c0_162 = arith.constant 0 : index
    %c0_163 = arith.constant 0 : index
    %229 = vector.load %arg3[%c0_160, %c10_161, %c0_162, %c0_163] : memref<1x16x16x16xf32, #tpu.memory_space<vmem>>, vector<1x1x16x16xf32>
    %230 = vector.shape_cast %229 : vector<1x1x16x16xf32> to vector<16x16xf32>
    %cst_164 = arith.constant dense<0.000000e+00> : vector<16x16xf32>
    %231 = tpu.matmul %228, %230, %cst_164 {dimension_numbers = #tpu.dot_dimension_numbers<[1], [0], [0], [1], [0, 0, 1, 1], [], []>} : vector<16x16xf32>, vector<16x16xf32>, vector<16x16xf32> -> vector<16x16xf32>
    %c0_165 = arith.constant 0 : index
    %c10_166 = arith.constant 10 : index
    %c0_167 = arith.constant 0 : index
    %c0_168 = arith.constant 0 : index
    %232 = vector.load %arg5[%c0_165, %c10_166, %c0_167, %c0_168] : memref<1x16x16x16xf32, #tpu.memory_space<vmem>>, vector<1x1x16x16xf32>
    %233 = vector.shape_cast %232 : vector<1x1x16x16xf32> to vector<16x16xf32>
    %234 = vector.shape_cast %231 : vector<16x16xf32> to vector<1x1x16x16xf32>
    tpu.vector_store %arg5[%c0_165, %c10_166, %c0_167, %c0_168], %234 {strides = array<i32>} : memref<1x16x16x16xf32, #tpu.memory_space<vmem>>, vector<1x1x16x16xf32>,
    %c0_169 = arith.constant 0 : index
    %c11 = arith.constant 11 : index
    %c0_170 = arith.constant 0 : index
    %235 = vector.load %arg6[%c0_169, %c11, %c0_170] : memref<16x16x16xf32, #tpu.memory_space<vmem>>, vector<16x1x16xf32>
    %236 = vector.shape_cast %235 : vector<16x1x16xf32> to vector<16x16xf32>
    %cst_171 = arith.constant dense<0.000000e+00> : vector<16x16xf32>
    %237 = tpu.matmul %12, %236, %cst_171 {dimension_numbers = #tpu.dot_dimension_numbers<[1], [1], [0], [0], [0, 0, 1, 0], [], []>} : vector<16x16xf32>, vector<16x16xf32>, vector<16x16xf32> -> vector<16x16xf32>
    %238 = arith.addf %237, %14 : vector<16x16xf32>
    %cst_172 = arith.constant dense<0xFF800000> : vector<16xf32>
    %239 = vector.multi_reduction <maximumf>, %238, %cst_172 [1] : vector<16x16xf32> to vector<16xf32>
    %240 = vector.shape_cast %239 : vector<16xf32> to vector<16x1xf32>
    %241 = vector.broadcast %240 : vector<16x1xf32> to vector<16x16xf32>
    %242 = arith.subf %238, %241 : vector<16x16xf32>
    %243 = math.exp %242 : vector<16x16xf32>
    %cst_173 = arith.constant dense<0.000000e+00> : vector<16xf32>
    %244 = vector.multi_reduction <add>, %243, %cst_173 [1] : vector<16x16xf32> to vector<16xf32>
    %245 = vector.shape_cast %244 : vector<16xf32> to vector<16x1xf32>
    %246 = tpu.reciprocal %245 {approx = true} : vector<16x1xf32> -> vector<16x1xf32>
    %247 = vector.broadcast %246 : vector<16x1xf32> to vector<16x16xf32>
    %248 = arith.mulf %243, %247 : vector<16x16xf32>
    %c0_174 = arith.constant 0 : index
    %c11_175 = arith.constant 11 : index
    %c0_176 = arith.constant 0 : index
    %c0_177 = arith.constant 0 : index
    %249 = vector.load %arg3[%c0_174, %c11_175, %c0_176, %c0_177] : memref<1x16x16x16xf32, #tpu.memory_space<vmem>>, vector<1x1x16x16xf32>
    %250 = vector.shape_cast %249 : vector<1x1x16x16xf32> to vector<16x16xf32>
    %cst_178 = arith.constant dense<0.000000e+00> : vector<16x16xf32>
    %251 = tpu.matmul %248, %250, %cst_178 {dimension_numbers = #tpu.dot_dimension_numbers<[1], [0], [0], [1], [0, 0, 1, 1], [], []>} : vector<16x16xf32>, vector<16x16xf32>, vector<16x16xf32> -> vector<16x16xf32>
    %c0_179 = arith.constant 0 : index
    %c11_180 = arith.constant 11 : index
    %c0_181 = arith.constant 0 : index
    %c0_182 = arith.constant 0 : index
    %252 = vector.load %arg5[%c0_179, %c11_180, %c0_181, %c0_182] : memref<1x16x16x16xf32, #tpu.memory_space<vmem>>, vector<1x1x16x16xf32>
    %253 = vector.shape_cast %252 : vector<1x1x16x16xf32> to vector<16x16xf32>
    %254 = vector.shape_cast %251 : vector<16x16xf32> to vector<1x1x16x16xf32>
    tpu.vector_store %arg5[%c0_179, %c11_180, %c0_181, %c0_182], %254 {strides = array<i32>} : memref<1x16x16x16xf32, #tpu.memory_space<vmem>>, vector<1x1x16x16xf32>,
    %c0_183 = arith.constant 0 : index
    %c12 = arith.constant 12 : index
    %c0_184 = arith.constant 0 : index
    %255 = vector.load %arg6[%c0_183, %c12, %c0_184] : memref<16x16x16xf32, #tpu.memory_space<vmem>>, vector<16x1x16xf32>
    %256 = vector.shape_cast %255 : vector<16x1x16xf32> to vector<16x16xf32>
    %cst_185 = arith.constant dense<0.000000e+00> : vector<16x16xf32>
    %257 = tpu.matmul %12, %256, %cst_185 {dimension_numbers = #tpu.dot_dimension_numbers<[1], [1], [0], [0], [0, 0, 1, 0], [], []>} : vector<16x16xf32>, vector<16x16xf32>, vector<16x16xf32> -> vector<16x16xf32>
    %258 = arith.addf %257, %14 : vector<16x16xf32>
    %cst_186 = arith.constant dense<0xFF800000> : vector<16xf32>
    %259 = vector.multi_reduction <maximumf>, %258, %cst_186 [1] : vector<16x16xf32> to vector<16xf32>
    %260 = vector.shape_cast %259 : vector<16xf32> to vector<16x1xf32>
    %261 = vector.broadcast %260 : vector<16x1xf32> to vector<16x16xf32>
    %262 = arith.subf %258, %261 : vector<16x16xf32>
    %263 = math.exp %262 : vector<16x16xf32>
    %cst_187 = arith.constant dense<0.000000e+00> : vector<16xf32>
    %264 = vector.multi_reduction <add>, %263, %cst_187 [1] : vector<16x16xf32> to vector<16xf32>
    %265 = vector.shape_cast %264 : vector<16xf32> to vector<16x1xf32>
    %266 = tpu.reciprocal %265 {approx = true} : vector<16x1xf32> -> vector<16x1xf32>
    %267 = vector.broadcast %266 : vector<16x1xf32> to vector<16x16xf32>
    %268 = arith.mulf %263, %267 : vector<16x16xf32>
    %c0_188 = arith.constant 0 : index
    %c12_189 = arith.constant 12 : index
    %c0_190 = arith.constant 0 : index
    %c0_191 = arith.constant 0 : index
    %269 = vector.load %arg3[%c0_188, %c12_189, %c0_190, %c0_191] : memref<1x16x16x16xf32, #tpu.memory_space<vmem>>, vector<1x1x16x16xf32>
    %270 = vector.shape_cast %269 : vector<1x1x16x16xf32> to vector<16x16xf32>
    %cst_192 = arith.constant dense<0.000000e+00> : vector<16x16xf32>
    %271 = tpu.matmul %268, %270, %cst_192 {dimension_numbers = #tpu.dot_dimension_numbers<[1], [0], [0], [1], [0, 0, 1, 1], [], []>} : vector<16x16xf32>, vector<16x16xf32>, vector<16x16xf32> -> vector<16x16xf32>
    %c0_193 = arith.constant 0 : index
    %c12_194 = arith.constant 12 : index
    %c0_195 = arith.constant 0 : index
    %c0_196 = arith.constant 0 : index
    %272 = vector.load %arg5[%c0_193, %c12_194, %c0_195, %c0_196] : memref<1x16x16x16xf32, #tpu.memory_space<vmem>>, vector<1x1x16x16xf32>
    %273 = vector.shape_cast %272 : vector<1x1x16x16xf32> to vector<16x16xf32>
    %274 = vector.shape_cast %271 : vector<16x16xf32> to vector<1x1x16x16xf32>
    tpu.vector_store %arg5[%c0_193, %c12_194, %c0_195, %c0_196], %274 {strides = array<i32>} : memref<1x16x16x16xf32, #tpu.memory_space<vmem>>, vector<1x1x16x16xf32>,
    %c0_197 = arith.constant 0 : index
    %c13 = arith.constant 13 : index
    %c0_198 = arith.constant 0 : index
    %275 = vector.load %arg6[%c0_197, %c13, %c0_198] : memref<16x16x16xf32, #tpu.memory_space<vmem>>, vector<16x1x16xf32>
    %276 = vector.shape_cast %275 : vector<16x1x16xf32> to vector<16x16xf32>
    %cst_199 = arith.constant dense<0.000000e+00> : vector<16x16xf32>
    %277 = tpu.matmul %12, %276, %cst_199 {dimension_numbers = #tpu.dot_dimension_numbers<[1], [1], [0], [0], [0, 0, 1, 0], [], []>} : vector<16x16xf32>, vector<16x16xf32>, vector<16x16xf32> -> vector<16x16xf32>
    %278 = arith.addf %277, %14 : vector<16x16xf32>
    %cst_200 = arith.constant dense<0xFF800000> : vector<16xf32>
    %279 = vector.multi_reduction <maximumf>, %278, %cst_200 [1] : vector<16x16xf32> to vector<16xf32>
    %280 = vector.shape_cast %279 : vector<16xf32> to vector<16x1xf32>
    %281 = vector.broadcast %280 : vector<16x1xf32> to vector<16x16xf32>
    %282 = arith.subf %278, %281 : vector<16x16xf32>
    %283 = math.exp %282 : vector<16x16xf32>
    %cst_201 = arith.constant dense<0.000000e+00> : vector<16xf32>
    %284 = vector.multi_reduction <add>, %283, %cst_201 [1] : vector<16x16xf32> to vector<16xf32>
    %285 = vector.shape_cast %284 : vector<16xf32> to vector<16x1xf32>
    %286 = tpu.reciprocal %285 {approx = true} : vector<16x1xf32> -> vector<16x1xf32>
    %287 = vector.broadcast %286 : vector<16x1xf32> to vector<16x16xf32>
    %288 = arith.mulf %283, %287 : vector<16x16xf32>
    %c0_202 = arith.constant 0 : index
    %c13_203 = arith.constant 13 : index
    %c0_204 = arith.constant 0 : index
    %c0_205 = arith.constant 0 : index
    %289 = vector.load %arg3[%c0_202, %c13_203, %c0_204, %c0_205] : memref<1x16x16x16xf32, #tpu.memory_space<vmem>>, vector<1x1x16x16xf32>
    %290 = vector.shape_cast %289 : vector<1x1x16x16xf32> to vector<16x16xf32>
    %cst_206 = arith.constant dense<0.000000e+00> : vector<16x16xf32>
    %291 = tpu.matmul %288, %290, %cst_206 {dimension_numbers = #tpu.dot_dimension_numbers<[1], [0], [0], [1], [0, 0, 1, 1], [], []>} : vector<16x16xf32>, vector<16x16xf32>, vector<16x16xf32> -> vector<16x16xf32>
    %c0_207 = arith.constant 0 : index
    %c13_208 = arith.constant 13 : index
    %c0_209 = arith.constant 0 : index
    %c0_210 = arith.constant 0 : index
    %292 = vector.load %arg5[%c0_207, %c13_208, %c0_209, %c0_210] : memref<1x16x16x16xf32, #tpu.memory_space<vmem>>, vector<1x1x16x16xf32>
    %293 = vector.shape_cast %292 : vector<1x1x16x16xf32> to vector<16x16xf32>
    %294 = vector.shape_cast %291 : vector<16x16xf32> to vector<1x1x16x16xf32>
    tpu.vector_store %arg5[%c0_207, %c13_208, %c0_209, %c0_210], %294 {strides = array<i32>} : memref<1x16x16x16xf32, #tpu.memory_space<vmem>>, vector<1x1x16x16xf32>,
    %c0_211 = arith.constant 0 : index
    %c14 = arith.constant 14 : index
    %c0_212 = arith.constant 0 : index
    %295 = vector.load %arg6[%c0_211, %c14, %c0_212] : memref<16x16x16xf32, #tpu.memory_space<vmem>>, vector<16x1x16xf32>
    %296 = vector.shape_cast %295 : vector<16x1x16xf32> to vector<16x16xf32>
    %cst_213 = arith.constant dense<0.000000e+00> : vector<16x16xf32>
    %297 = tpu.matmul %12, %296, %cst_213 {dimension_numbers = #tpu.dot_dimension_numbers<[1], [1], [0], [0], [0, 0, 1, 0], [], []>} : vector<16x16xf32>, vector<16x16xf32>, vector<16x16xf32> -> vector<16x16xf32>
    %298 = arith.addf %297, %14 : vector<16x16xf32>
    %cst_214 = arith.constant dense<0xFF800000> : vector<16xf32>
    %299 = vector.multi_reduction <maximumf>, %298, %cst_214 [1] : vector<16x16xf32> to vector<16xf32>
    %300 = vector.shape_cast %299 : vector<16xf32> to vector<16x1xf32>
    %301 = vector.broadcast %300 : vector<16x1xf32> to vector<16x16xf32>
    %302 = arith.subf %298, %301 : vector<16x16xf32>
    %303 = math.exp %302 : vector<16x16xf32>
    %cst_215 = arith.constant dense<0.000000e+00> : vector<16xf32>
    %304 = vector.multi_reduction <add>, %303, %cst_215 [1] : vector<16x16xf32> to vector<16xf32>
    %305 = vector.shape_cast %304 : vector<16xf32> to vector<16x1xf32>
    %306 = tpu.reciprocal %305 {approx = true} : vector<16x1xf32> -> vector<16x1xf32>
    %307 = vector.broadcast %306 : vector<16x1xf32> to vector<16x16xf32>
    %308 = arith.mulf %303, %307 : vector<16x16xf32>
    %c0_216 = arith.constant 0 : index
    %c14_217 = arith.constant 14 : index
    %c0_218 = arith.constant 0 : index
    %c0_219 = arith.constant 0 : index
    %309 = vector.load %arg3[%c0_216, %c14_217, %c0_218, %c0_219] : memref<1x16x16x16xf32, #tpu.memory_space<vmem>>, vector<1x1x16x16xf32>
    %310 = vector.shape_cast %309 : vector<1x1x16x16xf32> to vector<16x16xf32>
    %cst_220 = arith.constant dense<0.000000e+00> : vector<16x16xf32>
    %311 = tpu.matmul %308, %310, %cst_220 {dimension_numbers = #tpu.dot_dimension_numbers<[1], [0], [0], [1], [0, 0, 1, 1], [], []>} : vector<16x16xf32>, vector<16x16xf32>, vector<16x16xf32> -> vector<16x16xf32>
    %c0_221 = arith.constant 0 : index
    %c14_222 = arith.constant 14 : index
    %c0_223 = arith.constant 0 : index
    %c0_224 = arith.constant 0 : index
    %312 = vector.load %arg5[%c0_221, %c14_222, %c0_223, %c0_224] : memref<1x16x16x16xf32, #tpu.memory_space<vmem>>, vector<1x1x16x16xf32>
    %313 = vector.shape_cast %312 : vector<1x1x16x16xf32> to vector<16x16xf32>
    %314 = vector.shape_cast %311 : vector<16x16xf32> to vector<1x1x16x16xf32>
    tpu.vector_store %arg5[%c0_221, %c14_222, %c0_223, %c0_224], %314 {strides = array<i32>} : memref<1x16x16x16xf32, #tpu.memory_space<vmem>>, vector<1x1x16x16xf32>,
    %c0_225 = arith.constant 0 : index
    %c15 = arith.constant 15 : index
    %c0_226 = arith.constant 0 : index
    %315 = vector.load %arg6[%c0_225, %c15, %c0_226] : memref<16x16x16xf32, #tpu.memory_space<vmem>>, vector<16x1x16xf32>
    %316 = vector.shape_cast %315 : vector<16x1x16xf32> to vector<16x16xf32>
    %cst_227 = arith.constant dense<0.000000e+00> : vector<16x16xf32>
    %317 = tpu.matmul %12, %316, %cst_227 {dimension_numbers = #tpu.dot_dimension_numbers<[1], [1], [0], [0], [0, 0, 1, 0], [], []>} : vector<16x16xf32>, vector<16x16xf32>, vector<16x16xf32> -> vector<16x16xf32>
    %318 = arith.addf %317, %14 : vector<16x16xf32>
    %cst_228 = arith.constant dense<0xFF800000> : vector<16xf32>
    %319 = vector.multi_reduction <maximumf>, %318, %cst_228 [1] : vector<16x16xf32> to vector<16xf32>
    %320 = vector.shape_cast %319 : vector<16xf32> to vector<16x1xf32>
    %321 = vector.broadcast %320 : vector<16x1xf32> to vector<16x16xf32>
    %322 = arith.subf %318, %321 : vector<16x16xf32>
    %323 = math.exp %322 : vector<16x16xf32>
    %cst_229 = arith.constant dense<0.000000e+00> : vector<16xf32>
    %324 = vector.multi_reduction <add>, %323, %cst_229 [1] : vector<16x16xf32> to vector<16xf32>
    %325 = vector.shape_cast %324 : vector<16xf32> to vector<16x1xf32>
    %326 = tpu.reciprocal %325 {approx = true} : vector<16x1xf32> -> vector<16x1xf32>
    %327 = vector.broadcast %326 : vector<16x1xf32> to vector<16x16xf32>
    %328 = arith.mulf %323, %327 : vector<16x16xf32>
    %c0_230 = arith.constant 0 : index
    %c15_231 = arith.constant 15 : index
    %c0_232 = arith.constant 0 : index
    %c0_233 = arith.constant 0 : index
    %329 = vector.load %arg3[%c0_230, %c15_231, %c0_232, %c0_233] : memref<1x16x16x16xf32, #tpu.memory_space<vmem>>, vector<1x1x16x16xf32>
    %330 = vector.shape_cast %329 : vector<1x1x16x16xf32> to vector<16x16xf32>
    %cst_234 = arith.constant dense<0.000000e+00> : vector<16x16xf32>
    %331 = tpu.matmul %328, %330, %cst_234 {dimension_numbers = #tpu.dot_dimension_numbers<[1], [0], [0], [1], [0, 0, 1, 1], [], []>} : vector<16x16xf32>, vector<16x16xf32>, vector<16x16xf32> -> vector<16x16xf32>
    %c0_235 = arith.constant 0 : index
    %c15_236 = arith.constant 15 : index
    %c0_237 = arith.constant 0 : index
    %c0_238 = arith.constant 0 : index
    %332 = vector.load %arg5[%c0_235, %c15_236, %c0_237, %c0_238] : memref<1x16x16x16xf32, #tpu.memory_space<vmem>>, vector<1x1x16x16xf32>
    %333 = vector.shape_cast %332 : vector<1x1x16x16xf32> to vector<16x16xf32>
    %334 = vector.shape_cast %331 : vector<16x16xf32> to vector<1x1x16x16xf32>
    tpu.vector_store %arg5[%c0_235, %c15_236, %c0_237, %c0_238], %334 {strides = array<i32>} : memref<1x16x16x16xf32, #tpu.memory_space<vmem>>, vector<1x1x16x16xf32>,
    return
  }
  func.func @transform_0(%arg0: i32) -> (i32, i32, i32, i32) {
    %c0_i32 = arith.constant 0 : i32
    %c0_i32_0 = arith.constant 0 : i32
    %c0_i32_1 = arith.constant 0 : i32
    %c0_i32_2 = arith.constant 0 : i32
    return %arg0, %c0_i32, %c0_i32_0, %c0_i32_1 : i32, i32, i32, i32
  }
  func.func @transform_1(%arg0: i32) -> (i32, i32, i32, i32) {
    %c0_i32 = arith.constant 0 : i32
    %c0_i32_0 = arith.constant 0 : i32
    %c0_i32_1 = arith.constant 0 : i32
    %c0_i32_2 = arith.constant 0 : i32
    return %arg0, %c0_i32, %c0_i32_0, %c0_i32_1 : i32, i32, i32, i32
  }
  func.func @transform_2(%arg0: i32) -> (i32, i32, i32, i32) {
    %c0_i32 = arith.constant 0 : i32
    %c0_i32_0 = arith.constant 0 : i32
    %c0_i32_1 = arith.constant 0 : i32
    %c0_i32_2 = arith.constant 0 : i32
    return %arg0, %c0_i32, %c0_i32_0, %c0_i32_1 : i32, i32, i32, i32
  }
  func.func @transform_3(%arg0: i32) -> (i32, i32, i32) {
    %c0_i32 = arith.constant 0 : i32
    %c0_i32_0 = arith.constant 0 : i32
    %c0_i32_1 = arith.constant 0 : i32
    %c0_i32_2 = arith.constant 0 : i32
    return %c0_i32, %c0_i32_0, %c0_i32_1 : i32, i32, i32
  }
  func.func @transform_4(%arg0: i32) -> (i32, i32, i32, i32) {
    %c0_i32 = arith.constant 0 : i32
    %c0_i32_0 = arith.constant 0 : i32
    %c0_i32_1 = arith.constant 0 : i32
    %c0_i32_2 = arith.constant 0 : i32
    return %arg0, %c0_i32, %c0_i32_0, %c0_i32_1 : i32, i32, i32, i32
  }
}

</mosaic_0001>

<llo_original>
// kernel: model_forward.1
$region0: #{model_forward.1}
  #allocation0 [shape = 'u32[]', space=smem, size = 0x4, offset = 0x4, fixed_abs, tag = 'smem constant byte address 0x4 - core index']
  #allocation1 [shape = 'u32[144,128]{1,0:T(1,128)}', space=vmem, size = 0x12000, scoped, tag = 'internal scratch']
  #allocation2 [shape = 'f32[16,16,16]{2,1,0:T(8,128)}', space=vmem, size = 0x20000, scoped, tag = 'scratch operand']
  %s0 = inlined_call_operand.hbm [shape: f32[2,16,16,16], index: 0, kind: input, shape index: {}]
  %s1 = inlined_call_operand.hbm [shape: f32[2,16,16,16], index: 1, kind: input, shape index: {}]
  %s2 = inlined_call_operand.hbm [shape: f32[2,16,16,16], index: 2, kind: input, shape index: {}]
  %s3 = inlined_call_operand.hbm [shape: f32[1,16,16], index: 3, kind: input, shape index: {}]
  %s4 = inlined_call_operand.hbm [shape: f32[2,16,16,16], index: 4, kind: output, shape index: {}]
  %s5 = sld [smem:[#allocation0]]
  $region65: #{model_forward.1} parent=0
    _
  %s7 = ssub.s32 1, %s5
  %s8 = scalar_select 0, %s7, %s5
  $region1: #{model_forward.1} parent=0
    #allocation3 [shape = 'u8[262144]{0}', space=vmem, size = 0x40000, scoped, tag = 'input window, operand 0']
    #allocation4 [shape = 's32[2]{0}', space=sflag, size = 0x8, scoped, tag = 'scoped memory for model_forward.1']
    #allocation5 [shape = 's32[2]{0}', space=sflag, size = 0x8, scoped, tag = 'scoped memory for model_forward.1']
    #allocation6 [shape = 'u8[262144]{0}', space=vmem, size = 0x40000, scoped, tag = 'input window, operand 1']
    #allocation7 [shape = 's32[2]{0}', space=sflag, size = 0x8, scoped, tag = 'scoped memory for model_forward.1']
    #allocation8 [shape = 'u8[262144]{0}', space=vmem, size = 0x40000, scoped, tag = 'input window, operand 2']
    #allocation9 [shape = 'u8[8192]{0}', space=vmem, size = 0x2000, scoped, tag = 'input window, operand 3, single buffered']
    #allocation10 [shape = 's32[1]{0}', space=sflag, size = 0x4, scoped, tag = 'scoped memory for model_forward.1']
    #allocation11 [shape = 'u8[262144]{0}', space=vmem, size = 0x40000, scoped, tag = 'output window, operand 0']
    %9 = vsyncpa [#allocation4], 0
    %s10 = scalar_lea.sflag [#allocation4], 1
    %11 = vsyncpa %s10, 0
    %12 = vsyncpa [#allocation7], 0
    %s13 = scalar_lea.sflag [#allocation7], 1
    %14 = vsyncpa %s13, 0
    %15 = vsyncpa [#allocation10], 0
    %16 = vsyncpa [#allocation5], 0
    %s17 = scalar_lea.sflag [#allocation5], 1
    %18 = vsyncpa %s17, 0
    loop: start=0, step=1, limit=4
    $region2: #{model_forward.1} parent=1 // loop_pre_header
      _
    $region3: #{model_forward.1} parent=1 // loop_header
      %s20 = sphi 0, %s24
      %p21 = scmp.ge.s32.totalorder %s20, 4
      %s30 = sphi 0, %s32
      %s33 = sphi 0, %s30
      %s34 = sphi 0, %s33
      %s50 = sphi 0, %s34
      %s56 = sphi 0, %s58
      %s59 = sphi 0, %s56
      %s60 = sphi 0, %s59
      %s76 = sphi 0, %s60
      %s82 = sphi 0, %s84
      %s85 = sphi 0, %s82
      %s86 = sphi 0, %s85
      %s102 = sphi 0, %s86
      %s106 = sphi 0, %s106
      %s108 = sphi 0, %s106
      %s109 = sphi 0, %s108
      %s123 = sphi 0, %s109
      %s129 = sphi 0, %s131
      %s132 = sphi 0, %s129
      %s133 = sphi 0, %s132
      %s149 = sphi 0, %s133
    $region4: #{model_forward.1} parent=1 // loop_header_branch
      %23 = sbr.rel (%p21) target = $region8
    $region5: #{model_forward.1} parent=1 // loop_body
      %s25 = ssub.s32 %s20, 1
      %s26 = ssub.s32 %s20, 2
      %s27 = sadd.s32 %s20, 1
      %s28 = ssub.s32 %s20, %s27
      %p29 = scmp.eq.s32.totalorder %s28, 0
      %s31 = sadd.s32 %s30, 1
      %s32 = scalar_select %p29, %s30, %s31
      %p35 = pneg %p29
      %p36 = scmp.eq.s32.totalorder %s20, 1
      %p37 = por %p35, %p36
      %p38 = scmp.ne.s32.totalorder %s30, %s33
      %p39 = scmp.eq.s32.totalorder %s20, 0
      %p40 = por %p38, %p39
      %p41 = scmp.ne.s32.totalorder %s30, %s33
      %p42 = scmp.eq.s32.totalorder %s25, 1
      %p43 = por %p41, %p42
      %p44 = scmp.ne.s32.totalorder %s33, %s34
      %p45 = scmp.eq.s32.totalorder %s25, 0
      %p46 = por %p44, %p45
      %p47 = scmp.ne.s32.totalorder %s33, %s34
      %p48 = scmp.eq.s32.totalorder %s26, 1
      %p49 = por %p47, %p48
      %p51 = scmp.ne.s32.totalorder %s34, %s50
      %p52 = scmp.eq.s32.totalorder %s26, 0
      %p53 = por %p51, %p52
      %s54 = ssub.s32 %s20, %s27
      %p55 = scmp.eq.s32.totalorder %s54, 0
      %s57 = sadd.s32 %s56, 1
      %s58 = scalar_select %p55, %s56, %s57
      %p61 = pneg %p55
      %p62 = scmp.eq.s32.totalorder %s20, 1
      %p63 = por %p61, %p62
      %p64 = scmp.ne.s32.totalorder %s56, %s59
      %p65 = scmp.eq.s32.totalorder %s20, 0
      %p66 = por %p64, %p65
      %p67 = scmp.ne.s32.totalorder %s56, %s59
      %p68 = scmp.eq.s32.totalorder %s25, 1
      %p69 = por %p67, %p68
      %p70 = scmp.ne.s32.totalorder %s59, %s60
      %p71 = scmp.eq.s32.totalorder %s25, 0
      %p72 = por %p70, %p71
      %p73 = scmp.ne.s32.totalorder %s59, %s60
      %p74 = scmp.eq.s32.totalorder %s26, 1
      %p75 = por %p73, %p74
      %p77 = scmp.ne.s32.totalorder %s60, %s76
      %p78 = scmp.eq.s32.totalorder %s26, 0
      %p79 = por %p77, %p78
      %s80 = ssub.s32 %s20, %s27
      %p81 = scmp.eq.s32.totalorder %s80, 0
      %s83 = sadd.s32 %s82, 1
      %s84 = scalar_select %p81, %s82, %s83
      %p87 = pneg %p81
      %p88 = scmp.eq.s32.totalorder %s20, 1
      %p89 = por %p87, %p88
      %p90 = scmp.ne.s32.totalorder %s82, %s85
      %p91 = scmp.eq.s32.totalorder %s20, 0
      %p92 = por %p90, %p91
      %p93 = scmp.ne.s32.totalorder %s82, %s85
      %p94 = scmp.eq.s32.totalorder %s25, 1
      %p95 = por %p93, %p94
      %p96 = scmp.ne.s32.totalorder %s85, %s86
      %p97 = scmp.eq.s32.totalorder %s25, 0
      %p98 = por %p96, %p97
      %p99 = scmp.ne.s32.totalorder %s85, %s86
      %p100 = scmp.eq.s32.totalorder %s26, 1
      %p101 = por %p99, %p100
      %p103 = scmp.ne.s32.totalorder %s86, %s102
      %p104 = scmp.eq.s32.totalorder %s26, 0
      %p105 = por %p103, %p104
      %s107 = sadd.s32 %s106, 1
      %p110 = scmp.eq.s32.totalorder %s20, 1
      %p111 = scmp.ne.s32.totalorder %s106, %s108
      %p112 = scmp.eq.s32.totalorder %s20, 0
      %p113 = por %p111, %p112
      %p114 = scmp.ne.s32.totalorder %s106, %s108
      %p115 = scmp.eq.s32.totalorder %s25, 1
      %p116 = por %p114, %p115
      %p117 = scmp.ne.s32.totalorder %s108, %s109
      %p118 = scmp.eq.s32.totalorder %s25, 0
      %p119 = por %p117, %p118
      %p120 = scmp.ne.s32.totalorder %s108, %s109
      %p121 = scmp.eq.s32.totalorder %s26, 1
      %p122 = por %p120, %p121
      %p124 = scmp.ne.s32.totalorder %s109, %s123
      %p125 = scmp.eq.s32.totalorder %s26, 0
      %p126 = por %p124, %p125
      %s127 = ssub.s32 %s20, %s27
      %p128 = scmp.eq.s32.totalorder %s127, 0
      %s130 = sadd.s32 %s129, 1
      %s131 = scalar_select %p128, %s129, %s130
      %p134 = pneg %p128
      %p135 = scmp.eq.s32.totalorder %s20, 1
      %p136 = por %p134, %p135
      %p137 = scmp.ne.s32.totalorder %s129, %s132
      %p138 = scmp.eq.s32.totalorder %s20, 0
      %p139 = por %p137, %p138
      %p140 = scmp.ne.s32.totalorder %s129, %s132
      %p141 = scmp.eq.s32.totalorder %s25, 1
      %p142 = por %p140, %p141
      %p143 = scmp.ne.s32.totalorder %s132, %s133
      %p144 = scmp.eq.s32.totalorder %s25, 0
      %p145 = por %p143, %p144
      %p146 = scmp.ne.s32.totalorder %s132, %s133
      %p147 = scmp.eq.s32.totalorder %s26, 1
      %p148 = por %p146, %p147
      %p150 = scmp.ne.s32.totalorder %s133, %s149
      %p151 = scmp.eq.s32.totalorder %s26, 0
      %p152 = por %p150, %p151
      %p153 = scmp.le.s32.totalorder 1, %s20
      %p154 = scmp.lt.s32.totalorder %s20, 3
      %p155 = pnand %p153, %p154
      %p156 = pneg %p155
      // Predicated region
      $region9: #{model_forward.1} parent=5 // pred_check
        _
      $region10: #{model_forward.1} parent=5 // pred_check_branch
        %158 = sbr.rel (%p155) target = $region12
      $region11: #{model_forward.1} parent=5 // pred_region
        %s159 = ssub.s32 %s20, 1
        // Predicated region
        $region13: #{model_forward.1} parent=11 // pred_check
          %p160 = pneg %p119
        $region14: #{model_forward.1} parent=11 // pred_check_branch
          %162 = sbr.rel (%p160) target = $region16
        $region15: #{model_forward.1} parent=11 // pred_region
          %s164 = ssub.s32 256, 256
          %165 = vsyncadd [#allocation10], %s164
          %s166 = sshll.u32 [#allocation9], 4
          %s167 = int_to_ptr.vmem [resolvable:$true] %s166
          %172 = dma.hbm_to_vmem [thread:$0]  %s3, 256, %s167, [#allocation10], 128, 128, 8
        $region16: #{model_forward.1} parent=11 // pred_fallthru
          _
      $region12: #{model_forward.1} parent=5 // pred_fallthru
        _
      %p173 = scmp.lt.s32.totalorder %s20, 2
      // Predicated region
      $region17: #{model_forward.1} parent=5 // pred_check
        %p174 = pneg %p173
      $region18: #{model_forward.1} parent=5 // pred_check_branch
        %176 = sbr.rel (%p174) target = $region20
      $region19: #{model_forward.1} parent=5 // pred_region
        // Predicated region
        $region21: #{model_forward.1} parent=19 // pred_check
          %p177 = pneg %p40
        $region22: #{model_forward.1} parent=19 // pred_check_branch
          %179 = sbr.rel (%p177) target = $region24
        $region23: #{model_forward.1} parent=19 // pred_region
          %s180 = sand.u32 %s30, 1
          %s181 = scalar_lea.sflag [#allocation4], %s180
          %s182 = sand.u32 %s30, 1
          %s183 = smul.addr %s182, 256
          %s184 = scalar_lea.vmem [#allocation3], %s183
          %s186 = ssub.s32 4096, 4096
          %187 = vsyncadd %s181, %s186
          %s188 = smul.addr %s20, 32
          %s189 = smul.addr %s188, 128
          %s190 = scalar_lea.hbm %s0, %s189
          %s191 = sshll.u32 %s184, 4
          %s192 = int_to_ptr.vmem [resolvable:$true] %s191
          %197 = dma.hbm_to_vmem [thread:$0]  %s190, 4096, %s192, %s181, 128, 128, 8
        $region24: #{model_forward.1} parent=19 // pred_fallthru
          _
        // Predicated region
        $region25: #{model_forward.1} parent=19 // pred_check
          %p198 = pneg %p66
        $region26: #{model_forward.1} parent=19 // pred_check_branch
          %200 = sbr.rel (%p198) target = $region28
        $region27: #{model_forward.1} parent=19 // pred_region
          %s201 = sand.u32 %s20, 1
          %s202 = scalar_lea.sflag [#allocation7], %s201
          %s203 = sand.u32 %s56, 1
          %s204 = smul.addr %s203, 256
          %s205 = scalar_lea.vmem [#allocation6], %s204
          %s207 = ssub.s32 4096, 4096
          %208 = vsyncadd %s202, %s207
          %s209 = smul.addr %s20, 32
          %s210 = smul.addr %s209, 128
          %s211 = scalar_lea.hbm %s1, %s210
          %s212 = sshll.u32 %s205, 4
          %s213 = int_to_ptr.vmem [resolvable:$true] %s212
          %218 = dma.hbm_to_vmem [thread:$0]  %s211, 4096, %s213, %s202, 128, 128, 8
        $region28: #{model_forward.1} parent=19 // pred_fallthru
          _
        // Predicated region
        $region29: #{model_forward.1} parent=19 // pred_check
          %p219 = pneg %p92
        $region30: #{model_forward.1} parent=19 // pred_check_branch
          %221 = sbr.rel (%p219) target = $region32
        $region31: #{model_forward.1} parent=19 // pred_region
          %s222 = sand.u32 %s20, 1
          %s223 = scalar_lea.sflag [#allocation7], %s222
          %s224 = sand.u32 %s82, 1
          %s225 = smul.addr %s224, 256
          %s226 = scalar_lea.vmem [#allocation8], %s225
          %s228 = ssub.s32 4096, 4096
          %229 = vsyncadd %s223, %s228
          %s230 = smul.addr %s20, 32
          %s231 = smul.addr %s230, 128
          %s232 = scalar_lea.hbm %s2, %s231
          %s233 = sshll.u32 %s226, 4
          %s234 = int_to_ptr.vmem [resolvable:$true] %s233
          %239 = dma.hbm_to_vmem [thread:$0]  %s232, 4096, %s234, %s223, 128, 128, 8
        $region32: #{model_forward.1} parent=19 // pred_fallthru
          _
      $region20: #{model_forward.1} parent=5 // pred_fallthru
        _
      %p240 = scmp.le.s32.totalorder 1, %s20
      %p241 = scmp.lt.s32.totalorder %s20, 3
      %p242 = pnand %p240, %p241
      %p243 = pneg %p242
      // Predicated region
      $region33: #{model_forward.1} parent=5 // pred_check
        _
      $region34: #{model_forward.1} parent=5 // pred_check_branch
        %245 = sbr.rel (%p242) target = $region36
      $region35: #{model_forward.1} parent=5 // pred_region
        %s246 = ssub.s32 %s20, 1
        %s247 = sand.u32 %s33, 1
        %s248 = scalar_lea.sflag [#allocation4], %s247
        %s249 = sand.u32 %s33, 1
        %s250 = smul.addr %s249, 256
        %s251 = scalar_lea.vmem [#allocation3], %s250
        // Predicated region
        $region37: #{model_forward.1} parent=35 // pred_check
          %p252 = pneg %p46
        $region38: #{model_forward.1} parent=35 // pred_check_branch
          %254 = sbr.rel (%p252) target = $region40
        $region39: #{model_forward.1} parent=35 // pred_region
          %255 = dma.done %s248, 4096
        $region40: #{model_forward.1} parent=35 // pred_fallthru
          _
        %s256 = sand.u32 %s25, 1
        %s257 = scalar_lea.sflag [#allocation7], %s256
        %s258 = sand.u32 %s59, 1
        %s259 = smul.addr %s258, 256
        %s260 = scalar_lea.vmem [#allocation6], %s259
        // Predicated region
        $region41: #{model_forward.1} parent=35 // pred_check
          %p261 = pneg %p72
        $region42: #{model_forward.1} parent=35 // pred_check_branch
          %263 = sbr.rel (%p261) target = $region44
        $region43: #{model_forward.1} parent=35 // pred_region
          %264 = dma.done %s257, 4096
        $region44: #{model_forward.1} parent=35 // pred_fallthru
          _
        %s265 = sand.u32 %s25, 1
        %s266 = scalar_lea.sflag [#allocation7], %s265
        %s267 = sand.u32 %s85, 1
        %s268 = smul.addr %s267, 256
        %s269 = scalar_lea.vmem [#allocation8], %s268
        // Predicated region
        $region45: #{model_forward.1} parent=35 // pred_check
          %p270 = pneg %p98
        $region46: #{model_forward.1} parent=35 // pred_check_branch
          %272 = sbr.rel (%p270) target = $region48
        $region47: #{model_forward.1} parent=35 // pred_region
          %273 = dma.done %s266, 4096
        $region48: #{model_forward.1} parent=35 // pred_fallthru
          _
        // Predicated region
        $region49: #{model_forward.1} parent=35 // pred_check
          %p274 = pneg %p119
        $region50: #{model_forward.1} parent=35 // pred_check_branch
          %276 = sbr.rel (%p274) target = $region52
        $region51: #{model_forward.1} parent=35 // pred_region
          %277 = dma.done [#allocation10], 256
        $region52: #{model_forward.1} parent=35 // pred_fallthru
          _
        %s278 = sand.u32 %s33, 1
        %s279 = scalar_lea.sflag [#allocation4], %s278
        %s280 = sand.u32 %s33, 1
        %s281 = smul.addr %s280, 256
        %s282 = scalar_lea.vmem [#allocation3], %s281
        %p283 = pneg %p46
        %p284 = pneg %p43
        %s285 = sand.u32 %s25, 1
        %s286 = scalar_lea.sflag [#allocation7], %s285
        %s287 = sand.u32 %s59, 1
        %s288 = smul.addr %s287, 256
        %s289 = scalar_lea.vmem [#allocation6], %s288
        %p290 = pneg %p72
        %p291 = pneg %p69
        %s292 = sand.u32 %s25, 1
        %s293 = scalar_lea.sflag [#allocation7], %s292
        %s294 = sand.u32 %s85, 1
        %s295 = smul.addr %s294, 256
        %s296 = scalar_lea.vmem [#allocation8], %s295
        %p297 = pneg %p98
        %p298 = pneg %p95
        %p299 = pneg %p119
        %p300 = pneg %p116
        %p301 = pneg %p145
        %p302 = pneg %p142
        %s303 = sand.u32 %s132, 1
        %s304 = scalar_lea.sflag [#allocation5], %s303
        %s305 = sand.u32 %s132, 1
        %s306 = smul.addr %s305, 256
        %s307 = scalar_lea.vmem [#allocation11], %s306
        %v308 = vld [vmem:[%s251] sm:$0xff]
        %v309 = vld [vmem:[%s251 + $0x8] sm:$0xff]
        %v310 = vld [vmem:[%s251 + $0x10] sm:$0xff]
        %v311 = vld [vmem:[%s251 + $0x18] sm:$0xff]
        %v312 = vld [vmem:[%s251 + $0x20] sm:$0xff]
        %v313 = vld [vmem:[%s251 + $0x28] sm:$0xff]
        %v314 = vld [vmem:[%s251 + $0x30] sm:$0xff]
        %v315 = vld [vmem:[%s251 + $0x38] sm:$0xff]
        %v316 = vld [vmem:[%s251 + $0x40] sm:$0xff]
        %v317 = vld [vmem:[%s251 + $0x48] sm:$0xff]
        %v318 = vld [vmem:[%s251 + $0x50] sm:$0xff]
        %v319 = vld [vmem:[%s251 + $0x58] sm:$0xff]
        %v320 = vld [vmem:[%s251 + $0x60] sm:$0xff]
        %v321 = vld [vmem:[%s251 + $0x68] sm:$0xff]
        %v322 = vld [vmem:[%s251 + $0x70] sm:$0xff]
        %v323 = vld [vmem:[%s251 + $0x78] sm:$0xff]
        %v324 = vld [vmem:[%s251 + $0x80] sm:$0xff]
        %v325 = vld [vmem:[%s251 + $0x88] sm:$0xff]
        %v326 = vld [vmem:[%s251 + $0x90] sm:$0xff]
        %v327 = vld [vmem:[%s251 + $0x98] sm:$0xff]
        %v328 = vld [vmem:[%s251 + $0xa0] sm:$0xff]
        %v329 = vld [vmem:[%s251 + $0xa8] sm:$0xff]
        %v330 = vld [vmem:[%s251 + $0xb0] sm:$0xff]
        %v331 = vld [vmem:[%s251 + $0xb8] sm:$0xff]
        %v332 = vld [vmem:[%s251 + $0xc0] sm:$0xff]
        %v333 = vld [vmem:[%s251 + $0xc8] sm:$0xff]
        %v334 = vld [vmem:[%s251 + $0xd0] sm:$0xff]
        %v335 = vld [vmem:[%s251 + $0xd8] sm:$0xff]
        %v336 = vld [vmem:[%s251 + $0xe0] sm:$0xff]
        %v337 = vld [vmem:[%s251 + $0xe8] sm:$0xff]
        %v338 = vld [vmem:[%s251 + $0xf0] sm:$0xff]
        %v339 = vld [vmem:[%s251 + $0xf8] sm:$0xff]
        %v340 = vld [vmem:[%s260] sm:$0xff]
        %v341 = vld [vmem:[%s260 + $0x8] sm:$0xff]
        %v342 = vld [vmem:[%s260 + $0x10] sm:$0xff]
        %v343 = vld [vmem:[%s260 + $0x18] sm:$0xff]
        %v344 = vld [vmem:[%s260 + $0x20] sm:$0xff]
        %v345 = vld [vmem:[%s260 + $0x28] sm:$0xff]
        %v346 = vld [vmem:[%s260 + $0x30] sm:$0xff]
        %v347 = vld [vmem:[%s260 + $0x38] sm:$0xff]
        %v348 = vld [vmem:[%s260 + $0x40] sm:$0xff]
        %v349 = vld [vmem:[%s260 + $0x48] sm:$0xff]
        %v350 = vld [vmem:[%s260 + $0x50] sm:$0xff]
        %v351 = vld [vmem:[%s260 + $0x58] sm:$0xff]
        %v352 = vld [vmem:[%s260 + $0x60] sm:$0xff]
        %v353 = vld [vmem:[%s260 + $0x68] sm:$0xff]
        %v354 = vld [vmem:[%s260 + $0x70] sm:$0xff]
        %v355 = vld [vmem:[%s260 + $0x78] sm:$0xff]
        %v356 = vld [vmem:[%s260 + $0x80] sm:$0xff]
        %v357 = vld [vmem:[%s260 + $0x88] sm:$0xff]
        %v358 = vld [vmem:[%s260 + $0x90] sm:$0xff]
        %v359 = vld [vmem:[%s260 + $0x98] sm:$0xff]
        %v360 = vld [vmem:[%s260 + $0xa0] sm:$0xff]
        %v361 = vld [vmem:[%s260 + $0xa8] sm:$0xff]
        %v362 = vld [vmem:[%s260 + $0xb0] sm:$0xff]
        %v363 = vld [vmem:[%s260 + $0xb8] sm:$0xff]
        %v364 = vld [vmem:[%s260 + $0xc0] sm:$0xff]
        %v365 = vld [vmem:[%s260 + $0xc8] sm:$0xff]
        %v366 = vld [vmem:[%s260 + $0xd0] sm:$0xff]
        %v367 = vld [vmem:[%s260 + $0xd8] sm:$0xff]
        %v368 = vld [vmem:[%s260 + $0xe0] sm:$0xff]
        %v369 = vld [vmem:[%s260 + $0xe8] sm:$0xff]
        %v370 = vld [vmem:[%s260 + $0xf0] sm:$0xff]
        %v371 = vld [vmem:[%s260 + $0xf8] sm:$0xff]
        %vm372 = vcmask 130048
        %v374 = vsel %vm372, %v308, 0
        %v377 = vsel %vm372, %v309, 0
        %v380 = vsel %vm372, %v340, 0
        %v383 = vsel %vm372, %v341, 0
        %385 = vmatprep.subr.mxu0 0.0
        %386 = vmatpush1.xpose.msra.mxu0 0.0
        %387 = vmatprep.subr.mxu0 0.0
        %388 = vmatpush1.xpose.msra.mxu0 0.0
        %389 = vmatprep.subr.mxu0 0.0
        %390 = vmatpush1.xpose.msra.mxu0 0.0
        %391 = vmatprep.subr.mxu0 0.0
        %392 = vmatpush1.xpose.msra.mxu0 0.0
        %393 = vmatprep.subr.mxu0 0.0
        %394 = vmatpush1.xpose.msra.mxu0 0.0
        %395 = vmatprep.subr.mxu0 0.0
        %396 = vmatpush1.xpose.msra.mxu0 0.0
        %397 = vmatprep.subr.mxu0 0.0
        %398 = vmatpush1.xpose.msra.mxu0 0.0
        %399 = vmatprep.subr.mxu0 0.0
        %400 = vmatpush1.xpose.msra.mxu0 0.0
        %401 = vmatprep.subr.mxu0 0.0
        %402 = vmatpush1.xpose.msra.mxu0 0.0
        %403 = vmatprep.subr.mxu0 0.0
        %404 = vmatpush1.xpose.msra.mxu0 0.0
        %405 = vmatprep.subr.mxu0 0.0
        %406 = vmatpush1.xpose.msra.mxu0 0.0
        %407 = vmatprep.subr.mxu0 0.0
        %408 = vmatpush1.xpose.msra.mxu0 0.0
        %409 = vmatprep.subr.mxu0 0.0
        %410 = vmatpush1.xpose.msra.mxu0 0.0
        %411 = vmatprep.subr.mxu0 0.0
        %412 = vmatpush1.xpose.msra.mxu0 0.0
        %413 = vmatprep.subr.mxu0 0.0
        %414 = vmatpush1.xpose.msra.mxu0 %v383
        %415 = vmatprep.subr.mxu0 0.0
        %416 = vmatpush1.xpose.msra.mxu0 %v380
        %417 = vmatprep.subr.mxu0 0.0
        %418 = vmatpush2.xpose.msra.mxu0 0.0
        %419 = vmatprep.subr.mxu0 0.0
        %420 = vmatpush2.xpose.msra.mxu0 0.0
        %421 = vmatprep.subr.mxu0 0.0
        %422 = vmatpush2.xpose.msra.mxu0 0.0
        %423 = vmatprep.subr.mxu0 0.0
        %424 = vmatpush2.xpose.msra.mxu0 0.0
        %425 = vmatprep.subr.mxu0 0.0
        %426 = vmatpush2.xpose.msra.mxu0 0.0
        %427 = vmatprep.subr.mxu0 0.0
        %428 = vmatpush2.xpose.msra.mxu0 0.0
        %429 = vmatprep.subr.mxu0 0.0
        %430 = vmatpush2.xpose.msra.mxu0 0.0
        %431 = vmatprep.subr.mxu0 0.0
        %432 = vmatpush2.xpose.msra.mxu0 0.0
        %433 = vmatprep.subr.mxu0 0.0
        %434 = vmatpush2.xpose.msra.mxu0 0.0
        %435 = vmatprep.subr.mxu0 0.0
        %436 = vmatpush2.xpose.msra.mxu0 0.0
        %437 = vmatprep.subr.mxu0 0.0
        %438 = vmatpush2.xpose.msra.mxu0 0.0
        %439 = vmatprep.subr.mxu0 0.0
        %440 = vmatpush2.xpose.msra.mxu0 0.0
        %441 = vmatprep.subr.mxu0 0.0
        %442 = vmatpush2.xpose.msra.mxu0 0.0
        %443 = vmatprep.subr.mxu0 0.0
        %444 = vmatpush2.xpose.msra.mxu0 0.0
        %445 = vmatprep.subr.mxu0 0.0
        %446 = vmatpush2.xpose.msra.mxu0 0.0
        %447 = vmatprep.subr.mxu0 0.0
        %448 = vmatpush2.xpose.msra.mxu0 0.0
        %449 = vmatprep.mubr.f32.mxu0 0.0
        %450 = vmatmul.mubr.f32.gmra.mxu0 %v374
        %v451 = vpop.f32.mrf.mxu0
        %v452 = vadd.f32 0.0, %v451
        %v453 = vpop.f32.mrf.mxu0
        %454 = vmatprep.mubr.f32.mxu0 0.0
        %455 = vmatmul.mubr.f32.gmra.mxu0 %v377
        %v456 = vpop.f32.mrf.mxu0
        %v457 = vadd.f32 0.0, %v456
        %v458 = vpop.f32.mrf.mxu0
        %459 = vdwg.mxu0
        %v461 = vsel %vm372, %v310, 0
        %v464 = vsel %vm372, %v311, 0
        %v467 = vsel %vm372, %v342, 0
        %v470 = vsel %vm372, %v343, 0
        %472 = vmatprep.subr.mxu0 0.0
        %473 = vmatpush1.xpose.msra.mxu0 0.0
        %474 = vmatprep.subr.mxu0 0.0
        %475 = vmatpush1.xpose.msra.mxu0 0.0
        %476 = vmatprep.subr.mxu0 0.0
        %477 = vmatpush1.xpose.msra.mxu0 0.0
        %478 = vmatprep.subr.mxu0 0.0
        %479 = vmatpush1.xpose.msra.mxu0 0.0
        %480 = vmatprep.subr.mxu0 0.0
        %481 = vmatpush1.xpose.msra.mxu0 0.0
        %482 = vmatprep.subr.mxu0 0.0
        %483 = vmatpush1.xpose.msra.mxu0 0.0
        %484 = vmatprep.subr.mxu0 0.0
        %485 = vmatpush1.xpose.msra.mxu0 0.0
        %486 = vmatprep.subr.mxu0 0.0
        %487 = vmatpush1.xpose.msra.mxu0 0.0
        %488 = vmatprep.subr.mxu0 0.0
        %489 = vmatpush1.xpose.msra.mxu0 0.0
        %490 = vmatprep.subr.mxu0 0.0
        %491 = vmatpush1.xpose.msra.mxu0 0.0
        %492 = vmatprep.subr.mxu0 0.0
        %493 = vmatpush1.xpose.msra.mxu0 0.0
        %494 = vmatprep.subr.mxu0 0.0
        %495 = vmatpush1.xpose.msra.mxu0 0.0
        %496 = vmatprep.subr.mxu0 0.0
        %497 = vmatpush1.xpose.msra.mxu0 0.0
        %498 = vmatprep.subr.mxu0 0.0
        %499 = vmatpush1.xpose.msra.mxu0 0.0
        %500 = vmatprep.subr.mxu0 0.0
        %501 = vmatpush1.xpose.msra.mxu0 %v470
        %502 = vmatprep.subr.mxu0 0.0
        %503 = vmatpush1.xpose.msra.mxu0 %v467
        %504 = vmatprep.subr.mxu0 0.0
        %505 = vmatpush2.xpose.msra.mxu0 0.0
        %506 = vmatprep.subr.mxu0 0.0
        %507 = vmatpush2.xpose.msra.mxu0 0.0
        %508 = vmatprep.subr.mxu0 0.0
        %509 = vmatpush2.xpose.msra.mxu0 0.0
        %510 = vmatprep.subr.mxu0 0.0
        %511 = vmatpush2.xpose.msra.mxu0 0.0
        %512 = vmatprep.subr.mxu0 0.0
        %513 = vmatpush2.xpose.msra.mxu0 0.0
        %514 = vmatprep.subr.mxu0 0.0
        %515 = vmatpush2.xpose.msra.mxu0 0.0
        %516 = vmatprep.subr.mxu0 0.0
        %517 = vmatpush2.xpose.msra.mxu0 0.0
        %518 = vmatprep.subr.mxu0 0.0
        %519 = vmatpush2.xpose.msra.mxu0 0.0
        %520 = vmatprep.subr.mxu0 0.0
        %521 = vmatpush2.xpose.msra.mxu0 0.0
        %522 = vmatprep.subr.mxu0 0.0
        %523 = vmatpush2.xpose.msra.mxu0 0.0
        %524 = vmatprep.subr.mxu0 0.0
        %525 = vmatpush2.xpose.msra.mxu0 0.0
        %526 = vmatprep.subr.mxu0 0.0
        %527 = vmatpush2.xpose.msra.mxu0 0.0
        %528 = vmatprep.subr.mxu0 0.0
        %529 = vmatpush2.xpose.msra.mxu0 0.0
        %530 = vmatprep.subr.mxu0 0.0
        %531 = vmatpush2.xpose.msra.mxu0 0.0
        %532 = vmatprep.subr.mxu0 0.0
        %533 = vmatpush2.xpose.msra.mxu0 0.0
        %534 = vmatprep.subr.mxu0 0.0
        %535 = vmatpush2.xpose.msra.mxu0 0.0
        %536 = vmatprep.mubr.f32.mxu0 0.0
        %537 = vmatmul.mubr.f32.gmra.mxu0 %v461
        %v538 = vpop.f32.mrf.mxu0
        %v539 = vadd.f32 0.0, %v538
        %v540 = vpop.f32.mrf.mxu0
        %541 = vmatprep.mubr.f32.mxu0 0.0
        %542 = vmatmul.mubr.f32.gmra.mxu0 %v464
        %v543 = vpop.f32.mrf.mxu0
        %v544 = vadd.f32 0.0, %v543
        %v545 = vpop.f32.mrf.mxu0
        %546 = vdwg.mxu0
        %v548 = vsel %vm372, %v312, 0
        %v551 = vsel %vm372, %v313, 0
        %v554 = vsel %vm372, %v344, 0
        %v557 = vsel %vm372, %v345, 0
        %559 = vmatprep.subr.mxu0 0.0
        %560 = vmatpush1.xpose.msra.mxu0 0.0
        %561 = vmatprep.subr.mxu0 0.0
        %562 = vmatpush1.xpose.msra.mxu0 0.0
        %563 = vmatprep.subr.mxu0 0.0
        %564 = vmatpush1.xpose.msra.mxu0 0.0
        %565 = vmatprep.subr.mxu0 0.0
        %566 = vmatpush1.xpose.msra.mxu0 0.0
        %567 = vmatprep.subr.mxu0 0.0
        %568 = vmatpush1.xpose.msra.mxu0 0.0
        %569 = vmatprep.subr.mxu0 0.0
        %570 = vmatpush1.xpose.msra.mxu0 0.0
        %571 = vmatprep.subr.mxu0 0.0
        %572 = vmatpush1.xpose.msra.mxu0 0.0
        %573 = vmatprep.subr.mxu0 0.0
        %574 = vmatpush1.xpose.msra.mxu0 0.0
        %575 = vmatprep.subr.mxu0 0.0
        %576 = vmatpush1.xpose.msra.mxu0 0.0
        %577 = vmatprep.subr.mxu0 0.0
        %578 = vmatpush1.xpose.msra.mxu0 0.0
        %579 = vmatprep.subr.mxu0 0.0
        %580 = vmatpush1.xpose.msra.mxu0 0.0
        %581 = vmatprep.subr.mxu0 0.0
        %582 = vmatpush1.xpose.msra.mxu0 0.0
        %583 = vmatprep.subr.mxu0 0.0
        %584 = vmatpush1.xpose.msra.mxu0 0.0
        %585 = vmatprep.subr.mxu0 0.0
        %586 = vmatpush1.xpose.msra.mxu0 0.0
        %587 = vmatprep.subr.mxu0 0.0
        %588 = vmatpush1.xpose.msra.mxu0 %v557
        %589 = vmatprep.subr.mxu0 0.0
        %590 = vmatpush1.xpose.msra.mxu0 %v554
        %591 = vmatprep.subr.mxu0 0.0
        %592 = vmatpush2.xpose.msra.mxu0 0.0
        %593 = vmatprep.subr.mxu0 0.0
        %594 = vmatpush2.xpose.msra.mxu0 0.0
        %595 = vmatprep.subr.mxu0 0.0
        %596 = vmatpush2.xpose.msra.mxu0 0.0
        %597 = vmatprep.subr.mxu0 0.0
        %598 = vmatpush2.xpose.msra.mxu0 0.0
        %599 = vmatprep.subr.mxu0 0.0
        %600 = vmatpush2.xpose.msra.mxu0 0.0
        %601 = vmatprep.subr.mxu0 0.0
        %602 = vmatpush2.xpose.msra.mxu0 0.0
        %603 = vmatprep.subr.mxu0 0.0
        %604 = vmatpush2.xpose.msra.mxu0 0.0
        %605 = vmatprep.subr.mxu0 0.0
        %606 = vmatpush2.xpose.msra.mxu0 0.0
        %607 = vmatprep.subr.mxu0 0.0
        %608 = vmatpush2.xpose.msra.mxu0 0.0
        %609 = vmatprep.subr.mxu0 0.0
        %610 = vmatpush2.xpose.msra.mxu0 0.0
        %611 = vmatprep.subr.mxu0 0.0
        %612 = vmatpush2.xpose.msra.mxu0 0.0
        %613 = vmatprep.subr.mxu0 0.0
        %614 = vmatpush2.xpose.msra.mxu0 0.0
        %615 = vmatprep.subr.mxu0 0.0
        %616 = vmatpush2.xpose.msra.mxu0 0.0
        %617 = vmatprep.subr.mxu0 0.0
        %618 = vmatpush2.xpose.msra.mxu0 0.0
        %619 = vmatprep.subr.mxu0 0.0
        %620 = vmatpush2.xpose.msra.mxu0 0.0
        %621 = vmatprep.subr.mxu0 0.0
        %622 = vmatpush2.xpose.msra.mxu0 0.0
        %623 = vmatprep.mubr.f32.mxu0 0.0
        %624 = vmatmul.mubr.f32.gmra.mxu0 %v548
        %v625 = vpop.f32.mrf.mxu0
        %v626 = vadd.f32 0.0, %v625
        %v627 = vpop.f32.mrf.mxu0
        %628 = vmatprep.mubr.f32.mxu0 0.0
        %629 = vmatmul.mubr.f32.gmra.mxu0 %v551
        %v630 = vpop.f32.mrf.mxu0
        %v631 = vadd.f32 0.0, %v630
        %v632 = vpop.f32.mrf.mxu0
        %633 = vdwg.mxu0
        %v635 = vsel %vm372, %v314, 0
        %v638 = vsel %vm372, %v315, 0
        %v641 = vsel %vm372, %v346, 0
        %v644 = vsel %vm372, %v347, 0
        %646 = vmatprep.subr.mxu0 0.0
        %647 = vmatpush1.xpose.msra.mxu0 0.0
        %648 = vmatprep.subr.mxu0 0.0
        %649 = vmatpush1.xpose.msra.mxu0 0.0
        %650 = vmatprep.subr.mxu0 0.0
        %651 = vmatpush1.xpose.msra.mxu0 0.0
        %652 = vmatprep.subr.mxu0 0.0
        %653 = vmatpush1.xpose.msra.mxu0 0.0
        %654 = vmatprep.subr.mxu0 0.0
        %655 = vmatpush1.xpose.msra.mxu0 0.0
        %656 = vmatprep.subr.mxu0 0.0
        %657 = vmatpush1.xpose.msra.mxu0 0.0
        %658 = vmatprep.subr.mxu0 0.0
        %659 = vmatpush1.xpose.msra.mxu0 0.0
        %660 = vmatprep.subr.mxu0 0.0
        %661 = vmatpush1.xpose.msra.mxu0 0.0
        %662 = vmatprep.subr.mxu0 0.0
        %663 = vmatpush1.xpose.msra.mxu0 0.0
        %664 = vmatprep.subr.mxu0 0.0
        %665 = vmatpush1.xpose.msra.mxu0 0.0
        %666 = vmatprep.subr.mxu0 0.0
        %667 = vmatpush1.xpose.msra.mxu0 0.0
        %668 = vmatprep.subr.mxu0 0.0
        %669 = vmatpush1.xpose.msra.mxu0 0.0
        %670 = vmatprep.subr.mxu0 0.0
        %671 = vmatpush1.xpose.msra.mxu0 0.0
        %672 = vmatprep.subr.mxu0 0.0
        %673 = vmatpush1.xpose.msra.mxu0 0.0
        %674 = vmatprep.subr.mxu0 0.0
        %675 = vmatpush1.xpose.msra.mxu0 %v644
        %676 = vmatprep.subr.mxu0 0.0
        %677 = vmatpush1.xpose.msra.mxu0 %v641
        %678 = vmatprep.subr.mxu0 0.0
        %679 = vmatpush2.xpose.msra.mxu0 0.0
        %680 = vmatprep.subr.mxu0 0.0
        %681 = vmatpush2.xpose.msra.mxu0 0.0
        %682 = vmatprep.subr.mxu0 0.0
        %683 = vmatpush2.xpose.msra.mxu0 0.0
        %684 = vmatprep.subr.mxu0 0.0
        %685 = vmatpush2.xpose.msra.mxu0 0.0
        %686 = vmatprep.subr.mxu0 0.0
        %687 = vmatpush2.xpose.msra.mxu0 0.0
        %688 = vmatprep.subr.mxu0 0.0
        %689 = vmatpush2.xpose.msra.mxu0 0.0
        %690 = vmatprep.subr.mxu0 0.0
        %691 = vmatpush2.xpose.msra.mxu0 0.0
        %692 = vmatprep.subr.mxu0 0.0
        %693 = vmatpush2.xpose.msra.mxu0 0.0
        %694 = vmatprep.subr.mxu0 0.0
        %695 = vmatpush2.xpose.msra.mxu0 0.0
        %696 = vmatprep.subr.mxu0 0.0
        %697 = vmatpush2.xpose.msra.mxu0 0.0
        %698 = vmatprep.subr.mxu0 0.0
        %699 = vmatpush2.xpose.msra.mxu0 0.0
        %700 = vmatprep.subr.mxu0 0.0
        %701 = vmatpush2.xpose.msra.mxu0 0.0
        %702 = vmatprep.subr.mxu0 0.0
        %703 = vmatpush2.xpose.msra.mxu0 0.0
        %704 = vmatprep.subr.mxu0 0.0
        %705 = vmatpush2.xpose.msra.mxu0 0.0
        %706 = vmatprep.subr.mxu0 0.0
        %707 = vmatpush2.xpose.msra.mxu0 0.0
        %708 = vmatprep.subr.mxu0 0.0
        %709 = vmatpush2.xpose.msra.mxu0 0.0
        %710 = vmatprep.mubr.f32.mxu0 0.0
        %711 = vmatmul.mubr.f32.gmra.mxu0 %v635
        %v712 = vpop.f32.mrf.mxu0
        %v713 = vadd.f32 0.0, %v712
        %v714 = vpop.f32.mrf.mxu0
        %715 = vmatprep.mubr.f32.mxu0 0.0
        %716 = vmatmul.mubr.f32.gmra.mxu0 %v638
        %v717 = vpop.f32.mrf.mxu0
        %v718 = vadd.f32 0.0, %v717
        %v719 = vpop.f32.mrf.mxu0
        %720 = vdwg.mxu0
        %v722 = vsel %vm372, %v316, 0
        %v725 = vsel %vm372, %v317, 0
        %v728 = vsel %vm372, %v348, 0
        %v731 = vsel %vm372, %v349, 0
        %733 = vmatprep.subr.mxu0 0.0
        %734 = vmatpush1.xpose.msra.mxu0 0.0
        %735 = vmatprep.subr.mxu0 0.0
        %736 = vmatpush1.xpose.msra.mxu0 0.0
        %737 = vmatprep.subr.mxu0 0.0
        %738 = vmatpush1.xpose.msra.mxu0 0.0
        %739 = vmatprep.subr.mxu0 0.0
        %740 = vmatpush1.xpose.msra.mxu0 0.0
        %741 = vmatprep.subr.mxu0 0.0
        %742 = vmatpush1.xpose.msra.mxu0 0.0
        %743 = vmatprep.subr.mxu0 0.0
        %744 = vmatpush1.xpose.msra.mxu0 0.0
        %745 = vmatprep.subr.mxu0 0.0
        %746 = vmatpush1.xpose.msra.mxu0 0.0
        %747 = vmatprep.subr.mxu0 0.0
        %748 = vmatpush1.xpose.msra.mxu0 0.0
        %749 = vmatprep.subr.mxu0 0.0
        %750 = vmatpush1.xpose.msra.mxu0 0.0
        %751 = vmatprep.subr.mxu0 0.0
        %752 = vmatpush1.xpose.msra.mxu0 0.0
        %753 = vmatprep.subr.mxu0 0.0
        %754 = vmatpush1.xpose.msra.mxu0 0.0
        %755 = vmatprep.subr.mxu0 0.0
        %756 = vmatpush1.xpose.msra.mxu0 0.0
        %757 = vmatprep.subr.mxu0 0.0
        %758 = vmatpush1.xpose.msra.mxu0 0.0
        %759 = vmatprep.subr.mxu0 0.0
        %760 = vmatpush1.xpose.msra.mxu0 0.0
        %761 = vmatprep.subr.mxu0 0.0
        %762 = vmatpush1.xpose.msra.mxu0 %v731
        %763 = vmatprep.subr.mxu0 0.0
        %764 = vmatpush1.xpose.msra.mxu0 %v728
        %765 = vmatprep.subr.mxu0 0.0
        %766 = vmatpush2.xpose.msra.mxu0 0.0
        %767 = vmatprep.subr.mxu0 0.0
        %768 = vmatpush2.xpose.msra.mxu0 0.0
        %769 = vmatprep.subr.mxu0 0.0
        %770 = vmatpush2.xpose.msra.mxu0 0.0
        %771 = vmatprep.subr.mxu0 0.0
        %772 = vmatpush2.xpose.msra.mxu0 0.0
        %773 = vmatprep.subr.mxu0 0.0
        %774 = vmatpush2.xpose.msra.mxu0 0.0
        %775 = vmatprep.subr.mxu0 0.0
        %776 = vmatpush2.xpose.msra.mxu0 0.0
        %777 = vmatprep.subr.mxu0 0.0
        %778 = vmatpush2.xpose.msra.mxu0 0.0
        %779 = vmatprep.subr.mxu0 0.0
        %780 = vmatpush2.xpose.msra.mxu0 0.0
        %781 = vmatprep.subr.mxu0 0.0
        %782 = vmatpush2.xpose.msra.mxu0 0.0
        %783 = vmatprep.subr.mxu0 0.0
        %784 = vmatpush2.xpose.msra.mxu0 0.0
        %785 = vmatprep.subr.mxu0 0.0
        %786 = vmatpush2.xpose.msra.mxu0 0.0
        %787 = vmatprep.subr.mxu0 0.0
        %788 = vmatpush2.xpose.msra.mxu0 0.0
        %789 = vmatprep.subr.mxu0 0.0
        %790 = vmatpush2.xpose.msra.mxu0 0.0
        %791 = vmatprep.subr.mxu0 0.0
        %792 = vmatpush2.xpose.msra.mxu0 0.0
        %793 = vmatprep.subr.mxu0 0.0
        %794 = vmatpush2.xpose.msra.mxu0 0.0
        %795 = vmatprep.subr.mxu0 0.0
        %796 = vmatpush2.xpose.msra.mxu0 0.0
        %797 = vmatprep.mubr.f32.mxu0 0.0
        %798 = vmatmul.mubr.f32.gmra.mxu0 %v722
        %v799 = vpop.f32.mrf.mxu0
        %v800 = vadd.f32 0.0, %v799
        %v801 = vpop.f32.mrf.mxu0
        %802 = vmatprep.mubr.f32.mxu0 0.0
        %803 = vmatmul.mubr.f32.gmra.mxu0 %v725
        %v804 = vpop.f32.mrf.mxu0
        %v805 = vadd.f32 0.0, %v804
        %v806 = vpop.f32.mrf.mxu0
        %807 = vdwg.mxu0
        %v809 = vsel %vm372, %v318, 0
        %v812 = vsel %vm372, %v319, 0
        %v815 = vsel %vm372, %v350, 0
        %v818 = vsel %vm372, %v351, 0
        %820 = vmatprep.subr.mxu0 0.0
        %821 = vmatpush1.xpose.msra.mxu0 0.0
        %822 = vmatprep.subr.mxu0 0.0
        %823 = vmatpush1.xpose.msra.mxu0 0.0
        %824 = vmatprep.subr.mxu0 0.0
        %825 = vmatpush1.xpose.msra.mxu0 0.0
        %826 = vmatprep.subr.mxu0 0.0
        %827 = vmatpush1.xpose.msra.mxu0 0.0
        %828 = vmatprep.subr.mxu0 0.0
        %829 = vmatpush1.xpose.msra.mxu0 0.0
        %830 = vmatprep.subr.mxu0 0.0
        %831 = vmatpush1.xpose.msra.mxu0 0.0
        %832 = vmatprep.subr.mxu0 0.0
        %833 = vmatpush1.xpose.msra.mxu0 0.0
        %834 = vmatprep.subr.mxu0 0.0
        %835 = vmatpush1.xpose.msra.mxu0 0.0
        %836 = vmatprep.subr.mxu0 0.0
        %837 = vmatpush1.xpose.msra.mxu0 0.0
        %838 = vmatprep.subr.mxu0 0.0
        %839 = vmatpush1.xpose.msra.mxu0 0.0
        %840 = vmatprep.subr.mxu0 0.0
        %841 = vmatpush1.xpose.msra.mxu0 0.0
        %842 = vmatprep.subr.mxu0 0.0
        %843 = vmatpush1.xpose.msra.mxu0 0.0
        %844 = vmatprep.subr.mxu0 0.0
        %845 = vmatpush1.xpose.msra.mxu0 0.0
        %846 = vmatprep.subr.mxu0 0.0
        %847 = vmatpush1.xpose.msra.mxu0 0.0
        %848 = vmatprep.subr.mxu0 0.0
        %849 = vmatpush1.xpose.msra.mxu0 %v818
        %850 = vmatprep.subr.mxu0 0.0
        %851 = vmatpush1.xpose.msra.mxu0 %v815
        %852 = vmatprep.subr.mxu0 0.0
        %853 = vmatpush2.xpose.msra.mxu0 0.0
        %854 = vmatprep.subr.mxu0 0.0
        %855 = vmatpush2.xpose.msra.mxu0 0.0
        %856 = vmatprep.subr.mxu0 0.0
        %857 = vmatpush2.xpose.msra.mxu0 0.0
        %858 = vmatprep.subr.mxu0 0.0
        %859 = vmatpush2.xpose.msra.mxu0 0.0
        %860 = vmatprep.subr.mxu0 0.0
        %861 = vmatpush2.xpose.msra.mxu0 0.0
        %862 = vmatprep.subr.mxu0 0.0
        %863 = vmatpush2.xpose.msra.mxu0 0.0
        %864 = vmatprep.subr.mxu0 0.0
        %865 = vmatpush2.xpose.msra.mxu0 0.0
        %866 = vmatprep.subr.mxu0 0.0
        %867 = vmatpush2.xpose.msra.mxu0 0.0
        %868 = vmatprep.subr.mxu0 0.0
        %869 = vmatpush2.xpose.msra.mxu0 0.0
        %870 = vmatprep.subr.mxu0 0.0
        %871 = vmatpush2.xpose.msra.mxu0 0.0
        %872 = vmatprep.subr.mxu0 0.0
        %873 = vmatpush2.xpose.msra.mxu0 0.0
        %874 = vmatprep.subr.mxu0 0.0
        %875 = vmatpush2.xpose.msra.mxu0 0.0
        %876 = vmatprep.subr.mxu0 0.0
        %877 = vmatpush2.xpose.msra.mxu0 0.0
        %878 = vmatprep.subr.mxu0 0.0
        %879 = vmatpush2.xpose.msra.mxu0 0.0
        %880 = vmatprep.subr.mxu0 0.0
        %881 = vmatpush2.xpose.msra.mxu0 0.0
        %882 = vmatprep.subr.mxu0 0.0
        %883 = vmatpush2.xpose.msra.mxu0 0.0
        %884 = vmatprep.mubr.f32.mxu0 0.0
        %885 = vmatmul.mubr.f32.gmra.mxu0 %v809
        %v886 = vpop.f32.mrf.mxu0
        %v887 = vadd.f32 0.0, %v886
        %v888 = vpop.f32.mrf.mxu0
        %889 = vmatprep.mubr.f32.mxu0 0.0
        %890 = vmatmul.mubr.f32.gmra.mxu0 %v812
        %v891 = vpop.f32.mrf.mxu0
        %v892 = vadd.f32 0.0, %v891
        %v893 = vpop.f32.mrf.mxu0
        %894 = vdwg.mxu0
        %v896 = vsel %vm372, %v320, 0
        %v899 = vsel %vm372, %v321, 0
        %v902 = vsel %vm372, %v352, 0
        %v905 = vsel %vm372, %v353, 0
        %907 = vmatprep.subr.mxu0 0.0
        %908 = vmatpush1.xpose.msra.mxu0 0.0
        %909 = vmatprep.subr.mxu0 0.0
        %910 = vmatpush1.xpose.msra.mxu0 0.0
        %911 = vmatprep.subr.mxu0 0.0
        %912 = vmatpush1.xpose.msra.mxu0 0.0
        %913 = vmatprep.subr.mxu0 0.0
        %914 = vmatpush1.xpose.msra.mxu0 0.0
        %915 = vmatprep.subr.mxu0 0.0
        %916 = vmatpush1.xpose.msra.mxu0 0.0
        %917 = vmatprep.subr.mxu0 0.0
        %918 = vmatpush1.xpose.msra.mxu0 0.0
        %919 = vmatprep.subr.mxu0 0.0
        %920 = vmatpush1.xpose.msra.mxu0 0.0
        %921 = vmatprep.subr.mxu0 0.0
        %922 = vmatpush1.xpose.msra.mxu0 0.0
        %923 = vmatprep.subr.mxu0 0.0
        %924 = vmatpush1.xpose.msra.mxu0 0.0
        %925 = vmatprep.subr.mxu0 0.0
        %926 = vmatpush1.xpose.msra.mxu0 0.0
        %927 = vmatprep.subr.mxu0 0.0
        %928 = vmatpush1.xpose.msra.mxu0 0.0
        %929 = vmatprep.subr.mxu0 0.0
        %930 = vmatpush1.xpose.msra.mxu0 0.0
        %931 = vmatprep.subr.mxu0 0.0
        %932 = vmatpush1.xpose.msra.mxu0 0.0
        %933 = vmatprep.subr.mxu0 0.0
        %934 = vmatpush1.xpose.msra.mxu0 0.0
        %935 = vmatprep.subr.mxu0 0.0
        %936 = vmatpush1.xpose.msra.mxu0 %v905
        %937 = vmatprep.subr.mxu0 0.0
        %938 = vmatpush1.xpose.msra.mxu0 %v902
        %939 = vmatprep.subr.mxu0 0.0
        %940 = vmatpush2.xpose.msra.mxu0 0.0
        %941 = vmatprep.subr.mxu0 0.0
        %942 = vmatpush2.xpose.msra.mxu0 0.0
        %943 = vmatprep.subr.mxu0 0.0
        %944 = vmatpush2.xpose.msra.mxu0 0.0
        %945 = vmatprep.subr.mxu0 0.0
        %946 = vmatpush2.xpose.msra.mxu0 0.0
        %947 = vmatprep.subr.mxu0 0.0
        %948 = vmatpush2.xpose.msra.mxu0 0.0
        %949 = vmatprep.subr.mxu0 0.0
        %950 = vmatpush2.xpose.msra.mxu0 0.0
        %951 = vmatprep.subr.mxu0 0.0
        %952 = vmatpush2.xpose.msra.mxu0 0.0
        %953 = vmatprep.subr.mxu0 0.0
        %954 = vmatpush2.xpose.msra.mxu0 0.0
        %955 = vmatprep.subr.mxu0 0.0
        %956 = vmatpush2.xpose.msra.mxu0 0.0
        %957 = vmatprep.subr.mxu0 0.0
        %958 = vmatpush2.xpose.msra.mxu0 0.0
        %959 = vmatprep.subr.mxu0 0.0
        %960 = vmatpush2.xpose.msra.mxu0 0.0
        %961 = vmatprep.subr.mxu0 0.0
        %962 = vmatpush2.xpose.msra.mxu0 0.0
        %963 = vmatprep.subr.mxu0 0.0
        %964 = vmatpush2.xpose.msra.mxu0 0.0
        %965 = vmatprep.subr.mxu0 0.0
        %966 = vmatpush2.xpose.msra.mxu0 0.0
        %967 = vmatprep.subr.mxu0 0.0
        %968 = vmatpush2.xpose.msra.mxu0 0.0
        %969 = vmatprep.subr.mxu0 0.0
        %970 = vmatpush2.xpose.msra.mxu0 0.0
        %971 = vmatprep.mubr.f32.mxu0 0.0
        %972 = vmatmul.mubr.f32.gmra.mxu0 %v896
        %v973 = vpop.f32.mrf.mxu0
        %v974 = vadd.f32 0.0, %v973
        %v975 = vpop.f32.mrf.mxu0
        %976 = vmatprep.mubr.f32.mxu0 0.0
        %977 = vmatmul.mubr.f32.gmra.mxu0 %v899
        %v978 = vpop.f32.mrf.mxu0
        %v979 = vadd.f32 0.0, %v978
        %v980 = vpop.f32.mrf.mxu0
        %981 = vdwg.mxu0
        %v983 = vsel %vm372, %v322, 0
        %v986 = vsel %vm372, %v323, 0
        %v989 = vsel %vm372, %v354, 0
        %v992 = vsel %vm372, %v355, 0
        %994 = vmatprep.subr.mxu0 0.0
        %995 = vmatpush1.xpose.msra.mxu0 0.0
        %996 = vmatprep.subr.mxu0 0.0
        %997 = vmatpush1.xpose.msra.mxu0 0.0
        %998 = vmatprep.subr.mxu0 0.0
        %999 = vmatpush1.xpose.msra.mxu0 0.0
        %1000 = vmatprep.subr.mxu0 0.0
        %1001 = vmatpush1.xpose.msra.mxu0 0.0
        %1002 = vmatprep.subr.mxu0 0.0
        %1003 = vmatpush1.xpose.msra.mxu0 0.0
        %1004 = vmatprep.subr.mxu0 0.0
        %1005 = vmatpush1.xpose.msra.mxu0 0.0
        %1006 = vmatprep.subr.mxu0 0.0
        %1007 = vmatpush1.xpose.msra.mxu0 0.0
        %1008 = vmatprep.subr.mxu0 0.0
        %1009 = vmatpush1.xpose.msra.mxu0 0.0
        %1010 = vmatprep.subr.mxu0 0.0
        %1011 = vmatpush1.xpose.msra.mxu0 0.0
        %1012 = vmatprep.subr.mxu0 0.0
        %1013 = vmatpush1.xpose.msra.mxu0 0.0
        %1014 = vmatprep.subr.mxu0 0.0
        %1015 = vmatpush1.xpose.msra.mxu0 0.0
        %1016 = vmatprep.subr.mxu0 0.0
        %1017 = vmatpush1.xpose.msra.mxu0 0.0
        %1018 = vmatprep.subr.mxu0 0.0
        %1019 = vmatpush1.xpose.msra.mxu0 0.0
        %1020 = vmatprep.subr.mxu0 0.0
        %1021 = vmatpush1.xpose.msra.mxu0 0.0
        %1022 = vmatprep.subr.mxu0 0.0
        %1023 = vmatpush1.xpose.msra.mxu0 %v992
        %1024 = vmatprep.subr.mxu0 0.0
        %1025 = vmatpush1.xpose.msra.mxu0 %v989
        %1026 = vmatprep.subr.mxu0 0.0
        %1027 = vmatpush2.xpose.msra.mxu0 0.0
        %1028 = vmatprep.subr.mxu0 0.0
        %1029 = vmatpush2.xpose.msra.mxu0 0.0
        %1030 = vmatprep.subr.mxu0 0.0
        %1031 = vmatpush2.xpose.msra.mxu0 0.0
        %1032 = vmatprep.subr.mxu0 0.0
        %1033 = vmatpush2.xpose.msra.mxu0 0.0
        %1034 = vmatprep.subr.mxu0 0.0
        %1035 = vmatpush2.xpose.msra.mxu0 0.0
        %1036 = vmatprep.subr.mxu0 0.0
        %1037 = vmatpush2.xpose.msra.mxu0 0.0
        %1038 = vmatprep.subr.mxu0 0.0
        %1039 = vmatpush2.xpose.msra.mxu0 0.0
        %1040 = vmatprep.subr.mxu0 0.0
        %1041 = vmatpush2.xpose.msra.mxu0 0.0
        %1042 = vmatprep.subr.mxu0 0.0
        %1043 = vmatpush2.xpose.msra.mxu0 0.0
        %1044 = vmatprep.subr.mxu0 0.0
        %1045 = vmatpush2.xpose.msra.mxu0 0.0
        %1046 = vmatprep.subr.mxu0 0.0
        %1047 = vmatpush2.xpose.msra.mxu0 0.0
        %1048 = vmatprep.subr.mxu0 0.0
        %1049 = vmatpush2.xpose.msra.mxu0 0.0
        %1050 = vmatprep.subr.mxu0 0.0
        %1051 = vmatpush2.xpose.msra.mxu0 0.0
        %1052 = vmatprep.subr.mxu0 0.0
        %1053 = vmatpush2.xpose.msra.mxu0 0.0
        %1054 = vmatprep.subr.mxu0 0.0
        %1055 = vmatpush2.xpose.msra.mxu0 0.0
        %1056 = vmatprep.subr.mxu0 0.0
        %1057 = vmatpush2.xpose.msra.mxu0 0.0
        %1058 = vmatprep.mubr.f32.mxu0 0.0
        %1059 = vmatmul.mubr.f32.gmra.mxu0 %v983
        %v1060 = vpop.f32.mrf.mxu0
        %v1061 = vadd.f32 0.0, %v1060
        %v1062 = vpop.f32.mrf.mxu0
        %1063 = vmatprep.mubr.f32.mxu0 0.0
        %1064 = vmatmul.mubr.f32.gmra.mxu0 %v986
        %v1065 = vpop.f32.mrf.mxu0
        %v1066 = vadd.f32 0.0, %v1065
        %v1067 = vpop.f32.mrf.mxu0
        %1068 = vdwg.mxu0
        %v1070 = vsel %vm372, %v324, 0
        %v1073 = vsel %vm372, %v325, 0
        %v1076 = vsel %vm372, %v356, 0
        %v1079 = vsel %vm372, %v357, 0
        %1081 = vmatprep.subr.mxu0 0.0
        %1082 = vmatpush1.xpose.msra.mxu0 0.0
        %1083 = vmatprep.subr.mxu0 0.0
        %1084 = vmatpush1.xpose.msra.mxu0 0.0
        %1085 = vmatprep.subr.mxu0 0.0
        %1086 = vmatpush1.xpose.msra.mxu0 0.0
        %1087 = vmatprep.subr.mxu0 0.0
        %1088 = vmatpush1.xpose.msra.mxu0 0.0
        %1089 = vmatprep.subr.mxu0 0.0
        %1090 = vmatpush1.xpose.msra.mxu0 0.0
        %1091 = vmatprep.subr.mxu0 0.0
        %1092 = vmatpush1.xpose.msra.mxu0 0.0
        %1093 = vmatprep.subr.mxu0 0.0
        %1094 = vmatpush1.xpose.msra.mxu0 0.0
        %1095 = vmatprep.subr.mxu0 0.0
        %1096 = vmatpush1.xpose.msra.mxu0 0.0
        %1097 = vmatprep.subr.mxu0 0.0
        %1098 = vmatpush1.xpose.msra.mxu0 0.0
        %1099 = vmatprep.subr.mxu0 0.0
        %1100 = vmatpush1.xpose.msra.mxu0 0.0
        %1101 = vmatprep.subr.mxu0 0.0
        %1102 = vmatpush1.xpose.msra.mxu0 0.0
        %1103 = vmatprep.subr.mxu0 0.0
        %1104 = vmatpush1.xpose.msra.mxu0 0.0
        %1105 = vmatprep.subr.mxu0 0.0
        %1106 = vmatpush1.xpose.msra.mxu0 0.0
        %1107 = vmatprep.subr.mxu0 0.0
        %1108 = vmatpush1.xpose.msra.mxu0 0.0
        %1109 = vmatprep.subr.mxu0 0.0
        %1110 = vmatpush1.xpose.msra.mxu0 %v1079
        %1111 = vmatprep.subr.mxu0 0.0
        %1112 = vmatpush1.xpose.msra.mxu0 %v1076
        %1113 = vmatprep.subr.mxu0 0.0
        %1114 = vmatpush2.xpose.msra.mxu0 0.0
        %1115 = vmatprep.subr.mxu0 0.0
        %1116 = vmatpush2.xpose.msra.mxu0 0.0
        %1117 = vmatprep.subr.mxu0 0.0
        %1118 = vmatpush2.xpose.msra.mxu0 0.0
        %1119 = vmatprep.subr.mxu0 0.0
        %1120 = vmatpush2.xpose.msra.mxu0 0.0
        %1121 = vmatprep.subr.mxu0 0.0
        %1122 = vmatpush2.xpose.msra.mxu0 0.0
        %1123 = vmatprep.subr.mxu0 0.0
        %1124 = vmatpush2.xpose.msra.mxu0 0.0
        %1125 = vmatprep.subr.mxu0 0.0
        %1126 = vmatpush2.xpose.msra.mxu0 0.0
        %1127 = vmatprep.subr.mxu0 0.0
        %1128 = vmatpush2.xpose.msra.mxu0 0.0
        %1129 = vmatprep.subr.mxu0 0.0
        %1130 = vmatpush2.xpose.msra.mxu0 0.0
        %1131 = vmatprep.subr.mxu0 0.0
        %1132 = vmatpush2.xpose.msra.mxu0 0.0
        %1133 = vmatprep.subr.mxu0 0.0
        %1134 = vmatpush2.xpose.msra.mxu0 0.0
        %1135 = vmatprep.subr.mxu0 0.0
        %1136 = vmatpush2.xpose.msra.mxu0 0.0
        %1137 = vmatprep.subr.mxu0 0.0
        %1138 = vmatpush2.xpose.msra.mxu0 0.0
        %1139 = vmatprep.subr.mxu0 0.0
        %1140 = vmatpush2.xpose.msra.mxu0 0.0
        %1141 = vmatprep.subr.mxu0 0.0
        %1142 = vmatpush2.xpose.msra.mxu0 0.0
        %1143 = vmatprep.subr.mxu0 0.0
        %1144 = vmatpush2.xpose.msra.mxu0 0.0
        %1145 = vmatprep.mubr.f32.mxu0 0.0
        %1146 = vmatmul.mubr.f32.gmra.mxu0 %v1070
        %v1147 = vpop.f32.mrf.mxu0
        %v1148 = vadd.f32 0.0, %v1147
        %v1149 = vpop.f32.mrf.mxu0
        %1150 = vmatprep.mubr.f32.mxu0 0.0
        %1151 = vmatmul.mubr.f32.gmra.mxu0 %v1073
        %v1152 = vpop.f32.mrf.mxu0
        %v1153 = vadd.f32 0.0, %v1152
        %v1154 = vpop.f32.mrf.mxu0
        %1155 = vdwg.mxu0
        %v1157 = vsel %vm372, %v326, 0
        %v1160 = vsel %vm372, %v327, 0
        %v1163 = vsel %vm372, %v358, 0
        %v1166 = vsel %vm372, %v359, 0
        %1168 = vmatprep.subr.mxu0 0.0
        %1169 = vmatpush1.xpose.msra.mxu0 0.0
        %1170 = vmatprep.subr.mxu0 0.0
        %1171 = vmatpush1.xpose.msra.mxu0 0.0
        %1172 = vmatprep.subr.mxu0 0.0
        %1173 = vmatpush1.xpose.msra.mxu0 0.0
        %1174 = vmatprep.subr.mxu0 0.0
        %1175 = vmatpush1.xpose.msra.mxu0 0.0
        %1176 = vmatprep.subr.mxu0 0.0
        %1177 = vmatpush1.xpose.msra.mxu0 0.0
        %1178 = vmatprep.subr.mxu0 0.0
        %1179 = vmatpush1.xpose.msra.mxu0 0.0
        %1180 = vmatprep.subr.mxu0 0.0
        %1181 = vmatpush1.xpose.msra.mxu0 0.0
        %1182 = vmatprep.subr.mxu0 0.0
        %1183 = vmatpush1.xpose.msra.mxu0 0.0
        %1184 = vmatprep.subr.mxu0 0.0
        %1185 = vmatpush1.xpose.msra.mxu0 0.0
        %1186 = vmatprep.subr.mxu0 0.0
        %1187 = vmatpush1.xpose.msra.mxu0 0.0
        %1188 = vmatprep.subr.mxu0 0.0
        %1189 = vmatpush1.xpose.msra.mxu0 0.0
        %1190 = vmatprep.subr.mxu0 0.0
        %1191 = vmatpush1.xpose.msra.mxu0 0.0
        %1192 = vmatprep.subr.mxu0 0.0
        %1193 = vmatpush1.xpose.msra.mxu0 0.0
        %1194 = vmatprep.subr.mxu0 0.0
        %1195 = vmatpush1.xpose.msra.mxu0 0.0
        %1196 = vmatprep.subr.mxu0 0.0
        %1197 = vmatpush1.xpose.msra.mxu0 %v1166
        %1198 = vmatprep.subr.mxu0 0.0
        %1199 = vmatpush1.xpose.msra.mxu0 %v1163
        %1200 = vmatprep.subr.mxu0 0.0
        %1201 = vmatpush2.xpose.msra.mxu0 0.0
        %1202 = vmatprep.subr.mxu0 0.0
        %1203 = vmatpush2.xpose.msra.mxu0 0.0
        %1204 = vmatprep.subr.mxu0 0.0
        %1205 = vmatpush2.xpose.msra.mxu0 0.0
        %1206 = vmatprep.subr.mxu0 0.0
        %1207 = vmatpush2.xpose.msra.mxu0 0.0
        %1208 = vmatprep.subr.mxu0 0.0
        %1209 = vmatpush2.xpose.msra.mxu0 0.0
        %1210 = vmatprep.subr.mxu0 0.0
        %1211 = vmatpush2.xpose.msra.mxu0 0.0
        %1212 = vmatprep.subr.mxu0 0.0
        %1213 = vmatpush2.xpose.msra.mxu0 0.0
        %1214 = vmatprep.subr.mxu0 0.0
        %1215 = vmatpush2.xpose.msra.mxu0 0.0
        %1216 = vmatprep.subr.mxu0 0.0
        %1217 = vmatpush2.xpose.msra.mxu0 0.0
        %1218 = vmatprep.subr.mxu0 0.0
        %1219 = vmatpush2.xpose.msra.mxu0 0.0
        %1220 = vmatprep.subr.mxu0 0.0
        %1221 = vmatpush2.xpose.msra.mxu0 0.0
        %1222 = vmatprep.subr.mxu0 0.0
        %1223 = vmatpush2.xpose.msra.mxu0 0.0
        %1224 = vmatprep.subr.mxu0 0.0
        %1225 = vmatpush2.xpose.msra.mxu0 0.0
        %1226 = vmatprep.subr.mxu0 0.0
        %1227 = vmatpush2.xpose.msra.mxu0 0.0
        %1228 = vmatprep.subr.mxu0 0.0
        %1229 = vmatpush2.xpose.msra.mxu0 0.0
        %1230 = vmatprep.subr.mxu0 0.0
        %1231 = vmatpush2.xpose.msra.mxu0 0.0
        %1232 = vmatprep.mubr.f32.mxu0 0.0
        %1233 = vmatmul.mubr.f32.gmra.mxu0 %v1157
        %v1234 = vpop.f32.mrf.mxu0
        %v1235 = vadd.f32 0.0, %v1234
        %v1236 = vpop.f32.mrf.mxu0
        %1237 = vmatprep.mubr.f32.mxu0 0.0
        %1238 = vmatmul.mubr.f32.gmra.mxu0 %v1160
        %v1239 = vpop.f32.mrf.mxu0
        %v1240 = vadd.f32 0.0, %v1239
        %v1241 = vpop.f32.mrf.mxu0
        %1242 = vdwg.mxu0
        %v1244 = vsel %vm372, %v328, 0
        %v1247 = vsel %vm372, %v329, 0
        %v1250 = vsel %vm372, %v360, 0
        %v1253 = vsel %vm372, %v361, 0
        %1255 = vmatprep.subr.mxu0 0.0
        %1256 = vmatpush1.xpose.msra.mxu0 0.0
        %1257 = vmatprep.subr.mxu0 0.0
        %1258 = vmatpush1.xpose.msra.mxu0 0.0
        %1259 = vmatprep.subr.mxu0 0.0
        %1260 = vmatpush1.xpose.msra.mxu0 0.0
        %1261 = vmatprep.subr.mxu0 0.0
        %1262 = vmatpush1.xpose.msra.mxu0 0.0
        %1263 = vmatprep.subr.mxu0 0.0
        %1264 = vmatpush1.xpose.msra.mxu0 0.0
        %1265 = vmatprep.subr.mxu0 0.0
        %1266 = vmatpush1.xpose.msra.mxu0 0.0
        %1267 = vmatprep.subr.mxu0 0.0
        %1268 = vmatpush1.xpose.msra.mxu0 0.0
        %1269 = vmatprep.subr.mxu0 0.0
        %1270 = vmatpush1.xpose.msra.mxu0 0.0
        %1271 = vmatprep.subr.mxu0 0.0
        %1272 = vmatpush1.xpose.msra.mxu0 0.0
        %1273 = vmatprep.subr.mxu0 0.0
        %1274 = vmatpush1.xpose.msra.mxu0 0.0
        %1275 = vmatprep.subr.mxu0 0.0
        %1276 = vmatpush1.xpose.msra.mxu0 0.0
        %1277 = vmatprep.subr.mxu0 0.0
        %1278 = vmatpush1.xpose.msra.mxu0 0.0
        %1279 = vmatprep.subr.mxu0 0.0
        %1280 = vmatpush1.xpose.msra.mxu0 0.0
        %1281 = vmatprep.subr.mxu0 0.0
        %1282 = vmatpush1.xpose.msra.mxu0 0.0
        %1283 = vmatprep.subr.mxu0 0.0
        %1284 = vmatpush1.xpose.msra.mxu0 %v1253
        %1285 = vmatprep.subr.mxu0 0.0
        %1286 = vmatpush1.xpose.msra.mxu0 %v1250
        %1287 = vmatprep.subr.mxu0 0.0
        %1288 = vmatpush2.xpose.msra.mxu0 0.0
        %1289 = vmatprep.subr.mxu0 0.0
        %1290 = vmatpush2.xpose.msra.mxu0 0.0
        %1291 = vmatprep.subr.mxu0 0.0
        %1292 = vmatpush2.xpose.msra.mxu0 0.0
        %1293 = vmatprep.subr.mxu0 0.0
        %1294 = vmatpush2.xpose.msra.mxu0 0.0
        %1295 = vmatprep.subr.mxu0 0.0
        %1296 = vmatpush2.xpose.msra.mxu0 0.0
        %1297 = vmatprep.subr.mxu0 0.0
        %1298 = vmatpush2.xpose.msra.mxu0 0.0
        %1299 = vmatprep.subr.mxu0 0.0
        %1300 = vmatpush2.xpose.msra.mxu0 0.0
        %1301 = vmatprep.subr.mxu0 0.0
        %1302 = vmatpush2.xpose.msra.mxu0 0.0
        %1303 = vmatprep.subr.mxu0 0.0
        %1304 = vmatpush2.xpose.msra.mxu0 0.0
        %1305 = vmatprep.subr.mxu0 0.0
        %1306 = vmatpush2.xpose.msra.mxu0 0.0
        %1307 = vmatprep.subr.mxu0 0.0
        %1308 = vmatpush2.xpose.msra.mxu0 0.0
        %1309 = vmatprep.subr.mxu0 0.0
        %1310 = vmatpush2.xpose.msra.mxu0 0.0
        %1311 = vmatprep.subr.mxu0 0.0
        %1312 = vmatpush2.xpose.msra.mxu0 0.0
        %1313 = vmatprep.subr.mxu0 0.0
        %1314 = vmatpush2.xpose.msra.mxu0 0.0
        %1315 = vmatprep.subr.mxu0 0.0
        %1316 = vmatpush2.xpose.msra.mxu0 0.0
        %1317 = vmatprep.subr.mxu0 0.0
        %1318 = vmatpush2.xpose.msra.mxu0 0.0
        %1319 = vmatprep.mubr.f32.mxu0 0.0
        %1320 = vmatmul.mubr.f32.gmra.mxu0 %v1244
        %v1321 = vpop.f32.mrf.mxu0
        %v1322 = vadd.f32 0.0, %v1321
        %v1323 = vpop.f32.mrf.mxu0
        %1324 = vmatprep.mubr.f32.mxu0 0.0
        %1325 = vmatmul.mubr.f32.gmra.mxu0 %v1247
        %v1326 = vpop.f32.mrf.mxu0
        %v1327 = vadd.f32 0.0, %v1326
        %v1328 = vpop.f32.mrf.mxu0
        %1329 = vdwg.mxu0
        %v1331 = vsel %vm372, %v330, 0
        %v1334 = vsel %vm372, %v331, 0
        %v1337 = vsel %vm372, %v362, 0
        %v1340 = vsel %vm372, %v363, 0
        %1342 = vmatprep.subr.mxu0 0.0
        %1343 = vmatpush1.xpose.msra.mxu0 0.0
        %1344 = vmatprep.subr.mxu0 0.0
        %1345 = vmatpush1.xpose.msra.mxu0 0.0
        %1346 = vmatprep.subr.mxu0 0.0
        %1347 = vmatpush1.xpose.msra.mxu0 0.0
        %1348 = vmatprep.subr.mxu0 0.0
        %1349 = vmatpush1.xpose.msra.mxu0 0.0
        %1350 = vmatprep.subr.mxu0 0.0
        %1351 = vmatpush1.xpose.msra.mxu0 0.0
        %1352 = vmatprep.subr.mxu0 0.0
        %1353 = vmatpush1.xpose.msra.mxu0 0.0
        %1354 = vmatprep.subr.mxu0 0.0
        %1355 = vmatpush1.xpose.msra.mxu0 0.0
        %1356 = vmatprep.subr.mxu0 0.0
        %1357 = vmatpush1.xpose.msra.mxu0 0.0
        %1358 = vmatprep.subr.mxu0 0.0
        %1359 = vmatpush1.xpose.msra.mxu0 0.0
        %1360 = vmatprep.subr.mxu0 0.0
        %1361 = vmatpush1.xpose.msra.mxu0 0.0
        %1362 = vmatprep.subr.mxu0 0.0
        %1363 = vmatpush1.xpose.msra.mxu0 0.0
        %1364 = vmatprep.subr.mxu0 0.0
        %1365 = vmatpush1.xpose.msra.mxu0 0.0
        %1366 = vmatprep.subr.mxu0 0.0
        %1367 = vmatpush1.xpose.msra.mxu0 0.0
        %1368 = vmatprep.subr.mxu0 0.0
        %1369 = vmatpush1.xpose.msra.mxu0 0.0
        %1370 = vmatprep.subr.mxu0 0.0
        %1371 = vmatpush1.xpose.msra.mxu0 %v1340
        %1372 = vmatprep.subr.mxu0 0.0
        %1373 = vmatpush1.xpose.msra.mxu0 %v1337
        %1374 = vmatprep.subr.mxu0 0.0
        %1375 = vmatpush2.xpose.msra.mxu0 0.0
        %1376 = vmatprep.subr.mxu0 0.0
        %1377 = vmatpush2.xpose.msra.mxu0 0.0
        %1378 = vmatprep.subr.mxu0 0.0
        %1379 = vmatpush2.xpose.msra.mxu0 0.0
        %1380 = vmatprep.subr.mxu0 0.0
        %1381 = vmatpush2.xpose.msra.mxu0 0.0
        %1382 = vmatprep.subr.mxu0 0.0
        %1383 = vmatpush2.xpose.msra.mxu0 0.0
        %1384 = vmatprep.subr.mxu0 0.0
        %1385 = vmatpush2.xpose.msra.mxu0 0.0
        %1386 = vmatprep.subr.mxu0 0.0
        %1387 = vmatpush2.xpose.msra.mxu0 0.0
        %1388 = vmatprep.subr.mxu0 0.0
        %1389 = vmatpush2.xpose.msra.mxu0 0.0
        %1390 = vmatprep.subr.mxu0 0.0
        %1391 = vmatpush2.xpose.msra.mxu0 0.0
        %1392 = vmatprep.subr.mxu0 0.0
        %1393 = vmatpush2.xpose.msra.mxu0 0.0
        %1394 = vmatprep.subr.mxu0 0.0
        %1395 = vmatpush2.xpose.msra.mxu0 0.0
        %1396 = vmatprep.subr.mxu0 0.0
        %1397 = vmatpush2.xpose.msra.mxu0 0.0
        %1398 = vmatprep.subr.mxu0 0.0
        %1399 = vmatpush2.xpose.msra.mxu0 0.0
        %1400 = vmatprep.subr.mxu0 0.0
        %1401 = vmatpush2.xpose.msra.mxu0 0.0
        %1402 = vmatprep.subr.mxu0 0.0
        %1403 = vmatpush2.xpose.msra.mxu0 0.0
        %1404 = vmatprep.subr.mxu0 0.0
        %1405 = vmatpush2.xpose.msra.mxu0 0.0
        %1406 = vmatprep.mubr.f32.mxu0 0.0
        %1407 = vmatmul.mubr.f32.gmra.mxu0 %v1331
        %v1408 = vpop.f32.mrf.mxu0
        %v1409 = vadd.f32 0.0, %v1408
        %v1410 = vpop.f32.mrf.mxu0
        %1411 = vmatprep.mubr.f32.mxu0 0.0
        %1412 = vmatmul.mubr.f32.gmra.mxu0 %v1334
        %v1413 = vpop.f32.mrf.mxu0
        %v1414 = vadd.f32 0.0, %v1413
        %v1415 = vpop.f32.mrf.mxu0
        %1416 = vdwg.mxu0
        %v1418 = vsel %vm372, %v332, 0
        %v1421 = vsel %vm372, %v333, 0
        %v1424 = vsel %vm372, %v364, 0
        %v1427 = vsel %vm372, %v365, 0
        %1429 = vmatprep.subr.mxu0 0.0
        %1430 = vmatpush1.xpose.msra.mxu0 0.0
        %1431 = vmatprep.subr.mxu0 0.0
        %1432 = vmatpush1.xpose.msra.mxu0 0.0
        %1433 = vmatprep.subr.mxu0 0.0
        %1434 = vmatpush1.xpose.msra.mxu0 0.0
        %1435 = vmatprep.subr.mxu0 0.0
        %1436 = vmatpush1.xpose.msra.mxu0 0.0
        %1437 = vmatprep.subr.mxu0 0.0
        %1438 = vmatpush1.xpose.msra.mxu0 0.0
        %1439 = vmatprep.subr.mxu0 0.0
        %1440 = vmatpush1.xpose.msra.mxu0 0.0
        %1441 = vmatprep.subr.mxu0 0.0
        %1442 = vmatpush1.xpose.msra.mxu0 0.0
        %1443 = vmatprep.subr.mxu0 0.0
        %1444 = vmatpush1.xpose.msra.mxu0 0.0
        %1445 = vmatprep.subr.mxu0 0.0
        %1446 = vmatpush1.xpose.msra.mxu0 0.0
        %1447 = vmatprep.subr.mxu0 0.0
        %1448 = vmatpush1.xpose.msra.mxu0 0.0
        %1449 = vmatprep.subr.mxu0 0.0
        %1450 = vmatpush1.xpose.msra.mxu0 0.0
        %1451 = vmatprep.subr.mxu0 0.0
        %1452 = vmatpush1.xpose.msra.mxu0 0.0
        %1453 = vmatprep.subr.mxu0 0.0
        %1454 = vmatpush1.xpose.msra.mxu0 0.0
        %1455 = vmatprep.subr.mxu0 0.0
        %1456 = vmatpush1.xpose.msra.mxu0 0.0
        %1457 = vmatprep.subr.mxu0 0.0
        %1458 = vmatpush1.xpose.msra.mxu0 %v1427
        %1459 = vmatprep.subr.mxu0 0.0
        %1460 = vmatpush1.xpose.msra.mxu0 %v1424
        %1461 = vmatprep.subr.mxu0 0.0
        %1462 = vmatpush2.xpose.msra.mxu0 0.0
        %1463 = vmatprep.subr.mxu0 0.0
        %1464 = vmatpush2.xpose.msra.mxu0 0.0
        %1465 = vmatprep.subr.mxu0 0.0
        %1466 = vmatpush2.xpose.msra.mxu0 0.0
        %1467 = vmatprep.subr.mxu0 0.0
        %1468 = vmatpush2.xpose.msra.mxu0 0.0
        %1469 = vmatprep.subr.mxu0 0.0
        %1470 = vmatpush2.xpose.msra.mxu0 0.0
        %1471 = vmatprep.subr.mxu0 0.0
        %1472 = vmatpush2.xpose.msra.mxu0 0.0
        %1473 = vmatprep.subr.mxu0 0.0
        %1474 = vmatpush2.xpose.msra.mxu0 0.0
        %1475 = vmatprep.subr.mxu0 0.0
        %1476 = vmatpush2.xpose.msra.mxu0 0.0
        %1477 = vmatprep.subr.mxu0 0.0
        %1478 = vmatpush2.xpose.msra.mxu0 0.0
        %1479 = vmatprep.subr.mxu0 0.0
        %1480 = vmatpush2.xpose.msra.mxu0 0.0
        %1481 = vmatprep.subr.mxu0 0.0
        %1482 = vmatpush2.xpose.msra.mxu0 0.0
        %1483 = vmatprep.subr.mxu0 0.0
        %1484 = vmatpush2.xpose.msra.mxu0 0.0
        %1485 = vmatprep.subr.mxu0 0.0
        %1486 = vmatpush2.xpose.msra.mxu0 0.0
        %1487 = vmatprep.subr.mxu0 0.0
        %1488 = vmatpush2.xpose.msra.mxu0 0.0
        %1489 = vmatprep.subr.mxu0 0.0
        %1490 = vmatpush2.xpose.msra.mxu0 0.0
        %1491 = vmatprep.subr.mxu0 0.0
        %1492 = vmatpush2.xpose.msra.mxu0 0.0
        %1493 = vmatprep.mubr.f32.mxu0 0.0
        %1494 = vmatmul.mubr.f32.gmra.mxu0 %v1418
        %v1495 = vpop.f32.mrf.mxu0
        %v1496 = vadd.f32 0.0, %v1495
        %v1497 = vpop.f32.mrf.mxu0
        %1498 = vmatprep.mubr.f32.mxu0 0.0
        %1499 = vmatmul.mubr.f32.gmra.mxu0 %v1421
        %v1500 = vpop.f32.mrf.mxu0
        %v1501 = vadd.f32 0.0, %v1500
        %v1502 = vpop.f32.mrf.mxu0
        %1503 = vdwg.mxu0
        %v1505 = vsel %vm372, %v334, 0
        %v1508 = vsel %vm372, %v335, 0
        %v1511 = vsel %vm372, %v366, 0
        %v1514 = vsel %vm372, %v367, 0
        %1516 = vmatprep.subr.mxu0 0.0
        %1517 = vmatpush1.xpose.msra.mxu0 0.0
        %1518 = vmatprep.subr.mxu0 0.0
        %1519 = vmatpush1.xpose.msra.mxu0 0.0
        %1520 = vmatprep.subr.mxu0 0.0
        %1521 = vmatpush1.xpose.msra.mxu0 0.0
        %1522 = vmatprep.subr.mxu0 0.0
        %1523 = vmatpush1.xpose.msra.mxu0 0.0
        %1524 = vmatprep.subr.mxu0 0.0
        %1525 = vmatpush1.xpose.msra.mxu0 0.0
        %1526 = vmatprep.subr.mxu0 0.0
        %1527 = vmatpush1.xpose.msra.mxu0 0.0
        %1528 = vmatprep.subr.mxu0 0.0
        %1529 = vmatpush1.xpose.msra.mxu0 0.0
        %1530 = vmatprep.subr.mxu0 0.0
        %1531 = vmatpush1.xpose.msra.mxu0 0.0
        %1532 = vmatprep.subr.mxu0 0.0
        %1533 = vmatpush1.xpose.msra.mxu0 0.0
        %1534 = vmatprep.subr.mxu0 0.0
        %1535 = vmatpush1.xpose.msra.mxu0 0.0
        %1536 = vmatprep.subr.mxu0 0.0
        %1537 = vmatpush1.xpose.msra.mxu0 0.0
        %1538 = vmatprep.subr.mxu0 0.0
        %1539 = vmatpush1.xpose.msra.mxu0 0.0
        %1540 = vmatprep.subr.mxu0 0.0
        %1541 = vmatpush1.xpose.msra.mxu0 0.0
        %1542 = vmatprep.subr.mxu0 0.0
        %1543 = vmatpush1.xpose.msra.mxu0 0.0
        %1544 = vmatprep.subr.mxu0 0.0
        %1545 = vmatpush1.xpose.msra.mxu0 %v1514
        %1546 = vmatprep.subr.mxu0 0.0
        %1547 = vmatpush1.xpose.msra.mxu0 %v1511
        %1548 = vmatprep.subr.mxu0 0.0
        %1549 = vmatpush2.xpose.msra.mxu0 0.0
        %1550 = vmatprep.subr.mxu0 0.0
        %1551 = vmatpush2.xpose.msra.mxu0 0.0
        %1552 = vmatprep.subr.mxu0 0.0
        %1553 = vmatpush2.xpose.msra.mxu0 0.0
        %1554 = vmatprep.subr.mxu0 0.0
        %1555 = vmatpush2.xpose.msra.mxu0 0.0
        %1556 = vmatprep.subr.mxu0 0.0
        %1557 = vmatpush2.xpose.msra.mxu0 0.0
        %1558 = vmatprep.subr.mxu0 0.0
        %1559 = vmatpush2.xpose.msra.mxu0 0.0
        %1560 = vmatprep.subr.mxu0 0.0
        %1561 = vmatpush2.xpose.msra.mxu0 0.0
        %1562 = vmatprep.subr.mxu0 0.0
        %1563 = vmatpush2.xpose.msra.mxu0 0.0
        %1564 = vmatprep.subr.mxu0 0.0
        %1565 = vmatpush2.xpose.msra.mxu0 0.0
        %1566 = vmatprep.subr.mxu0 0.0
        %1567 = vmatpush2.xpose.msra.mxu0 0.0
        %1568 = vmatprep.subr.mxu0 0.0
        %1569 = vmatpush2.xpose.msra.mxu0 0.0
        %1570 = vmatprep.subr.mxu0 0.0
        %1571 = vmatpush2.xpose.msra.mxu0 0.0
        %1572 = vmatprep.subr.mxu0 0.0
        %1573 = vmatpush2.xpose.msra.mxu0 0.0
        %1574 = vmatprep.subr.mxu0 0.0
        %1575 = vmatpush2.xpose.msra.mxu0 0.0
        %1576 = vmatprep.subr.mxu0 0.0
        %1577 = vmatpush2.xpose.msra.mxu0 0.0
        %1578 = vmatprep.subr.mxu0 0.0
        %1579 = vmatpush2.xpose.msra.mxu0 0.0
        %1580 = vmatprep.mubr.f32.mxu0 0.0
        %1581 = vmatmul.mubr.f32.gmra.mxu0 %v1505
        %v1582 = vpop.f32.mrf.mxu0
        %v1583 = vadd.f32 0.0, %v1582
        %v1584 = vpop.f32.mrf.mxu0
        %1585 = vmatprep.mubr.f32.mxu0 0.0
        %1586 = vmatmul.mubr.f32.gmra.mxu0 %v1508
        %v1587 = vpop.f32.mrf.mxu0
        %v1588 = vadd.f32 0.0, %v1587
        %v1589 = vpop.f32.mrf.mxu0
        %1590 = vdwg.mxu0
        %v1592 = vsel %vm372, %v336, 0
        %v1595 = vsel %vm372, %v337, 0
        %v1598 = vsel %vm372, %v368, 0
        %v1601 = vsel %vm372, %v369, 0
        %1603 = vmatprep.subr.mxu0 0.0
        %1604 = vmatpush1.xpose.msra.mxu0 0.0
        %1605 = vmatprep.subr.mxu0 0.0
        %1606 = vmatpush1.xpose.msra.mxu0 0.0
        %1607 = vmatprep.subr.mxu0 0.0
        %1608 = vmatpush1.xpose.msra.mxu0 0.0
        %1609 = vmatprep.subr.mxu0 0.0
        %1610 = vmatpush1.xpose.msra.mxu0 0.0
        %1611 = vmatprep.subr.mxu0 0.0
        %1612 = vmatpush1.xpose.msra.mxu0 0.0
        %1613 = vmatprep.subr.mxu0 0.0
        %1614 = vmatpush1.xpose.msra.mxu0 0.0
        %1615 = vmatprep.subr.mxu0 0.0
        %1616 = vmatpush1.xpose.msra.mxu0 0.0
        %1617 = vmatprep.subr.mxu0 0.0
        %1618 = vmatpush1.xpose.msra.mxu0 0.0
        %1619 = vmatprep.subr.mxu0 0.0
        %1620 = vmatpush1.xpose.msra.mxu0 0.0
        %1621 = vmatprep.subr.mxu0 0.0
        %1622 = vmatpush1.xpose.msra.mxu0 0.0
        %1623 = vmatprep.subr.mxu0 0.0
        %1624 = vmatpush1.xpose.msra.mxu0 0.0
        %1625 = vmatprep.subr.mxu0 0.0
        %1626 = vmatpush1.xpose.msra.mxu0 0.0
        %1627 = vmatprep.subr.mxu0 0.0
        %1628 = vmatpush1.xpose.msra.mxu0 0.0
        %1629 = vmatprep.subr.mxu0 0.0
        %1630 = vmatpush1.xpose.msra.mxu0 0.0
        %1631 = vmatprep.subr.mxu0 0.0
        %1632 = vmatpush1.xpose.msra.mxu0 %v1601
        %1633 = vmatprep.subr.mxu0 0.0
        %1634 = vmatpush1.xpose.msra.mxu0 %v1598
        %1635 = vmatprep.subr.mxu0 0.0
        %1636 = vmatpush2.xpose.msra.mxu0 0.0
        %1637 = vmatprep.subr.mxu0 0.0
        %1638 = vmatpush2.xpose.msra.mxu0 0.0
        %1639 = vmatprep.subr.mxu0 0.0
        %1640 = vmatpush2.xpose.msra.mxu0 0.0
        %1641 = vmatprep.subr.mxu0 0.0
        %1642 = vmatpush2.xpose.msra.mxu0 0.0
        %1643 = vmatprep.subr.mxu0 0.0
        %1644 = vmatpush2.xpose.msra.mxu0 0.0
        %1645 = vmatprep.subr.mxu0 0.0
        %1646 = vmatpush2.xpose.msra.mxu0 0.0
        %1647 = vmatprep.subr.mxu0 0.0
        %1648 = vmatpush2.xpose.msra.mxu0 0.0
        %1649 = vmatprep.subr.mxu0 0.0
        %1650 = vmatpush2.xpose.msra.mxu0 0.0
        %1651 = vmatprep.subr.mxu0 0.0
        %1652 = vmatpush2.xpose.msra.mxu0 0.0
        %1653 = vmatprep.subr.mxu0 0.0
        %1654 = vmatpush2.xpose.msra.mxu0 0.0
        %1655 = vmatprep.subr.mxu0 0.0
        %1656 = vmatpush2.xpose.msra.mxu0 0.0
        %1657 = vmatprep.subr.mxu0 0.0
        %1658 = vmatpush2.xpose.msra.mxu0 0.0
        %1659 = vmatprep.subr.mxu0 0.0
        %1660 = vmatpush2.xpose.msra.mxu0 0.0
        %1661 = vmatprep.subr.mxu0 0.0
        %1662 = vmatpush2.xpose.msra.mxu0 0.0
        %1663 = vmatprep.subr.mxu0 0.0
        %1664 = vmatpush2.xpose.msra.mxu0 0.0
        %1665 = vmatprep.subr.mxu0 0.0
        %1666 = vmatpush2.xpose.msra.mxu0 0.0
        %1667 = vmatprep.mubr.f32.mxu0 0.0
        %1668 = vmatmul.mubr.f32.gmra.mxu0 %v1592
        %v1669 = vpop.f32.mrf.mxu0
        %v1670 = vadd.f32 0.0, %v1669
        %v1671 = vpop.f32.mrf.mxu0
        %1672 = vmatprep.mubr.f32.mxu0 0.0
        %1673 = vmatmul.mubr.f32.gmra.mxu0 %v1595
        %v1674 = vpop.f32.mrf.mxu0
        %v1675 = vadd.f32 0.0, %v1674
        %v1676 = vpop.f32.mrf.mxu0
        %1677 = vdwg.mxu0
        %v1679 = vsel %vm372, %v338, 0
        %v1682 = vsel %vm372, %v339, 0
        %v1685 = vsel %vm372, %v370, 0
        %v1688 = vsel %vm372, %v371, 0
        %1690 = vmatprep.subr.mxu0 0.0
        %1691 = vmatpush1.xpose.msra.mxu0 0.0
        %1692 = vmatprep.subr.mxu0 0.0
        %1693 = vmatpush1.xpose.msra.mxu0 0.0
        %1694 = vmatprep.subr.mxu0 0.0
        %1695 = vmatpush1.xpose.msra.mxu0 0.0
        %1696 = vmatprep.subr.mxu0 0.0
        %1697 = vmatpush1.xpose.msra.mxu0 0.0
        %1698 = vmatprep.subr.mxu0 0.0
        %1699 = vmatpush1.xpose.msra.mxu0 0.0
        %1700 = vmatprep.subr.mxu0 0.0
        %1701 = vmatpush1.xpose.msra.mxu0 0.0
        %1702 = vmatprep.subr.mxu0 0.0
        %1703 = vmatpush1.xpose.msra.mxu0 0.0
        %1704 = vmatprep.subr.mxu0 0.0
        %1705 = vmatpush1.xpose.msra.mxu0 0.0
        %1706 = vmatprep.subr.mxu0 0.0
        %1707 = vmatpush1.xpose.msra.mxu0 0.0
        %1708 = vmatprep.subr.mxu0 0.0
        %1709 = vmatpush1.xpose.msra.mxu0 0.0
        %1710 = vmatprep.subr.mxu0 0.0
        %1711 = vmatpush1.xpose.msra.mxu0 0.0
        %1712 = vmatprep.subr.mxu0 0.0
        %1713 = vmatpush1.xpose.msra.mxu0 0.0
        %1714 = vmatprep.subr.mxu0 0.0
        %1715 = vmatpush1.xpose.msra.mxu0 0.0
        %1716 = vmatprep.subr.mxu0 0.0
        %1717 = vmatpush1.xpose.msra.mxu0 0.0
        %1718 = vmatprep.subr.mxu0 0.0
        %1719 = vmatpush1.xpose.msra.mxu0 %v1688
        %1720 = vmatprep.subr.mxu0 0.0
        %1721 = vmatpush1.xpose.msra.mxu0 %v1685
        %1722 = vmatprep.subr.mxu0 0.0
        %1723 = vmatpush2.xpose.msra.mxu0 0.0
        %1724 = vmatprep.subr.mxu0 0.0
        %1725 = vmatpush2.xpose.msra.mxu0 0.0
        %1726 = vmatprep.subr.mxu0 0.0
        %1727 = vmatpush2.xpose.msra.mxu0 0.0
        %1728 = vmatprep.subr.mxu0 0.0
        %1729 = vmatpush2.xpose.msra.mxu0 0.0
        %1730 = vmatprep.subr.mxu0 0.0
        %1731 = vmatpush2.xpose.msra.mxu0 0.0
        %1732 = vmatprep.subr.mxu0 0.0
        %1733 = vmatpush2.xpose.msra.mxu0 0.0
        %1734 = vmatprep.subr.mxu0 0.0
        %1735 = vmatpush2.xpose.msra.mxu0 0.0
        %1736 = vmatprep.subr.mxu0 0.0
        %1737 = vmatpush2.xpose.msra.mxu0 0.0
        %1738 = vmatprep.subr.mxu0 0.0
        %1739 = vmatpush2.xpose.msra.mxu0 0.0
        %1740 = vmatprep.subr.mxu0 0.0
        %1741 = vmatpush2.xpose.msra.mxu0 0.0
        %1742 = vmatprep.subr.mxu0 0.0
        %1743 = vmatpush2.xpose.msra.mxu0 0.0
        %1744 = vmatprep.subr.mxu0 0.0
        %1745 = vmatpush2.xpose.msra.mxu0 0.0
        %1746 = vmatprep.subr.mxu0 0.0
        %1747 = vmatpush2.xpose.msra.mxu0 0.0
        %1748 = vmatprep.subr.mxu0 0.0
        %1749 = vmatpush2.xpose.msra.mxu0 0.0
        %1750 = vmatprep.subr.mxu0 0.0
        %1751 = vmatpush2.xpose.msra.mxu0 0.0
        %1752 = vmatprep.subr.mxu0 0.0
        %1753 = vmatpush2.xpose.msra.mxu0 0.0
        %1754 = vmatprep.mubr.f32.mxu0 0.0
        %1755 = vmatmul.mubr.f32.gmra.mxu0 %v1679
        %v1756 = vpop.f32.mrf.mxu0
        %v1757 = vadd.f32 0.0, %v1756
        %v1758 = vpop.f32.mrf.mxu0
        %1759 = vmatprep.mubr.f32.mxu0 0.0
        %1760 = vmatmul.mubr.f32.gmra.mxu0 %v1682
        %v1761 = vpop.f32.mrf.mxu0
        %v1762 = vadd.f32 0.0, %v1761
        %v1763 = vpop.f32.mrf.mxu0
        %1764 = vdwg.mxu0
        %v1765 = vmul.f32 %v452, 0.25
        %v1766 = vmul.f32 %v457, 0.25
        %v1767 = vmul.f32 %v539, 0.25
        %v1768 = vmul.f32 %v544, 0.25
        %v1769 = vmul.f32 %v626, 0.25
        %v1770 = vmul.f32 %v631, 0.25
        %v1771 = vmul.f32 %v713, 0.25
        %v1772 = vmul.f32 %v718, 0.25
        %v1773 = vmul.f32 %v800, 0.25
        %v1774 = vmul.f32 %v805, 0.25
        %v1775 = vmul.f32 %v887, 0.25
        %v1776 = vmul.f32 %v892, 0.25
        %v1777 = vmul.f32 %v974, 0.25
        %v1778 = vmul.f32 %v979, 0.25
        %v1779 = vmul.f32 %v1061, 0.25
        %v1780 = vmul.f32 %v1066, 0.25
        %v1781 = vmul.f32 %v1148, 0.25
        %v1782 = vmul.f32 %v1153, 0.25
        %v1783 = vmul.f32 %v1235, 0.25
        %v1784 = vmul.f32 %v1240, 0.25
        %v1785 = vmul.f32 %v1322, 0.25
        %v1786 = vmul.f32 %v1327, 0.25
        %v1787 = vmul.f32 %v1409, 0.25
        %v1788 = vmul.f32 %v1414, 0.25
        %v1789 = vmul.f32 %v1496, 0.25
        %v1790 = vmul.f32 %v1501, 0.25
        %v1791 = vmul.f32 %v1583, 0.25
        %v1792 = vmul.f32 %v1588, 0.25
        %v1793 = vmul.f32 %v1670, 0.25
        %v1794 = vmul.f32 %v1675, 0.25
        %v1795 = vmul.f32 %v1757, 0.25
        %v1796 = vmul.f32 %v1762, 0.25
        %1797 = vst.msk [vmem:[#allocation2] sm:$0xff] %vm372, %v1765
        %1798 = vst.msk [vmem:[#allocation2 + $0x8] sm:$0xff] %vm372, %v1766
        %1799 = vst.msk [vmem:[#allocation2 + $0x10] sm:$0xff] %vm372, %v1767
        %1800 = vst.msk [vmem:[#allocation2 + $0x18] sm:$0xff] %vm372, %v1768
        %1801 = vst.msk [vmem:[#allocation2 + $0x20] sm:$0xff] %vm372, %v1769
        %1802 = vst.msk [vmem:[#allocation2 + $0x28] sm:$0xff] %vm372, %v1770
        %1803 = vst.msk [vmem:[#allocation2 + $0x30] sm:$0xff] %vm372, %v1771
        %1804 = vst.msk [vmem:[#allocation2 + $0x38] sm:$0xff] %vm372, %v1772
        %1805 = vst.msk [vmem:[#allocation2 + $0x40] sm:$0xff] %vm372, %v1773
        %1806 = vst.msk [vmem:[#allocation2 + $0x48] sm:$0xff] %vm372, %v1774
        %1807 = vst.msk [vmem:[#allocation2 + $0x50] sm:$0xff] %vm372, %v1775
        %1808 = vst.msk [vmem:[#allocation2 + $0x58] sm:$0xff] %vm372, %v1776
        %1809 = vst.msk [vmem:[#allocation2 + $0x60] sm:$0xff] %vm372, %v1777
        %1810 = vst.msk [vmem:[#allocation2 + $0x68] sm:$0xff] %vm372, %v1778
        %1811 = vst.msk [vmem:[#allocation2 + $0x70] sm:$0xff] %vm372, %v1779
        %1812 = vst.msk [vmem:[#allocation2 + $0x78] sm:$0xff] %vm372, %v1780
        %1813 = vst.msk [vmem:[#allocation2 + $0x80] sm:$0xff] %vm372, %v1781
        %1814 = vst.msk [vmem:[#allocation2 + $0x88] sm:$0xff] %vm372, %v1782
        %1815 = vst.msk [vmem:[#allocation2 + $0x90] sm:$0xff] %vm372, %v1783
        %1816 = vst.msk [vmem:[#allocation2 + $0x98] sm:$0xff] %vm372, %v1784
        %1817 = vst.msk [vmem:[#allocation2 + $0xa0] sm:$0xff] %vm372, %v1785
        %1818 = vst.msk [vmem:[#allocation2 + $0xa8] sm:$0xff] %vm372, %v1786
        %1819 = vst.msk [vmem:[#allocation2 + $0xb0] sm:$0xff] %vm372, %v1787
        %1820 = vst.msk [vmem:[#allocation2 + $0xb8] sm:$0xff] %vm372, %v1788
        %1821 = vst.msk [vmem:[#allocation2 + $0xc0] sm:$0xff] %vm372, %v1789
        %1822 = vst.msk [vmem:[#allocation2 + $0xc8] sm:$0xff] %vm372, %v1790
        %1823 = vst.msk [vmem:[#allocation2 + $0xd0] sm:$0xff] %vm372, %v1791
        %1824 = vst.msk [vmem:[#allocation2 + $0xd8] sm:$0xff] %vm372, %v1792
        %1825 = vst.msk [vmem:[#allocation2 + $0xe0] sm:$0xff] %vm372, %v1793
        %1826 = vst.msk [vmem:[#allocation2 + $0xe8] sm:$0xff] %vm372, %v1794
        %1827 = vst.msk [vmem:[#allocation2 + $0xf0] sm:$0xff] %vm372, %v1795
        %1828 = vst.msk [vmem:[#allocation2 + $0xf8] sm:$0xff] %vm372, %v1796
        %v1829 = vlaneseq
        %v1830 = vshrl.u32 %v1829, 7
        %v1831 = vadd.s32 %v1830, 8
        %v1832 = vlaneseq
        %v1833 = vand.u32 %v1832, 127
        %vm1834 = vcmp.eq.s32.totalorder %v1830, %v1833
        %vm1835 = vcmp.eq.s32.totalorder %v1831, %v1833
        %v1836 = vsel %vm1834, 1, 0
        %v1837 = vsel %vm1835, 1, 0
        %v1838 = vcvt.s32.f32 %v1836
        %v1839 = vcvt.s32.f32 %v1837
        %v1840 = vld [vmem:[#allocation9] sm:$0xff]
        %v1841 = vld [vmem:[#allocation9 + $0x8] sm:$0xff]
        %v1842 = vld [vmem:[#allocation2] sm:$0x1]
        %v1843 = vld [vmem:[#allocation2 + $0x10] sm:$0x1]
        %v1844 = vld [vmem:[#allocation2 + $0x20] sm:$0x1]
        %v1845 = vld [vmem:[#allocation2 + $0x30] sm:$0x1]
        %v1846 = vld [vmem:[#allocation2 + $0x40] sm:$0x1]
        %v1847 = vld [vmem:[#allocation2 + $0x50] sm:$0x1]
        %v1848 = vld [vmem:[#allocation2 + $0x60] sm:$0x1]
        %v1849 = vld [vmem:[#allocation2 + $0x70] sm:$0x1]
        %v1850 = vld [vmem:[#allocation2 + $0x80] sm:$0x1]
        %v1851 = vld [vmem:[#allocation2 + $0x90] sm:$0x1]
        %v1852 = vld [vmem:[#allocation2 + $0xa0] sm:$0x1]
        %v1853 = vld [vmem:[#allocation2 + $0xb0] sm:$0x1]
        %v1854 = vld [vmem:[#allocation2 + $0xc0] sm:$0x1]
        %v1855 = vld [vmem:[#allocation2 + $0xd0] sm:$0x1]
        %v1856 = vld [vmem:[#allocation2 + $0xe0] sm:$0x1]
        %v1857 = vld [vmem:[#allocation2 + $0xf0] sm:$0x1]
        %v1874 = vrot.slane %v1843, 7
        %vm1875 = vcmask 1041409
        %v1876 = vsel %vm1875, %v1874, %v1842
        %v1877 = vrot.slane %v1844, 6
        %vm1878 = vcmask 1042434
        %v1879 = vsel %vm1878, %v1877, %v1876
        %v1880 = vrot.slane %v1845, 5
        %vm1881 = vcmask 1043459
        %v1882 = vsel %vm1881, %v1880, %v1879
        %v1883 = vrot.slane %v1846, 4
        %vm1884 = vcmask 1044484
        %v1885 = vsel %vm1884, %v1883, %v1882
        %v1886 = vrot.slane %v1847, 3
        %vm1887 = vcmask 1045509
        %v1888 = vsel %vm1887, %v1886, %v1885
        %v1889 = vrot.slane %v1848, 2
        %vm1890 = vcmask 1046534
        %v1891 = vsel %vm1890, %v1889, %v1888
        %v1892 = vrot.slane %v1849, 1
        %vm1893 = vcmask 1047559
        %v1894 = vsel %vm1893, %v1892, %v1891
        %v1895 = vrot.slane %v1851, 7
        %v1896 = vsel %vm1875, %v1895, %v1850
        %v1897 = vrot.slane %v1852, 6
        %v1898 = vsel %vm1878, %v1897, %v1896
        %v1899 = vrot.slane %v1853, 5
        %v1900 = vsel %vm1881, %v1899, %v1898
        %v1901 = vrot.slane %v1854, 4
        %v1902 = vsel %vm1884, %v1901, %v1900
        %v1903 = vrot.slane %v1855, 3
        %v1904 = vsel %vm1887, %v1903, %v1902
        %v1905 = vrot.slane %v1856, 2
        %v1906 = vsel %vm1890, %v1905, %v1904
        %v1907 = vrot.slane %v1857, 1
        %v1908 = vsel %vm1893, %v1907, %v1906
        %v1910 = vsel %vm372, %v1838, 0
        %v1913 = vsel %vm372, %v1839, 0
        %v1915 = vsel %vm372, %v1894, 0
        %v1917 = vsel %vm372, %v1908, 0
        %1919 = vmatprep.subr.mxu0 0.0
        %1920 = vmatpush1.xpose.msra.mxu0 0.0
        %1921 = vmatprep.subr.mxu0 0.0
        %1922 = vmatpush1.xpose.msra.mxu0 0.0
        %1923 = vmatprep.subr.mxu0 0.0
        %1924 = vmatpush1.xpose.msra.mxu0 0.0
        %1925 = vmatprep.subr.mxu0 0.0
        %1926 = vmatpush1.xpose.msra.mxu0 0.0
        %1927 = vmatprep.subr.mxu0 0.0
        %1928 = vmatpush1.xpose.msra.mxu0 0.0
        %1929 = vmatprep.subr.mxu0 0.0
        %1930 = vmatpush1.xpose.msra.mxu0 0.0
        %1931 = vmatprep.subr.mxu0 0.0
        %1932 = vmatpush1.xpose.msra.mxu0 0.0
        %1933 = vmatprep.subr.mxu0 0.0
        %1934 = vmatpush1.xpose.msra.mxu0 0.0
        %1935 = vmatprep.subr.mxu0 0.0
        %1936 = vmatpush1.xpose.msra.mxu0 0.0
        %1937 = vmatprep.subr.mxu0 0.0
        %1938 = vmatpush1.xpose.msra.mxu0 0.0
        %1939 = vmatprep.subr.mxu0 0.0
        %1940 = vmatpush1.xpose.msra.mxu0 0.0
        %1941 = vmatprep.subr.mxu0 0.0
        %1942 = vmatpush1.xpose.msra.mxu0 0.0
        %1943 = vmatprep.subr.mxu0 0.0
        %1944 = vmatpush1.xpose.msra.mxu0 0.0
        %1945 = vmatprep.subr.mxu0 0.0
        %1946 = vmatpush1.xpose.msra.mxu0 0.0
        %1947 = vmatprep.subr.mxu0 0.0
        %1948 = vmatpush1.xpose.msra.mxu0 %v1917
        %1949 = vmatprep.subr.mxu0 0.0
        %1950 = vmatpush1.xpose.msra.mxu0 %v1915
        %1951 = vmatprep.subr.mxu0 0.0
        %1952 = vmatpush2.xpose.msra.mxu0 0.0
        %1953 = vmatprep.subr.mxu0 0.0
        %1954 = vmatpush2.xpose.msra.mxu0 0.0
        %1955 = vmatprep.subr.mxu0 0.0
        %1956 = vmatpush2.xpose.msra.mxu0 0.0
        %1957 = vmatprep.subr.mxu0 0.0
        %1958 = vmatpush2.xpose.msra.mxu0 0.0
        %1959 = vmatprep.subr.mxu0 0.0
        %1960 = vmatpush2.xpose.msra.mxu0 0.0
        %1961 = vmatprep.subr.mxu0 0.0
        %1962 = vmatpush2.xpose.msra.mxu0 0.0
        %1963 = vmatprep.subr.mxu0 0.0
        %1964 = vmatpush2.xpose.msra.mxu0 0.0
        %1965 = vmatprep.subr.mxu0 0.0
        %1966 = vmatpush2.xpose.msra.mxu0 0.0
        %1967 = vmatprep.subr.mxu0 0.0
        %1968 = vmatpush2.xpose.msra.mxu0 0.0
        %1969 = vmatprep.subr.mxu0 0.0
        %1970 = vmatpush2.xpose.msra.mxu0 0.0
        %1971 = vmatprep.subr.mxu0 0.0
        %1972 = vmatpush2.xpose.msra.mxu0 0.0
        %1973 = vmatprep.subr.mxu0 0.0
        %1974 = vmatpush2.xpose.msra.mxu0 0.0
        %1975 = vmatprep.subr.mxu0 0.0
        %1976 = vmatpush2.xpose.msra.mxu0 0.0
        %1977 = vmatprep.subr.mxu0 0.0
        %1978 = vmatpush2.xpose.msra.mxu0 0.0
        %1979 = vmatprep.subr.mxu0 0.0
        %1980 = vmatpush2.xpose.msra.mxu0 0.0
        %1981 = vmatprep.subr.mxu0 0.0
        %1982 = vmatpush2.xpose.msra.mxu0 0.0
        %1983 = vmatprep.mubr.f32.mxu0 0.0
        %1984 = vmatmul.mubr.f32.gmra.mxu0 %v1910
        %v1985 = vpop.f32.mrf.mxu0
        %v1986 = vadd.f32 %v1840, %v1985
        %v1987 = vpop.f32.mrf.mxu0
        %1988 = vmatprep.mubr.f32.mxu0 0.0
        %1989 = vmatmul.mubr.f32.gmra.mxu0 %v1913
        %v1990 = vpop.f32.mrf.mxu0
        %v1991 = vadd.f32 %v1841, %v1990
        %v1992 = vpop.f32.mrf.mxu0
        %1993 = vdwg.mxu0
        %v1994 = vsel %vm372, %v1986, -inf
        %1995 = vmax.xlane.f32.xlu0 %v1994
        %v1996 = vpop.xlane.xlu0 %1995
        %v1997 = vsel %vm372, %v1991, -inf
        %1998 = vmax.xlane.f32.xlu0 %v1997
        %v1999 = vpop.xlane.xlu0 %1998
        %v2000 = vsub.f32 %v1986, %v1996
        %v2001 = vsub.f32 %v1991, %v1999
        %v2002 = vmul.f32 %v2000, 1.442695
        %v2003 = vpow.pop %v2002
        %v2004 = vmul.f32 %v2001, 1.442695
        %v2005 = vpow.pop %v2004
        %v2006 = vsel %vm372, %v2003, 0.0
        %2007 = vadd.xlane.f32.xlu0 %v2006
        %v2008 = vpop.xlane.xlu0 %2007
        %v2009 = vsel %vm372, %v2005, 0.0
        %2010 = vadd.xlane.f32.xlu0 %v2009
        %v2011 = vpop.xlane.xlu0 %2010
        %v2012 = vrcp.pop %v2008
        %v2013 = vrcp.pop %v2011
        %v2014 = vmul.f32 %v2003, %v2012
        %v2015 = vmul.f32 %v2005, %v2013
        %v2016 = vld [vmem:[%s269] sm:$0xff]
        %v2017 = vld [vmem:[%s269 + $0x8] sm:$0xff]
        %v2019 = vsel %vm372, %v2014, 0
        %v2022 = vsel %vm372, %v2015, 0
        %2024 = vmatprep.subr.mxu0 0.0
        %2025 = vmatpush1.msra.mxu0 0.0
        %2026 = vmatprep.subr.mxu0 0.0
        %2027 = vmatpush1.msra.mxu0 0.0
        %2028 = vmatprep.subr.mxu0 0.0
        %2029 = vmatpush1.msra.mxu0 0.0
        %2030 = vmatprep.subr.mxu0 0.0
        %2031 = vmatpush1.msra.mxu0 0.0
        %2032 = vmatprep.subr.mxu0 0.0
        %2033 = vmatpush1.msra.mxu0 0.0
        %2034 = vmatprep.subr.mxu0 0.0
        %2035 = vmatpush1.msra.mxu0 0.0
        %2036 = vmatprep.subr.mxu0 0.0
        %2037 = vmatpush1.msra.mxu0 0.0
        %2038 = vmatprep.subr.mxu0 0.0
        %2039 = vmatpush1.msra.mxu0 0.0
        %2040 = vmatprep.subr.mxu0 0.0
        %2041 = vmatpush1.msra.mxu0 0.0
        %2042 = vmatprep.subr.mxu0 0.0
        %2043 = vmatpush1.msra.mxu0 0.0
        %2044 = vmatprep.subr.mxu0 0.0
        %2045 = vmatpush1.msra.mxu0 0.0
        %2046 = vmatprep.subr.mxu0 0.0
        %2047 = vmatpush1.msra.mxu0 0.0
        %2048 = vmatprep.subr.mxu0 0.0
        %2049 = vmatpush1.msra.mxu0 0.0
        %2050 = vmatprep.subr.mxu0 0.0
        %2051 = vmatpush1.msra.mxu0 0.0
        %2052 = vmatprep.subr.mxu0 0.0
        %2053 = vmatpush1.msra.mxu0 %v2017
        %2054 = vmatprep.subr.mxu0 0.0
        %2055 = vmatpush1.msra.mxu0 %v2016
        %2056 = vmatprep.subr.mxu0 0.0
        %2057 = vmatpush2.msra.mxu0 0.0
        %2058 = vmatprep.subr.mxu0 0.0
        %2059 = vmatpush2.msra.mxu0 0.0
        %2060 = vmatprep.subr.mxu0 0.0
        %2061 = vmatpush2.msra.mxu0 0.0
        %2062 = vmatprep.subr.mxu0 0.0
        %2063 = vmatpush2.msra.mxu0 0.0
        %2064 = vmatprep.subr.mxu0 0.0
        %2065 = vmatpush2.msra.mxu0 0.0
        %2066 = vmatprep.subr.mxu0 0.0
        %2067 = vmatpush2.msra.mxu0 0.0
        %2068 = vmatprep.subr.mxu0 0.0
        %2069 = vmatpush2.msra.mxu0 0.0
        %2070 = vmatprep.subr.mxu0 0.0
        %2071 = vmatpush2.msra.mxu0 0.0
        %2072 = vmatprep.subr.mxu0 0.0
        %2073 = vmatpush2.msra.mxu0 0.0
        %2074 = vmatprep.subr.mxu0 0.0
        %2075 = vmatpush2.msra.mxu0 0.0
        %2076 = vmatprep.subr.mxu0 0.0
        %2077 = vmatpush2.msra.mxu0 0.0
        %2078 = vmatprep.subr.mxu0 0.0
        %2079 = vmatpush2.msra.mxu0 0.0
        %2080 = vmatprep.subr.mxu0 0.0
        %2081 = vmatpush2.msra.mxu0 0.0
        %2082 = vmatprep.subr.mxu0 0.0
        %2083 = vmatpush2.msra.mxu0 0.0
        %2084 = vmatprep.subr.mxu0 0.0
        %2085 = vmatpush2.msra.mxu0 0.0
        %2086 = vmatprep.subr.mxu0 0.0
        %2087 = vmatpush2.msra.mxu0 0.0
        %2088 = vmatprep.mubr.f32.mxu0 0.0
        %2089 = vmatmul.mubr.f32.gmra.mxu0 %v2019
        %v2090 = vpop.f32.mrf.mxu0
        %v2091 = vadd.f32 0.0, %v2090
        %v2092 = vpop.f32.mrf.mxu0
        %2093 = vmatprep.mubr.f32.mxu0 0.0
        %2094 = vmatmul.mubr.f32.gmra.mxu0 %v2022
        %v2095 = vpop.f32.mrf.mxu0
        %v2096 = vadd.f32 0.0, %v2095
        %v2097 = vpop.f32.mrf.mxu0
        %2098 = vdwg.mxu0
        %2099 = vst.msk [vmem:[%s307] sm:$0xff] %vm372, %v2091
        %2100 = vst.msk [vmem:[%s307 + $0x8] sm:$0xff] %vm372, %v2096
        %v2101 = vld [vmem:[#allocation2 + $0x1] sm:$0x1]
        %v2102 = vld [vmem:[#allocation2 + $0x11] sm:$0x1]
        %v2103 = vld [vmem:[#allocation2 + $0x21] sm:$0x1]
        %v2104 = vld [vmem:[#allocation2 + $0x31] sm:$0x1]
        %v2105 = vld [vmem:[#allocation2 + $0x41] sm:$0x1]
        %v2106 = vld [vmem:[#allocation2 + $0x51] sm:$0x1]
        %v2107 = vld [vmem:[#allocation2 + $0x61] sm:$0x1]
        %v2108 = vld [vmem:[#allocation2 + $0x71] sm:$0x1]
        %v2109 = vld [vmem:[#allocation2 + $0x81] sm:$0x1]
        %v2110 = vld [vmem:[#allocation2 + $0x91] sm:$0x1]
        %v2111 = vld [vmem:[#allocation2 + $0xa1] sm:$0x1]
        %v2112 = vld [vmem:[#allocation2 + $0xb1] sm:$0x1]
        %v2113 = vld [vmem:[#allocation2 + $0xc1] sm:$0x1]
        %v2114 = vld [vmem:[#allocation2 + $0xd1] sm:$0x1]
        %v2115 = vld [vmem:[#allocation2 + $0xe1] sm:$0x1]
        %v2116 = vld [vmem:[#allocation2 + $0xf1] sm:$0x1]
        %v2133 = vrot.slane %v2102, 7
        %v2134 = vsel %vm1875, %v2133, %v2101
        %v2135 = vrot.slane %v2103, 6
        %v2136 = vsel %vm1878, %v2135, %v2134
        %v2137 = vrot.slane %v2104, 5
        %v2138 = vsel %vm1881, %v2137, %v2136
        %v2139 = vrot.slane %v2105, 4
        %v2140 = vsel %vm1884, %v2139, %v2138
        %v2141 = vrot.slane %v2106, 3
        %v2142 = vsel %vm1887, %v2141, %v2140
        %v2143 = vrot.slane %v2107, 2
        %v2144 = vsel %vm1890, %v2143, %v2142
        %v2145 = vrot.slane %v2108, 1
        %v2146 = vsel %vm1893, %v2145, %v2144
        %v2147 = vrot.slane %v2110, 7
        %v2148 = vsel %vm1875, %v2147, %v2109
        %v2149 = vrot.slane %v2111, 6
        %v2150 = vsel %vm1878, %v2149, %v2148
        %v2151 = vrot.slane %v2112, 5
        %v2152 = vsel %vm1881, %v2151, %v2150
        %v2153 = vrot.slane %v2113, 4
        %v2154 = vsel %vm1884, %v2153, %v2152
        %v2155 = vrot.slane %v2114, 3
        %v2156 = vsel %vm1887, %v2155, %v2154
        %v2157 = vrot.slane %v2115, 2
        %v2158 = vsel %vm1890, %v2157, %v2156
        %v2159 = vrot.slane %v2116, 1
        %v2160 = vsel %vm1893, %v2159, %v2158
        %v2161 = vsel %vm372, %v2146, 0
        %v2163 = vsel %vm372, %v2160, 0
        %2165 = vmatprep.subr.mxu0 0.0
        %2166 = vmatpush1.xpose.msra.mxu0 0.0
        %2167 = vmatprep.subr.mxu0 0.0
        %2168 = vmatpush1.xpose.msra.mxu0 0.0
        %2169 = vmatprep.subr.mxu0 0.0
        %2170 = vmatpush1.xpose.msra.mxu0 0.0
        %2171 = vmatprep.subr.mxu0 0.0
        %2172 = vmatpush1.xpose.msra.mxu0 0.0
        %2173 = vmatprep.subr.mxu0 0.0
        %2174 = vmatpush1.xpose.msra.mxu0 0.0
        %2175 = vmatprep.subr.mxu0 0.0
        %2176 = vmatpush1.xpose.msra.mxu0 0.0
        %2177 = vmatprep.subr.mxu0 0.0
        %2178 = vmatpush1.xpose.msra.mxu0 0.0
        %2179 = vmatprep.subr.mxu0 0.0
        %2180 = vmatpush1.xpose.msra.mxu0 0.0
        %2181 = vmatprep.subr.mxu0 0.0
        %2182 = vmatpush1.xpose.msra.mxu0 0.0
        %2183 = vmatprep.subr.mxu0 0.0
        %2184 = vmatpush1.xpose.msra.mxu0 0.0
        %2185 = vmatprep.subr.mxu0 0.0
        %2186 = vmatpush1.xpose.msra.mxu0 0.0
        %2187 = vmatprep.subr.mxu0 0.0
        %2188 = vmatpush1.xpose.msra.mxu0 0.0
        %2189 = vmatprep.subr.mxu0 0.0
        %2190 = vmatpush1.xpose.msra.mxu0 0.0
        %2191 = vmatprep.subr.mxu0 0.0
        %2192 = vmatpush1.xpose.msra.mxu0 0.0
        %2193 = vmatprep.subr.mxu0 0.0
        %2194 = vmatpush1.xpose.msra.mxu0 %v2163
        %2195 = vmatprep.subr.mxu0 0.0
        %2196 = vmatpush1.xpose.msra.mxu0 %v2161
        %2197 = vmatprep.subr.mxu0 0.0
        %2198 = vmatpush2.xpose.msra.mxu0 0.0
        %2199 = vmatprep.subr.mxu0 0.0
        %2200 = vmatpush2.xpose.msra.mxu0 0.0
        %2201 = vmatprep.subr.mxu0 0.0
        %2202 = vmatpush2.xpose.msra.mxu0 0.0
        %2203 = vmatprep.subr.mxu0 0.0
        %2204 = vmatpush2.xpose.msra.mxu0 0.0
        %2205 = vmatprep.subr.mxu0 0.0
        %2206 = vmatpush2.xpose.msra.mxu0 0.0
        %2207 = vmatprep.subr.mxu0 0.0
        %2208 = vmatpush2.xpose.msra.mxu0 0.0
        %2209 = vmatprep.subr.mxu0 0.0
        %2210 = vmatpush2.xpose.msra.mxu0 0.0
        %2211 = vmatprep.subr.mxu0 0.0
        %2212 = vmatpush2.xpose.msra.mxu0 0.0
        %2213 = vmatprep.subr.mxu0 0.0
        %2214 = vmatpush2.xpose.msra.mxu0 0.0
        %2215 = vmatprep.subr.mxu0 0.0
        %2216 = vmatpush2.xpose.msra.mxu0 0.0
        %2217 = vmatprep.subr.mxu0 0.0
        %2218 = vmatpush2.xpose.msra.mxu0 0.0
        %2219 = vmatprep.subr.mxu0 0.0
        %2220 = vmatpush2.xpose.msra.mxu0 0.0
        %2221 = vmatprep.subr.mxu0 0.0
        %2222 = vmatpush2.xpose.msra.mxu0 0.0
        %2223 = vmatprep.subr.mxu0 0.0
        %2224 = vmatpush2.xpose.msra.mxu0 0.0
        %2225 = vmatprep.subr.mxu0 0.0
        %2226 = vmatpush2.xpose.msra.mxu0 0.0
        %2227 = vmatprep.subr.mxu0 0.0
        %2228 = vmatpush2.xpose.msra.mxu0 0.0
        %2229 = vmatprep.mubr.f32.mxu0 0.0
        %2230 = vmatmul.mubr.f32.gmra.mxu0 %v1910
        %v2231 = vpop.f32.mrf.mxu0
        %v2232 = vadd.f32 %v1840, %v2231
        %v2233 = vpop.f32.mrf.mxu0
        %2234 = vmatprep.mubr.f32.mxu0 0.0
        %2235 = vmatmul.mubr.f32.gmra.mxu0 %v1913
        %v2236 = vpop.f32.mrf.mxu0
        %v2237 = vadd.f32 %v1841, %v2236
        %v2238 = vpop.f32.mrf.mxu0
        %2239 = vdwg.mxu0
        %v2240 = vsel %vm372, %v2232, -inf
        %2241 = vmax.xlane.f32.xlu0 %v2240
        %v2242 = vpop.xlane.xlu0 %2241
        %v2243 = vsel %vm372, %v2237, -inf
        %2244 = vmax.xlane.f32.xlu0 %v2243
        %v2245 = vpop.xlane.xlu0 %2244
        %v2246 = vsub.f32 %v2232, %v2242
        %v2247 = vsub.f32 %v2237, %v2245
        %v2248 = vmul.f32 %v2246, 1.442695
        %v2249 = vpow.pop %v2248
        %v2250 = vmul.f32 %v2247, 1.442695
        %v2251 = vpow.pop %v2250
        %v2252 = vsel %vm372, %v2249, 0.0
        %2253 = vadd.xlane.f32.xlu0 %v2252
        %v2254 = vpop.xlane.xlu0 %2253
        %v2255 = vsel %vm372, %v2251, 0.0
        %2256 = vadd.xlane.f32.xlu0 %v2255
        %v2257 = vpop.xlane.xlu0 %2256
        %v2258 = vrcp.pop %v2254
        %v2259 = vrcp.pop %v2257
        %v2260 = vmul.f32 %v2249, %v2258
        %v2261 = vmul.f32 %v2251, %v2259
        %s2262 = scalar_lea.vmem %s269, 16 [#allocation8]
        %v2263 = vld [vmem:[%s2262] sm:$0xff]
        %v2264 = vld [vmem:[%s2262 + $0x8] sm:$0xff]
        %v2266 = vsel %vm372, %v2260, 0
        %v2269 = vsel %vm372, %v2261, 0
        %2271 = vmatprep.subr.mxu0 0.0
        %2272 = vmatpush1.msra.mxu0 0.0
        %2273 = vmatprep.subr.mxu0 0.0
        %2274 = vmatpush1.msra.mxu0 0.0
        %2275 = vmatprep.subr.mxu0 0.0
        %2276 = vmatpush1.msra.mxu0 0.0
        %2277 = vmatprep.subr.mxu0 0.0
        %2278 = vmatpush1.msra.mxu0 0.0
        %2279 = vmatprep.subr.mxu0 0.0
        %2280 = vmatpush1.msra.mxu0 0.0
        %2281 = vmatprep.subr.mxu0 0.0
        %2282 = vmatpush1.msra.mxu0 0.0
        %2283 = vmatprep.subr.mxu0 0.0
        %2284 = vmatpush1.msra.mxu0 0.0
        %2285 = vmatprep.subr.mxu0 0.0
        %2286 = vmatpush1.msra.mxu0 0.0
        %2287 = vmatprep.subr.mxu0 0.0
        %2288 = vmatpush1.msra.mxu0 0.0
        %2289 = vmatprep.subr.mxu0 0.0
        %2290 = vmatpush1.msra.mxu0 0.0
        %2291 = vmatprep.subr.mxu0 0.0
        %2292 = vmatpush1.msra.mxu0 0.0
        %2293 = vmatprep.subr.mxu0 0.0
        %2294 = vmatpush1.msra.mxu0 0.0
        %2295 = vmatprep.subr.mxu0 0.0
        %2296 = vmatpush1.msra.mxu0 0.0
        %2297 = vmatprep.subr.mxu0 0.0
        %2298 = vmatpush1.msra.mxu0 0.0
        %2299 = vmatprep.subr.mxu0 0.0
        %2300 = vmatpush1.msra.mxu0 %v2264
        %2301 = vmatprep.subr.mxu0 0.0
        %2302 = vmatpush1.msra.mxu0 %v2263
        %2303 = vmatprep.subr.mxu0 0.0
        %2304 = vmatpush2.msra.mxu0 0.0
        %2305 = vmatprep.subr.mxu0 0.0
        %2306 = vmatpush2.msra.mxu0 0.0
        %2307 = vmatprep.subr.mxu0 0.0
        %2308 = vmatpush2.msra.mxu0 0.0
        %2309 = vmatprep.subr.mxu0 0.0
        %2310 = vmatpush2.msra.mxu0 0.0
        %2311 = vmatprep.subr.mxu0 0.0
        %2312 = vmatpush2.msra.mxu0 0.0
        %2313 = vmatprep.subr.mxu0 0.0
        %2314 = vmatpush2.msra.mxu0 0.0
        %2315 = vmatprep.subr.mxu0 0.0
        %2316 = vmatpush2.msra.mxu0 0.0
        %2317 = vmatprep.subr.mxu0 0.0
        %2318 = vmatpush2.msra.mxu0 0.0
        %2319 = vmatprep.subr.mxu0 0.0
        %2320 = vmatpush2.msra.mxu0 0.0
        %2321 = vmatprep.subr.mxu0 0.0
        %2322 = vmatpush2.msra.mxu0 0.0
        %2323 = vmatprep.subr.mxu0 0.0
        %2324 = vmatpush2.msra.mxu0 0.0
        %2325 = vmatprep.subr.mxu0 0.0
        %2326 = vmatpush2.msra.mxu0 0.0
        %2327 = vmatprep.subr.mxu0 0.0
        %2328 = vmatpush2.msra.mxu0 0.0
        %2329 = vmatprep.subr.mxu0 0.0
        %2330 = vmatpush2.msra.mxu0 0.0
        %2331 = vmatprep.subr.mxu0 0.0
        %2332 = vmatpush2.msra.mxu0 0.0
        %2333 = vmatprep.subr.mxu0 0.0
        %2334 = vmatpush2.msra.mxu0 0.0
        %2335 = vmatprep.mubr.f32.mxu0 0.0
        %2336 = vmatmul.mubr.f32.gmra.mxu0 %v2266
        %v2337 = vpop.f32.mrf.mxu0
        %v2338 = vadd.f32 0.0, %v2337
        %v2339 = vpop.f32.mrf.mxu0
        %2340 = vmatprep.mubr.f32.mxu0 0.0
        %2341 = vmatmul.mubr.f32.gmra.mxu0 %v2269
        %v2342 = vpop.f32.mrf.mxu0
        %v2343 = vadd.f32 0.0, %v2342
        %v2344 = vpop.f32.mrf.mxu0
        %2345 = vdwg.mxu0
        %s2346 = scalar_lea.vmem %s307, 16 [#allocation11]
        %2347 = vst.msk [vmem:[%s2346] sm:$0xff] %vm372, %v2338
        %2348 = vst.msk [vmem:[%s2346 + $0x8] sm:$0xff] %vm372, %v2343
        %v2349 = vld [vmem:[#allocation2 + $0x2] sm:$0x1]
        %v2350 = vld [vmem:[#allocation2 + $0x12] sm:$0x1]
        %v2351 = vld [vmem:[#allocation2 + $0x22] sm:$0x1]
        %v2352 = vld [vmem:[#allocation2 + $0x32] sm:$0x1]
        %v2353 = vld [vmem:[#allocation2 + $0x42] sm:$0x1]
        %v2354 = vld [vmem:[#allocation2 + $0x52] sm:$0x1]
        %v2355 = vld [vmem:[#allocation2 + $0x62] sm:$0x1]
        %v2356 = vld [vmem:[#allocation2 + $0x72] sm:$0x1]
        %v2357 = vld [vmem:[#allocation2 + $0x82] sm:$0x1]
        %v2358 = vld [vmem:[#allocation2 + $0x92] sm:$0x1]
        %v2359 = vld [vmem:[#allocation2 + $0xa2] sm:$0x1]
        %v2360 = vld [vmem:[#allocation2 + $0xb2] sm:$0x1]
        %v2361 = vld [vmem:[#allocation2 + $0xc2] sm:$0x1]
        %v2362 = vld [vmem:[#allocation2 + $0xd2] sm:$0x1]
        %v2363 = vld [vmem:[#allocation2 + $0xe2] sm:$0x1]
        %v2364 = vld [vmem:[#allocation2 + $0xf2] sm:$0x1]
        %v2381 = vrot.slane %v2350, 7
        %v2382 = vsel %vm1875, %v2381, %v2349
        %v2383 = vrot.slane %v2351, 6
        %v2384 = vsel %vm1878, %v2383, %v2382
        %v2385 = vrot.slane %v2352, 5
        %v2386 = vsel %vm1881, %v2385, %v2384
        %v2387 = vrot.slane %v2353, 4
        %v2388 = vsel %vm1884, %v2387, %v2386
        %v2389 = vrot.slane %v2354, 3
        %v2390 = vsel %vm1887, %v2389, %v2388
        %v2391 = vrot.slane %v2355, 2
        %v2392 = vsel %vm1890, %v2391, %v2390
        %v2393 = vrot.slane %v2356, 1
        %v2394 = vsel %vm1893, %v2393, %v2392
        %v2395 = vrot.slane %v2358, 7
        %v2396 = vsel %vm1875, %v2395, %v2357
        %v2397 = vrot.slane %v2359, 6
        %v2398 = vsel %vm1878, %v2397, %v2396
        %v2399 = vrot.slane %v2360, 5
        %v2400 = vsel %vm1881, %v2399, %v2398
        %v2401 = vrot.slane %v2361, 4
        %v2402 = vsel %vm1884, %v2401, %v2400
        %v2403 = vrot.slane %v2362, 3
        %v2404 = vsel %vm1887, %v2403, %v2402
        %v2405 = vrot.slane %v2363, 2
        %v2406 = vsel %vm1890, %v2405, %v2404
        %v2407 = vrot.slane %v2364, 1
        %v2408 = vsel %vm1893, %v2407, %v2406
        %v2409 = vsel %vm372, %v2394, 0
        %v2411 = vsel %vm372, %v2408, 0
        %2413 = vmatprep.subr.mxu0 0.0
        %2414 = vmatpush1.xpose.msra.mxu0 0.0
        %2415 = vmatprep.subr.mxu0 0.0
        %2416 = vmatpush1.xpose.msra.mxu0 0.0
        %2417 = vmatprep.subr.mxu0 0.0
        %2418 = vmatpush1.xpose.msra.mxu0 0.0
        %2419 = vmatprep.subr.mxu0 0.0
        %2420 = vmatpush1.xpose.msra.mxu0 0.0
        %2421 = vmatprep.subr.mxu0 0.0
        %2422 = vmatpush1.xpose.msra.mxu0 0.0
        %2423 = vmatprep.subr.mxu0 0.0
        %2424 = vmatpush1.xpose.msra.mxu0 0.0
        %2425 = vmatprep.subr.mxu0 0.0
        %2426 = vmatpush1.xpose.msra.mxu0 0.0
        %2427 = vmatprep.subr.mxu0 0.0
        %2428 = vmatpush1.xpose.msra.mxu0 0.0
        %2429 = vmatprep.subr.mxu0 0.0
        %2430 = vmatpush1.xpose.msra.mxu0 0.0
        %2431 = vmatprep.subr.mxu0 0.0
        %2432 = vmatpush1.xpose.msra.mxu0 0.0
        %2433 = vmatprep.subr.mxu0 0.0
        %2434 = vmatpush1.xpose.msra.mxu0 0.0
        %2435 = vmatprep.subr.mxu0 0.0
        %2436 = vmatpush1.xpose.msra.mxu0 0.0
        %2437 = vmatprep.subr.mxu0 0.0
        %2438 = vmatpush1.xpose.msra.mxu0 0.0
        %2439 = vmatprep.subr.mxu0 0.0
        %2440 = vmatpush1.xpose.msra.mxu0 0.0
        %2441 = vmatprep.subr.mxu0 0.0
        %2442 = vmatpush1.xpose.msra.mxu0 %v2411
        %2443 = vmatprep.subr.mxu0 0.0
        %2444 = vmatpush1.xpose.msra.mxu0 %v2409
        %2445 = vmatprep.subr.mxu0 0.0
        %2446 = vmatpush2.xpose.msra.mxu0 0.0
        %2447 = vmatprep.subr.mxu0 0.0
        %2448 = vmatpush2.xpose.msra.mxu0 0.0
        %2449 = vmatprep.subr.mxu0 0.0
        %2450 = vmatpush2.xpose.msra.mxu0 0.0
        %2451 = vmatprep.subr.mxu0 0.0
        %2452 = vmatpush2.xpose.msra.mxu0 0.0
        %2453 = vmatprep.subr.mxu0 0.0
        %2454 = vmatpush2.xpose.msra.mxu0 0.0
        %2455 = vmatprep.subr.mxu0 0.0
        %2456 = vmatpush2.xpose.msra.mxu0 0.0
        %2457 = vmatprep.subr.mxu0 0.0
        %2458 = vmatpush2.xpose.msra.mxu0 0.0
        %2459 = vmatprep.subr.mxu0 0.0
        %2460 = vmatpush2.xpose.msra.mxu0 0.0
        %2461 = vmatprep.subr.mxu0 0.0
        %2462 = vmatpush2.xpose.msra.mxu0 0.0
        %2463 = vmatprep.subr.mxu0 0.0
        %2464 = vmatpush2.xpose.msra.mxu0 0.0
        %2465 = vmatprep.subr.mxu0 0.0
        %2466 = vmatpush2.xpose.msra.mxu0 0.0
        %2467 = vmatprep.subr.mxu0 0.0
        %2468 = vmatpush2.xpose.msra.mxu0 0.0
        %2469 = vmatprep.subr.mxu0 0.0
        %2470 = vmatpush2.xpose.msra.mxu0 0.0
        %2471 = vmatprep.subr.mxu0 0.0
        %2472 = vmatpush2.xpose.msra.mxu0 0.0
        %2473 = vmatprep.subr.mxu0 0.0
        %2474 = vmatpush2.xpose.msra.mxu0 0.0
        %2475 = vmatprep.subr.mxu0 0.0
        %2476 = vmatpush2.xpose.msra.mxu0 0.0
        %2477 = vmatprep.mubr.f32.mxu0 0.0
        %2478 = vmatmul.mubr.f32.gmra.mxu0 %v1910
        %v2479 = vpop.f32.mrf.mxu0
        %v2480 = vadd.f32 %v1840, %v2479
        %v2481 = vpop.f32.mrf.mxu0
        %2482 = vmatprep.mubr.f32.mxu0 0.0
        %2483 = vmatmul.mubr.f32.gmra.mxu0 %v1913
        %v2484 = vpop.f32.mrf.mxu0
        %v2485 = vadd.f32 %v1841, %v2484
        %v2486 = vpop.f32.mrf.mxu0
        %2487 = vdwg.mxu0
        %v2488 = vsel %vm372, %v2480, -inf
        %2489 = vmax.xlane.f32.xlu0 %v2488
        %v2490 = vpop.xlane.xlu0 %2489
        %v2491 = vsel %vm372, %v2485, -inf
        %2492 = vmax.xlane.f32.xlu0 %v2491
        %v2493 = vpop.xlane.xlu0 %2492
        %v2494 = vsub.f32 %v2480, %v2490
        %v2495 = vsub.f32 %v2485, %v2493
        %v2496 = vmul.f32 %v2494, 1.442695
        %v2497 = vpow.pop %v2496
        %v2498 = vmul.f32 %v2495, 1.442695
        %v2499 = vpow.pop %v2498
        %v2500 = vsel %vm372, %v2497, 0.0
        %2501 = vadd.xlane.f32.xlu0 %v2500
        %v2502 = vpop.xlane.xlu0 %2501
        %v2503 = vsel %vm372, %v2499, 0.0
        %2504 = vadd.xlane.f32.xlu0 %v2503
        %v2505 = vpop.xlane.xlu0 %2504
        %v2506 = vrcp.pop %v2502
        %v2507 = vrcp.pop %v2505
        %v2508 = vmul.f32 %v2497, %v2506
        %v2509 = vmul.f32 %v2499, %v2507
        %s2510 = scalar_lea.vmem %s269, 32 [#allocation8]
        %v2511 = vld [vmem:[%s2510] sm:$0xff]
        %v2512 = vld [vmem:[%s2510 + $0x8] sm:$0xff]
        %v2514 = vsel %vm372, %v2508, 0
        %v2517 = vsel %vm372, %v2509, 0
        %2519 = vmatprep.subr.mxu0 0.0
        %2520 = vmatpush1.msra.mxu0 0.0
        %2521 = vmatprep.subr.mxu0 0.0
        %2522 = vmatpush1.msra.mxu0 0.0
        %2523 = vmatprep.subr.mxu0 0.0
        %2524 = vmatpush1.msra.mxu0 0.0
        %2525 = vmatprep.subr.mxu0 0.0
        %2526 = vmatpush1.msra.mxu0 0.0
        %2527 = vmatprep.subr.mxu0 0.0
        %2528 = vmatpush1.msra.mxu0 0.0
        %2529 = vmatprep.subr.mxu0 0.0
        %2530 = vmatpush1.msra.mxu0 0.0
        %2531 = vmatprep.subr.mxu0 0.0
        %2532 = vmatpush1.msra.mxu0 0.0
        %2533 = vmatprep.subr.mxu0 0.0
        %2534 = vmatpush1.msra.mxu0 0.0
        %2535 = vmatprep.subr.mxu0 0.0
        %2536 = vmatpush1.msra.mxu0 0.0
        %2537 = vmatprep.subr.mxu0 0.0
        %2538 = vmatpush1.msra.mxu0 0.0
        %2539 = vmatprep.subr.mxu0 0.0
        %2540 = vmatpush1.msra.mxu0 0.0
        %2541 = vmatprep.subr.mxu0 0.0
        %2542 = vmatpush1.msra.mxu0 0.0
        %2543 = vmatprep.subr.mxu0 0.0
        %2544 = vmatpush1.msra.mxu0 0.0
        %2545 = vmatprep.subr.mxu0 0.0
        %2546 = vmatpush1.msra.mxu0 0.0
        %2547 = vmatprep.subr.mxu0 0.0
        %2548 = vmatpush1.msra.mxu0 %v2512
        %2549 = vmatprep.subr.mxu0 0.0
        %2550 = vmatpush1.msra.mxu0 %v2511
        %2551 = vmatprep.subr.mxu0 0.0
        %2552 = vmatpush2.msra.mxu0 0.0
        %2553 = vmatprep.subr.mxu0 0.0
        %2554 = vmatpush2.msra.mxu0 0.0
        %2555 = vmatprep.subr.mxu0 0.0
        %2556 = vmatpush2.msra.mxu0 0.0
        %2557 = vmatprep.subr.mxu0 0.0
        %2558 = vmatpush2.msra.mxu0 0.0
        %2559 = vmatprep.subr.mxu0 0.0
        %2560 = vmatpush2.msra.mxu0 0.0
        %2561 = vmatprep.subr.mxu0 0.0
        %2562 = vmatpush2.msra.mxu0 0.0
        %2563 = vmatprep.subr.mxu0 0.0
        %2564 = vmatpush2.msra.mxu0 0.0
        %2565 = vmatprep.subr.mxu0 0.0
        %2566 = vmatpush2.msra.mxu0 0.0
        %2567 = vmatprep.subr.mxu0 0.0
        %2568 = vmatpush2.msra.mxu0 0.0
        %2569 = vmatprep.subr.mxu0 0.0
        %2570 = vmatpush2.msra.mxu0 0.0
        %2571 = vmatprep.subr.mxu0 0.0
        %2572 = vmatpush2.msra.mxu0 0.0
        %2573 = vmatprep.subr.mxu0 0.0
        %2574 = vmatpush2.msra.mxu0 0.0
        %2575 = vmatprep.subr.mxu0 0.0
        %2576 = vmatpush2.msra.mxu0 0.0
        %2577 = vmatprep.subr.mxu0 0.0
        %2578 = vmatpush2.msra.mxu0 0.0
        %2579 = vmatprep.subr.mxu0 0.0
        %2580 = vmatpush2.msra.mxu0 0.0
        %2581 = vmatprep.subr.mxu0 0.0
        %2582 = vmatpush2.msra.mxu0 0.0
        %2583 = vmatprep.mubr.f32.mxu0 0.0
        %2584 = vmatmul.mubr.f32.gmra.mxu0 %v2514
        %v2585 = vpop.f32.mrf.mxu0
        %v2586 = vadd.f32 0.0, %v2585
        %v2587 = vpop.f32.mrf.mxu0
        %2588 = vmatprep.mubr.f32.mxu0 0.0
        %2589 = vmatmul.mubr.f32.gmra.mxu0 %v2517
        %v2590 = vpop.f32.mrf.mxu0
        %v2591 = vadd.f32 0.0, %v2590
        %v2592 = vpop.f32.mrf.mxu0
        %2593 = vdwg.mxu0
        %s2594 = scalar_lea.vmem %s307, 32 [#allocation11]
        %2595 = vst.msk [vmem:[%s2594] sm:$0xff] %vm372, %v2586
        %2596 = vst.msk [vmem:[%s2594 + $0x8] sm:$0xff] %vm372, %v2591
        %v2597 = vld [vmem:[#allocation2 + $0x3] sm:$0x1]
        %v2598 = vld [vmem:[#allocation2 + $0x13] sm:$0x1]
        %v2599 = vld [vmem:[#allocation2 + $0x23] sm:$0x1]
        %v2600 = vld [vmem:[#allocation2 + $0x33] sm:$0x1]
        %v2601 = vld [vmem:[#allocation2 + $0x43] sm:$0x1]
        %v2602 = vld [vmem:[#allocation2 + $0x53] sm:$0x1]
        %v2603 = vld [vmem:[#allocation2 + $0x63] sm:$0x1]
        %v2604 = vld [vmem:[#allocation2 + $0x73] sm:$0x1]
        %v2605 = vld [vmem:[#allocation2 + $0x83] sm:$0x1]
        %v2606 = vld [vmem:[#allocation2 + $0x93] sm:$0x1]
        %v2607 = vld [vmem:[#allocation2 + $0xa3] sm:$0x1]
        %v2608 = vld [vmem:[#allocation2 + $0xb3] sm:$0x1]
        %v2609 = vld [vmem:[#allocation2 + $0xc3] sm:$0x1]
        %v2610 = vld [vmem:[#allocation2 + $0xd3] sm:$0x1]
        %v2611 = vld [vmem:[#allocation2 + $0xe3] sm:$0x1]
        %v2612 = vld [vmem:[#allocation2 + $0xf3] sm:$0x1]
        %v2629 = vrot.slane %v2598, 7
        %v2630 = vsel %vm1875, %v2629, %v2597
        %v2631 = vrot.slane %v2599, 6
        %v2632 = vsel %vm1878, %v2631, %v2630
        %v2633 = vrot.slane %v2600, 5
        %v2634 = vsel %vm1881, %v2633, %v2632
        %v2635 = vrot.slane %v2601, 4
        %v2636 = vsel %vm1884, %v2635, %v2634
        %v2637 = vrot.slane %v2602, 3
        %v2638 = vsel %vm1887, %v2637, %v2636
        %v2639 = vrot.slane %v2603, 2
        %v2640 = vsel %vm1890, %v2639, %v2638
        %v2641 = vrot.slane %v2604, 1
        %v2642 = vsel %vm1893, %v2641, %v2640
        %v2643 = vrot.slane %v2606, 7
        %v2644 = vsel %vm1875, %v2643, %v2605
        %v2645 = vrot.slane %v2607, 6
        %v2646 = vsel %vm1878, %v2645, %v2644
        %v2647 = vrot.slane %v2608, 5
        %v2648 = vsel %vm1881, %v2647, %v2646
        %v2649 = vrot.slane %v2609, 4
        %v2650 = vsel %vm1884, %v2649, %v2648
        %v2651 = vrot.slane %v2610, 3
        %v2652 = vsel %vm1887, %v2651, %v2650
        %v2653 = vrot.slane %v2611, 2
        %v2654 = vsel %vm1890, %v2653, %v2652
        %v2655 = vrot.slane %v2612, 1
        %v2656 = vsel %vm1893, %v2655, %v2654
        %v2657 = vsel %vm372, %v2642, 0
        %v2659 = vsel %vm372, %v2656, 0
        %2661 = vmatprep.subr.mxu0 0.0
        %2662 = vmatpush1.xpose.msra.mxu0 0.0
        %2663 = vmatprep.subr.mxu0 0.0
        %2664 = vmatpush1.xpose.msra.mxu0 0.0
        %2665 = vmatprep.subr.mxu0 0.0
        %2666 = vmatpush1.xpose.msra.mxu0 0.0
        %2667 = vmatprep.subr.mxu0 0.0
        %2668 = vmatpush1.xpose.msra.mxu0 0.0
        %2669 = vmatprep.subr.mxu0 0.0
        %2670 = vmatpush1.xpose.msra.mxu0 0.0
        %2671 = vmatprep.subr.mxu0 0.0
        %2672 = vmatpush1.xpose.msra.mxu0 0.0
        %2673 = vmatprep.subr.mxu0 0.0
        %2674 = vmatpush1.xpose.msra.mxu0 0.0
        %2675 = vmatprep.subr.mxu0 0.0
        %2676 = vmatpush1.xpose.msra.mxu0 0.0
        %2677 = vmatprep.subr.mxu0 0.0
        %2678 = vmatpush1.xpose.msra.mxu0 0.0
        %2679 = vmatprep.subr.mxu0 0.0
        %2680 = vmatpush1.xpose.msra.mxu0 0.0
        %2681 = vmatprep.subr.mxu0 0.0
        %2682 = vmatpush1.xpose.msra.mxu0 0.0
        %2683 = vmatprep.subr.mxu0 0.0
        %2684 = vmatpush1.xpose.msra.mxu0 0.0
        %2685 = vmatprep.subr.mxu0 0.0
        %2686 = vmatpush1.xpose.msra.mxu0 0.0
        %2687 = vmatprep.subr.mxu0 0.0
        %2688 = vmatpush1.xpose.msra.mxu0 0.0
        %2689 = vmatprep.subr.mxu0 0.0
        %2690 = vmatpush1.xpose.msra.mxu0 %v2659
        %2691 = vmatprep.subr.mxu0 0.0
        %2692 = vmatpush1.xpose.msra.mxu0 %v2657
        %2693 = vmatprep.subr.mxu0 0.0
        %2694 = vmatpush2.xpose.msra.mxu0 0.0
        %2695 = vmatprep.subr.mxu0 0.0
        %2696 = vmatpush2.xpose.msra.mxu0 0.0
        %2697 = vmatprep.subr.mxu0 0.0
        %2698 = vmatpush2.xpose.msra.mxu0 0.0
        %2699 = vmatprep.subr.mxu0 0.0
        %2700 = vmatpush2.xpose.msra.mxu0 0.0
        %2701 = vmatprep.subr.mxu0 0.0
        %2702 = vmatpush2.xpose.msra.mxu0 0.0
        %2703 = vmatprep.subr.mxu0 0.0
        %2704 = vmatpush2.xpose.msra.mxu0 0.0
        %2705 = vmatprep.subr.mxu0 0.0
        %2706 = vmatpush2.xpose.msra.mxu0 0.0
        %2707 = vmatprep.subr.mxu0 0.0
        %2708 = vmatpush2.xpose.msra.mxu0 0.0
        %2709 = vmatprep.subr.mxu0 0.0
        %2710 = vmatpush2.xpose.msra.mxu0 0.0
        %2711 = vmatprep.subr.mxu0 0.0
        %2712 = vmatpush2.xpose.msra.mxu0 0.0
        %2713 = vmatprep.subr.mxu0 0.0
        %2714 = vmatpush2.xpose.msra.mxu0 0.0
        %2715 = vmatprep.subr.mxu0 0.0
        %2716 = vmatpush2.xpose.msra.mxu0 0.0
        %2717 = vmatprep.subr.mxu0 0.0
        %2718 = vmatpush2.xpose.msra.mxu0 0.0
        %2719 = vmatprep.subr.mxu0 0.0
        %2720 = vmatpush2.xpose.msra.mxu0 0.0
        %2721 = vmatprep.subr.mxu0 0.0
        %2722 = vmatpush2.xpose.msra.mxu0 0.0
        %2723 = vmatprep.subr.mxu0 0.0
        %2724 = vmatpush2.xpose.msra.mxu0 0.0
        %2725 = vmatprep.mubr.f32.mxu0 0.0
        %2726 = vmatmul.mubr.f32.gmra.mxu0 %v1910
        %v2727 = vpop.f32.mrf.mxu0
        %v2728 = vadd.f32 %v1840, %v2727
        %v2729 = vpop.f32.mrf.mxu0
        %2730 = vmatprep.mubr.f32.mxu0 0.0
        %2731 = vmatmul.mubr.f32.gmra.mxu0 %v1913
        %v2732 = vpop.f32.mrf.mxu0
        %v2733 = vadd.f32 %v1841, %v2732
        %v2734 = vpop.f32.mrf.mxu0
        %2735 = vdwg.mxu0
        %v2736 = vsel %vm372, %v2728, -inf
        %2737 = vmax.xlane.f32.xlu0 %v2736
        %v2738 = vpop.xlane.xlu0 %2737
        %v2739 = vsel %vm372, %v2733, -inf
        %2740 = vmax.xlane.f32.xlu0 %v2739
        %v2741 = vpop.xlane.xlu0 %2740
        %v2742 = vsub.f32 %v2728, %v2738
        %v2743 = vsub.f32 %v2733, %v2741
        %v2744 = vmul.f32 %v2742, 1.442695
        %v2745 = vpow.pop %v2744
        %v2746 = vmul.f32 %v2743, 1.442695
        %v2747 = vpow.pop %v2746
        %v2748 = vsel %vm372, %v2745, 0.0
        %2749 = vadd.xlane.f32.xlu0 %v2748
        %v2750 = vpop.xlane.xlu0 %2749
        %v2751 = vsel %vm372, %v2747, 0.0
        %2752 = vadd.xlane.f32.xlu0 %v2751
        %v2753 = vpop.xlane.xlu0 %2752
        %v2754 = vrcp.pop %v2750
        %v2755 = vrcp.pop %v2753
        %v2756 = vmul.f32 %v2745, %v2754
        %v2757 = vmul.f32 %v2747, %v2755
        %s2758 = scalar_lea.vmem %s269, 48 [#allocation8]
        %v2759 = vld [vmem:[%s2758] sm:$0xff]
        %v2760 = vld [vmem:[%s2758 + $0x8] sm:$0xff]
        %v2762 = vsel %vm372, %v2756, 0
        %v2765 = vsel %vm372, %v2757, 0
        %2767 = vmatprep.subr.mxu0 0.0
        %2768 = vmatpush1.msra.mxu0 0.0
        %2769 = vmatprep.subr.mxu0 0.0
        %2770 = vmatpush1.msra.mxu0 0.0
        %2771 = vmatprep.subr.mxu0 0.0
        %2772 = vmatpush1.msra.mxu0 0.0
        %2773 = vmatprep.subr.mxu0 0.0
        %2774 = vmatpush1.msra.mxu0 0.0
        %2775 = vmatprep.subr.mxu0 0.0
        %2776 = vmatpush1.msra.mxu0 0.0
        %2777 = vmatprep.subr.mxu0 0.0
        %2778 = vmatpush1.msra.mxu0 0.0
        %2779 = vmatprep.subr.mxu0 0.0
        %2780 = vmatpush1.msra.mxu0 0.0
        %2781 = vmatprep.subr.mxu0 0.0
        %2782 = vmatpush1.msra.mxu0 0.0
        %2783 = vmatprep.subr.mxu0 0.0
        %2784 = vmatpush1.msra.mxu0 0.0
        %2785 = vmatprep.subr.mxu0 0.0
        %2786 = vmatpush1.msra.mxu0 0.0
        %2787 = vmatprep.subr.mxu0 0.0
        %2788 = vmatpush1.msra.mxu0 0.0
        %2789 = vmatprep.subr.mxu0 0.0
        %2790 = vmatpush1.msra.mxu0 0.0
        %2791 = vmatprep.subr.mxu0 0.0
        %2792 = vmatpush1.msra.mxu0 0.0
        %2793 = vmatprep.subr.mxu0 0.0
        %2794 = vmatpush1.msra.mxu0 0.0
        %2795 = vmatprep.subr.mxu0 0.0
        %2796 = vmatpush1.msra.mxu0 %v2760
        %2797 = vmatprep.subr.mxu0 0.0
        %2798 = vmatpush1.msra.mxu0 %v2759
        %2799 = vmatprep.subr.mxu0 0.0
        %2800 = vmatpush2.msra.mxu0 0.0
        %2801 = vmatprep.subr.mxu0 0.0
        %2802 = vmatpush2.msra.mxu0 0.0
        %2803 = vmatprep.subr.mxu0 0.0
        %2804 = vmatpush2.msra.mxu0 0.0
        %2805 = vmatprep.subr.mxu0 0.0
        %2806 = vmatpush2.msra.mxu0 0.0
        %2807 = vmatprep.subr.mxu0 0.0
        %2808 = vmatpush2.msra.mxu0 0.0
        %2809 = vmatprep.subr.mxu0 0.0
        %2810 = vmatpush2.msra.mxu0 0.0
        %2811 = vmatprep.subr.mxu0 0.0
        %2812 = vmatpush2.msra.mxu0 0.0
        %2813 = vmatprep.subr.mxu0 0.0
        %2814 = vmatpush2.msra.mxu0 0.0
        %2815 = vmatprep.subr.mxu0 0.0
        %2816 = vmatpush2.msra.mxu0 0.0
        %2817 = vmatprep.subr.mxu0 0.0
        %2818 = vmatpush2.msra.mxu0 0.0
        %2819 = vmatprep.subr.mxu0 0.0
        %2820 = vmatpush2.msra.mxu0 0.0
        %2821 = vmatprep.subr.mxu0 0.0
        %2822 = vmatpush2.msra.mxu0 0.0
        %2823 = vmatprep.subr.mxu0 0.0
        %2824 = vmatpush2.msra.mxu0 0.0
        %2825 = vmatprep.subr.mxu0 0.0
        %2826 = vmatpush2.msra.mxu0 0.0
        %2827 = vmatprep.subr.mxu0 0.0
        %2828 = vmatpush2.msra.mxu0 0.0
        %2829 = vmatprep.subr.mxu0 0.0
        %2830 = vmatpush2.msra.mxu0 0.0
        %2831 = vmatprep.mubr.f32.mxu0 0.0
        %2832 = vmatmul.mubr.f32.gmra.mxu0 %v2762
        %v2833 = vpop.f32.mrf.mxu0
        %v2834 = vadd.f32 0.0, %v2833
        %v2835 = vpop.f32.mrf.mxu0
        %2836 = vmatprep.mubr.f32.mxu0 0.0
        %2837 = vmatmul.mubr.f32.gmra.mxu0 %v2765
        %v2838 = vpop.f32.mrf.mxu0
        %v2839 = vadd.f32 0.0, %v2838
        %v2840 = vpop.f32.mrf.mxu0
        %2841 = vdwg.mxu0
        %s2842 = scalar_lea.vmem %s307, 48 [#allocation11]
        %2843 = vst.msk [vmem:[%s2842] sm:$0xff] %vm372, %v2834
        %2844 = vst.msk [vmem:[%s2842 + $0x8] sm:$0xff] %vm372, %v2839
        %v2845 = vld [vmem:[#allocation2 + $0x4] sm:$0x1]
        %v2846 = vld [vmem:[#allocation2 + $0x14] sm:$0x1]
        %v2847 = vld [vmem:[#allocation2 + $0x24] sm:$0x1]
        %v2848 = vld [vmem:[#allocation2 + $0x34] sm:$0x1]
        %v2849 = vld [vmem:[#allocation2 + $0x44] sm:$0x1]
        %v2850 = vld [vmem:[#allocation2 + $0x54] sm:$0x1]
        %v2851 = vld [vmem:[#allocation2 + $0x64] sm:$0x1]
        %v2852 = vld [vmem:[#allocation2 + $0x74] sm:$0x1]
        %v2853 = vld [vmem:[#allocation2 + $0x84] sm:$0x1]
        %v2854 = vld [vmem:[#allocation2 + $0x94] sm:$0x1]
        %v2855 = vld [vmem:[#allocation2 + $0xa4] sm:$0x1]
        %v2856 = vld [vmem:[#allocation2 + $0xb4] sm:$0x1]
        %v2857 = vld [vmem:[#allocation2 + $0xc4] sm:$0x1]
        %v2858 = vld [vmem:[#allocation2 + $0xd4] sm:$0x1]
        %v2859 = vld [vmem:[#allocation2 + $0xe4] sm:$0x1]
        %v2860 = vld [vmem:[#allocation2 + $0xf4] sm:$0x1]
        %v2877 = vrot.slane %v2846, 7
        %v2878 = vsel %vm1875, %v2877, %v2845
        %v2879 = vrot.slane %v2847, 6
        %v2880 = vsel %vm1878, %v2879, %v2878
        %v2881 = vrot.slane %v2848, 5
        %v2882 = vsel %vm1881, %v2881, %v2880
        %v2883 = vrot.slane %v2849, 4
        %v2884 = vsel %vm1884, %v2883, %v2882
        %v2885 = vrot.slane %v2850, 3
        %v2886 = vsel %vm1887, %v2885, %v2884
        %v2887 = vrot.slane %v2851, 2
        %v2888 = vsel %vm1890, %v2887, %v2886
        %v2889 = vrot.slane %v2852, 1
        %v2890 = vsel %vm1893, %v2889, %v2888
        %v2891 = vrot.slane %v2854, 7
        %v2892 = vsel %vm1875, %v2891, %v2853
        %v2893 = vrot.slane %v2855, 6
        %v2894 = vsel %vm1878, %v2893, %v2892
        %v2895 = vrot.slane %v2856, 5
        %v2896 = vsel %vm1881, %v2895, %v2894
        %v2897 = vrot.slane %v2857, 4
        %v2898 = vsel %vm1884, %v2897, %v2896
        %v2899 = vrot.slane %v2858, 3
        %v2900 = vsel %vm1887, %v2899, %v2898
        %v2901 = vrot.slane %v2859, 2
        %v2902 = vsel %vm1890, %v2901, %v2900
        %v2903 = vrot.slane %v2860, 1
        %v2904 = vsel %vm1893, %v2903, %v2902
        %v2905 = vsel %vm372, %v2890, 0
        %v2907 = vsel %vm372, %v2904, 0
        %2909 = vmatprep.subr.mxu0 0.0
        %2910 = vmatpush1.xpose.msra.mxu0 0.0
        %2911 = vmatprep.subr.mxu0 0.0
        %2912 = vmatpush1.xpose.msra.mxu0 0.0
        %2913 = vmatprep.subr.mxu0 0.0
        %2914 = vmatpush1.xpose.msra.mxu0 0.0
        %2915 = vmatprep.subr.mxu0 0.0
        %2916 = vmatpush1.xpose.msra.mxu0 0.0
        %2917 = vmatprep.subr.mxu0 0.0
        %2918 = vmatpush1.xpose.msra.mxu0 0.0
        %2919 = vmatprep.subr.mxu0 0.0
        %2920 = vmatpush1.xpose.msra.mxu0 0.0
        %2921 = vmatprep.subr.mxu0 0.0
        %2922 = vmatpush1.xpose.msra.mxu0 0.0
        %2923 = vmatprep.subr.mxu0 0.0
        %2924 = vmatpush1.xpose.msra.mxu0 0.0
        %2925 = vmatprep.subr.mxu0 0.0
        %2926 = vmatpush1.xpose.msra.mxu0 0.0
        %2927 = vmatprep.subr.mxu0 0.0
        %2928 = vmatpush1.xpose.msra.mxu0 0.0
        %2929 = vmatprep.subr.mxu0 0.0
        %2930 = vmatpush1.xpose.msra.mxu0 0.0
        %2931 = vmatprep.subr.mxu0 0.0
        %2932 = vmatpush1.xpose.msra.mxu0 0.0
        %2933 = vmatprep.subr.mxu0 0.0
        %2934 = vmatpush1.xpose.msra.mxu0 0.0
        %2935 = vmatprep.subr.mxu0 0.0
        %2936 = vmatpush1.xpose.msra.mxu0 0.0
        %2937 = vmatprep.subr.mxu0 0.0
        %2938 = vmatpush1.xpose.msra.mxu0 %v2907
        %2939 = vmatprep.subr.mxu0 0.0
        %2940 = vmatpush1.xpose.msra.mxu0 %v2905
        %2941 = vmatprep.subr.mxu0 0.0
        %2942 = vmatpush2.xpose.msra.mxu0 0.0
        %2943 = vmatprep.subr.mxu0 0.0
        %2944 = vmatpush2.xpose.msra.mxu0 0.0
        %2945 = vmatprep.subr.mxu0 0.0
        %2946 = vmatpush2.xpose.msra.mxu0 0.0
        %2947 = vmatprep.subr.mxu0 0.0
        %2948 = vmatpush2.xpose.msra.mxu0 0.0
        %2949 = vmatprep.subr.mxu0 0.0
        %2950 = vmatpush2.xpose.msra.mxu0 0.0
        %2951 = vmatprep.subr.mxu0 0.0
        %2952 = vmatpush2.xpose.msra.mxu0 0.0
        %2953 = vmatprep.subr.mxu0 0.0
        %2954 = vmatpush2.xpose.msra.mxu0 0.0
        %2955 = vmatprep.subr.mxu0 0.0
        %2956 = vmatpush2.xpose.msra.mxu0 0.0
        %2957 = vmatprep.subr.mxu0 0.0
        %2958 = vmatpush2.xpose.msra.mxu0 0.0
        %2959 = vmatprep.subr.mxu0 0.0
        %2960 = vmatpush2.xpose.msra.mxu0 0.0
        %2961 = vmatprep.subr.mxu0 0.0
        %2962 = vmatpush2.xpose.msra.mxu0 0.0
        %2963 = vmatprep.subr.mxu0 0.0
        %2964 = vmatpush2.xpose.msra.mxu0 0.0
        %2965 = vmatprep.subr.mxu0 0.0
        %2966 = vmatpush2.xpose.msra.mxu0 0.0
        %2967 = vmatprep.subr.mxu0 0.0
        %2968 = vmatpush2.xpose.msra.mxu0 0.0
        %2969 = vmatprep.subr.mxu0 0.0
        %2970 = vmatpush2.xpose.msra.mxu0 0.0
        %2971 = vmatprep.subr.mxu0 0.0
        %2972 = vmatpush2.xpose.msra.mxu0 0.0
        %2973 = vmatprep.mubr.f32.mxu0 0.0
        %2974 = vmatmul.mubr.f32.gmra.mxu0 %v1910
        %v2975 = vpop.f32.mrf.mxu0
        %v2976 = vadd.f32 %v1840, %v2975
        %v2977 = vpop.f32.mrf.mxu0
        %2978 = vmatprep.mubr.f32.mxu0 0.0
        %2979 = vmatmul.mubr.f32.gmra.mxu0 %v1913
        %v2980 = vpop.f32.mrf.mxu0
        %v2981 = vadd.f32 %v1841, %v2980
        %v2982 = vpop.f32.mrf.mxu0
        %2983 = vdwg.mxu0
        %v2984 = vsel %vm372, %v2976, -inf
        %2985 = vmax.xlane.f32.xlu0 %v2984
        %v2986 = vpop.xlane.xlu0 %2985
        %v2987 = vsel %vm372, %v2981, -inf
        %2988 = vmax.xlane.f32.xlu0 %v2987
        %v2989 = vpop.xlane.xlu0 %2988
        %v2990 = vsub.f32 %v2976, %v2986
        %v2991 = vsub.f32 %v2981, %v2989
        %v2992 = vmul.f32 %v2990, 1.442695
        %v2993 = vpow.pop %v2992
        %v2994 = vmul.f32 %v2991, 1.442695
        %v2995 = vpow.pop %v2994
        %v2996 = vsel %vm372, %v2993, 0.0
        %2997 = vadd.xlane.f32.xlu0 %v2996
        %v2998 = vpop.xlane.xlu0 %2997
        %v2999 = vsel %vm372, %v2995, 0.0
        %3000 = vadd.xlane.f32.xlu0 %v2999
        %v3001 = vpop.xlane.xlu0 %3000
        %v3002 = vrcp.pop %v2998
        %v3003 = vrcp.pop %v3001
        %v3004 = vmul.f32 %v2993, %v3002
        %v3005 = vmul.f32 %v2995, %v3003
        %s3006 = scalar_lea.vmem %s269, 64 [#allocation8]
        %v3007 = vld [vmem:[%s3006] sm:$0xff]
        %v3008 = vld [vmem:[%s3006 + $0x8] sm:$0xff]
        %v3010 = vsel %vm372, %v3004, 0
        %v3013 = vsel %vm372, %v3005, 0
        %3015 = vmatprep.subr.mxu0 0.0
        %3016 = vmatpush1.msra.mxu0 0.0
        %3017 = vmatprep.subr.mxu0 0.0
        %3018 = vmatpush1.msra.mxu0 0.0
        %3019 = vmatprep.subr.mxu0 0.0
        %3020 = vmatpush1.msra.mxu0 0.0
        %3021 = vmatprep.subr.mxu0 0.0
        %3022 = vmatpush1.msra.mxu0 0.0
        %3023 = vmatprep.subr.mxu0 0.0
        %3024 = vmatpush1.msra.mxu0 0.0
        %3025 = vmatprep.subr.mxu0 0.0
        %3026 = vmatpush1.msra.mxu0 0.0
        %3027 = vmatprep.subr.mxu0 0.0
        %3028 = vmatpush1.msra.mxu0 0.0
        %3029 = vmatprep.subr.mxu0 0.0
        %3030 = vmatpush1.msra.mxu0 0.0
        %3031 = vmatprep.subr.mxu0 0.0
        %3032 = vmatpush1.msra.mxu0 0.0
        %3033 = vmatprep.subr.mxu0 0.0
        %3034 = vmatpush1.msra.mxu0 0.0
        %3035 = vmatprep.subr.mxu0 0.0
        %3036 = vmatpush1.msra.mxu0 0.0
        %3037 = vmatprep.subr.mxu0 0.0
        %3038 = vmatpush1.msra.mxu0 0.0
        %3039 = vmatprep.subr.mxu0 0.0
        %3040 = vmatpush1.msra.mxu0 0.0
        %3041 = vmatprep.subr.mxu0 0.0
        %3042 = vmatpush1.msra.mxu0 0.0
        %3043 = vmatprep.subr.mxu0 0.0
        %3044 = vmatpush1.msra.mxu0 %v3008
        %3045 = vmatprep.subr.mxu0 0.0
        %3046 = vmatpush1.msra.mxu0 %v3007
        %3047 = vmatprep.subr.mxu0 0.0
        %3048 = vmatpush2.msra.mxu0 0.0
        %3049 = vmatprep.subr.mxu0 0.0
        %3050 = vmatpush2.msra.mxu0 0.0
        %3051 = vmatprep.subr.mxu0 0.0
        %3052 = vmatpush2.msra.mxu0 0.0
        %3053 = vmatprep.subr.mxu0 0.0
        %3054 = vmatpush2.msra.mxu0 0.0
        %3055 = vmatprep.subr.mxu0 0.0
        %3056 = vmatpush2.msra.mxu0 0.0
        %3057 = vmatprep.subr.mxu0 0.0
        %3058 = vmatpush2.msra.mxu0 0.0
        %3059 = vmatprep.subr.mxu0 0.0
        %3060 = vmatpush2.msra.mxu0 0.0
        %3061 = vmatprep.subr.mxu0 0.0
        %3062 = vmatpush2.msra.mxu0 0.0
        %3063 = vmatprep.subr.mxu0 0.0
        %3064 = vmatpush2.msra.mxu0 0.0
        %3065 = vmatprep.subr.mxu0 0.0
        %3066 = vmatpush2.msra.mxu0 0.0
        %3067 = vmatprep.subr.mxu0 0.0
        %3068 = vmatpush2.msra.mxu0 0.0
        %3069 = vmatprep.subr.mxu0 0.0
        %3070 = vmatpush2.msra.mxu0 0.0
        %3071 = vmatprep.subr.mxu0 0.0
        %3072 = vmatpush2.msra.mxu0 0.0
        %3073 = vmatprep.subr.mxu0 0.0
        %3074 = vmatpush2.msra.mxu0 0.0
        %3075 = vmatprep.subr.mxu0 0.0
        %3076 = vmatpush2.msra.mxu0 0.0
        %3077 = vmatprep.subr.mxu0 0.0
        %3078 = vmatpush2.msra.mxu0 0.0
        %3079 = vmatprep.mubr.f32.mxu0 0.0
        %3080 = vmatmul.mubr.f32.gmra.mxu0 %v3010
        %v3081 = vpop.f32.mrf.mxu0
        %v3082 = vadd.f32 0.0, %v3081
        %v3083 = vpop.f32.mrf.mxu0
        %3084 = vmatprep.mubr.f32.mxu0 0.0
        %3085 = vmatmul.mubr.f32.gmra.mxu0 %v3013
        %v3086 = vpop.f32.mrf.mxu0
        %v3087 = vadd.f32 0.0, %v3086
        %v3088 = vpop.f32.mrf.mxu0
        %3089 = vdwg.mxu0
        %s3090 = scalar_lea.vmem %s307, 64 [#allocation11]
        %3091 = vst.msk [vmem:[%s3090] sm:$0xff] %vm372, %v3082
        %3092 = vst.msk [vmem:[%s3090 + $0x8] sm:$0xff] %vm372, %v3087
        %v3093 = vld [vmem:[#allocation2 + $0x5] sm:$0x1]
        %v3094 = vld [vmem:[#allocation2 + $0x15] sm:$0x1]
        %v3095 = vld [vmem:[#allocation2 + $0x25] sm:$0x1]
        %v3096 = vld [vmem:[#allocation2 + $0x35] sm:$0x1]
        %v3097 = vld [vmem:[#allocation2 + $0x45] sm:$0x1]
        %v3098 = vld [vmem:[#allocation2 + $0x55] sm:$0x1]
        %v3099 = vld [vmem:[#allocation2 + $0x65] sm:$0x1]
        %v3100 = vld [vmem:[#allocation2 + $0x75] sm:$0x1]
        %v3101 = vld [vmem:[#allocation2 + $0x85] sm:$0x1]
        %v3102 = vld [vmem:[#allocation2 + $0x95] sm:$0x1]
        %v3103 = vld [vmem:[#allocation2 + $0xa5] sm:$0x1]
        %v3104 = vld [vmem:[#allocation2 + $0xb5] sm:$0x1]
        %v3105 = vld [vmem:[#allocation2 + $0xc5] sm:$0x1]
        %v3106 = vld [vmem:[#allocation2 + $0xd5] sm:$0x1]
        %v3107 = vld [vmem:[#allocation2 + $0xe5] sm:$0x1]
        %v3108 = vld [vmem:[#allocation2 + $0xf5] sm:$0x1]
        %v3125 = vrot.slane %v3094, 7
        %v3126 = vsel %vm1875, %v3125, %v3093
        %v3127 = vrot.slane %v3095, 6
        %v3128 = vsel %vm1878, %v3127, %v3126
        %v3129 = vrot.slane %v3096, 5
        %v3130 = vsel %vm1881, %v3129, %v3128
        %v3131 = vrot.slane %v3097, 4
        %v3132 = vsel %vm1884, %v3131, %v3130
        %v3133 = vrot.slane %v3098, 3
        %v3134 = vsel %vm1887, %v3133, %v3132
        %v3135 = vrot.slane %v3099, 2
        %v3136 = vsel %vm1890, %v3135, %v3134
        %v3137 = vrot.slane %v3100, 1
        %v3138 = vsel %vm1893, %v3137, %v3136
        %v3139 = vrot.slane %v3102, 7
        %v3140 = vsel %vm1875, %v3139, %v3101
        %v3141 = vrot.slane %v3103, 6
        %v3142 = vsel %vm1878, %v3141, %v3140
        %v3143 = vrot.slane %v3104, 5
        %v3144 = vsel %vm1881, %v3143, %v3142
        %v3145 = vrot.slane %v3105, 4
        %v3146 = vsel %vm1884, %v3145, %v3144
        %v3147 = vrot.slane %v3106, 3
        %v3148 = vsel %vm1887, %v3147, %v3146
        %v3149 = vrot.slane %v3107, 2
        %v3150 = vsel %vm1890, %v3149, %v3148
        %v3151 = vrot.slane %v3108, 1
        %v3152 = vsel %vm1893, %v3151, %v3150
        %v3153 = vsel %vm372, %v3138, 0
        %v3155 = vsel %vm372, %v3152, 0
        %3157 = vmatprep.subr.mxu0 0.0
        %3158 = vmatpush1.xpose.msra.mxu0 0.0
        %3159 = vmatprep.subr.mxu0 0.0
        %3160 = vmatpush1.xpose.msra.mxu0 0.0
        %3161 = vmatprep.subr.mxu0 0.0
        %3162 = vmatpush1.xpose.msra.mxu0 0.0
        %3163 = vmatprep.subr.mxu0 0.0
        %3164 = vmatpush1.xpose.msra.mxu0 0.0
        %3165 = vmatprep.subr.mxu0 0.0
        %3166 = vmatpush1.xpose.msra.mxu0 0.0
        %3167 = vmatprep.subr.mxu0 0.0
        %3168 = vmatpush1.xpose.msra.mxu0 0.0
        %3169 = vmatprep.subr.mxu0 0.0
        %3170 = vmatpush1.xpose.msra.mxu0 0.0
        %3171 = vmatprep.subr.mxu0 0.0
        %3172 = vmatpush1.xpose.msra.mxu0 0.0
        %3173 = vmatprep.subr.mxu0 0.0
        %3174 = vmatpush1.xpose.msra.mxu0 0.0
        %3175 = vmatprep.subr.mxu0 0.0
        %3176 = vmatpush1.xpose.msra.mxu0 0.0
        %3177 = vmatprep.subr.mxu0 0.0
        %3178 = vmatpush1.xpose.msra.mxu0 0.0
        %3179 = vmatprep.subr.mxu0 0.0
        %3180 = vmatpush1.xpose.msra.mxu0 0.0
        %3181 = vmatprep.subr.mxu0 0.0
        %3182 = vmatpush1.xpose.msra.mxu0 0.0
        %3183 = vmatprep.subr.mxu0 0.0
        %3184 = vmatpush1.xpose.msra.mxu0 0.0
        %3185 = vmatprep.subr.mxu0 0.0
        %3186 = vmatpush1.xpose.msra.mxu0 %v3155
        %3187 = vmatprep.subr.mxu0 0.0
        %3188 = vmatpush1.xpose.msra.mxu0 %v3153
        %3189 = vmatprep.subr.mxu0 0.0
        %3190 = vmatpush2.xpose.msra.mxu0 0.0
        %3191 = vmatprep.subr.mxu0 0.0
        %3192 = vmatpush2.xpose.msra.mxu0 0.0
        %3193 = vmatprep.subr.mxu0 0.0
        %3194 = vmatpush2.xpose.msra.mxu0 0.0
        %3195 = vmatprep.subr.mxu0 0.0
        %3196 = vmatpush2.xpose.msra.mxu0 0.0
        %3197 = vmatprep.subr.mxu0 0.0
        %3198 = vmatpush2.xpose.msra.mxu0 0.0
        %3199 = vmatprep.subr.mxu0 0.0
        %3200 = vmatpush2.xpose.msra.mxu0 0.0
        %3201 = vmatprep.subr.mxu0 0.0
        %3202 = vmatpush2.xpose.msra.mxu0 0.0
        %3203 = vmatprep.subr.mxu0 0.0
        %3204 = vmatpush2.xpose.msra.mxu0 0.0
        %3205 = vmatprep.subr.mxu0 0.0
        %3206 = vmatpush2.xpose.msra.mxu0 0.0
        %3207 = vmatprep.subr.mxu0 0.0
        %3208 = vmatpush2.xpose.msra.mxu0 0.0
        %3209 = vmatprep.subr.mxu0 0.0
        %3210 = vmatpush2.xpose.msra.mxu0 0.0
        %3211 = vmatprep.subr.mxu0 0.0
        %3212 = vmatpush2.xpose.msra.mxu0 0.0
        %3213 = vmatprep.subr.mxu0 0.0
        %3214 = vmatpush2.xpose.msra.mxu0 0.0
        %3215 = vmatprep.subr.mxu0 0.0
        %3216 = vmatpush2.xpose.msra.mxu0 0.0
        %3217 = vmatprep.subr.mxu0 0.0
        %3218 = vmatpush2.xpose.msra.mxu0 0.0
        %3219 = vmatprep.subr.mxu0 0.0
        %3220 = vmatpush2.xpose.msra.mxu0 0.0
        %3221 = vmatprep.mubr.f32.mxu0 0.0
        %3222 = vmatmul.mubr.f32.gmra.mxu0 %v1910
        %v3223 = vpop.f32.mrf.mxu0
        %v3224 = vadd.f32 %v1840, %v3223
        %v3225 = vpop.f32.mrf.mxu0
        %3226 = vmatprep.mubr.f32.mxu0 0.0
        %3227 = vmatmul.mubr.f32.gmra.mxu0 %v1913
        %v3228 = vpop.f32.mrf.mxu0
        %v3229 = vadd.f32 %v1841, %v3228
        %v3230 = vpop.f32.mrf.mxu0
        %3231 = vdwg.mxu0
        %v3232 = vsel %vm372, %v3224, -inf
        %3233 = vmax.xlane.f32.xlu0 %v3232
        %v3234 = vpop.xlane.xlu0 %3233
        %v3235 = vsel %vm372, %v3229, -inf
        %3236 = vmax.xlane.f32.xlu0 %v3235
        %v3237 = vpop.xlane.xlu0 %3236
        %v3238 = vsub.f32 %v3224, %v3234
        %v3239 = vsub.f32 %v3229, %v3237
        %v3240 = vmul.f32 %v3238, 1.442695
        %v3241 = vpow.pop %v3240
        %v3242 = vmul.f32 %v3239, 1.442695
        %v3243 = vpow.pop %v3242
        %v3244 = vsel %vm372, %v3241, 0.0
        %3245 = vadd.xlane.f32.xlu0 %v3244
        %v3246 = vpop.xlane.xlu0 %3245
        %v3247 = vsel %vm372, %v3243, 0.0
        %3248 = vadd.xlane.f32.xlu0 %v3247
        %v3249 = vpop.xlane.xlu0 %3248
        %v3250 = vrcp.pop %v3246
        %v3251 = vrcp.pop %v3249
        %v3252 = vmul.f32 %v3241, %v3250
        %v3253 = vmul.f32 %v3243, %v3251
        %s3254 = scalar_lea.vmem %s269, 80 [#allocation8]
        %v3255 = vld [vmem:[%s3254] sm:$0xff]
        %v3256 = vld [vmem:[%s3254 + $0x8] sm:$0xff]
        %v3258 = vsel %vm372, %v3252, 0
        %v3261 = vsel %vm372, %v3253, 0
        %3263 = vmatprep.subr.mxu0 0.0
        %3264 = vmatpush1.msra.mxu0 0.0
        %3265 = vmatprep.subr.mxu0 0.0
        %3266 = vmatpush1.msra.mxu0 0.0
        %3267 = vmatprep.subr.mxu0 0.0
        %3268 = vmatpush1.msra.mxu0 0.0
        %3269 = vmatprep.subr.mxu0 0.0
        %3270 = vmatpush1.msra.mxu0 0.0
        %3271 = vmatprep.subr.mxu0 0.0
        %3272 = vmatpush1.msra.mxu0 0.0
        %3273 = vmatprep.subr.mxu0 0.0
        %3274 = vmatpush1.msra.mxu0 0.0
        %3275 = vmatprep.subr.mxu0 0.0
        %3276 = vmatpush1.msra.mxu0 0.0
        %3277 = vmatprep.subr.mxu0 0.0
        %3278 = vmatpush1.msra.mxu0 0.0
        %3279 = vmatprep.subr.mxu0 0.0
        %3280 = vmatpush1.msra.mxu0 0.0
        %3281 = vmatprep.subr.mxu0 0.0
        %3282 = vmatpush1.msra.mxu0 0.0
        %3283 = vmatprep.subr.mxu0 0.0
        %3284 = vmatpush1.msra.mxu0 0.0
        %3285 = vmatprep.subr.mxu0 0.0
        %3286 = vmatpush1.msra.mxu0 0.0
        %3287 = vmatprep.subr.mxu0 0.0
        %3288 = vmatpush1.msra.mxu0 0.0
        %3289 = vmatprep.subr.mxu0 0.0
        %3290 = vmatpush1.msra.mxu0 0.0
        %3291 = vmatprep.subr.mxu0 0.0
        %3292 = vmatpush1.msra.mxu0 %v3256
        %3293 = vmatprep.subr.mxu0 0.0
        %3294 = vmatpush1.msra.mxu0 %v3255
        %3295 = vmatprep.subr.mxu0 0.0
        %3296 = vmatpush2.msra.mxu0 0.0
        %3297 = vmatprep.subr.mxu0 0.0
        %3298 = vmatpush2.msra.mxu0 0.0
        %3299 = vmatprep.subr.mxu0 0.0
        %3300 = vmatpush2.msra.mxu0 0.0
        %3301 = vmatprep.subr.mxu0 0.0
        %3302 = vmatpush2.msra.mxu0 0.0
        %3303 = vmatprep.subr.mxu0 0.0
        %3304 = vmatpush2.msra.mxu0 0.0
        %3305 = vmatprep.subr.mxu0 0.0
        %3306 = vmatpush2.msra.mxu0 0.0
        %3307 = vmatprep.subr.mxu0 0.0
        %3308 = vmatpush2.msra.mxu0 0.0
        %3309 = vmatprep.subr.mxu0 0.0
        %3310 = vmatpush2.msra.mxu0 0.0
        %3311 = vmatprep.subr.mxu0 0.0
        %3312 = vmatpush2.msra.mxu0 0.0
        %3313 = vmatprep.subr.mxu0 0.0
        %3314 = vmatpush2.msra.mxu0 0.0
        %3315 = vmatprep.subr.mxu0 0.0
        %3316 = vmatpush2.msra.mxu0 0.0
        %3317 = vmatprep.subr.mxu0 0.0
        %3318 = vmatpush2.msra.mxu0 0.0
        %3319 = vmatprep.subr.mxu0 0.0
        %3320 = vmatpush2.msra.mxu0 0.0
        %3321 = vmatprep.subr.mxu0 0.0
        %3322 = vmatpush2.msra.mxu0 0.0
        %3323 = vmatprep.subr.mxu0 0.0
        %3324 = vmatpush2.msra.mxu0 0.0
        %3325 = vmatprep.subr.mxu0 0.0
        %3326 = vmatpush2.msra.mxu0 0.0
        %3327 = vmatprep.mubr.f32.mxu0 0.0
        %3328 = vmatmul.mubr.f32.gmra.mxu0 %v3258
        %v3329 = vpop.f32.mrf.mxu0
        %v3330 = vadd.f32 0.0, %v3329
        %v3331 = vpop.f32.mrf.mxu0
        %3332 = vmatprep.mubr.f32.mxu0 0.0
        %3333 = vmatmul.mubr.f32.gmra.mxu0 %v3261
        %v3334 = vpop.f32.mrf.mxu0
        %v3335 = vadd.f32 0.0, %v3334
        %v3336 = vpop.f32.mrf.mxu0
        %3337 = vdwg.mxu0
        %s3338 = scalar_lea.vmem %s307, 80 [#allocation11]
        %3339 = vst.msk [vmem:[%s3338] sm:$0xff] %vm372, %v3330
        %3340 = vst.msk [vmem:[%s3338 + $0x8] sm:$0xff] %vm372, %v3335
        %v3341 = vld [vmem:[#allocation2 + $0x6] sm:$0x1]
        %v3342 = vld [vmem:[#allocation2 + $0x16] sm:$0x1]
        %v3343 = vld [vmem:[#allocation2 + $0x26] sm:$0x1]
        %v3344 = vld [vmem:[#allocation2 + $0x36] sm:$0x1]
        %v3345 = vld [vmem:[#allocation2 + $0x46] sm:$0x1]
        %v3346 = vld [vmem:[#allocation2 + $0x56] sm:$0x1]
        %v3347 = vld [vmem:[#allocation2 + $0x66] sm:$0x1]
        %v3348 = vld [vmem:[#allocation2 + $0x76] sm:$0x1]
        %v3349 = vld [vmem:[#allocation2 + $0x86] sm:$0x1]
        %v3350 = vld [vmem:[#allocation2 + $0x96] sm:$0x1]
        %v3351 = vld [vmem:[#allocation2 + $0xa6] sm:$0x1]
        %v3352 = vld [vmem:[#allocation2 + $0xb6] sm:$0x1]
        %v3353 = vld [vmem:[#allocation2 + $0xc6] sm:$0x1]
        %v3354 = vld [vmem:[#allocation2 + $0xd6] sm:$0x1]
        %v3355 = vld [vmem:[#allocation2 + $0xe6] sm:$0x1]
        %v3356 = vld [vmem:[#allocation2 + $0xf6] sm:$0x1]
        %v3373 = vrot.slane %v3342, 7
        %v3374 = vsel %vm1875, %v3373, %v3341
        %v3375 = vrot.slane %v3343, 6
        %v3376 = vsel %vm1878, %v3375, %v3374
        %v3377 = vrot.slane %v3344, 5
        %v3378 = vsel %vm1881, %v3377, %v3376
        %v3379 = vrot.slane %v3345, 4
        %v3380 = vsel %vm1884, %v3379, %v3378
        %v3381 = vrot.slane %v3346, 3
        %v3382 = vsel %vm1887, %v3381, %v3380
        %v3383 = vrot.slane %v3347, 2
        %v3384 = vsel %vm1890, %v3383, %v3382
        %v3385 = vrot.slane %v3348, 1
        %v3386 = vsel %vm1893, %v3385, %v3384
        %v3387 = vrot.slane %v3350, 7
        %v3388 = vsel %vm1875, %v3387, %v3349
        %v3389 = vrot.slane %v3351, 6
        %v3390 = vsel %vm1878, %v3389, %v3388
        %v3391 = vrot.slane %v3352, 5
        %v3392 = vsel %vm1881, %v3391, %v3390
        %v3393 = vrot.slane %v3353, 4
        %v3394 = vsel %vm1884, %v3393, %v3392
        %v3395 = vrot.slane %v3354, 3
        %v3396 = vsel %vm1887, %v3395, %v3394
        %v3397 = vrot.slane %v3355, 2
        %v3398 = vsel %vm1890, %v3397, %v3396
        %v3399 = vrot.slane %v3356, 1
        %v3400 = vsel %vm1893, %v3399, %v3398
        %v3401 = vsel %vm372, %v3386, 0
        %v3403 = vsel %vm372, %v3400, 0
        %3405 = vmatprep.subr.mxu0 0.0
        %3406 = vmatpush1.xpose.msra.mxu0 0.0
        %3407 = vmatprep.subr.mxu0 0.0
        %3408 = vmatpush1.xpose.msra.mxu0 0.0
        %3409 = vmatprep.subr.mxu0 0.0
        %3410 = vmatpush1.xpose.msra.mxu0 0.0
        %3411 = vmatprep.subr.mxu0 0.0
        %3412 = vmatpush1.xpose.msra.mxu0 0.0
        %3413 = vmatprep.subr.mxu0 0.0
        %3414 = vmatpush1.xpose.msra.mxu0 0.0
        %3415 = vmatprep.subr.mxu0 0.0
        %3416 = vmatpush1.xpose.msra.mxu0 0.0
        %3417 = vmatprep.subr.mxu0 0.0
        %3418 = vmatpush1.xpose.msra.mxu0 0.0
        %3419 = vmatprep.subr.mxu0 0.0
        %3420 = vmatpush1.xpose.msra.mxu0 0.0
        %3421 = vmatprep.subr.mxu0 0.0
        %3422 = vmatpush1.xpose.msra.mxu0 0.0
        %3423 = vmatprep.subr.mxu0 0.0
        %3424 = vmatpush1.xpose.msra.mxu0 0.0
        %3425 = vmatprep.subr.mxu0 0.0
        %3426 = vmatpush1.xpose.msra.mxu0 0.0
        %3427 = vmatprep.subr.mxu0 0.0
        %3428 = vmatpush1.xpose.msra.mxu0 0.0
        %3429 = vmatprep.subr.mxu0 0.0
        %3430 = vmatpush1.xpose.msra.mxu0 0.0
        %3431 = vmatprep.subr.mxu0 0.0
        %3432 = vmatpush1.xpose.msra.mxu0 0.0
        %3433 = vmatprep.subr.mxu0 0.0
        %3434 = vmatpush1.xpose.msra.mxu0 %v3403
        %3435 = vmatprep.subr.mxu0 0.0
        %3436 = vmatpush1.xpose.msra.mxu0 %v3401
        %3437 = vmatprep.subr.mxu0 0.0
        %3438 = vmatpush2.xpose.msra.mxu0 0.0
        %3439 = vmatprep.subr.mxu0 0.0
        %3440 = vmatpush2.xpose.msra.mxu0 0.0
        %3441 = vmatprep.subr.mxu0 0.0
        %3442 = vmatpush2.xpose.msra.mxu0 0.0
        %3443 = vmatprep.subr.mxu0 0.0
        %3444 = vmatpush2.xpose.msra.mxu0 0.0
        %3445 = vmatprep.subr.mxu0 0.0
        %3446 = vmatpush2.xpose.msra.mxu0 0.0
        %3447 = vmatprep.subr.mxu0 0.0
        %3448 = vmatpush2.xpose.msra.mxu0 0.0
        %3449 = vmatprep.subr.mxu0 0.0
        %3450 = vmatpush2.xpose.msra.mxu0 0.0
        %3451 = vmatprep.subr.mxu0 0.0
        %3452 = vmatpush2.xpose.msra.mxu0 0.0
        %3453 = vmatprep.subr.mxu0 0.0
        %3454 = vmatpush2.xpose.msra.mxu0 0.0
        %3455 = vmatprep.subr.mxu0 0.0
        %3456 = vmatpush2.xpose.msra.mxu0 0.0
        %3457 = vmatprep.subr.mxu0 0.0
        %3458 = vmatpush2.xpose.msra.mxu0 0.0
        %3459 = vmatprep.subr.mxu0 0.0
        %3460 = vmatpush2.xpose.msra.mxu0 0.0
        %3461 = vmatprep.subr.mxu0 0.0
        %3462 = vmatpush2.xpose.msra.mxu0 0.0
        %3463 = vmatprep.subr.mxu0 0.0
        %3464 = vmatpush2.xpose.msra.mxu0 0.0
        %3465 = vmatprep.subr.mxu0 0.0
        %3466 = vmatpush2.xpose.msra.mxu0 0.0
        %3467 = vmatprep.subr.mxu0 0.0
        %3468 = vmatpush2.xpose.msra.mxu0 0.0
        %3469 = vmatprep.mubr.f32.mxu0 0.0
        %3470 = vmatmul.mubr.f32.gmra.mxu0 %v1910
        %v3471 = vpop.f32.mrf.mxu0
        %v3472 = vadd.f32 %v1840, %v3471
        %v3473 = vpop.f32.mrf.mxu0
        %3474 = vmatprep.mubr.f32.mxu0 0.0
        %3475 = vmatmul.mubr.f32.gmra.mxu0 %v1913
        %v3476 = vpop.f32.mrf.mxu0
        %v3477 = vadd.f32 %v1841, %v3476
        %v3478 = vpop.f32.mrf.mxu0
        %3479 = vdwg.mxu0
        %v3480 = vsel %vm372, %v3472, -inf
        %3481 = vmax.xlane.f32.xlu0 %v3480
        %v3482 = vpop.xlane.xlu0 %3481
        %v3483 = vsel %vm372, %v3477, -inf
        %3484 = vmax.xlane.f32.xlu0 %v3483
        %v3485 = vpop.xlane.xlu0 %3484
        %v3486 = vsub.f32 %v3472, %v3482
        %v3487 = vsub.f32 %v3477, %v3485
        %v3488 = vmul.f32 %v3486, 1.442695
        %v3489 = vpow.pop %v3488
        %v3490 = vmul.f32 %v3487, 1.442695
        %v3491 = vpow.pop %v3490
        %v3492 = vsel %vm372, %v3489, 0.0
        %3493 = vadd.xlane.f32.xlu0 %v3492
        %v3494 = vpop.xlane.xlu0 %3493
        %v3495 = vsel %vm372, %v3491, 0.0
        %3496 = vadd.xlane.f32.xlu0 %v3495
        %v3497 = vpop.xlane.xlu0 %3496
        %v3498 = vrcp.pop %v3494
        %v3499 = vrcp.pop %v3497
        %v3500 = vmul.f32 %v3489, %v3498
        %v3501 = vmul.f32 %v3491, %v3499
        %s3502 = scalar_lea.vmem %s269, 96 [#allocation8]
        %v3503 = vld [vmem:[%s3502] sm:$0xff]
        %v3504 = vld [vmem:[%s3502 + $0x8] sm:$0xff]
        %v3506 = vsel %vm372, %v3500, 0
        %v3509 = vsel %vm372, %v3501, 0
        %3511 = vmatprep.subr.mxu0 0.0
        %3512 = vmatpush1.msra.mxu0 0.0
        %3513 = vmatprep.subr.mxu0 0.0
        %3514 = vmatpush1.msra.mxu0 0.0
        %3515 = vmatprep.subr.mxu0 0.0
        %3516 = vmatpush1.msra.mxu0 0.0
        %3517 = vmatprep.subr.mxu0 0.0
        %3518 = vmatpush1.msra.mxu0 0.0
        %3519 = vmatprep.subr.mxu0 0.0
        %3520 = vmatpush1.msra.mxu0 0.0
        %3521 = vmatprep.subr.mxu0 0.0
        %3522 = vmatpush1.msra.mxu0 0.0
        %3523 = vmatprep.subr.mxu0 0.0
        %3524 = vmatpush1.msra.mxu0 0.0
        %3525 = vmatprep.subr.mxu0 0.0
        %3526 = vmatpush1.msra.mxu0 0.0
        %3527 = vmatprep.subr.mxu0 0.0
        %3528 = vmatpush1.msra.mxu0 0.0
        %3529 = vmatprep.subr.mxu0 0.0
        %3530 = vmatpush1.msra.mxu0 0.0
        %3531 = vmatprep.subr.mxu0 0.0
        %3532 = vmatpush1.msra.mxu0 0.0
        %3533 = vmatprep.subr.mxu0 0.0
        %3534 = vmatpush1.msra.mxu0 0.0
        %3535 = vmatprep.subr.mxu0 0.0
        %3536 = vmatpush1.msra.mxu0 0.0
        %3537 = vmatprep.subr.mxu0 0.0
        %3538 = vmatpush1.msra.mxu0 0.0
        %3539 = vmatprep.subr.mxu0 0.0
        %3540 = vmatpush1.msra.mxu0 %v3504
        %3541 = vmatprep.subr.mxu0 0.0
        %3542 = vmatpush1.msra.mxu0 %v3503
        %3543 = vmatprep.subr.mxu0 0.0
        %3544 = vmatpush2.msra.mxu0 0.0
        %3545 = vmatprep.subr.mxu0 0.0
        %3546 = vmatpush2.msra.mxu0 0.0
        %3547 = vmatprep.subr.mxu0 0.0
        %3548 = vmatpush2.msra.mxu0 0.0
        %3549 = vmatprep.subr.mxu0 0.0
        %3550 = vmatpush2.msra.mxu0 0.0
        %3551 = vmatprep.subr.mxu0 0.0
        %3552 = vmatpush2.msra.mxu0 0.0
        %3553 = vmatprep.subr.mxu0 0.0
        %3554 = vmatpush2.msra.mxu0 0.0
        %3555 = vmatprep.subr.mxu0 0.0
        %3556 = vmatpush2.msra.mxu0 0.0
        %3557 = vmatprep.subr.mxu0 0.0
        %3558 = vmatpush2.msra.mxu0 0.0
        %3559 = vmatprep.subr.mxu0 0.0
        %3560 = vmatpush2.msra.mxu0 0.0
        %3561 = vmatprep.subr.mxu0 0.0
        %3562 = vmatpush2.msra.mxu0 0.0
        %3563 = vmatprep.subr.mxu0 0.0
        %3564 = vmatpush2.msra.mxu0 0.0
        %3565 = vmatprep.subr.mxu0 0.0
        %3566 = vmatpush2.msra.mxu0 0.0
        %3567 = vmatprep.subr.mxu0 0.0
        %3568 = vmatpush2.msra.mxu0 0.0
        %3569 = vmatprep.subr.mxu0 0.0
        %3570 = vmatpush2.msra.mxu0 0.0
        %3571 = vmatprep.subr.mxu0 0.0
        %3572 = vmatpush2.msra.mxu0 0.0
        %3573 = vmatprep.subr.mxu0 0.0
        %3574 = vmatpush2.msra.mxu0 0.0
        %3575 = vmatprep.mubr.f32.mxu0 0.0
        %3576 = vmatmul.mubr.f32.gmra.mxu0 %v3506
        %v3577 = vpop.f32.mrf.mxu0
        %v3578 = vadd.f32 0.0, %v3577
        %v3579 = vpop.f32.mrf.mxu0
        %3580 = vmatprep.mubr.f32.mxu0 0.0
        %3581 = vmatmul.mubr.f32.gmra.mxu0 %v3509
        %v3582 = vpop.f32.mrf.mxu0
        %v3583 = vadd.f32 0.0, %v3582
        %v3584 = vpop.f32.mrf.mxu0
        %3585 = vdwg.mxu0
        %s3586 = scalar_lea.vmem %s307, 96 [#allocation11]
        %3587 = vst.msk [vmem:[%s3586] sm:$0xff] %vm372, %v3578
        %3588 = vst.msk [vmem:[%s3586 + $0x8] sm:$0xff] %vm372, %v3583
        %v3589 = vld [vmem:[#allocation2 + $0x7] sm:$0x1]
        %v3590 = vld [vmem:[#allocation2 + $0x17] sm:$0x1]
        %v3591 = vld [vmem:[#allocation2 + $0x27] sm:$0x1]
        %v3592 = vld [vmem:[#allocation2 + $0x37] sm:$0x1]
        %v3593 = vld [vmem:[#allocation2 + $0x47] sm:$0x1]
        %v3594 = vld [vmem:[#allocation2 + $0x57] sm:$0x1]
        %v3595 = vld [vmem:[#allocation2 + $0x67] sm:$0x1]
        %v3596 = vld [vmem:[#allocation2 + $0x77] sm:$0x1]
        %v3597 = vld [vmem:[#allocation2 + $0x87] sm:$0x1]
        %v3598 = vld [vmem:[#allocation2 + $0x97] sm:$0x1]
        %v3599 = vld [vmem:[#allocation2 + $0xa7] sm:$0x1]
        %v3600 = vld [vmem:[#allocation2 + $0xb7] sm:$0x1]
        %v3601 = vld [vmem:[#allocation2 + $0xc7] sm:$0x1]
        %v3602 = vld [vmem:[#allocation2 + $0xd7] sm:$0x1]
        %v3603 = vld [vmem:[#allocation2 + $0xe7] sm:$0x1]
        %v3604 = vld [vmem:[#allocation2 + $0xf7] sm:$0x1]
        %v3621 = vrot.slane %v3590, 7
        %v3622 = vsel %vm1875, %v3621, %v3589
        %v3623 = vrot.slane %v3591, 6
        %v3624 = vsel %vm1878, %v3623, %v3622
        %v3625 = vrot.slane %v3592, 5
        %v3626 = vsel %vm1881, %v3625, %v3624
        %v3627 = vrot.slane %v3593, 4
        %v3628 = vsel %vm1884, %v3627, %v3626
        %v3629 = vrot.slane %v3594, 3
        %v3630 = vsel %vm1887, %v3629, %v3628
        %v3631 = vrot.slane %v3595, 2
        %v3632 = vsel %vm1890, %v3631, %v3630
        %v3633 = vrot.slane %v3596, 1
        %v3634 = vsel %vm1893, %v3633, %v3632
        %v3635 = vrot.slane %v3598, 7
        %v3636 = vsel %vm1875, %v3635, %v3597
        %v3637 = vrot.slane %v3599, 6
        %v3638 = vsel %vm1878, %v3637, %v3636
        %v3639 = vrot.slane %v3600, 5
        %v3640 = vsel %vm1881, %v3639, %v3638
        %v3641 = vrot.slane %v3601, 4
        %v3642 = vsel %vm1884, %v3641, %v3640
        %v3643 = vrot.slane %v3602, 3
        %v3644 = vsel %vm1887, %v3643, %v3642
        %v3645 = vrot.slane %v3603, 2
        %v3646 = vsel %vm1890, %v3645, %v3644
        %v3647 = vrot.slane %v3604, 1
        %v3648 = vsel %vm1893, %v3647, %v3646
        %v3649 = vsel %vm372, %v3634, 0
        %v3651 = vsel %vm372, %v3648, 0
        %3653 = vmatprep.subr.mxu0 0.0
        %3654 = vmatpush1.xpose.msra.mxu0 0.0
        %3655 = vmatprep.subr.mxu0 0.0
        %3656 = vmatpush1.xpose.msra.mxu0 0.0
        %3657 = vmatprep.subr.mxu0 0.0
        %3658 = vmatpush1.xpose.msra.mxu0 0.0
        %3659 = vmatprep.subr.mxu0 0.0
        %3660 = vmatpush1.xpose.msra.mxu0 0.0
        %3661 = vmatprep.subr.mxu0 0.0
        %3662 = vmatpush1.xpose.msra.mxu0 0.0
        %3663 = vmatprep.subr.mxu0 0.0
        %3664 = vmatpush1.xpose.msra.mxu0 0.0
        %3665 = vmatprep.subr.mxu0 0.0
        %3666 = vmatpush1.xpose.msra.mxu0 0.0
        %3667 = vmatprep.subr.mxu0 0.0
        %3668 = vmatpush1.xpose.msra.mxu0 0.0
        %3669 = vmatprep.subr.mxu0 0.0
        %3670 = vmatpush1.xpose.msra.mxu0 0.0
        %3671 = vmatprep.subr.mxu0 0.0
        %3672 = vmatpush1.xpose.msra.mxu0 0.0
        %3673 = vmatprep.subr.mxu0 0.0
        %3674 = vmatpush1.xpose.msra.mxu0 0.0
        %3675 = vmatprep.subr.mxu0 0.0
        %3676 = vmatpush1.xpose.msra.mxu0 0.0
        %3677 = vmatprep.subr.mxu0 0.0
        %3678 = vmatpush1.xpose.msra.mxu0 0.0
        %3679 = vmatprep.subr.mxu0 0.0
        %3680 = vmatpush1.xpose.msra.mxu0 0.0
        %3681 = vmatprep.subr.mxu0 0.0
        %3682 = vmatpush1.xpose.msra.mxu0 %v3651
        %3683 = vmatprep.subr.mxu0 0.0
        %3684 = vmatpush1.xpose.msra.mxu0 %v3649
        %3685 = vmatprep.subr.mxu0 0.0
        %3686 = vmatpush2.xpose.msra.mxu0 0.0
        %3687 = vmatprep.subr.mxu0 0.0
        %3688 = vmatpush2.xpose.msra.mxu0 0.0
        %3689 = vmatprep.subr.mxu0 0.0
        %3690 = vmatpush2.xpose.msra.mxu0 0.0
        %3691 = vmatprep.subr.mxu0 0.0
        %3692 = vmatpush2.xpose.msra.mxu0 0.0
        %3693 = vmatprep.subr.mxu0 0.0
        %3694 = vmatpush2.xpose.msra.mxu0 0.0
        %3695 = vmatprep.subr.mxu0 0.0
        %3696 = vmatpush2.xpose.msra.mxu0 0.0
        %3697 = vmatprep.subr.mxu0 0.0
        %3698 = vmatpush2.xpose.msra.mxu0 0.0
        %3699 = vmatprep.subr.mxu0 0.0
        %3700 = vmatpush2.xpose.msra.mxu0 0.0
        %3701 = vmatprep.subr.mxu0 0.0
        %3702 = vmatpush2.xpose.msra.mxu0 0.0
        %3703 = vmatprep.subr.mxu0 0.0
        %3704 = vmatpush2.xpose.msra.mxu0 0.0
        %3705 = vmatprep.subr.mxu0 0.0
        %3706 = vmatpush2.xpose.msra.mxu0 0.0
        %3707 = vmatprep.subr.mxu0 0.0
        %3708 = vmatpush2.xpose.msra.mxu0 0.0
        %3709 = vmatprep.subr.mxu0 0.0
        %3710 = vmatpush2.xpose.msra.mxu0 0.0
        %3711 = vmatprep.subr.mxu0 0.0
        %3712 = vmatpush2.xpose.msra.mxu0 0.0
        %3713 = vmatprep.subr.mxu0 0.0
        %3714 = vmatpush2.xpose.msra.mxu0 0.0
        %3715 = vmatprep.subr.mxu0 0.0
        %3716 = vmatpush2.xpose.msra.mxu0 0.0
        %3717 = vmatprep.mubr.f32.mxu0 0.0
        %3718 = vmatmul.mubr.f32.gmra.mxu0 %v1910
        %v3719 = vpop.f32.mrf.mxu0
        %v3720 = vadd.f32 %v1840, %v3719
        %v3721 = vpop.f32.mrf.mxu0
        %3722 = vmatprep.mubr.f32.mxu0 0.0
        %3723 = vmatmul.mubr.f32.gmra.mxu0 %v1913
        %v3724 = vpop.f32.mrf.mxu0
        %v3725 = vadd.f32 %v1841, %v3724
        %v3726 = vpop.f32.mrf.mxu0
        %3727 = vdwg.mxu0
        %v3728 = vsel %vm372, %v3720, -inf
        %3729 = vmax.xlane.f32.xlu0 %v3728
        %v3730 = vpop.xlane.xlu0 %3729
        %v3731 = vsel %vm372, %v3725, -inf
        %3732 = vmax.xlane.f32.xlu0 %v3731
        %v3733 = vpop.xlane.xlu0 %3732
        %v3734 = vsub.f32 %v3720, %v3730
        %v3735 = vsub.f32 %v3725, %v3733
        %v3736 = vmul.f32 %v3734, 1.442695
        %v3737 = vpow.pop %v3736
        %v3738 = vmul.f32 %v3735, 1.442695
        %v3739 = vpow.pop %v3738
        %v3740 = vsel %vm372, %v3737, 0.0
        %3741 = vadd.xlane.f32.xlu0 %v3740
        %v3742 = vpop.xlane.xlu0 %3741
        %v3743 = vsel %vm372, %v3739, 0.0
        %3744 = vadd.xlane.f32.xlu0 %v3743
        %v3745 = vpop.xlane.xlu0 %3744
        %v3746 = vrcp.pop %v3742
        %v3747 = vrcp.pop %v3745
        %v3748 = vmul.f32 %v3737, %v3746
        %v3749 = vmul.f32 %v3739, %v3747
        %s3750 = scalar_lea.vmem %s269, 112 [#allocation8]
        %v3751 = vld [vmem:[%s3750] sm:$0xff]
        %v3752 = vld [vmem:[%s3750 + $0x8] sm:$0xff]
        %v3754 = vsel %vm372, %v3748, 0
        %v3757 = vsel %vm372, %v3749, 0
        %3759 = vmatprep.subr.mxu0 0.0
        %3760 = vmatpush1.msra.mxu0 0.0
        %3761 = vmatprep.subr.mxu0 0.0
        %3762 = vmatpush1.msra.mxu0 0.0
        %3763 = vmatprep.subr.mxu0 0.0
        %3764 = vmatpush1.msra.mxu0 0.0
        %3765 = vmatprep.subr.mxu0 0.0
        %3766 = vmatpush1.msra.mxu0 0.0
        %3767 = vmatprep.subr.mxu0 0.0
        %3768 = vmatpush1.msra.mxu0 0.0
        %3769 = vmatprep.subr.mxu0 0.0
        %3770 = vmatpush1.msra.mxu0 0.0
        %3771 = vmatprep.subr.mxu0 0.0
        %3772 = vmatpush1.msra.mxu0 0.0
        %3773 = vmatprep.subr.mxu0 0.0
        %3774 = vmatpush1.msra.mxu0 0.0
        %3775 = vmatprep.subr.mxu0 0.0
        %3776 = vmatpush1.msra.mxu0 0.0
        %3777 = vmatprep.subr.mxu0 0.0
        %3778 = vmatpush1.msra.mxu0 0.0
        %3779 = vmatprep.subr.mxu0 0.0
        %3780 = vmatpush1.msra.mxu0 0.0
        %3781 = vmatprep.subr.mxu0 0.0
        %3782 = vmatpush1.msra.mxu0 0.0
        %3783 = vmatprep.subr.mxu0 0.0
        %3784 = vmatpush1.msra.mxu0 0.0
        %3785 = vmatprep.subr.mxu0 0.0
        %3786 = vmatpush1.msra.mxu0 0.0
        %3787 = vmatprep.subr.mxu0 0.0
        %3788 = vmatpush1.msra.mxu0 %v3752
        %3789 = vmatprep.subr.mxu0 0.0
        %3790 = vmatpush1.msra.mxu0 %v3751
        %3791 = vmatprep.subr.mxu0 0.0
        %3792 = vmatpush2.msra.mxu0 0.0
        %3793 = vmatprep.subr.mxu0 0.0
        %3794 = vmatpush2.msra.mxu0 0.0
        %3795 = vmatprep.subr.mxu0 0.0
        %3796 = vmatpush2.msra.mxu0 0.0
        %3797 = vmatprep.subr.mxu0 0.0
        %3798 = vmatpush2.msra.mxu0 0.0
        %3799 = vmatprep.subr.mxu0 0.0
        %3800 = vmatpush2.msra.mxu0 0.0
        %3801 = vmatprep.subr.mxu0 0.0
        %3802 = vmatpush2.msra.mxu0 0.0
        %3803 = vmatprep.subr.mxu0 0.0
        %3804 = vmatpush2.msra.mxu0 0.0
        %3805 = vmatprep.subr.mxu0 0.0
        %3806 = vmatpush2.msra.mxu0 0.0
        %3807 = vmatprep.subr.mxu0 0.0
        %3808 = vmatpush2.msra.mxu0 0.0
        %3809 = vmatprep.subr.mxu0 0.0
        %3810 = vmatpush2.msra.mxu0 0.0
        %3811 = vmatprep.subr.mxu0 0.0
        %3812 = vmatpush2.msra.mxu0 0.0
        %3813 = vmatprep.subr.mxu0 0.0
        %3814 = vmatpush2.msra.mxu0 0.0
        %3815 = vmatprep.subr.mxu0 0.0
        %3816 = vmatpush2.msra.mxu0 0.0
        %3817 = vmatprep.subr.mxu0 0.0
        %3818 = vmatpush2.msra.mxu0 0.0
        %3819 = vmatprep.subr.mxu0 0.0
        %3820 = vmatpush2.msra.mxu0 0.0
        %3821 = vmatprep.subr.mxu0 0.0
        %3822 = vmatpush2.msra.mxu0 0.0
        %3823 = vmatprep.mubr.f32.mxu0 0.0
        %3824 = vmatmul.mubr.f32.gmra.mxu0 %v3754
        %v3825 = vpop.f32.mrf.mxu0
        %v3826 = vadd.f32 0.0, %v3825
        %v3827 = vpop.f32.mrf.mxu0
        %3828 = vmatprep.mubr.f32.mxu0 0.0
        %3829 = vmatmul.mubr.f32.gmra.mxu0 %v3757
        %v3830 = vpop.f32.mrf.mxu0
        %v3831 = vadd.f32 0.0, %v3830
        %v3832 = vpop.f32.mrf.mxu0
        %3833 = vdwg.mxu0
        %s3834 = scalar_lea.vmem %s307, 112 [#allocation11]
        %3835 = vst.msk [vmem:[%s3834] sm:$0xff] %vm372, %v3826
        %3836 = vst.msk [vmem:[%s3834 + $0x8] sm:$0xff] %vm372, %v3831
        %v3837 = vld [vmem:[#allocation2 + $0x8] sm:$0x1]
        %v3838 = vld [vmem:[#allocation2 + $0x18] sm:$0x1]
        %v3839 = vld [vmem:[#allocation2 + $0x28] sm:$0x1]
        %v3840 = vld [vmem:[#allocation2 + $0x38] sm:$0x1]
        %v3841 = vld [vmem:[#allocation2 + $0x48] sm:$0x1]
        %v3842 = vld [vmem:[#allocation2 + $0x58] sm:$0x1]
        %v3843 = vld [vmem:[#allocation2 + $0x68] sm:$0x1]
        %v3844 = vld [vmem:[#allocation2 + $0x78] sm:$0x1]
        %v3845 = vld [vmem:[#allocation2 + $0x88] sm:$0x1]
        %v3846 = vld [vmem:[#allocation2 + $0x98] sm:$0x1]
        %v3847 = vld [vmem:[#allocation2 + $0xa8] sm:$0x1]
        %v3848 = vld [vmem:[#allocation2 + $0xb8] sm:$0x1]
        %v3849 = vld [vmem:[#allocation2 + $0xc8] sm:$0x1]
        %v3850 = vld [vmem:[#allocation2 + $0xd8] sm:$0x1]
        %v3851 = vld [vmem:[#allocation2 + $0xe8] sm:$0x1]
        %v3852 = vld [vmem:[#allocation2 + $0xf8] sm:$0x1]
        %v3869 = vrot.slane %v3838, 7
        %v3870 = vsel %vm1875, %v3869, %v3837
        %v3871 = vrot.slane %v3839, 6
        %v3872 = vsel %vm1878, %v3871, %v3870
        %v3873 = vrot.slane %v3840, 5
        %v3874 = vsel %vm1881, %v3873, %v3872
        %v3875 = vrot.slane %v3841, 4
        %v3876 = vsel %vm1884, %v3875, %v3874
        %v3877 = vrot.slane %v3842, 3
        %v3878 = vsel %vm1887, %v3877, %v3876
        %v3879 = vrot.slane %v3843, 2
        %v3880 = vsel %vm1890, %v3879, %v3878
        %v3881 = vrot.slane %v3844, 1
        %v3882 = vsel %vm1893, %v3881, %v3880
        %v3883 = vrot.slane %v3846, 7
        %v3884 = vsel %vm1875, %v3883, %v3845
        %v3885 = vrot.slane %v3847, 6
        %v3886 = vsel %vm1878, %v3885, %v3884
        %v3887 = vrot.slane %v3848, 5
        %v3888 = vsel %vm1881, %v3887, %v3886
        %v3889 = vrot.slane %v3849, 4
        %v3890 = vsel %vm1884, %v3889, %v3888
        %v3891 = vrot.slane %v3850, 3
        %v3892 = vsel %vm1887, %v3891, %v3890
        %v3893 = vrot.slane %v3851, 2
        %v3894 = vsel %vm1890, %v3893, %v3892
        %v3895 = vrot.slane %v3852, 1
        %v3896 = vsel %vm1893, %v3895, %v3894
        %v3897 = vsel %vm372, %v3882, 0
        %v3899 = vsel %vm372, %v3896, 0
        %3901 = vmatprep.subr.mxu0 0.0
        %3902 = vmatpush1.xpose.msra.mxu0 0.0
        %3903 = vmatprep.subr.mxu0 0.0
        %3904 = vmatpush1.xpose.msra.mxu0 0.0
        %3905 = vmatprep.subr.mxu0 0.0
        %3906 = vmatpush1.xpose.msra.mxu0 0.0
        %3907 = vmatprep.subr.mxu0 0.0
        %3908 = vmatpush1.xpose.msra.mxu0 0.0
        %3909 = vmatprep.subr.mxu0 0.0
        %3910 = vmatpush1.xpose.msra.mxu0 0.0
        %3911 = vmatprep.subr.mxu0 0.0
        %3912 = vmatpush1.xpose.msra.mxu0 0.0
        %3913 = vmatprep.subr.mxu0 0.0
        %3914 = vmatpush1.xpose.msra.mxu0 0.0
        %3915 = vmatprep.subr.mxu0 0.0
        %3916 = vmatpush1.xpose.msra.mxu0 0.0
        %3917 = vmatprep.subr.mxu0 0.0
        %3918 = vmatpush1.xpose.msra.mxu0 0.0
        %3919 = vmatprep.subr.mxu0 0.0
        %3920 = vmatpush1.xpose.msra.mxu0 0.0
        %3921 = vmatprep.subr.mxu0 0.0
        %3922 = vmatpush1.xpose.msra.mxu0 0.0
        %3923 = vmatprep.subr.mxu0 0.0
        %3924 = vmatpush1.xpose.msra.mxu0 0.0
        %3925 = vmatprep.subr.mxu0 0.0
        %3926 = vmatpush1.xpose.msra.mxu0 0.0
        %3927 = vmatprep.subr.mxu0 0.0
        %3928 = vmatpush1.xpose.msra.mxu0 0.0
        %3929 = vmatprep.subr.mxu0 0.0
        %3930 = vmatpush1.xpose.msra.mxu0 %v3899
        %3931 = vmatprep.subr.mxu0 0.0
        %3932 = vmatpush1.xpose.msra.mxu0 %v3897
        %3933 = vmatprep.subr.mxu0 0.0
        %3934 = vmatpush2.xpose.msra.mxu0 0.0
        %3935 = vmatprep.subr.mxu0 0.0
        %3936 = vmatpush2.xpose.msra.mxu0 0.0
        %3937 = vmatprep.subr.mxu0 0.0
        %3938 = vmatpush2.xpose.msra.mxu0 0.0
        %3939 = vmatprep.subr.mxu0 0.0
        %3940 = vmatpush2.xpose.msra.mxu0 0.0
        %3941 = vmatprep.subr.mxu0 0.0
        %3942 = vmatpush2.xpose.msra.mxu0 0.0
        %3943 = vmatprep.subr.mxu0 0.0
        %3944 = vmatpush2.xpose.msra.mxu0 0.0
        %3945 = vmatprep.subr.mxu0 0.0
        %3946 = vmatpush2.xpose.msra.mxu0 0.0
        %3947 = vmatprep.subr.mxu0 0.0
        %3948 = vmatpush2.xpose.msra.mxu0 0.0
        %3949 = vmatprep.subr.mxu0 0.0
        %3950 = vmatpush2.xpose.msra.mxu0 0.0
        %3951 = vmatprep.subr.mxu0 0.0
        %3952 = vmatpush2.xpose.msra.mxu0 0.0
        %3953 = vmatprep.subr.mxu0 0.0
        %3954 = vmatpush2.xpose.msra.mxu0 0.0
        %3955 = vmatprep.subr.mxu0 0.0
        %3956 = vmatpush2.xpose.msra.mxu0 0.0
        %3957 = vmatprep.subr.mxu0 0.0
        %3958 = vmatpush2.xpose.msra.mxu0 0.0
        %3959 = vmatprep.subr.mxu0 0.0
        %3960 = vmatpush2.xpose.msra.mxu0 0.0
        %3961 = vmatprep.subr.mxu0 0.0
        %3962 = vmatpush2.xpose.msra.mxu0 0.0
        %3963 = vmatprep.subr.mxu0 0.0
        %3964 = vmatpush2.xpose.msra.mxu0 0.0
        %3965 = vmatprep.mubr.f32.mxu0 0.0
        %3966 = vmatmul.mubr.f32.gmra.mxu0 %v1910
        %v3967 = vpop.f32.mrf.mxu0
        %v3968 = vadd.f32 %v1840, %v3967
        %v3969 = vpop.f32.mrf.mxu0
        %3970 = vmatprep.mubr.f32.mxu0 0.0
        %3971 = vmatmul.mubr.f32.gmra.mxu0 %v1913
        %v3972 = vpop.f32.mrf.mxu0
        %v3973 = vadd.f32 %v1841, %v3972
        %v3974 = vpop.f32.mrf.mxu0
        %3975 = vdwg.mxu0
        %v3976 = vsel %vm372, %v3968, -inf
        %3977 = vmax.xlane.f32.xlu0 %v3976
        %v3978 = vpop.xlane.xlu0 %3977
        %v3979 = vsel %vm372, %v3973, -inf
        %3980 = vmax.xlane.f32.xlu0 %v3979
        %v3981 = vpop.xlane.xlu0 %3980
        %v3982 = vsub.f32 %v3968, %v3978
        %v3983 = vsub.f32 %v3973, %v3981
        %v3984 = vmul.f32 %v3982, 1.442695
        %v3985 = vpow.pop %v3984
        %v3986 = vmul.f32 %v3983, 1.442695
        %v3987 = vpow.pop %v3986
        %v3988 = vsel %vm372, %v3985, 0.0
        %3989 = vadd.xlane.f32.xlu0 %v3988
        %v3990 = vpop.xlane.xlu0 %3989
        %v3991 = vsel %vm372, %v3987, 0.0
        %3992 = vadd.xlane.f32.xlu0 %v3991
        %v3993 = vpop.xlane.xlu0 %3992
        %v3994 = vrcp.pop %v3990
        %v3995 = vrcp.pop %v3993
        %v3996 = vmul.f32 %v3985, %v3994
        %v3997 = vmul.f32 %v3987, %v3995
        %s3998 = scalar_lea.vmem %s269, 128 [#allocation8]
        %v3999 = vld [vmem:[%s3998] sm:$0xff]
        %v4000 = vld [vmem:[%s3998 + $0x8] sm:$0xff]
        %v4002 = vsel %vm372, %v3996, 0
        %v4005 = vsel %vm372, %v3997, 0
        %4007 = vmatprep.subr.mxu0 0.0
        %4008 = vmatpush1.msra.mxu0 0.0
        %4009 = vmatprep.subr.mxu0 0.0
        %4010 = vmatpush1.msra.mxu0 0.0
        %4011 = vmatprep.subr.mxu0 0.0
        %4012 = vmatpush1.msra.mxu0 0.0
        %4013 = vmatprep.subr.mxu0 0.0
        %4014 = vmatpush1.msra.mxu0 0.0
        %4015 = vmatprep.subr.mxu0 0.0
        %4016 = vmatpush1.msra.mxu0 0.0
        %4017 = vmatprep.subr.mxu0 0.0
        %4018 = vmatpush1.msra.mxu0 0.0
        %4019 = vmatprep.subr.mxu0 0.0
        %4020 = vmatpush1.msra.mxu0 0.0
        %4021 = vmatprep.subr.mxu0 0.0
        %4022 = vmatpush1.msra.mxu0 0.0
        %4023 = vmatprep.subr.mxu0 0.0
        %4024 = vmatpush1.msra.mxu0 0.0
        %4025 = vmatprep.subr.mxu0 0.0
        %4026 = vmatpush1.msra.mxu0 0.0
        %4027 = vmatprep.subr.mxu0 0.0
        %4028 = vmatpush1.msra.mxu0 0.0
        %4029 = vmatprep.subr.mxu0 0.0
        %4030 = vmatpush1.msra.mxu0 0.0
        %4031 = vmatprep.subr.mxu0 0.0
        %4032 = vmatpush1.msra.mxu0 0.0
        %4033 = vmatprep.subr.mxu0 0.0
        %4034 = vmatpush1.msra.mxu0 0.0
        %4035 = vmatprep.subr.mxu0 0.0
        %4036 = vmatpush1.msra.mxu0 %v4000
        %4037 = vmatprep.subr.mxu0 0.0
        %4038 = vmatpush1.msra.mxu0 %v3999
        %4039 = vmatprep.subr.mxu0 0.0
        %4040 = vmatpush2.msra.mxu0 0.0
        %4041 = vmatprep.subr.mxu0 0.0
        %4042 = vmatpush2.msra.mxu0 0.0
        %4043 = vmatprep.subr.mxu0 0.0
        %4044 = vmatpush2.msra.mxu0 0.0
        %4045 = vmatprep.subr.mxu0 0.0
        %4046 = vmatpush2.msra.mxu0 0.0
        %4047 = vmatprep.subr.mxu0 0.0
        %4048 = vmatpush2.msra.mxu0 0.0
        %4049 = vmatprep.subr.mxu0 0.0
        %4050 = vmatpush2.msra.mxu0 0.0
        %4051 = vmatprep.subr.mxu0 0.0
        %4052 = vmatpush2.msra.mxu0 0.0
        %4053 = vmatprep.subr.mxu0 0.0
        %4054 = vmatpush2.msra.mxu0 0.0
        %4055 = vmatprep.subr.mxu0 0.0
        %4056 = vmatpush2.msra.mxu0 0.0
        %4057 = vmatprep.subr.mxu0 0.0
        %4058 = vmatpush2.msra.mxu0 0.0
        %4059 = vmatprep.subr.mxu0 0.0
        %4060 = vmatpush2.msra.mxu0 0.0
        %4061 = vmatprep.subr.mxu0 0.0
        %4062 = vmatpush2.msra.mxu0 0.0
        %4063 = vmatprep.subr.mxu0 0.0
        %4064 = vmatpush2.msra.mxu0 0.0
        %4065 = vmatprep.subr.mxu0 0.0
        %4066 = vmatpush2.msra.mxu0 0.0
        %4067 = vmatprep.subr.mxu0 0.0
        %4068 = vmatpush2.msra.mxu0 0.0
        %4069 = vmatprep.subr.mxu0 0.0
        %4070 = vmatpush2.msra.mxu0 0.0
        %4071 = vmatprep.mubr.f32.mxu0 0.0
        %4072 = vmatmul.mubr.f32.gmra.mxu0 %v4002
        %v4073 = vpop.f32.mrf.mxu0
        %v4074 = vadd.f32 0.0, %v4073
        %v4075 = vpop.f32.mrf.mxu0
        %4076 = vmatprep.mubr.f32.mxu0 0.0
        %4077 = vmatmul.mubr.f32.gmra.mxu0 %v4005
        %v4078 = vpop.f32.mrf.mxu0
        %v4079 = vadd.f32 0.0, %v4078
        %v4080 = vpop.f32.mrf.mxu0
        %4081 = vdwg.mxu0
        %s4082 = scalar_lea.vmem %s307, 128 [#allocation11]
        %4083 = vst.msk [vmem:[%s4082] sm:$0xff] %vm372, %v4074
        %4084 = vst.msk [vmem:[%s4082 + $0x8] sm:$0xff] %vm372, %v4079
        %v4085 = vld [vmem:[#allocation2 + $0x9] sm:$0x1]
        %v4086 = vld [vmem:[#allocation2 + $0x19] sm:$0x1]
        %v4087 = vld [vmem:[#allocation2 + $0x29] sm:$0x1]
        %v4088 = vld [vmem:[#allocation2 + $0x39] sm:$0x1]
        %v4089 = vld [vmem:[#allocation2 + $0x49] sm:$0x1]
        %v4090 = vld [vmem:[#allocation2 + $0x59] sm:$0x1]
        %v4091 = vld [vmem:[#allocation2 + $0x69] sm:$0x1]
        %v4092 = vld [vmem:[#allocation2 + $0x79] sm:$0x1]
        %v4093 = vld [vmem:[#allocation2 + $0x89] sm:$0x1]
        %v4094 = vld [vmem:[#allocation2 + $0x99] sm:$0x1]
        %v4095 = vld [vmem:[#allocation2 + $0xa9] sm:$0x1]
        %v4096 = vld [vmem:[#allocation2 + $0xb9] sm:$0x1]
        %v4097 = vld [vmem:[#allocation2 + $0xc9] sm:$0x1]
        %v4098 = vld [vmem:[#allocation2 + $0xd9] sm:$0x1]
        %v4099 = vld [vmem:[#allocation2 + $0xe9] sm:$0x1]
        %v4100 = vld [vmem:[#allocation2 + $0xf9] sm:$0x1]
        %v4117 = vrot.slane %v4086, 7
        %v4118 = vsel %vm1875, %v4117, %v4085
        %v4119 = vrot.slane %v4087, 6
        %v4120 = vsel %vm1878, %v4119, %v4118
        %v4121 = vrot.slane %v4088, 5
        %v4122 = vsel %vm1881, %v4121, %v4120
        %v4123 = vrot.slane %v4089, 4
        %v4124 = vsel %vm1884, %v4123, %v4122
        %v4125 = vrot.slane %v4090, 3
        %v4126 = vsel %vm1887, %v4125, %v4124
        %v4127 = vrot.slane %v4091, 2
        %v4128 = vsel %vm1890, %v4127, %v4126
        %v4129 = vrot.slane %v4092, 1
        %v4130 = vsel %vm1893, %v4129, %v4128
        %v4131 = vrot.slane %v4094, 7
        %v4132 = vsel %vm1875, %v4131, %v4093
        %v4133 = vrot.slane %v4095, 6
        %v4134 = vsel %vm1878, %v4133, %v4132
        %v4135 = vrot.slane %v4096, 5
        %v4136 = vsel %vm1881, %v4135, %v4134
        %v4137 = vrot.slane %v4097, 4
        %v4138 = vsel %vm1884, %v4137, %v4136
        %v4139 = vrot.slane %v4098, 3
        %v4140 = vsel %vm1887, %v4139, %v4138
        %v4141 = vrot.slane %v4099, 2
        %v4142 = vsel %vm1890, %v4141, %v4140
        %v4143 = vrot.slane %v4100, 1
        %v4144 = vsel %vm1893, %v4143, %v4142
        %v4145 = vsel %vm372, %v4130, 0
        %v4147 = vsel %vm372, %v4144, 0
        %4149 = vmatprep.subr.mxu0 0.0
        %4150 = vmatpush1.xpose.msra.mxu0 0.0
        %4151 = vmatprep.subr.mxu0 0.0
        %4152 = vmatpush1.xpose.msra.mxu0 0.0
        %4153 = vmatprep.subr.mxu0 0.0
        %4154 = vmatpush1.xpose.msra.mxu0 0.0
        %4155 = vmatprep.subr.mxu0 0.0
        %4156 = vmatpush1.xpose.msra.mxu0 0.0
        %4157 = vmatprep.subr.mxu0 0.0
        %4158 = vmatpush1.xpose.msra.mxu0 0.0
        %4159 = vmatprep.subr.mxu0 0.0
        %4160 = vmatpush1.xpose.msra.mxu0 0.0
        %4161 = vmatprep.subr.mxu0 0.0
        %4162 = vmatpush1.xpose.msra.mxu0 0.0
        %4163 = vmatprep.subr.mxu0 0.0
        %4164 = vmatpush1.xpose.msra.mxu0 0.0
        %4165 = vmatprep.subr.mxu0 0.0
        %4166 = vmatpush1.xpose.msra.mxu0 0.0
        %4167 = vmatprep.subr.mxu0 0.0
        %4168 = vmatpush1.xpose.msra.mxu0 0.0
        %4169 = vmatprep.subr.mxu0 0.0
        %4170 = vmatpush1.xpose.msra.mxu0 0.0
        %4171 = vmatprep.subr.mxu0 0.0
        %4172 = vmatpush1.xpose.msra.mxu0 0.0
        %4173 = vmatprep.subr.mxu0 0.0
        %4174 = vmatpush1.xpose.msra.mxu0 0.0
        %4175 = vmatprep.subr.mxu0 0.0
        %4176 = vmatpush1.xpose.msra.mxu0 0.0
        %4177 = vmatprep.subr.mxu0 0.0
        %4178 = vmatpush1.xpose.msra.mxu0 %v4147
        %4179 = vmatprep.subr.mxu0 0.0
        %4180 = vmatpush1.xpose.msra.mxu0 %v4145
        %4181 = vmatprep.subr.mxu0 0.0
        %4182 = vmatpush2.xpose.msra.mxu0 0.0
        %4183 = vmatprep.subr.mxu0 0.0
        %4184 = vmatpush2.xpose.msra.mxu0 0.0
        %4185 = vmatprep.subr.mxu0 0.0
        %4186 = vmatpush2.xpose.msra.mxu0 0.0
        %4187 = vmatprep.subr.mxu0 0.0
        %4188 = vmatpush2.xpose.msra.mxu0 0.0
        %4189 = vmatprep.subr.mxu0 0.0
        %4190 = vmatpush2.xpose.msra.mxu0 0.0
        %4191 = vmatprep.subr.mxu0 0.0
        %4192 = vmatpush2.xpose.msra.mxu0 0.0
        %4193 = vmatprep.subr.mxu0 0.0
        %4194 = vmatpush2.xpose.msra.mxu0 0.0
        %4195 = vmatprep.subr.mxu0 0.0
        %4196 = vmatpush2.xpose.msra.mxu0 0.0
        %4197 = vmatprep.subr.mxu0 0.0
        %4198 = vmatpush2.xpose.msra.mxu0 0.0
        %4199 = vmatprep.subr.mxu0 0.0
        %4200 = vmatpush2.xpose.msra.mxu0 0.0
        %4201 = vmatprep.subr.mxu0 0.0
        %4202 = vmatpush2.xpose.msra.mxu0 0.0
        %4203 = vmatprep.subr.mxu0 0.0
        %4204 = vmatpush2.xpose.msra.mxu0 0.0
        %4205 = vmatprep.subr.mxu0 0.0
        %4206 = vmatpush2.xpose.msra.mxu0 0.0
        %4207 = vmatprep.subr.mxu0 0.0
        %4208 = vmatpush2.xpose.msra.mxu0 0.0
        %4209 = vmatprep.subr.mxu0 0.0
        %4210 = vmatpush2.xpose.msra.mxu0 0.0
        %4211 = vmatprep.subr.mxu0 0.0
        %4212 = vmatpush2.xpose.msra.mxu0 0.0
        %4213 = vmatprep.mubr.f32.mxu0 0.0
        %4214 = vmatmul.mubr.f32.gmra.mxu0 %v1910
        %v4215 = vpop.f32.mrf.mxu0
        %v4216 = vadd.f32 %v1840, %v4215
        %v4217 = vpop.f32.mrf.mxu0
        %4218 = vmatprep.mubr.f32.mxu0 0.0
        %4219 = vmatmul.mubr.f32.gmra.mxu0 %v1913
        %v4220 = vpop.f32.mrf.mxu0
        %v4221 = vadd.f32 %v1841, %v4220
        %v4222 = vpop.f32.mrf.mxu0
        %4223 = vdwg.mxu0
        %v4224 = vsel %vm372, %v4216, -inf
        %4225 = vmax.xlane.f32.xlu0 %v4224
        %v4226 = vpop.xlane.xlu0 %4225
        %v4227 = vsel %vm372, %v4221, -inf
        %4228 = vmax.xlane.f32.xlu0 %v4227
        %v4229 = vpop.xlane.xlu0 %4228
        %v4230 = vsub.f32 %v4216, %v4226
        %v4231 = vsub.f32 %v4221, %v4229
        %v4232 = vmul.f32 %v4230, 1.442695
        %v4233 = vpow.pop %v4232
        %v4234 = vmul.f32 %v4231, 1.442695
        %v4235 = vpow.pop %v4234
        %v4236 = vsel %vm372, %v4233, 0.0
        %4237 = vadd.xlane.f32.xlu0 %v4236
        %v4238 = vpop.xlane.xlu0 %4237
        %v4239 = vsel %vm372, %v4235, 0.0
        %4240 = vadd.xlane.f32.xlu0 %v4239
        %v4241 = vpop.xlane.xlu0 %4240
        %v4242 = vrcp.pop %v4238
        %v4243 = vrcp.pop %v4241
        %v4244 = vmul.f32 %v4233, %v4242
        %v4245 = vmul.f32 %v4235, %v4243
        %s4246 = scalar_lea.vmem %s269, 144 [#allocation8]
        %v4247 = vld [vmem:[%s4246] sm:$0xff]
        %v4248 = vld [vmem:[%s4246 + $0x8] sm:$0xff]
        %v4250 = vsel %vm372, %v4244, 0
        %v4253 = vsel %vm372, %v4245, 0
        %4255 = vmatprep.subr.mxu0 0.0
        %4256 = vmatpush1.msra.mxu0 0.0
        %4257 = vmatprep.subr.mxu0 0.0
        %4258 = vmatpush1.msra.mxu0 0.0
        %4259 = vmatprep.subr.mxu0 0.0
        %4260 = vmatpush1.msra.mxu0 0.0
        %4261 = vmatprep.subr.mxu0 0.0
        %4262 = vmatpush1.msra.mxu0 0.0
        %4263 = vmatprep.subr.mxu0 0.0
        %4264 = vmatpush1.msra.mxu0 0.0
        %4265 = vmatprep.subr.mxu0 0.0
        %4266 = vmatpush1.msra.mxu0 0.0
        %4267 = vmatprep.subr.mxu0 0.0
        %4268 = vmatpush1.msra.mxu0 0.0
        %4269 = vmatprep.subr.mxu0 0.0
        %4270 = vmatpush1.msra.mxu0 0.0
        %4271 = vmatprep.subr.mxu0 0.0
        %4272 = vmatpush1.msra.mxu0 0.0
        %4273 = vmatprep.subr.mxu0 0.0
        %4274 = vmatpush1.msra.mxu0 0.0
        %4275 = vmatprep.subr.mxu0 0.0
        %4276 = vmatpush1.msra.mxu0 0.0
        %4277 = vmatprep.subr.mxu0 0.0
        %4278 = vmatpush1.msra.mxu0 0.0
        %4279 = vmatprep.subr.mxu0 0.0
        %4280 = vmatpush1.msra.mxu0 0.0
        %4281 = vmatprep.subr.mxu0 0.0
        %4282 = vmatpush1.msra.mxu0 0.0
        %4283 = vmatprep.subr.mxu0 0.0
        %4284 = vmatpush1.msra.mxu0 %v4248
        %4285 = vmatprep.subr.mxu0 0.0
        %4286 = vmatpush1.msra.mxu0 %v4247
        %4287 = vmatprep.subr.mxu0 0.0
        %4288 = vmatpush2.msra.mxu0 0.0
        %4289 = vmatprep.subr.mxu0 0.0
        %4290 = vmatpush2.msra.mxu0 0.0
        %4291 = vmatprep.subr.mxu0 0.0
        %4292 = vmatpush2.msra.mxu0 0.0
        %4293 = vmatprep.subr.mxu0 0.0
        %4294 = vmatpush2.msra.mxu0 0.0
        %4295 = vmatprep.subr.mxu0 0.0
        %4296 = vmatpush2.msra.mxu0 0.0
        %4297 = vmatprep.subr.mxu0 0.0
        %4298 = vmatpush2.msra.mxu0 0.0
        %4299 = vmatprep.subr.mxu0 0.0
        %4300 = vmatpush2.msra.mxu0 0.0
        %4301 = vmatprep.subr.mxu0 0.0
        %4302 = vmatpush2.msra.mxu0 0.0
        %4303 = vmatprep.subr.mxu0 0.0
        %4304 = vmatpush2.msra.mxu0 0.0
        %4305 = vmatprep.subr.mxu0 0.0
        %4306 = vmatpush2.msra.mxu0 0.0
        %4307 = vmatprep.subr.mxu0 0.0
        %4308 = vmatpush2.msra.mxu0 0.0
        %4309 = vmatprep.subr.mxu0 0.0
        %4310 = vmatpush2.msra.mxu0 0.0
        %4311 = vmatprep.subr.mxu0 0.0
        %4312 = vmatpush2.msra.mxu0 0.0
        %4313 = vmatprep.subr.mxu0 0.0
        %4314 = vmatpush2.msra.mxu0 0.0
        %4315 = vmatprep.subr.mxu0 0.0
        %4316 = vmatpush2.msra.mxu0 0.0
        %4317 = vmatprep.subr.mxu0 0.0
        %4318 = vmatpush2.msra.mxu0 0.0
        %4319 = vmatprep.mubr.f32.mxu0 0.0
        %4320 = vmatmul.mubr.f32.gmra.mxu0 %v4250
        %v4321 = vpop.f32.mrf.mxu0
        %v4322 = vadd.f32 0.0, %v4321
        %v4323 = vpop.f32.mrf.mxu0
        %4324 = vmatprep.mubr.f32.mxu0 0.0
        %4325 = vmatmul.mubr.f32.gmra.mxu0 %v4253
        %v4326 = vpop.f32.mrf.mxu0
        %v4327 = vadd.f32 0.0, %v4326
        %v4328 = vpop.f32.mrf.mxu0
        %4329 = vdwg.mxu0
        %s4330 = scalar_lea.vmem %s307, 144 [#allocation11]
        %4331 = vst.msk [vmem:[%s4330] sm:$0xff] %vm372, %v4322
        %4332 = vst.msk [vmem:[%s4330 + $0x8] sm:$0xff] %vm372, %v4327
        %v4333 = vld [vmem:[#allocation2 + $0xa] sm:$0x1]
        %v4334 = vld [vmem:[#allocation2 + $0x1a] sm:$0x1]
        %v4335 = vld [vmem:[#allocation2 + $0x2a] sm:$0x1]
        %v4336 = vld [vmem:[#allocation2 + $0x3a] sm:$0x1]
        %v4337 = vld [vmem:[#allocation2 + $0x4a] sm:$0x1]
        %v4338 = vld [vmem:[#allocation2 + $0x5a] sm:$0x1]
        %v4339 = vld [vmem:[#allocation2 + $0x6a] sm:$0x1]
        %v4340 = vld [vmem:[#allocation2 + $0x7a] sm:$0x1]
        %v4341 = vld [vmem:[#allocation2 + $0x8a] sm:$0x1]
        %v4342 = vld [vmem:[#allocation2 + $0x9a] sm:$0x1]
        %v4343 = vld [vmem:[#allocation2 + $0xaa] sm:$0x1]
        %v4344 = vld [vmem:[#allocation2 + $0xba] sm:$0x1]
        %v4345 = vld [vmem:[#allocation2 + $0xca] sm:$0x1]
        %v4346 = vld [vmem:[#allocation2 + $0xda] sm:$0x1]
        %v4347 = vld [vmem:[#allocation2 + $0xea] sm:$0x1]
        %v4348 = vld [vmem:[#allocation2 + $0xfa] sm:$0x1]
        %v4365 = vrot.slane %v4334, 7
        %v4366 = vsel %vm1875, %v4365, %v4333
        %v4367 = vrot.slane %v4335, 6
        %v4368 = vsel %vm1878, %v4367, %v4366
        %v4369 = vrot.slane %v4336, 5
        %v4370 = vsel %vm1881, %v4369, %v4368
        %v4371 = vrot.slane %v4337, 4
        %v4372 = vsel %vm1884, %v4371, %v4370
        %v4373 = vrot.slane %v4338, 3
        %v4374 = vsel %vm1887, %v4373, %v4372
        %v4375 = vrot.slane %v4339, 2
        %v4376 = vsel %vm1890, %v4375, %v4374
        %v4377 = vrot.slane %v4340, 1
        %v4378 = vsel %vm1893, %v4377, %v4376
        %v4379 = vrot.slane %v4342, 7
        %v4380 = vsel %vm1875, %v4379, %v4341
        %v4381 = vrot.slane %v4343, 6
        %v4382 = vsel %vm1878, %v4381, %v4380
        %v4383 = vrot.slane %v4344, 5
        %v4384 = vsel %vm1881, %v4383, %v4382
        %v4385 = vrot.slane %v4345, 4
        %v4386 = vsel %vm1884, %v4385, %v4384
        %v4387 = vrot.slane %v4346, 3
        %v4388 = vsel %vm1887, %v4387, %v4386
        %v4389 = vrot.slane %v4347, 2
        %v4390 = vsel %vm1890, %v4389, %v4388
        %v4391 = vrot.slane %v4348, 1
        %v4392 = vsel %vm1893, %v4391, %v4390
        %v4393 = vsel %vm372, %v4378, 0
        %v4395 = vsel %vm372, %v4392, 0
        %4397 = vmatprep.subr.mxu0 0.0
        %4398 = vmatpush1.xpose.msra.mxu0 0.0
        %4399 = vmatprep.subr.mxu0 0.0
        %4400 = vmatpush1.xpose.msra.mxu0 0.0
        %4401 = vmatprep.subr.mxu0 0.0
        %4402 = vmatpush1.xpose.msra.mxu0 0.0
        %4403 = vmatprep.subr.mxu0 0.0
        %4404 = vmatpush1.xpose.msra.mxu0 0.0
        %4405 = vmatprep.subr.mxu0 0.0
        %4406 = vmatpush1.xpose.msra.mxu0 0.0
        %4407 = vmatprep.subr.mxu0 0.0
        %4408 = vmatpush1.xpose.msra.mxu0 0.0
        %4409 = vmatprep.subr.mxu0 0.0
        %4410 = vmatpush1.xpose.msra.mxu0 0.0
        %4411 = vmatprep.subr.mxu0 0.0
        %4412 = vmatpush1.xpose.msra.mxu0 0.0
        %4413 = vmatprep.subr.mxu0 0.0
        %4414 = vmatpush1.xpose.msra.mxu0 0.0
        %4415 = vmatprep.subr.mxu0 0.0
        %4416 = vmatpush1.xpose.msra.mxu0 0.0
        %4417 = vmatprep.subr.mxu0 0.0
        %4418 = vmatpush1.xpose.msra.mxu0 0.0
        %4419 = vmatprep.subr.mxu0 0.0
        %4420 = vmatpush1.xpose.msra.mxu0 0.0
        %4421 = vmatprep.subr.mxu0 0.0
        %4422 = vmatpush1.xpose.msra.mxu0 0.0
        %4423 = vmatprep.subr.mxu0 0.0
        %4424 = vmatpush1.xpose.msra.mxu0 0.0
        %4425 = vmatprep.subr.mxu0 0.0
        %4426 = vmatpush1.xpose.msra.mxu0 %v4395
        %4427 = vmatprep.subr.mxu0 0.0
        %4428 = vmatpush1.xpose.msra.mxu0 %v4393
        %4429 = vmatprep.subr.mxu0 0.0
        %4430 = vmatpush2.xpose.msra.mxu0 0.0
        %4431 = vmatprep.subr.mxu0 0.0
        %4432 = vmatpush2.xpose.msra.mxu0 0.0
        %4433 = vmatprep.subr.mxu0 0.0
        %4434 = vmatpush2.xpose.msra.mxu0 0.0
        %4435 = vmatprep.subr.mxu0 0.0
        %4436 = vmatpush2.xpose.msra.mxu0 0.0
        %4437 = vmatprep.subr.mxu0 0.0
        %4438 = vmatpush2.xpose.msra.mxu0 0.0
        %4439 = vmatprep.subr.mxu0 0.0
        %4440 = vmatpush2.xpose.msra.mxu0 0.0
        %4441 = vmatprep.subr.mxu0 0.0
        %4442 = vmatpush2.xpose.msra.mxu0 0.0
        %4443 = vmatprep.subr.mxu0 0.0
        %4444 = vmatpush2.xpose.msra.mxu0 0.0
        %4445 = vmatprep.subr.mxu0 0.0
        %4446 = vmatpush2.xpose.msra.mxu0 0.0
        %4447 = vmatprep.subr.mxu0 0.0
        %4448 = vmatpush2.xpose.msra.mxu0 0.0
        %4449 = vmatprep.subr.mxu0 0.0
        %4450 = vmatpush2.xpose.msra.mxu0 0.0
        %4451 = vmatprep.subr.mxu0 0.0
        %4452 = vmatpush2.xpose.msra.mxu0 0.0
        %4453 = vmatprep.subr.mxu0 0.0
        %4454 = vmatpush2.xpose.msra.mxu0 0.0
        %4455 = vmatprep.subr.mxu0 0.0
        %4456 = vmatpush2.xpose.msra.mxu0 0.0
        %4457 = vmatprep.subr.mxu0 0.0
        %4458 = vmatpush2.xpose.msra.mxu0 0.0
        %4459 = vmatprep.subr.mxu0 0.0
        %4460 = vmatpush2.xpose.msra.mxu0 0.0
        %4461 = vmatprep.mubr.f32.mxu0 0.0
        %4462 = vmatmul.mubr.f32.gmra.mxu0 %v1910
        %v4463 = vpop.f32.mrf.mxu0
        %v4464 = vadd.f32 %v1840, %v4463
        %v4465 = vpop.f32.mrf.mxu0
        %4466 = vmatprep.mubr.f32.mxu0 0.0
        %4467 = vmatmul.mubr.f32.gmra.mxu0 %v1913
        %v4468 = vpop.f32.mrf.mxu0
        %v4469 = vadd.f32 %v1841, %v4468
        %v4470 = vpop.f32.mrf.mxu0
        %4471 = vdwg.mxu0
        %v4472 = vsel %vm372, %v4464, -inf
        %4473 = vmax.xlane.f32.xlu0 %v4472
        %v4474 = vpop.xlane.xlu0 %4473
        %v4475 = vsel %vm372, %v4469, -inf
        %4476 = vmax.xlane.f32.xlu0 %v4475
        %v4477 = vpop.xlane.xlu0 %4476
        %v4478 = vsub.f32 %v4464, %v4474
        %v4479 = vsub.f32 %v4469, %v4477
        %v4480 = vmul.f32 %v4478, 1.442695
        %v4481 = vpow.pop %v4480
        %v4482 = vmul.f32 %v4479, 1.442695
        %v4483 = vpow.pop %v4482
        %v4484 = vsel %vm372, %v4481, 0.0
        %4485 = vadd.xlane.f32.xlu0 %v4484
        %v4486 = vpop.xlane.xlu0 %4485
        %v4487 = vsel %vm372, %v4483, 0.0
        %4488 = vadd.xlane.f32.xlu0 %v4487
        %v4489 = vpop.xlane.xlu0 %4488
        %v4490 = vrcp.pop %v4486
        %v4491 = vrcp.pop %v4489
        %v4492 = vmul.f32 %v4481, %v4490
        %v4493 = vmul.f32 %v4483, %v4491
        %s4494 = scalar_lea.vmem %s269, 160 [#allocation8]
        %v4495 = vld [vmem:[%s4494] sm:$0xff]
        %v4496 = vld [vmem:[%s4494 + $0x8] sm:$0xff]
        %v4498 = vsel %vm372, %v4492, 0
        %v4501 = vsel %vm372, %v4493, 0
        %4503 = vmatprep.subr.mxu0 0.0
        %4504 = vmatpush1.msra.mxu0 0.0
        %4505 = vmatprep.subr.mxu0 0.0
        %4506 = vmatpush1.msra.mxu0 0.0
        %4507 = vmatprep.subr.mxu0 0.0
        %4508 = vmatpush1.msra.mxu0 0.0
        %4509 = vmatprep.subr.mxu0 0.0
        %4510 = vmatpush1.msra.mxu0 0.0
        %4511 = vmatprep.subr.mxu0 0.0
        %4512 = vmatpush1.msra.mxu0 0.0
        %4513 = vmatprep.subr.mxu0 0.0
        %4514 = vmatpush1.msra.mxu0 0.0
        %4515 = vmatprep.subr.mxu0 0.0
        %4516 = vmatpush1.msra.mxu0 0.0
        %4517 = vmatprep.subr.mxu0 0.0
        %4518 = vmatpush1.msra.mxu0 0.0
        %4519 = vmatprep.subr.mxu0 0.0
        %4520 = vmatpush1.msra.mxu0 0.0
        %4521 = vmatprep.subr.mxu0 0.0
        %4522 = vmatpush1.msra.mxu0 0.0
        %4523 = vmatprep.subr.mxu0 0.0
        %4524 = vmatpush1.msra.mxu0 0.0
        %4525 = vmatprep.subr.mxu0 0.0
        %4526 = vmatpush1.msra.mxu0 0.0
        %4527 = vmatprep.subr.mxu0 0.0
        %4528 = vmatpush1.msra.mxu0 0.0
        %4529 = vmatprep.subr.mxu0 0.0
        %4530 = vmatpush1.msra.mxu0 0.0
        %4531 = vmatprep.subr.mxu0 0.0
        %4532 = vmatpush1.msra.mxu0 %v4496
        %4533 = vmatprep.subr.mxu0 0.0
        %4534 = vmatpush1.msra.mxu0 %v4495
        %4535 = vmatprep.subr.mxu0 0.0
        %4536 = vmatpush2.msra.mxu0 0.0
        %4537 = vmatprep.subr.mxu0 0.0
        %4538 = vmatpush2.msra.mxu0 0.0
        %4539 = vmatprep.subr.mxu0 0.0
        %4540 = vmatpush2.msra.mxu0 0.0
        %4541 = vmatprep.subr.mxu0 0.0
        %4542 = vmatpush2.msra.mxu0 0.0
        %4543 = vmatprep.subr.mxu0 0.0
        %4544 = vmatpush2.msra.mxu0 0.0
        %4545 = vmatprep.subr.mxu0 0.0
        %4546 = vmatpush2.msra.mxu0 0.0
        %4547 = vmatprep.subr.mxu0 0.0
        %4548 = vmatpush2.msra.mxu0 0.0
        %4549 = vmatprep.subr.mxu0 0.0
        %4550 = vmatpush2.msra.mxu0 0.0
        %4551 = vmatprep.subr.mxu0 0.0
        %4552 = vmatpush2.msra.mxu0 0.0
        %4553 = vmatprep.subr.mxu0 0.0
        %4554 = vmatpush2.msra.mxu0 0.0
        %4555 = vmatprep.subr.mxu0 0.0
        %4556 = vmatpush2.msra.mxu0 0.0
        %4557 = vmatprep.subr.mxu0 0.0
        %4558 = vmatpush2.msra.mxu0 0.0
        %4559 = vmatprep.subr.mxu0 0.0
        %4560 = vmatpush2.msra.mxu0 0.0
        %4561 = vmatprep.subr.mxu0 0.0
        %4562 = vmatpush2.msra.mxu0 0.0
        %4563 = vmatprep.subr.mxu0 0.0
        %4564 = vmatpush2.msra.mxu0 0.0
        %4565 = vmatprep.subr.mxu0 0.0
        %4566 = vmatpush2.msra.mxu0 0.0
        %4567 = vmatprep.mubr.f32.mxu0 0.0
        %4568 = vmatmul.mubr.f32.gmra.mxu0 %v4498
        %v4569 = vpop.f32.mrf.mxu0
        %v4570 = vadd.f32 0.0, %v4569
        %v4571 = vpop.f32.mrf.mxu0
        %4572 = vmatprep.mubr.f32.mxu0 0.0
        %4573 = vmatmul.mubr.f32.gmra.mxu0 %v4501
        %v4574 = vpop.f32.mrf.mxu0
        %v4575 = vadd.f32 0.0, %v4574
        %v4576 = vpop.f32.mrf.mxu0
        %4577 = vdwg.mxu0
        %s4578 = scalar_lea.vmem %s307, 160 [#allocation11]
        %4579 = vst.msk [vmem:[%s4578] sm:$0xff] %vm372, %v4570
        %4580 = vst.msk [vmem:[%s4578 + $0x8] sm:$0xff] %vm372, %v4575
        %v4581 = vld [vmem:[#allocation2 + $0xb] sm:$0x1]
        %v4582 = vld [vmem:[#allocation2 + $0x1b] sm:$0x1]
        %v4583 = vld [vmem:[#allocation2 + $0x2b] sm:$0x1]
        %v4584 = vld [vmem:[#allocation2 + $0x3b] sm:$0x1]
        %v4585 = vld [vmem:[#allocation2 + $0x4b] sm:$0x1]
        %v4586 = vld [vmem:[#allocation2 + $0x5b] sm:$0x1]
        %v4587 = vld [vmem:[#allocation2 + $0x6b] sm:$0x1]
        %v4588 = vld [vmem:[#allocation2 + $0x7b] sm:$0x1]
        %v4589 = vld [vmem:[#allocation2 + $0x8b] sm:$0x1]
        %v4590 = vld [vmem:[#allocation2 + $0x9b] sm:$0x1]
        %v4591 = vld [vmem:[#allocation2 + $0xab] sm:$0x1]
        %v4592 = vld [vmem:[#allocation2 + $0xbb] sm:$0x1]
        %v4593 = vld [vmem:[#allocation2 + $0xcb] sm:$0x1]
        %v4594 = vld [vmem:[#allocation2 + $0xdb] sm:$0x1]
        %v4595 = vld [vmem:[#allocation2 + $0xeb] sm:$0x1]
        %v4596 = vld [vmem:[#allocation2 + $0xfb] sm:$0x1]
        %v4613 = vrot.slane %v4582, 7
        %v4614 = vsel %vm1875, %v4613, %v4581
        %v4615 = vrot.slane %v4583, 6
        %v4616 = vsel %vm1878, %v4615, %v4614
        %v4617 = vrot.slane %v4584, 5
        %v4618 = vsel %vm1881, %v4617, %v4616
        %v4619 = vrot.slane %v4585, 4
        %v4620 = vsel %vm1884, %v4619, %v4618
        %v4621 = vrot.slane %v4586, 3
        %v4622 = vsel %vm1887, %v4621, %v4620
        %v4623 = vrot.slane %v4587, 2
        %v4624 = vsel %vm1890, %v4623, %v4622
        %v4625 = vrot.slane %v4588, 1
        %v4626 = vsel %vm1893, %v4625, %v4624
        %v4627 = vrot.slane %v4590, 7
        %v4628 = vsel %vm1875, %v4627, %v4589
        %v4629 = vrot.slane %v4591, 6
        %v4630 = vsel %vm1878, %v4629, %v4628
        %v4631 = vrot.slane %v4592, 5
        %v4632 = vsel %vm1881, %v4631, %v4630
        %v4633 = vrot.slane %v4593, 4
        %v4634 = vsel %vm1884, %v4633, %v4632
        %v4635 = vrot.slane %v4594, 3
        %v4636 = vsel %vm1887, %v4635, %v4634
        %v4637 = vrot.slane %v4595, 2
        %v4638 = vsel %vm1890, %v4637, %v4636
        %v4639 = vrot.slane %v4596, 1
        %v4640 = vsel %vm1893, %v4639, %v4638
        %v4641 = vsel %vm372, %v4626, 0
        %v4643 = vsel %vm372, %v4640, 0
        %4645 = vmatprep.subr.mxu0 0.0
        %4646 = vmatpush1.xpose.msra.mxu0 0.0
        %4647 = vmatprep.subr.mxu0 0.0
        %4648 = vmatpush1.xpose.msra.mxu0 0.0
        %4649 = vmatprep.subr.mxu0 0.0
        %4650 = vmatpush1.xpose.msra.mxu0 0.0
        %4651 = vmatprep.subr.mxu0 0.0
        %4652 = vmatpush1.xpose.msra.mxu0 0.0
        %4653 = vmatprep.subr.mxu0 0.0
        %4654 = vmatpush1.xpose.msra.mxu0 0.0
        %4655 = vmatprep.subr.mxu0 0.0
        %4656 = vmatpush1.xpose.msra.mxu0 0.0
        %4657 = vmatprep.subr.mxu0 0.0
        %4658 = vmatpush1.xpose.msra.mxu0 0.0
        %4659 = vmatprep.subr.mxu0 0.0
        %4660 = vmatpush1.xpose.msra.mxu0 0.0
        %4661 = vmatprep.subr.mxu0 0.0
        %4662 = vmatpush1.xpose.msra.mxu0 0.0
        %4663 = vmatprep.subr.mxu0 0.0
        %4664 = vmatpush1.xpose.msra.mxu0 0.0
        %4665 = vmatprep.subr.mxu0 0.0
        %4666 = vmatpush1.xpose.msra.mxu0 0.0
        %4667 = vmatprep.subr.mxu0 0.0
        %4668 = vmatpush1.xpose.msra.mxu0 0.0
        %4669 = vmatprep.subr.mxu0 0.0
        %4670 = vmatpush1.xpose.msra.mxu0 0.0
        %4671 = vmatprep.subr.mxu0 0.0
        %4672 = vmatpush1.xpose.msra.mxu0 0.0
        %4673 = vmatprep.subr.mxu0 0.0
        %4674 = vmatpush1.xpose.msra.mxu0 %v4643
        %4675 = vmatprep.subr.mxu0 0.0
        %4676 = vmatpush1.xpose.msra.mxu0 %v4641
        %4677 = vmatprep.subr.mxu0 0.0
        %4678 = vmatpush2.xpose.msra.mxu0 0.0
        %4679 = vmatprep.subr.mxu0 0.0
        %4680 = vmatpush2.xpose.msra.mxu0 0.0
        %4681 = vmatprep.subr.mxu0 0.0
        %4682 = vmatpush2.xpose.msra.mxu0 0.0
        %4683 = vmatprep.subr.mxu0 0.0
        %4684 = vmatpush2.xpose.msra.mxu0 0.0
        %4685 = vmatprep.subr.mxu0 0.0
        %4686 = vmatpush2.xpose.msra.mxu0 0.0
        %4687 = vmatprep.subr.mxu0 0.0
        %4688 = vmatpush2.xpose.msra.mxu0 0.0
        %4689 = vmatprep.subr.mxu0 0.0
        %4690 = vmatpush2.xpose.msra.mxu0 0.0
        %4691 = vmatprep.subr.mxu0 0.0
        %4692 = vmatpush2.xpose.msra.mxu0 0.0
        %4693 = vmatprep.subr.mxu0 0.0
        %4694 = vmatpush2.xpose.msra.mxu0 0.0
        %4695 = vmatprep.subr.mxu0 0.0
        %4696 = vmatpush2.xpose.msra.mxu0 0.0
        %4697 = vmatprep.subr.mxu0 0.0
        %4698 = vmatpush2.xpose.msra.mxu0 0.0
        %4699 = vmatprep.subr.mxu0 0.0
        %4700 = vmatpush2.xpose.msra.mxu0 0.0
        %4701 = vmatprep.subr.mxu0 0.0
        %4702 = vmatpush2.xpose.msra.mxu0 0.0
        %4703 = vmatprep.subr.mxu0 0.0
        %4704 = vmatpush2.xpose.msra.mxu0 0.0
        %4705 = vmatprep.subr.mxu0 0.0
        %4706 = vmatpush2.xpose.msra.mxu0 0.0
        %4707 = vmatprep.subr.mxu0 0.0
        %4708 = vmatpush2.xpose.msra.mxu0 0.0
        %4709 = vmatprep.mubr.f32.mxu0 0.0
        %4710 = vmatmul.mubr.f32.gmra.mxu0 %v1910
        %v4711 = vpop.f32.mrf.mxu0
        %v4712 = vadd.f32 %v1840, %v4711
        %v4713 = vpop.f32.mrf.mxu0
        %4714 = vmatprep.mubr.f32.mxu0 0.0
        %4715 = vmatmul.mubr.f32.gmra.mxu0 %v1913
        %v4716 = vpop.f32.mrf.mxu0
        %v4717 = vadd.f32 %v1841, %v4716
        %v4718 = vpop.f32.mrf.mxu0
        %4719 = vdwg.mxu0
        %v4720 = vsel %vm372, %v4712, -inf
        %4721 = vmax.xlane.f32.xlu0 %v4720
        %v4722 = vpop.xlane.xlu0 %4721
        %v4723 = vsel %vm372, %v4717, -inf
        %4724 = vmax.xlane.f32.xlu0 %v4723
        %v4725 = vpop.xlane.xlu0 %4724
        %v4726 = vsub.f32 %v4712, %v4722
        %v4727 = vsub.f32 %v4717, %v4725
        %v4728 = vmul.f32 %v4726, 1.442695
        %v4729 = vpow.pop %v4728
        %v4730 = vmul.f32 %v4727, 1.442695
        %v4731 = vpow.pop %v4730
        %v4732 = vsel %vm372, %v4729, 0.0
        %4733 = vadd.xlane.f32.xlu0 %v4732
        %v4734 = vpop.xlane.xlu0 %4733
        %v4735 = vsel %vm372, %v4731, 0.0
        %4736 = vadd.xlane.f32.xlu0 %v4735
        %v4737 = vpop.xlane.xlu0 %4736
        %v4738 = vrcp.pop %v4734
        %v4739 = vrcp.pop %v4737
        %v4740 = vmul.f32 %v4729, %v4738
        %v4741 = vmul.f32 %v4731, %v4739
        %s4742 = scalar_lea.vmem %s269, 176 [#allocation8]
        %v4743 = vld [vmem:[%s4742] sm:$0xff]
        %v4744 = vld [vmem:[%s4742 + $0x8] sm:$0xff]
        %v4746 = vsel %vm372, %v4740, 0
        %v4749 = vsel %vm372, %v4741, 0
        %4751 = vmatprep.subr.mxu0 0.0
        %4752 = vmatpush1.msra.mxu0 0.0
        %4753 = vmatprep.subr.mxu0 0.0
        %4754 = vmatpush1.msra.mxu0 0.0
        %4755 = vmatprep.subr.mxu0 0.0
        %4756 = vmatpush1.msra.mxu0 0.0
        %4757 = vmatprep.subr.mxu0 0.0
        %4758 = vmatpush1.msra.mxu0 0.0
        %4759 = vmatprep.subr.mxu0 0.0
        %4760 = vmatpush1.msra.mxu0 0.0
        %4761 = vmatprep.subr.mxu0 0.0
        %4762 = vmatpush1.msra.mxu0 0.0
        %4763 = vmatprep.subr.mxu0 0.0
        %4764 = vmatpush1.msra.mxu0 0.0
        %4765 = vmatprep.subr.mxu0 0.0
        %4766 = vmatpush1.msra.mxu0 0.0
        %4767 = vmatprep.subr.mxu0 0.0
        %4768 = vmatpush1.msra.mxu0 0.0
        %4769 = vmatprep.subr.mxu0 0.0
        %4770 = vmatpush1.msra.mxu0 0.0
        %4771 = vmatprep.subr.mxu0 0.0
        %4772 = vmatpush1.msra.mxu0 0.0
        %4773 = vmatprep.subr.mxu0 0.0
        %4774 = vmatpush1.msra.mxu0 0.0
        %4775 = vmatprep.subr.mxu0 0.0
        %4776 = vmatpush1.msra.mxu0 0.0
        %4777 = vmatprep.subr.mxu0 0.0
        %4778 = vmatpush1.msra.mxu0 0.0
        %4779 = vmatprep.subr.mxu0 0.0
        %4780 = vmatpush1.msra.mxu0 %v4744
        %4781 = vmatprep.subr.mxu0 0.0
        %4782 = vmatpush1.msra.mxu0 %v4743
        %4783 = vmatprep.subr.mxu0 0.0
        %4784 = vmatpush2.msra.mxu0 0.0
        %4785 = vmatprep.subr.mxu0 0.0
        %4786 = vmatpush2.msra.mxu0 0.0
        %4787 = vmatprep.subr.mxu0 0.0
        %4788 = vmatpush2.msra.mxu0 0.0
        %4789 = vmatprep.subr.mxu0 0.0
        %4790 = vmatpush2.msra.mxu0 0.0
        %4791 = vmatprep.subr.mxu0 0.0
        %4792 = vmatpush2.msra.mxu0 0.0
        %4793 = vmatprep.subr.mxu0 0.0
        %4794 = vmatpush2.msra.mxu0 0.0
        %4795 = vmatprep.subr.mxu0 0.0
        %4796 = vmatpush2.msra.mxu0 0.0
        %4797 = vmatprep.subr.mxu0 0.0
        %4798 = vmatpush2.msra.mxu0 0.0
        %4799 = vmatprep.subr.mxu0 0.0
        %4800 = vmatpush2.msra.mxu0 0.0
        %4801 = vmatprep.subr.mxu0 0.0
        %4802 = vmatpush2.msra.mxu0 0.0
        %4803 = vmatprep.subr.mxu0 0.0
        %4804 = vmatpush2.msra.mxu0 0.0
        %4805 = vmatprep.subr.mxu0 0.0
        %4806 = vmatpush2.msra.mxu0 0.0
        %4807 = vmatprep.subr.mxu0 0.0
        %4808 = vmatpush2.msra.mxu0 0.0
        %4809 = vmatprep.subr.mxu0 0.0
        %4810 = vmatpush2.msra.mxu0 0.0
        %4811 = vmatprep.subr.mxu0 0.0
        %4812 = vmatpush2.msra.mxu0 0.0
        %4813 = vmatprep.subr.mxu0 0.0
        %4814 = vmatpush2.msra.mxu0 0.0
        %4815 = vmatprep.mubr.f32.mxu0 0.0
        %4816 = vmatmul.mubr.f32.gmra.mxu0 %v4746
        %v4817 = vpop.f32.mrf.mxu0
        %v4818 = vadd.f32 0.0, %v4817
        %v4819 = vpop.f32.mrf.mxu0
        %4820 = vmatprep.mubr.f32.mxu0 0.0
        %4821 = vmatmul.mubr.f32.gmra.mxu0 %v4749
        %v4822 = vpop.f32.mrf.mxu0
        %v4823 = vadd.f32 0.0, %v4822
        %v4824 = vpop.f32.mrf.mxu0
        %4825 = vdwg.mxu0
        %s4826 = scalar_lea.vmem %s307, 176 [#allocation11]
        %4827 = vst.msk [vmem:[%s4826] sm:$0xff] %vm372, %v4818
        %4828 = vst.msk [vmem:[%s4826 + $0x8] sm:$0xff] %vm372, %v4823
        %v4829 = vld [vmem:[#allocation2 + $0xc] sm:$0x1]
        %v4830 = vld [vmem:[#allocation2 + $0x1c] sm:$0x1]
        %v4831 = vld [vmem:[#allocation2 + $0x2c] sm:$0x1]
        %v4832 = vld [vmem:[#allocation2 + $0x3c] sm:$0x1]
        %v4833 = vld [vmem:[#allocation2 + $0x4c] sm:$0x1]
        %v4834 = vld [vmem:[#allocation2 + $0x5c] sm:$0x1]
        %v4835 = vld [vmem:[#allocation2 + $0x6c] sm:$0x1]
        %v4836 = vld [vmem:[#allocation2 + $0x7c] sm:$0x1]
        %v4837 = vld [vmem:[#allocation2 + $0x8c] sm:$0x1]
        %v4838 = vld [vmem:[#allocation2 + $0x9c] sm:$0x1]
        %v4839 = vld [vmem:[#allocation2 + $0xac] sm:$0x1]
        %v4840 = vld [vmem:[#allocation2 + $0xbc] sm:$0x1]
        %v4841 = vld [vmem:[#allocation2 + $0xcc] sm:$0x1]
        %v4842 = vld [vmem:[#allocation2 + $0xdc] sm:$0x1]
        %v4843 = vld [vmem:[#allocation2 + $0xec] sm:$0x1]
        %v4844 = vld [vmem:[#allocation2 + $0xfc] sm:$0x1]
        %v4861 = vrot.slane %v4830, 7
        %v4862 = vsel %vm1875, %v4861, %v4829
        %v4863 = vrot.slane %v4831, 6
        %v4864 = vsel %vm1878, %v4863, %v4862
        %v4865 = vrot.slane %v4832, 5
        %v4866 = vsel %vm1881, %v4865, %v4864
        %v4867 = vrot.slane %v4833, 4
        %v4868 = vsel %vm1884, %v4867, %v4866
        %v4869 = vrot.slane %v4834, 3
        %v4870 = vsel %vm1887, %v4869, %v4868
        %v4871 = vrot.slane %v4835, 2
        %v4872 = vsel %vm1890, %v4871, %v4870
        %v4873 = vrot.slane %v4836, 1
        %v4874 = vsel %vm1893, %v4873, %v4872
        %v4875 = vrot.slane %v4838, 7
        %v4876 = vsel %vm1875, %v4875, %v4837
        %v4877 = vrot.slane %v4839, 6
        %v4878 = vsel %vm1878, %v4877, %v4876
        %v4879 = vrot.slane %v4840, 5
        %v4880 = vsel %vm1881, %v4879, %v4878
        %v4881 = vrot.slane %v4841, 4
        %v4882 = vsel %vm1884, %v4881, %v4880
        %v4883 = vrot.slane %v4842, 3
        %v4884 = vsel %vm1887, %v4883, %v4882
        %v4885 = vrot.slane %v4843, 2
        %v4886 = vsel %vm1890, %v4885, %v4884
        %v4887 = vrot.slane %v4844, 1
        %v4888 = vsel %vm1893, %v4887, %v4886
        %v4889 = vsel %vm372, %v4874, 0
        %v4891 = vsel %vm372, %v4888, 0
        %4893 = vmatprep.subr.mxu0 0.0
        %4894 = vmatpush1.xpose.msra.mxu0 0.0
        %4895 = vmatprep.subr.mxu0 0.0
        %4896 = vmatpush1.xpose.msra.mxu0 0.0
        %4897 = vmatprep.subr.mxu0 0.0
        %4898 = vmatpush1.xpose.msra.mxu0 0.0
        %4899 = vmatprep.subr.mxu0 0.0
        %4900 = vmatpush1.xpose.msra.mxu0 0.0
        %4901 = vmatprep.subr.mxu0 0.0
        %4902 = vmatpush1.xpose.msra.mxu0 0.0
        %4903 = vmatprep.subr.mxu0 0.0
        %4904 = vmatpush1.xpose.msra.mxu0 0.0
        %4905 = vmatprep.subr.mxu0 0.0
        %4906 = vmatpush1.xpose.msra.mxu0 0.0
        %4907 = vmatprep.subr.mxu0 0.0
        %4908 = vmatpush1.xpose.msra.mxu0 0.0
        %4909 = vmatprep.subr.mxu0 0.0
        %4910 = vmatpush1.xpose.msra.mxu0 0.0
        %4911 = vmatprep.subr.mxu0 0.0
        %4912 = vmatpush1.xpose.msra.mxu0 0.0
        %4913 = vmatprep.subr.mxu0 0.0
        %4914 = vmatpush1.xpose.msra.mxu0 0.0
        %4915 = vmatprep.subr.mxu0 0.0
        %4916 = vmatpush1.xpose.msra.mxu0 0.0
        %4917 = vmatprep.subr.mxu0 0.0
        %4918 = vmatpush1.xpose.msra.mxu0 0.0
        %4919 = vmatprep.subr.mxu0 0.0
        %4920 = vmatpush1.xpose.msra.mxu0 0.0
        %4921 = vmatprep.subr.mxu0 0.0
        %4922 = vmatpush1.xpose.msra.mxu0 %v4891
        %4923 = vmatprep.subr.mxu0 0.0
        %4924 = vmatpush1.xpose.msra.mxu0 %v4889
        %4925 = vmatprep.subr.mxu0 0.0
        %4926 = vmatpush2.xpose.msra.mxu0 0.0
        %4927 = vmatprep.subr.mxu0 0.0
        %4928 = vmatpush2.xpose.msra.mxu0 0.0
        %4929 = vmatprep.subr.mxu0 0.0
        %4930 = vmatpush2.xpose.msra.mxu0 0.0
        %4931 = vmatprep.subr.mxu0 0.0
        %4932 = vmatpush2.xpose.msra.mxu0 0.0
        %4933 = vmatprep.subr.mxu0 0.0
        %4934 = vmatpush2.xpose.msra.mxu0 0.0
        %4935 = vmatprep.subr.mxu0 0.0
        %4936 = vmatpush2.xpose.msra.mxu0 0.0
        %4937 = vmatprep.subr.mxu0 0.0
        %4938 = vmatpush2.xpose.msra.mxu0 0.0
        %4939 = vmatprep.subr.mxu0 0.0
        %4940 = vmatpush2.xpose.msra.mxu0 0.0
        %4941 = vmatprep.subr.mxu0 0.0
        %4942 = vmatpush2.xpose.msra.mxu0 0.0
        %4943 = vmatprep.subr.mxu0 0.0
        %4944 = vmatpush2.xpose.msra.mxu0 0.0
        %4945 = vmatprep.subr.mxu0 0.0
        %4946 = vmatpush2.xpose.msra.mxu0 0.0
        %4947 = vmatprep.subr.mxu0 0.0
        %4948 = vmatpush2.xpose.msra.mxu0 0.0
        %4949 = vmatprep.subr.mxu0 0.0
        %4950 = vmatpush2.xpose.msra.mxu0 0.0
        %4951 = vmatprep.subr.mxu0 0.0
        %4952 = vmatpush2.xpose.msra.mxu0 0.0
        %4953 = vmatprep.subr.mxu0 0.0
        %4954 = vmatpush2.xpose.msra.mxu0 0.0
        %4955 = vmatprep.subr.mxu0 0.0
        %4956 = vmatpush2.xpose.msra.mxu0 0.0
        %4957 = vmatprep.mubr.f32.mxu0 0.0
        %4958 = vmatmul.mubr.f32.gmra.mxu0 %v1910
        %v4959 = vpop.f32.mrf.mxu0
        %v4960 = vadd.f32 %v1840, %v4959
        %v4961 = vpop.f32.mrf.mxu0
        %4962 = vmatprep.mubr.f32.mxu0 0.0
        %4963 = vmatmul.mubr.f32.gmra.mxu0 %v1913
        %v4964 = vpop.f32.mrf.mxu0
        %v4965 = vadd.f32 %v1841, %v4964
        %v4966 = vpop.f32.mrf.mxu0
        %4967 = vdwg.mxu0
        %v4968 = vsel %vm372, %v4960, -inf
        %4969 = vmax.xlane.f32.xlu0 %v4968
        %v4970 = vpop.xlane.xlu0 %4969
        %v4971 = vsel %vm372, %v4965, -inf
        %4972 = vmax.xlane.f32.xlu0 %v4971
        %v4973 = vpop.xlane.xlu0 %4972
        %v4974 = vsub.f32 %v4960, %v4970
        %v4975 = vsub.f32 %v4965, %v4973
        %v4976 = vmul.f32 %v4974, 1.442695
        %v4977 = vpow.pop %v4976
        %v4978 = vmul.f32 %v4975, 1.442695
        %v4979 = vpow.pop %v4978
        %v4980 = vsel %vm372, %v4977, 0.0
        %4981 = vadd.xlane.f32.xlu0 %v4980
        %v4982 = vpop.xlane.xlu0 %4981
        %v4983 = vsel %vm372, %v4979, 0.0
        %4984 = vadd.xlane.f32.xlu0 %v4983
        %v4985 = vpop.xlane.xlu0 %4984
        %v4986 = vrcp.pop %v4982
        %v4987 = vrcp.pop %v4985
        %v4988 = vmul.f32 %v4977, %v4986
        %v4989 = vmul.f32 %v4979, %v4987
        %s4990 = scalar_lea.vmem %s269, 192 [#allocation8]
        %v4991 = vld [vmem:[%s4990] sm:$0xff]
        %v4992 = vld [vmem:[%s4990 + $0x8] sm:$0xff]
        %v4994 = vsel %vm372, %v4988, 0
        %v4997 = vsel %vm372, %v4989, 0
        %4999 = vmatprep.subr.mxu0 0.0
        %5000 = vmatpush1.msra.mxu0 0.0
        %5001 = vmatprep.subr.mxu0 0.0
        %5002 = vmatpush1.msra.mxu0 0.0
        %5003 = vmatprep.subr.mxu0 0.0
        %5004 = vmatpush1.msra.mxu0 0.0
        %5005 = vmatprep.subr.mxu0 0.0
        %5006 = vmatpush1.msra.mxu0 0.0
        %5007 = vmatprep.subr.mxu0 0.0
        %5008 = vmatpush1.msra.mxu0 0.0
        %5009 = vmatprep.subr.mxu0 0.0
        %5010 = vmatpush1.msra.mxu0 0.0
        %5011 = vmatprep.subr.mxu0 0.0
        %5012 = vmatpush1.msra.mxu0 0.0
        %5013 = vmatprep.subr.mxu0 0.0
        %5014 = vmatpush1.msra.mxu0 0.0
        %5015 = vmatprep.subr.mxu0 0.0
        %5016 = vmatpush1.msra.mxu0 0.0
        %5017 = vmatprep.subr.mxu0 0.0
        %5018 = vmatpush1.msra.mxu0 0.0
        %5019 = vmatprep.subr.mxu0 0.0
        %5020 = vmatpush1.msra.mxu0 0.0
        %5021 = vmatprep.subr.mxu0 0.0
        %5022 = vmatpush1.msra.mxu0 0.0
        %5023 = vmatprep.subr.mxu0 0.0
        %5024 = vmatpush1.msra.mxu0 0.0
        %5025 = vmatprep.subr.mxu0 0.0
        %5026 = vmatpush1.msra.mxu0 0.0
        %5027 = vmatprep.subr.mxu0 0.0
        %5028 = vmatpush1.msra.mxu0 %v4992
        %5029 = vmatprep.subr.mxu0 0.0
        %5030 = vmatpush1.msra.mxu0 %v4991
        %5031 = vmatprep.subr.mxu0 0.0
        %5032 = vmatpush2.msra.mxu0 0.0
        %5033 = vmatprep.subr.mxu0 0.0
        %5034 = vmatpush2.msra.mxu0 0.0
        %5035 = vmatprep.subr.mxu0 0.0
        %5036 = vmatpush2.msra.mxu0 0.0
        %5037 = vmatprep.subr.mxu0 0.0
        %5038 = vmatpush2.msra.mxu0 0.0
        %5039 = vmatprep.subr.mxu0 0.0
        %5040 = vmatpush2.msra.mxu0 0.0
        %5041 = vmatprep.subr.mxu0 0.0
        %5042 = vmatpush2.msra.mxu0 0.0
        %5043 = vmatprep.subr.mxu0 0.0
        %5044 = vmatpush2.msra.mxu0 0.0
        %5045 = vmatprep.subr.mxu0 0.0
        %5046 = vmatpush2.msra.mxu0 0.0
        %5047 = vmatprep.subr.mxu0 0.0
        %5048 = vmatpush2.msra.mxu0 0.0
        %5049 = vmatprep.subr.mxu0 0.0
        %5050 = vmatpush2.msra.mxu0 0.0
        %5051 = vmatprep.subr.mxu0 0.0
        %5052 = vmatpush2.msra.mxu0 0.0
        %5053 = vmatprep.subr.mxu0 0.0
        %5054 = vmatpush2.msra.mxu0 0.0
        %5055 = vmatprep.subr.mxu0 0.0
        %5056 = vmatpush2.msra.mxu0 0.0
        %5057 = vmatprep.subr.mxu0 0.0
        %5058 = vmatpush2.msra.mxu0 0.0
        %5059 = vmatprep.subr.mxu0 0.0
        %5060 = vmatpush2.msra.mxu0 0.0
        %5061 = vmatprep.subr.mxu0 0.0
        %5062 = vmatpush2.msra.mxu0 0.0
        %5063 = vmatprep.mubr.f32.mxu0 0.0
        %5064 = vmatmul.mubr.f32.gmra.mxu0 %v4994
        %v5065 = vpop.f32.mrf.mxu0
        %v5066 = vadd.f32 0.0, %v5065
        %v5067 = vpop.f32.mrf.mxu0
        %5068 = vmatprep.mubr.f32.mxu0 0.0
        %5069 = vmatmul.mubr.f32.gmra.mxu0 %v4997
        %v5070 = vpop.f32.mrf.mxu0
        %v5071 = vadd.f32 0.0, %v5070
        %v5072 = vpop.f32.mrf.mxu0
        %5073 = vdwg.mxu0
        %s5074 = scalar_lea.vmem %s307, 192 [#allocation11]
        %5075 = vst.msk [vmem:[%s5074] sm:$0xff] %vm372, %v5066
        %5076 = vst.msk [vmem:[%s5074 + $0x8] sm:$0xff] %vm372, %v5071
        %v5077 = vld [vmem:[#allocation2 + $0xd] sm:$0x1]
        %v5078 = vld [vmem:[#allocation2 + $0x1d] sm:$0x1]
        %v5079 = vld [vmem:[#allocation2 + $0x2d] sm:$0x1]
        %v5080 = vld [vmem:[#allocation2 + $0x3d] sm:$0x1]
        %v5081 = vld [vmem:[#allocation2 + $0x4d] sm:$0x1]
        %v5082 = vld [vmem:[#allocation2 + $0x5d] sm:$0x1]
        %v5083 = vld [vmem:[#allocation2 + $0x6d] sm:$0x1]
        %v5084 = vld [vmem:[#allocation2 + $0x7d] sm:$0x1]
        %v5085 = vld [vmem:[#allocation2 + $0x8d] sm:$0x1]
        %v5086 = vld [vmem:[#allocation2 + $0x9d] sm:$0x1]
        %v5087 = vld [vmem:[#allocation2 + $0xad] sm:$0x1]
        %v5088 = vld [vmem:[#allocation2 + $0xbd] sm:$0x1]
        %v5089 = vld [vmem:[#allocation2 + $0xcd] sm:$0x1]
        %v5090 = vld [vmem:[#allocation2 + $0xdd] sm:$0x1]
        %v5091 = vld [vmem:[#allocation2 + $0xed] sm:$0x1]
        %v5092 = vld [vmem:[#allocation2 + $0xfd] sm:$0x1]
        %v5109 = vrot.slane %v5078, 7
        %v5110 = vsel %vm1875, %v5109, %v5077
        %v5111 = vrot.slane %v5079, 6
        %v5112 = vsel %vm1878, %v5111, %v5110
        %v5113 = vrot.slane %v5080, 5
        %v5114 = vsel %vm1881, %v5113, %v5112
        %v5115 = vrot.slane %v5081, 4
        %v5116 = vsel %vm1884, %v5115, %v5114
        %v5117 = vrot.slane %v5082, 3
        %v5118 = vsel %vm1887, %v5117, %v5116
        %v5119 = vrot.slane %v5083, 2
        %v5120 = vsel %vm1890, %v5119, %v5118
        %v5121 = vrot.slane %v5084, 1
        %v5122 = vsel %vm1893, %v5121, %v5120
        %v5123 = vrot.slane %v5086, 7
        %v5124 = vsel %vm1875, %v5123, %v5085
        %v5125 = vrot.slane %v5087, 6
        %v5126 = vsel %vm1878, %v5125, %v5124
        %v5127 = vrot.slane %v5088, 5
        %v5128 = vsel %vm1881, %v5127, %v5126
        %v5129 = vrot.slane %v5089, 4
        %v5130 = vsel %vm1884, %v5129, %v5128
        %v5131 = vrot.slane %v5090, 3
        %v5132 = vsel %vm1887, %v5131, %v5130
        %v5133 = vrot.slane %v5091, 2
        %v5134 = vsel %vm1890, %v5133, %v5132
        %v5135 = vrot.slane %v5092, 1
        %v5136 = vsel %vm1893, %v5135, %v5134
        %v5137 = vsel %vm372, %v5122, 0
        %v5139 = vsel %vm372, %v5136, 0
        %5141 = vmatprep.subr.mxu0 0.0
        %5142 = vmatpush1.xpose.msra.mxu0 0.0
        %5143 = vmatprep.subr.mxu0 0.0
        %5144 = vmatpush1.xpose.msra.mxu0 0.0
        %5145 = vmatprep.subr.mxu0 0.0
        %5146 = vmatpush1.xpose.msra.mxu0 0.0
        %5147 = vmatprep.subr.mxu0 0.0
        %5148 = vmatpush1.xpose.msra.mxu0 0.0
        %5149 = vmatprep.subr.mxu0 0.0
        %5150 = vmatpush1.xpose.msra.mxu0 0.0
        %5151 = vmatprep.subr.mxu0 0.0
        %5152 = vmatpush1.xpose.msra.mxu0 0.0
        %5153 = vmatprep.subr.mxu0 0.0
        %5154 = vmatpush1.xpose.msra.mxu0 0.0
        %5155 = vmatprep.subr.mxu0 0.0
        %5156 = vmatpush1.xpose.msra.mxu0 0.0
        %5157 = vmatprep.subr.mxu0 0.0
        %5158 = vmatpush1.xpose.msra.mxu0 0.0
        %5159 = vmatprep.subr.mxu0 0.0
        %5160 = vmatpush1.xpose.msra.mxu0 0.0
        %5161 = vmatprep.subr.mxu0 0.0
        %5162 = vmatpush1.xpose.msra.mxu0 0.0
        %5163 = vmatprep.subr.mxu0 0.0
        %5164 = vmatpush1.xpose.msra.mxu0 0.0
        %5165 = vmatprep.subr.mxu0 0.0
        %5166 = vmatpush1.xpose.msra.mxu0 0.0
        %5167 = vmatprep.subr.mxu0 0.0
        %5168 = vmatpush1.xpose.msra.mxu0 0.0
        %5169 = vmatprep.subr.mxu0 0.0
        %5170 = vmatpush1.xpose.msra.mxu0 %v5139
        %5171 = vmatprep.subr.mxu0 0.0
        %5172 = vmatpush1.xpose.msra.mxu0 %v5137
        %5173 = vmatprep.subr.mxu0 0.0
        %5174 = vmatpush2.xpose.msra.mxu0 0.0
        %5175 = vmatprep.subr.mxu0 0.0
        %5176 = vmatpush2.xpose.msra.mxu0 0.0
        %5177 = vmatprep.subr.mxu0 0.0
        %5178 = vmatpush2.xpose.msra.mxu0 0.0
        %5179 = vmatprep.subr.mxu0 0.0
        %5180 = vmatpush2.xpose.msra.mxu0 0.0
        %5181 = vmatprep.subr.mxu0 0.0
        %5182 = vmatpush2.xpose.msra.mxu0 0.0
        %5183 = vmatprep.subr.mxu0 0.0
        %5184 = vmatpush2.xpose.msra.mxu0 0.0
        %5185 = vmatprep.subr.mxu0 0.0
        %5186 = vmatpush2.xpose.msra.mxu0 0.0
        %5187 = vmatprep.subr.mxu0 0.0
        %5188 = vmatpush2.xpose.msra.mxu0 0.0
        %5189 = vmatprep.subr.mxu0 0.0
        %5190 = vmatpush2.xpose.msra.mxu0 0.0
        %5191 = vmatprep.subr.mxu0 0.0
        %5192 = vmatpush2.xpose.msra.mxu0 0.0
        %5193 = vmatprep.subr.mxu0 0.0
        %5194 = vmatpush2.xpose.msra.mxu0 0.0
        %5195 = vmatprep.subr.mxu0 0.0
        %5196 = vmatpush2.xpose.msra.mxu0 0.0
        %5197 = vmatprep.subr.mxu0 0.0
        %5198 = vmatpush2.xpose.msra.mxu0 0.0
        %5199 = vmatprep.subr.mxu0 0.0
        %5200 = vmatpush2.xpose.msra.mxu0 0.0
        %5201 = vmatprep.subr.mxu0 0.0
        %5202 = vmatpush2.xpose.msra.mxu0 0.0
        %5203 = vmatprep.subr.mxu0 0.0
        %5204 = vmatpush2.xpose.msra.mxu0 0.0
        %5205 = vmatprep.mubr.f32.mxu0 0.0
        %5206 = vmatmul.mubr.f32.gmra.mxu0 %v1910
        %v5207 = vpop.f32.mrf.mxu0
        %v5208 = vadd.f32 %v1840, %v5207
        %v5209 = vpop.f32.mrf.mxu0
        %5210 = vmatprep.mubr.f32.mxu0 0.0
        %5211 = vmatmul.mubr.f32.gmra.mxu0 %v1913
        %v5212 = vpop.f32.mrf.mxu0
        %v5213 = vadd.f32 %v1841, %v5212
        %v5214 = vpop.f32.mrf.mxu0
        %5215 = vdwg.mxu0
        %v5216 = vsel %vm372, %v5208, -inf
        %5217 = vmax.xlane.f32.xlu0 %v5216
        %v5218 = vpop.xlane.xlu0 %5217
        %v5219 = vsel %vm372, %v5213, -inf
        %5220 = vmax.xlane.f32.xlu0 %v5219
        %v5221 = vpop.xlane.xlu0 %5220
        %v5222 = vsub.f32 %v5208, %v5218
        %v5223 = vsub.f32 %v5213, %v5221
        %v5224 = vmul.f32 %v5222, 1.442695
        %v5225 = vpow.pop %v5224
        %v5226 = vmul.f32 %v5223, 1.442695
        %v5227 = vpow.pop %v5226
        %v5228 = vsel %vm372, %v5225, 0.0
        %5229 = vadd.xlane.f32.xlu0 %v5228
        %v5230 = vpop.xlane.xlu0 %5229
        %v5231 = vsel %vm372, %v5227, 0.0
        %5232 = vadd.xlane.f32.xlu0 %v5231
        %v5233 = vpop.xlane.xlu0 %5232
        %v5234 = vrcp.pop %v5230
        %v5235 = vrcp.pop %v5233
        %v5236 = vmul.f32 %v5225, %v5234
        %v5237 = vmul.f32 %v5227, %v5235
        %s5238 = scalar_lea.vmem %s269, 208 [#allocation8]
        %v5239 = vld [vmem:[%s5238] sm:$0xff]
        %v5240 = vld [vmem:[%s5238 + $0x8] sm:$0xff]
        %v5242 = vsel %vm372, %v5236, 0
        %v5245 = vsel %vm372, %v5237, 0
        %5247 = vmatprep.subr.mxu0 0.0
        %5248 = vmatpush1.msra.mxu0 0.0
        %5249 = vmatprep.subr.mxu0 0.0
        %5250 = vmatpush1.msra.mxu0 0.0
        %5251 = vmatprep.subr.mxu0 0.0
        %5252 = vmatpush1.msra.mxu0 0.0
        %5253 = vmatprep.subr.mxu0 0.0
        %5254 = vmatpush1.msra.mxu0 0.0
        %5255 = vmatprep.subr.mxu0 0.0
        %5256 = vmatpush1.msra.mxu0 0.0
        %5257 = vmatprep.subr.mxu0 0.0
        %5258 = vmatpush1.msra.mxu0 0.0
        %5259 = vmatprep.subr.mxu0 0.0
        %5260 = vmatpush1.msra.mxu0 0.0
        %5261 = vmatprep.subr.mxu0 0.0
        %5262 = vmatpush1.msra.mxu0 0.0
        %5263 = vmatprep.subr.mxu0 0.0
        %5264 = vmatpush1.msra.mxu0 0.0
        %5265 = vmatprep.subr.mxu0 0.0
        %5266 = vmatpush1.msra.mxu0 0.0
        %5267 = vmatprep.subr.mxu0 0.0
        %5268 = vmatpush1.msra.mxu0 0.0
        %5269 = vmatprep.subr.mxu0 0.0
        %5270 = vmatpush1.msra.mxu0 0.0
        %5271 = vmatprep.subr.mxu0 0.0
        %5272 = vmatpush1.msra.mxu0 0.0
        %5273 = vmatprep.subr.mxu0 0.0
        %5274 = vmatpush1.msra.mxu0 0.0
        %5275 = vmatprep.subr.mxu0 0.0
        %5276 = vmatpush1.msra.mxu0 %v5240
        %5277 = vmatprep.subr.mxu0 0.0
        %5278 = vmatpush1.msra.mxu0 %v5239
        %5279 = vmatprep.subr.mxu0 0.0
        %5280 = vmatpush2.msra.mxu0 0.0
        %5281 = vmatprep.subr.mxu0 0.0
        %5282 = vmatpush2.msra.mxu0 0.0
        %5283 = vmatprep.subr.mxu0 0.0
        %5284 = vmatpush2.msra.mxu0 0.0
        %5285 = vmatprep.subr.mxu0 0.0
        %5286 = vmatpush2.msra.mxu0 0.0
        %5287 = vmatprep.subr.mxu0 0.0
        %5288 = vmatpush2.msra.mxu0 0.0
        %5289 = vmatprep.subr.mxu0 0.0
        %5290 = vmatpush2.msra.mxu0 0.0
        %5291 = vmatprep.subr.mxu0 0.0
        %5292 = vmatpush2.msra.mxu0 0.0
        %5293 = vmatprep.subr.mxu0 0.0
        %5294 = vmatpush2.msra.mxu0 0.0
        %5295 = vmatprep.subr.mxu0 0.0
        %5296 = vmatpush2.msra.mxu0 0.0
        %5297 = vmatprep.subr.mxu0 0.0
        %5298 = vmatpush2.msra.mxu0 0.0
        %5299 = vmatprep.subr.mxu0 0.0
        %5300 = vmatpush2.msra.mxu0 0.0
        %5301 = vmatprep.subr.mxu0 0.0
        %5302 = vmatpush2.msra.mxu0 0.0
        %5303 = vmatprep.subr.mxu0 0.0
        %5304 = vmatpush2.msra.mxu0 0.0
        %5305 = vmatprep.subr.mxu0 0.0
        %5306 = vmatpush2.msra.mxu0 0.0
        %5307 = vmatprep.subr.mxu0 0.0
        %5308 = vmatpush2.msra.mxu0 0.0
        %5309 = vmatprep.subr.mxu0 0.0
        %5310 = vmatpush2.msra.mxu0 0.0
        %5311 = vmatprep.mubr.f32.mxu0 0.0
        %5312 = vmatmul.mubr.f32.gmra.mxu0 %v5242
        %v5313 = vpop.f32.mrf.mxu0
        %v5314 = vadd.f32 0.0, %v5313
        %v5315 = vpop.f32.mrf.mxu0
        %5316 = vmatprep.mubr.f32.mxu0 0.0
        %5317 = vmatmul.mubr.f32.gmra.mxu0 %v5245
        %v5318 = vpop.f32.mrf.mxu0
        %v5319 = vadd.f32 0.0, %v5318
        %v5320 = vpop.f32.mrf.mxu0
        %5321 = vdwg.mxu0
        %s5322 = scalar_lea.vmem %s307, 208 [#allocation11]
        %5323 = vst.msk [vmem:[%s5322] sm:$0xff] %vm372, %v5314
        %5324 = vst.msk [vmem:[%s5322 + $0x8] sm:$0xff] %vm372, %v5319
        %v5325 = vld [vmem:[#allocation2 + $0xe] sm:$0x1]
        %v5326 = vld [vmem:[#allocation2 + $0x1e] sm:$0x1]
        %v5327 = vld [vmem:[#allocation2 + $0x2e] sm:$0x1]
        %v5328 = vld [vmem:[#allocation2 + $0x3e] sm:$0x1]
        %v5329 = vld [vmem:[#allocation2 + $0x4e] sm:$0x1]
        %v5330 = vld [vmem:[#allocation2 + $0x5e] sm:$0x1]
        %v5331 = vld [vmem:[#allocation2 + $0x6e] sm:$0x1]
        %v5332 = vld [vmem:[#allocation2 + $0x7e] sm:$0x1]
        %v5333 = vld [vmem:[#allocation2 + $0x8e] sm:$0x1]
        %v5334 = vld [vmem:[#allocation2 + $0x9e] sm:$0x1]
        %v5335 = vld [vmem:[#allocation2 + $0xae] sm:$0x1]
        %v5336 = vld [vmem:[#allocation2 + $0xbe] sm:$0x1]
        %v5337 = vld [vmem:[#allocation2 + $0xce] sm:$0x1]
        %v5338 = vld [vmem:[#allocation2 + $0xde] sm:$0x1]
        %v5339 = vld [vmem:[#allocation2 + $0xee] sm:$0x1]
        %v5340 = vld [vmem:[#allocation2 + $0xfe] sm:$0x1]
        %v5357 = vrot.slane %v5326, 7
        %v5358 = vsel %vm1875, %v5357, %v5325
        %v5359 = vrot.slane %v5327, 6
        %v5360 = vsel %vm1878, %v5359, %v5358
        %v5361 = vrot.slane %v5328, 5
        %v5362 = vsel %vm1881, %v5361, %v5360
        %v5363 = vrot.slane %v5329, 4
        %v5364 = vsel %vm1884, %v5363, %v5362
        %v5365 = vrot.slane %v5330, 3
        %v5366 = vsel %vm1887, %v5365, %v5364
        %v5367 = vrot.slane %v5331, 2
        %v5368 = vsel %vm1890, %v5367, %v5366
        %v5369 = vrot.slane %v5332, 1
        %v5370 = vsel %vm1893, %v5369, %v5368
        %v5371 = vrot.slane %v5334, 7
        %v5372 = vsel %vm1875, %v5371, %v5333
        %v5373 = vrot.slane %v5335, 6
        %v5374 = vsel %vm1878, %v5373, %v5372
        %v5375 = vrot.slane %v5336, 5
        %v5376 = vsel %vm1881, %v5375, %v5374
        %v5377 = vrot.slane %v5337, 4
        %v5378 = vsel %vm1884, %v5377, %v5376
        %v5379 = vrot.slane %v5338, 3
        %v5380 = vsel %vm1887, %v5379, %v5378
        %v5381 = vrot.slane %v5339, 2
        %v5382 = vsel %vm1890, %v5381, %v5380
        %v5383 = vrot.slane %v5340, 1
        %v5384 = vsel %vm1893, %v5383, %v5382
        %v5385 = vsel %vm372, %v5370, 0
        %v5387 = vsel %vm372, %v5384, 0
        %5389 = vmatprep.subr.mxu0 0.0
        %5390 = vmatpush1.xpose.msra.mxu0 0.0
        %5391 = vmatprep.subr.mxu0 0.0
        %5392 = vmatpush1.xpose.msra.mxu0 0.0
        %5393 = vmatprep.subr.mxu0 0.0
        %5394 = vmatpush1.xpose.msra.mxu0 0.0
        %5395 = vmatprep.subr.mxu0 0.0
        %5396 = vmatpush1.xpose.msra.mxu0 0.0
        %5397 = vmatprep.subr.mxu0 0.0
        %5398 = vmatpush1.xpose.msra.mxu0 0.0
        %5399 = vmatprep.subr.mxu0 0.0
        %5400 = vmatpush1.xpose.msra.mxu0 0.0
        %5401 = vmatprep.subr.mxu0 0.0
        %5402 = vmatpush1.xpose.msra.mxu0 0.0
        %5403 = vmatprep.subr.mxu0 0.0
        %5404 = vmatpush1.xpose.msra.mxu0 0.0
        %5405 = vmatprep.subr.mxu0 0.0
        %5406 = vmatpush1.xpose.msra.mxu0 0.0
        %5407 = vmatprep.subr.mxu0 0.0
        %5408 = vmatpush1.xpose.msra.mxu0 0.0
        %5409 = vmatprep.subr.mxu0 0.0
        %5410 = vmatpush1.xpose.msra.mxu0 0.0
        %5411 = vmatprep.subr.mxu0 0.0
        %5412 = vmatpush1.xpose.msra.mxu0 0.0
        %5413 = vmatprep.subr.mxu0 0.0
        %5414 = vmatpush1.xpose.msra.mxu0 0.0
        %5415 = vmatprep.subr.mxu0 0.0
        %5416 = vmatpush1.xpose.msra.mxu0 0.0
        %5417 = vmatprep.subr.mxu0 0.0
        %5418 = vmatpush1.xpose.msra.mxu0 %v5387
        %5419 = vmatprep.subr.mxu0 0.0
        %5420 = vmatpush1.xpose.msra.mxu0 %v5385
        %5421 = vmatprep.subr.mxu0 0.0
        %5422 = vmatpush2.xpose.msra.mxu0 0.0
        %5423 = vmatprep.subr.mxu0 0.0
        %5424 = vmatpush2.xpose.msra.mxu0 0.0
        %5425 = vmatprep.subr.mxu0 0.0
        %5426 = vmatpush2.xpose.msra.mxu0 0.0
        %5427 = vmatprep.subr.mxu0 0.0
        %5428 = vmatpush2.xpose.msra.mxu0 0.0
        %5429 = vmatprep.subr.mxu0 0.0
        %5430 = vmatpush2.xpose.msra.mxu0 0.0
        %5431 = vmatprep.subr.mxu0 0.0
        %5432 = vmatpush2.xpose.msra.mxu0 0.0
        %5433 = vmatprep.subr.mxu0 0.0
        %5434 = vmatpush2.xpose.msra.mxu0 0.0
        %5435 = vmatprep.subr.mxu0 0.0
        %5436 = vmatpush2.xpose.msra.mxu0 0.0
        %5437 = vmatprep.subr.mxu0 0.0
        %5438 = vmatpush2.xpose.msra.mxu0 0.0
        %5439 = vmatprep.subr.mxu0 0.0
        %5440 = vmatpush2.xpose.msra.mxu0 0.0
        %5441 = vmatprep.subr.mxu0 0.0
        %5442 = vmatpush2.xpose.msra.mxu0 0.0
        %5443 = vmatprep.subr.mxu0 0.0
        %5444 = vmatpush2.xpose.msra.mxu0 0.0
        %5445 = vmatprep.subr.mxu0 0.0
        %5446 = vmatpush2.xpose.msra.mxu0 0.0
        %5447 = vmatprep.subr.mxu0 0.0
        %5448 = vmatpush2.xpose.msra.mxu0 0.0
        %5449 = vmatprep.subr.mxu0 0.0
        %5450 = vmatpush2.xpose.msra.mxu0 0.0
        %5451 = vmatprep.subr.mxu0 0.0
        %5452 = vmatpush2.xpose.msra.mxu0 0.0
        %5453 = vmatprep.mubr.f32.mxu0 0.0
        %5454 = vmatmul.mubr.f32.gmra.mxu0 %v1910
        %v5455 = vpop.f32.mrf.mxu0
        %v5456 = vadd.f32 %v1840, %v5455
        %v5457 = vpop.f32.mrf.mxu0
        %5458 = vmatprep.mubr.f32.mxu0 0.0
        %5459 = vmatmul.mubr.f32.gmra.mxu0 %v1913
        %v5460 = vpop.f32.mrf.mxu0
        %v5461 = vadd.f32 %v1841, %v5460
        %v5462 = vpop.f32.mrf.mxu0
        %5463 = vdwg.mxu0
        %v5464 = vsel %vm372, %v5456, -inf
        %5465 = vmax.xlane.f32.xlu0 %v5464
        %v5466 = vpop.xlane.xlu0 %5465
        %v5467 = vsel %vm372, %v5461, -inf
        %5468 = vmax.xlane.f32.xlu0 %v5467
        %v5469 = vpop.xlane.xlu0 %5468
        %v5470 = vsub.f32 %v5456, %v5466
        %v5471 = vsub.f32 %v5461, %v5469
        %v5472 = vmul.f32 %v5470, 1.442695
        %v5473 = vpow.pop %v5472
        %v5474 = vmul.f32 %v5471, 1.442695
        %v5475 = vpow.pop %v5474
        %v5476 = vsel %vm372, %v5473, 0.0
        %5477 = vadd.xlane.f32.xlu0 %v5476
        %v5478 = vpop.xlane.xlu0 %5477
        %v5479 = vsel %vm372, %v5475, 0.0
        %5480 = vadd.xlane.f32.xlu0 %v5479
        %v5481 = vpop.xlane.xlu0 %5480
        %v5482 = vrcp.pop %v5478
        %v5483 = vrcp.pop %v5481
        %v5484 = vmul.f32 %v5473, %v5482
        %v5485 = vmul.f32 %v5475, %v5483
        %s5486 = scalar_lea.vmem %s269, 224 [#allocation8]
        %v5487 = vld [vmem:[%s5486] sm:$0xff]
        %v5488 = vld [vmem:[%s5486 + $0x8] sm:$0xff]
        %v5490 = vsel %vm372, %v5484, 0
        %v5493 = vsel %vm372, %v5485, 0
        %5495 = vmatprep.subr.mxu0 0.0
        %5496 = vmatpush1.msra.mxu0 0.0
        %5497 = vmatprep.subr.mxu0 0.0
        %5498 = vmatpush1.msra.mxu0 0.0
        %5499 = vmatprep.subr.mxu0 0.0
        %5500 = vmatpush1.msra.mxu0 0.0
        %5501 = vmatprep.subr.mxu0 0.0
        %5502 = vmatpush1.msra.mxu0 0.0
        %5503 = vmatprep.subr.mxu0 0.0
        %5504 = vmatpush1.msra.mxu0 0.0
        %5505 = vmatprep.subr.mxu0 0.0
        %5506 = vmatpush1.msra.mxu0 0.0
        %5507 = vmatprep.subr.mxu0 0.0
        %5508 = vmatpush1.msra.mxu0 0.0
        %5509 = vmatprep.subr.mxu0 0.0
        %5510 = vmatpush1.msra.mxu0 0.0
        %5511 = vmatprep.subr.mxu0 0.0
        %5512 = vmatpush1.msra.mxu0 0.0
        %5513 = vmatprep.subr.mxu0 0.0
        %5514 = vmatpush1.msra.mxu0 0.0
        %5515 = vmatprep.subr.mxu0 0.0
        %5516 = vmatpush1.msra.mxu0 0.0
        %5517 = vmatprep.subr.mxu0 0.0
        %5518 = vmatpush1.msra.mxu0 0.0
        %5519 = vmatprep.subr.mxu0 0.0
        %5520 = vmatpush1.msra.mxu0 0.0
        %5521 = vmatprep.subr.mxu0 0.0
        %5522 = vmatpush1.msra.mxu0 0.0
        %5523 = vmatprep.subr.mxu0 0.0
        %5524 = vmatpush1.msra.mxu0 %v5488
        %5525 = vmatprep.subr.mxu0 0.0
        %5526 = vmatpush1.msra.mxu0 %v5487
        %5527 = vmatprep.subr.mxu0 0.0
        %5528 = vmatpush2.msra.mxu0 0.0
        %5529 = vmatprep.subr.mxu0 0.0
        %5530 = vmatpush2.msra.mxu0 0.0
        %5531 = vmatprep.subr.mxu0 0.0
        %5532 = vmatpush2.msra.mxu0 0.0
        %5533 = vmatprep.subr.mxu0 0.0
        %5534 = vmatpush2.msra.mxu0 0.0
        %5535 = vmatprep.subr.mxu0 0.0
        %5536 = vmatpush2.msra.mxu0 0.0
        %5537 = vmatprep.subr.mxu0 0.0
        %5538 = vmatpush2.msra.mxu0 0.0
        %5539 = vmatprep.subr.mxu0 0.0
        %5540 = vmatpush2.msra.mxu0 0.0
        %5541 = vmatprep.subr.mxu0 0.0
        %5542 = vmatpush2.msra.mxu0 0.0
        %5543 = vmatprep.subr.mxu0 0.0
        %5544 = vmatpush2.msra.mxu0 0.0
        %5545 = vmatprep.subr.mxu0 0.0
        %5546 = vmatpush2.msra.mxu0 0.0
        %5547 = vmatprep.subr.mxu0 0.0
        %5548 = vmatpush2.msra.mxu0 0.0
        %5549 = vmatprep.subr.mxu0 0.0
        %5550 = vmatpush2.msra.mxu0 0.0
        %5551 = vmatprep.subr.mxu0 0.0
        %5552 = vmatpush2.msra.mxu0 0.0
        %5553 = vmatprep.subr.mxu0 0.0
        %5554 = vmatpush2.msra.mxu0 0.0
        %5555 = vmatprep.subr.mxu0 0.0
        %5556 = vmatpush2.msra.mxu0 0.0
        %5557 = vmatprep.subr.mxu0 0.0
        %5558 = vmatpush2.msra.mxu0 0.0
        %5559 = vmatprep.mubr.f32.mxu0 0.0
        %5560 = vmatmul.mubr.f32.gmra.mxu0 %v5490
        %v5561 = vpop.f32.mrf.mxu0
        %v5562 = vadd.f32 0.0, %v5561
        %v5563 = vpop.f32.mrf.mxu0
        %5564 = vmatprep.mubr.f32.mxu0 0.0
        %5565 = vmatmul.mubr.f32.gmra.mxu0 %v5493
        %v5566 = vpop.f32.mrf.mxu0
        %v5567 = vadd.f32 0.0, %v5566
        %v5568 = vpop.f32.mrf.mxu0
        %5569 = vdwg.mxu0
        %s5570 = scalar_lea.vmem %s307, 224 [#allocation11]
        %5571 = vst.msk [vmem:[%s5570] sm:$0xff] %vm372, %v5562
        %5572 = vst.msk [vmem:[%s5570 + $0x8] sm:$0xff] %vm372, %v5567
        %v5573 = vld [vmem:[#allocation2 + $0xf] sm:$0x1]
        %v5574 = vld [vmem:[#allocation2 + $0x1f] sm:$0x1]
        %v5575 = vld [vmem:[#allocation2 + $0x2f] sm:$0x1]
        %v5576 = vld [vmem:[#allocation2 + $0x3f] sm:$0x1]
        %v5577 = vld [vmem:[#allocation2 + $0x4f] sm:$0x1]
        %v5578 = vld [vmem:[#allocation2 + $0x5f] sm:$0x1]
        %v5579 = vld [vmem:[#allocation2 + $0x6f] sm:$0x1]
        %v5580 = vld [vmem:[#allocation2 + $0x7f] sm:$0x1]
        %v5581 = vld [vmem:[#allocation2 + $0x8f] sm:$0x1]
        %v5582 = vld [vmem:[#allocation2 + $0x9f] sm:$0x1]
        %v5583 = vld [vmem:[#allocation2 + $0xaf] sm:$0x1]
        %v5584 = vld [vmem:[#allocation2 + $0xbf] sm:$0x1]
        %v5585 = vld [vmem:[#allocation2 + $0xcf] sm:$0x1]
        %v5586 = vld [vmem:[#allocation2 + $0xdf] sm:$0x1]
        %v5587 = vld [vmem:[#allocation2 + $0xef] sm:$0x1]
        %v5588 = vld [vmem:[#allocation2 + $0xff] sm:$0x1]
        %v5605 = vrot.slane %v5574, 7
        %v5606 = vsel %vm1875, %v5605, %v5573
        %v5607 = vrot.slane %v5575, 6
        %v5608 = vsel %vm1878, %v5607, %v5606
        %v5609 = vrot.slane %v5576, 5
        %v5610 = vsel %vm1881, %v5609, %v5608
        %v5611 = vrot.slane %v5577, 4
        %v5612 = vsel %vm1884, %v5611, %v5610
        %v5613 = vrot.slane %v5578, 3
        %v5614 = vsel %vm1887, %v5613, %v5612
        %v5615 = vrot.slane %v5579, 2
        %v5616 = vsel %vm1890, %v5615, %v5614
        %v5617 = vrot.slane %v5580, 1
        %v5618 = vsel %vm1893, %v5617, %v5616
        %v5619 = vrot.slane %v5582, 7
        %v5620 = vsel %vm1875, %v5619, %v5581
        %v5621 = vrot.slane %v5583, 6
        %v5622 = vsel %vm1878, %v5621, %v5620
        %v5623 = vrot.slane %v5584, 5
        %v5624 = vsel %vm1881, %v5623, %v5622
        %v5625 = vrot.slane %v5585, 4
        %v5626 = vsel %vm1884, %v5625, %v5624
        %v5627 = vrot.slane %v5586, 3
        %v5628 = vsel %vm1887, %v5627, %v5626
        %v5629 = vrot.slane %v5587, 2
        %v5630 = vsel %vm1890, %v5629, %v5628
        %v5631 = vrot.slane %v5588, 1
        %v5632 = vsel %vm1893, %v5631, %v5630
        %v5633 = vsel %vm372, %v5618, 0
        %v5635 = vsel %vm372, %v5632, 0
        %5637 = vmatprep.subr.mxu0 0.0
        %5638 = vmatpush1.xpose.msra.mxu0 0.0
        %5639 = vmatprep.subr.mxu0 0.0
        %5640 = vmatpush1.xpose.msra.mxu0 0.0
        %5641 = vmatprep.subr.mxu0 0.0
        %5642 = vmatpush1.xpose.msra.mxu0 0.0
        %5643 = vmatprep.subr.mxu0 0.0
        %5644 = vmatpush1.xpose.msra.mxu0 0.0
        %5645 = vmatprep.subr.mxu0 0.0
        %5646 = vmatpush1.xpose.msra.mxu0 0.0
        %5647 = vmatprep.subr.mxu0 0.0
        %5648 = vmatpush1.xpose.msra.mxu0 0.0
        %5649 = vmatprep.subr.mxu0 0.0
        %5650 = vmatpush1.xpose.msra.mxu0 0.0
        %5651 = vmatprep.subr.mxu0 0.0
        %5652 = vmatpush1.xpose.msra.mxu0 0.0
        %5653 = vmatprep.subr.mxu0 0.0
        %5654 = vmatpush1.xpose.msra.mxu0 0.0
        %5655 = vmatprep.subr.mxu0 0.0
        %5656 = vmatpush1.xpose.msra.mxu0 0.0
        %5657 = vmatprep.subr.mxu0 0.0
        %5658 = vmatpush1.xpose.msra.mxu0 0.0
        %5659 = vmatprep.subr.mxu0 0.0
        %5660 = vmatpush1.xpose.msra.mxu0 0.0
        %5661 = vmatprep.subr.mxu0 0.0
        %5662 = vmatpush1.xpose.msra.mxu0 0.0
        %5663 = vmatprep.subr.mxu0 0.0
        %5664 = vmatpush1.xpose.msra.mxu0 0.0
        %5665 = vmatprep.subr.mxu0 0.0
        %5666 = vmatpush1.xpose.msra.mxu0 %v5635
        %5667 = vmatprep.subr.mxu0 0.0
        %5668 = vmatpush1.xpose.msra.mxu0 %v5633
        %5669 = vmatprep.subr.mxu0 0.0
        %5670 = vmatpush2.xpose.msra.mxu0 0.0
        %5671 = vmatprep.subr.mxu0 0.0
        %5672 = vmatpush2.xpose.msra.mxu0 0.0
        %5673 = vmatprep.subr.mxu0 0.0
        %5674 = vmatpush2.xpose.msra.mxu0 0.0
        %5675 = vmatprep.subr.mxu0 0.0
        %5676 = vmatpush2.xpose.msra.mxu0 0.0
        %5677 = vmatprep.subr.mxu0 0.0
        %5678 = vmatpush2.xpose.msra.mxu0 0.0
        %5679 = vmatprep.subr.mxu0 0.0
        %5680 = vmatpush2.xpose.msra.mxu0 0.0
        %5681 = vmatprep.subr.mxu0 0.0
        %5682 = vmatpush2.xpose.msra.mxu0 0.0
        %5683 = vmatprep.subr.mxu0 0.0
        %5684 = vmatpush2.xpose.msra.mxu0 0.0
        %5685 = vmatprep.subr.mxu0 0.0
        %5686 = vmatpush2.xpose.msra.mxu0 0.0
        %5687 = vmatprep.subr.mxu0 0.0
        %5688 = vmatpush2.xpose.msra.mxu0 0.0
        %5689 = vmatprep.subr.mxu0 0.0
        %5690 = vmatpush2.xpose.msra.mxu0 0.0
        %5691 = vmatprep.subr.mxu0 0.0
        %5692 = vmatpush2.xpose.msra.mxu0 0.0
        %5693 = vmatprep.subr.mxu0 0.0
        %5694 = vmatpush2.xpose.msra.mxu0 0.0
        %5695 = vmatprep.subr.mxu0 0.0
        %5696 = vmatpush2.xpose.msra.mxu0 0.0
        %5697 = vmatprep.subr.mxu0 0.0
        %5698 = vmatpush2.xpose.msra.mxu0 0.0
        %5699 = vmatprep.subr.mxu0 0.0
        %5700 = vmatpush2.xpose.msra.mxu0 0.0
        %5701 = vmatprep.mubr.f32.mxu0 0.0
        %5702 = vmatmul.mubr.f32.gmra.mxu0 %v1910
        %v5703 = vpop.f32.mrf.mxu0
        %v5704 = vadd.f32 %v1840, %v5703
        %v5705 = vpop.f32.mrf.mxu0
        %5706 = vmatprep.mubr.f32.mxu0 0.0
        %5707 = vmatmul.mubr.f32.gmra.mxu0 %v1913
        %v5708 = vpop.f32.mrf.mxu0
        %v5709 = vadd.f32 %v1841, %v5708
        %v5710 = vpop.f32.mrf.mxu0
        %5711 = vdwg.mxu0
        %v5712 = vsel %vm372, %v5704, -inf
        %5713 = vmax.xlane.f32.xlu0 %v5712
        %v5714 = vpop.xlane.xlu0 %5713
        %v5715 = vsel %vm372, %v5709, -inf
        %5716 = vmax.xlane.f32.xlu0 %v5715
        %v5717 = vpop.xlane.xlu0 %5716
        %v5718 = vsub.f32 %v5704, %v5714
        %v5719 = vsub.f32 %v5709, %v5717
        %v5720 = vmul.f32 %v5718, 1.442695
        %v5721 = vpow.pop %v5720
        %v5722 = vmul.f32 %v5719, 1.442695
        %v5723 = vpow.pop %v5722
        %v5724 = vsel %vm372, %v5721, 0.0
        %5725 = vadd.xlane.f32.xlu0 %v5724
        %v5726 = vpop.xlane.xlu0 %5725
        %v5727 = vsel %vm372, %v5723, 0.0
        %5728 = vadd.xlane.f32.xlu0 %v5727
        %v5729 = vpop.xlane.xlu0 %5728
        %v5730 = vrcp.pop %v5726
        %v5731 = vrcp.pop %v5729
        %v5732 = vmul.f32 %v5721, %v5730
        %v5733 = vmul.f32 %v5723, %v5731
        %s5734 = scalar_lea.vmem %s269, 240 [#allocation8]
        %v5735 = vld [vmem:[%s5734] sm:$0xff]
        %v5736 = vld [vmem:[%s5734 + $0x8] sm:$0xff]
        %v5738 = vsel %vm372, %v5732, 0
        %v5741 = vsel %vm372, %v5733, 0
        %5743 = vmatprep.subr.mxu0 0.0
        %5744 = vmatpush1.msra.mxu0 0.0
        %5745 = vmatprep.subr.mxu0 0.0
        %5746 = vmatpush1.msra.mxu0 0.0
        %5747 = vmatprep.subr.mxu0 0.0
        %5748 = vmatpush1.msra.mxu0 0.0
        %5749 = vmatprep.subr.mxu0 0.0
        %5750 = vmatpush1.msra.mxu0 0.0
        %5751 = vmatprep.subr.mxu0 0.0
        %5752 = vmatpush1.msra.mxu0 0.0
        %5753 = vmatprep.subr.mxu0 0.0
        %5754 = vmatpush1.msra.mxu0 0.0
        %5755 = vmatprep.subr.mxu0 0.0
        %5756 = vmatpush1.msra.mxu0 0.0
        %5757 = vmatprep.subr.mxu0 0.0
        %5758 = vmatpush1.msra.mxu0 0.0
        %5759 = vmatprep.subr.mxu0 0.0
        %5760 = vmatpush1.msra.mxu0 0.0
        %5761 = vmatprep.subr.mxu0 0.0
        %5762 = vmatpush1.msra.mxu0 0.0
        %5763 = vmatprep.subr.mxu0 0.0
        %5764 = vmatpush1.msra.mxu0 0.0
        %5765 = vmatprep.subr.mxu0 0.0
        %5766 = vmatpush1.msra.mxu0 0.0
        %5767 = vmatprep.subr.mxu0 0.0
        %5768 = vmatpush1.msra.mxu0 0.0
        %5769 = vmatprep.subr.mxu0 0.0
        %5770 = vmatpush1.msra.mxu0 0.0
        %5771 = vmatprep.subr.mxu0 0.0
        %5772 = vmatpush1.msra.mxu0 %v5736
        %5773 = vmatprep.subr.mxu0 0.0
        %5774 = vmatpush1.msra.mxu0 %v5735
        %5775 = vmatprep.subr.mxu0 0.0
        %5776 = vmatpush2.msra.mxu0 0.0
        %5777 = vmatprep.subr.mxu0 0.0
        %5778 = vmatpush2.msra.mxu0 0.0
        %5779 = vmatprep.subr.mxu0 0.0
        %5780 = vmatpush2.msra.mxu0 0.0
        %5781 = vmatprep.subr.mxu0 0.0
        %5782 = vmatpush2.msra.mxu0 0.0
        %5783 = vmatprep.subr.mxu0 0.0
        %5784 = vmatpush2.msra.mxu0 0.0
        %5785 = vmatprep.subr.mxu0 0.0
        %5786 = vmatpush2.msra.mxu0 0.0
        %5787 = vmatprep.subr.mxu0 0.0
        %5788 = vmatpush2.msra.mxu0 0.0
        %5789 = vmatprep.subr.mxu0 0.0
        %5790 = vmatpush2.msra.mxu0 0.0
        %5791 = vmatprep.subr.mxu0 0.0
        %5792 = vmatpush2.msra.mxu0 0.0
        %5793 = vmatprep.subr.mxu0 0.0
        %5794 = vmatpush2.msra.mxu0 0.0
        %5795 = vmatprep.subr.mxu0 0.0
        %5796 = vmatpush2.msra.mxu0 0.0
        %5797 = vmatprep.subr.mxu0 0.0
        %5798 = vmatpush2.msra.mxu0 0.0
        %5799 = vmatprep.subr.mxu0 0.0
        %5800 = vmatpush2.msra.mxu0 0.0
        %5801 = vmatprep.subr.mxu0 0.0
        %5802 = vmatpush2.msra.mxu0 0.0
        %5803 = vmatprep.subr.mxu0 0.0
        %5804 = vmatpush2.msra.mxu0 0.0
        %5805 = vmatprep.subr.mxu0 0.0
        %5806 = vmatpush2.msra.mxu0 0.0
        %5807 = vmatprep.mubr.f32.mxu0 0.0
        %5808 = vmatmul.mubr.f32.gmra.mxu0 %v5738
        %v5809 = vpop.f32.mrf.mxu0
        %v5810 = vadd.f32 0.0, %v5809
        %v5811 = vpop.f32.mrf.mxu0
        %5812 = vmatprep.mubr.f32.mxu0 0.0
        %5813 = vmatmul.mubr.f32.gmra.mxu0 %v5741
        %v5814 = vpop.f32.mrf.mxu0
        %v5815 = vadd.f32 0.0, %v5814
        %v5816 = vpop.f32.mrf.mxu0
        %5817 = vdwg.mxu0
        %s5818 = scalar_lea.vmem %s307, 240 [#allocation11]
        %5819 = vst.msk [vmem:[%s5818] sm:$0xff] %vm372, %v5810
        %5820 = vst.msk [vmem:[%s5818 + $0x8] sm:$0xff] %vm372, %v5815
        %s5821 = sand.u32 %s132, 1
        %s5822 = scalar_lea.sflag [#allocation5], %s5821
        %s5823 = sand.u32 %s132, 1
        %s5824 = smul.addr %s5823, 256
        %s5825 = scalar_lea.vmem [#allocation11], %s5824
        // Predicated region
        $region53: #{model_forward.1} parent=35 // pred_check
          %p5826 = pneg %p142
        $region54: #{model_forward.1} parent=35 // pred_check_branch
          %5828 = sbr.rel (%p5826) target = $region56
        $region55: #{model_forward.1} parent=35 // pred_region
          %s5830 = ssub.s32 4096, 4096
          %5831 = vsyncadd %s5822, %s5830
          %s5832 = smul.addr %s25, 32
          %s5833 = smul.addr %s5832, 128
          %s5834 = scalar_lea.hbm %s4, %s5833
          %s5835 = sshll.u32 %s5825, 4
          %s5836 = int_to_ptr.vmem [resolvable:$true] %s5835
          %5841 = dma.vmem_to_hbm [thread:$0]  %s5836, 4096, %s5834, %s5822, 128, 128, 8
        $region56: #{model_forward.1} parent=35 // pred_fallthru
          _
      $region36: #{model_forward.1} parent=5 // pred_fallthru
        _
      %p5842 = scmp.le.s32.totalorder 2, %s20
      // Predicated region
      $region57: #{model_forward.1} parent=5 // pred_check
        %p5843 = pneg %p5842
      $region58: #{model_forward.1} parent=5 // pred_check_branch
        %5845 = sbr.rel (%p5843) target = $region60
      $region59: #{model_forward.1} parent=5 // pred_region
        %s5846 = ssub.s32 %s20, 2
        // Predicated region
        $region61: #{model_forward.1} parent=59 // pred_check
          %p5847 = pneg %p148
        $region62: #{model_forward.1} parent=59 // pred_check_branch
          %5849 = sbr.rel (%p5847) target = $region64
        $region63: #{model_forward.1} parent=59 // pred_region
          %s5850 = sand.u32 %s133, 1
          %s5851 = scalar_lea.sflag [#allocation5], %s5850
          %s5852 = sand.u32 %s133, 1
          %s5853 = smul.addr %s5852, 256
          %s5854 = scalar_lea.vmem [#allocation11], %s5853
          %5855 = dma.done %s5851, 4096
        $region64: #{model_forward.1} parent=59 // pred_fallthru
          _
      $region60: #{model_forward.1} parent=5 // pred_fallthru
        _
    $region6: #{model_forward.1} parent=1 // loop_footer
      %s24 = sadd.s32 1, %s20
    $region7: #{model_forward.1} parent=1 // loop_footer_branch
      %19 = sbr.rel target = $region3
    $region8: #{model_forward.1} parent=1 // loop_exit
      _
    %5856 = vsyncpa [#allocation4], 1
    %s5857 = scalar_lea.sflag [#allocation4], 1
    %5858 = vsyncpa %s5857, 1
    %5859 = vsyncpa [#allocation7], 1
    %s5860 = scalar_lea.sflag [#allocation7], 1
    %5861 = vsyncpa %s5860, 1
    %5862 = vsyncpa [#allocation10], 1
    %5863 = vsyncpa [#allocation5], 1
    %s5864 = scalar_lea.sflag [#allocation5], 1
    %5865 = vsyncpa %s5864, 1

</llo_original>
